<compile_context>
chip_gen: v6e
topology: v6e:2x2x1
jax: 0.10.0
libtpu: 0.0.40
codegen_flags: <defaults>
</compile_context>

<pallas_src>
import functools
import math

import jax
import jax.numpy as jnp
from jax.experimental import pallas as pl
from jax.experimental.pallas import tpu as pltpu

LN_EPS = 1e-5
BN_EPS = 1e-5
LANE = 128
FF_CHUNK = 512               # d_ff tile for the chunked feed-forward modules

N_BLOCK_PARAMS = 31          # kernel-ready params per Conformer block
N_INTERCTC_PARAMS = 4        # kernel-ready params per InterCTC residual module


# ---------------------------------------------------------------------------
# In-kernel helpers (operate on plain jnp values / Refs)
# ---------------------------------------------------------------------------
def _layer_norm(z, g, b):
    mu = jnp.mean(z, axis=-1, keepdims=True)
    var = jnp.mean((z - mu) ** 2, axis=-1, keepdims=True)
    return (z - mu) * jax.lax.rsqrt(var + LN_EPS) * g + b


def _swish(z):
    return z * jax.nn.sigmoid(z)


def _softmax_approx(z):
    # attention path: approx reciprocal goes to the EUP slot (free-ish)
    m = jnp.max(z, axis=-1, keepdims=True)
    e = jnp.exp(z - m)
    return e * pl.reciprocal(jnp.sum(e, axis=-1, keepdims=True), approx=True)


def _softmax_exact(z):
    # interCTC path: exact reciprocal (feeds the CTC loss / residual)
    m = jnp.max(z, axis=-1, keepdims=True)
    e = jnp.exp(z - m)
    return e / jnp.sum(e, axis=-1, keepdims=True)


def _ffn_module(x, ln_g_ref, ln_b_ref, w1_ref, b1_ref, w2_ref, b2_ref):
    """LayerNorm -> Linear -> Swish -> Linear, chunked over d_ff so the
    (mb, d_ff) f32 intermediate never materializes."""
    y = _layer_norm(x, ln_g_ref[...], ln_b_ref[...])
    yb = y.astype(jnp.bfloat16)
    d_ff = w1_ref.shape[1]
    chunk = min(d_ff, FF_CHUNK)
    acc = jnp.zeros(x.shape, jnp.float32)
    for c0 in range(0, d_ff, chunk):
        c1 = min(c0 + chunk, d_ff)
        h = (jnp.dot(yb, w1_ref[:, c0:c1], preferred_element_type=jnp.float32)
             + b1_ref[:, c0:c1])
        h = _swish(h)
        acc = acc + jnp.dot(h.astype(jnp.bfloat16), w2_ref[c0:c1, :],
                            preferred_element_type=jnp.float32)
    return acc + b2_ref[...]


# ---------------------------------------------------------------------------
# Fused Conformer block kernel:
#   FFN(0.5) -> MHSA -> ConvModule -> FFN(0.5) -> LayerNorm [-> InterCTC residual]
# One grid step processes B_blk batch elements flattened into (B_blk*T, D) rows.
# ---------------------------------------------------------------------------
def _conformer_block_kernel(*refs, num_heads, kernel_size, seq_len, n_params,
                            with_interctc):
    x_ref = refs[0]
    p = refs[1:1 + n_params]
    o_ref = refs[1 + n_params]
    if with_interctc:
        lg_ref = refs[2 + n_params]
        conv_ref = refs[3 + n_params]            # VMEM scratch (b_blk, T+2*pad, D)
    else:
        lg_ref = None
        conv_ref = refs[2 + n_params]

    x = x_ref[...].astype(jnp.float32)           # (MB, D), MB = B_blk * T
    mb, d_model = x.shape
    t_len = seq_len
    b_blk = mb // t_len
    dh = d_model // num_heads

    # ---- Feed-forward module 1 (macaron, half-step residual) ----
    x = x + 0.5 * _ffn_module(x, p[0], p[1], p[2], p[3], p[4], p[5])

    # ---- Multi-head self-attention (module built with mask=None) ----
    # Fused QKV projection: (mb, D) @ (D, 3D) -> full MXU N; the 1/sqrt(dh)
    # scale is already folded into the Q columns/bias in the wrapper.
    y = _layer_norm(x, p[6][...], p[7][...])
    yb = y.astype(jnp.bfloat16)
    qkv = (jnp.dot(yb, p[8][...], preferred_element_type=jnp.float32)
           + p[9][...])                           # (mb, 3*D), layout [Q | K | V]
    ctx = []
    for h in range(num_heads):
        q0 = h * dh
        qh = qkv[:, q0:q0 + dh].reshape(b_blk, t_len, dh)
        kh = qkv[:, d_model + q0:d_model + q0 + dh].reshape(b_blk, t_len, dh)
        vh = qkv[:, 2 * d_model + q0:2 * d_model + q0 + dh].reshape(b_blk, t_len, dh)
        s = jnp.einsum("bqd,bkd->bqk",
                       qh.astype(jnp.bfloat16), kh.astype(jnp.bfloat16),
                       preferred_element_type=jnp.float32)
        pr = _softmax_approx(s)
        oh = jnp.einsum("bqk,bkd->bqd",
                        pr.astype(jnp.bfloat16), vh.astype(jnp.bfloat16),
                        preferred_element_type=jnp.float32)
        ctx.append(oh.reshape(mb, dh))
    ctx = jnp.concatenate(ctx, axis=-1) if num_heads > 1 else ctx[0]
    # Single output projection with full contraction depth K = D.
    att = (jnp.dot(ctx.astype(jnp.bfloat16), p[10][...],
                   preferred_element_type=jnp.float32) + p[11][...])
    x = x + att

    # ---- Convolution module ----
    y = _layer_norm(x, p[12][...], p[13][...])
    yb = y.astype(jnp.bfloat16)
    val = jnp.dot(yb, p[14][...], preferred_element_type=jnp.float32) + p[15][...]
    gate = jnp.dot(yb, p[16][...], preferred_element_type=jnp.float32) + p[17][...]
    glu = val * jax.nn.sigmoid(gate)

    # Depthwise conv1d, 'same' padding, stride 1:
    # write GLU into a zero-padded (b_blk, T + 2*pad, D) scratch once, then each
    # tap is a static sublane-offset slice * per-channel weight + accumulate
    # (no per-tap masks, zero padding handles the boundaries exactly).
    pad = (kernel_size - 1) // 2
    if pad > 0:
        zpad = jnp.zeros((b_blk, pad, d_model), jnp.float32)
        conv_ref[:, :pad, :] = zpad
        conv_ref[:, t_len + pad:, :] = zpad
    conv_ref[:, pad:pad + t_len, :] = glu.reshape(b_blk, t_len, d_model)

    wdw = p[18][...]                                            # (K, D) f32
    acc = jnp.zeros((b_blk, t_len, d_model), jnp.float32)
    for kk in range(kernel_size):
        acc = acc + conv_ref[:, kk:kk + t_len, :] * wdw[kk, :]
    # BatchNorm1d (eval) + depthwise bias folded into per-channel scale/bias
    y = acc.reshape(mb, d_model) * p[19][...] + p[20][...]
    y = _swish(y)
    y = (jnp.dot(y.astype(jnp.bfloat16), p[21][...],
                 preferred_element_type=jnp.float32) + p[22][...])
    x = x + y

    # ---- Feed-forward module 2 (half-step residual) ----
    x = x + 0.5 * _ffn_module(x, p[23], p[24], p[25], p[26], p[27], p[28])

    # ---- Final LayerNorm ----
    x = _layer_norm(x, p[29][...], p[30][...])

    if with_interctc:
        # InterCTCResModule fused in the same grid step:
        #   logits = x @ Wp + bp ; x = x + softmax(logits) @ Wb + bb
        # (vocab padded to a lane multiple; padded bias = -1e30 so the padded
        #  columns vanish in the softmax and contribute nothing to the residual)
        logits = (jnp.dot(x.astype(jnp.bfloat16), p[31][...],
                          preferred_element_type=jnp.float32) + p[32][...])
        probs = _softmax_exact(logits)
        res = (jnp.dot(probs.astype(jnp.bfloat16), p[33][...],
                       preferred_element_type=jnp.float32) + p[34][...])
        o_ref[...] = (x + res).astype(o_ref.dtype)
        lg_ref[...] = logits.astype(lg_ref.dtype)
    else:
        o_ref[...] = x.astype(o_ref.dtype)


# ---------------------------------------------------------------------------
# Wrapper
# ---------------------------------------------------------------------------
def _weight_spec(shape, single_buffer):
    nd = len(shape)
    index_map = lambda g, _nd=nd: (0,) * _nd       # grid-invariant
    if single_buffer:
        # constant index_map -> never re-DMA'd; single buffer halves VMEM use
        return pl.BlockSpec(shape, index_map, pipeline_mode=pl.Buffered(1))
    return pl.BlockSpec(shape, index_map)


def _default_vmem_limit():
    """Generation-aware scoped-VMEM budget (~75% of physical, <=100 MiB)."""
    try:
        cap = int(pltpu.get_tpu_info().vmem_capacity_bytes)
    except Exception:
        cap = 64 * 1024 * 1024                      # conservative (v7x-sized)
    return max(32 * 1024 * 1024, min((cap * 3) // 4, 100 * 1024 * 1024))


def _pick_batch_block(batch, seq_len, *, target_rows=512, max_rows=1024,
                      min_grid=2):
    """Pick a batch chunk per grid step so that (a) rows stay sublane-aligned,
    (b) the grid has >= min_grid steps when possible (v7x has 2 TensorCores and
    a multi-step grid lets BlockSpec pipelining hide the x/out DMAs), and
    (c) rows per step reach target_rows (tall MXU M) without exceeding max_rows."""
    divisors = [d for d in range(1, batch + 1) if batch % d == 0]
    ok = [d for d in divisors if (d * seq_len) % 8 == 0] or [batch]
    # TODO(synk): if B*T % 8 != 0 the fallback yields a ragged sublane count;
    # pad T upstream instead of relying on it.
    cands = [d for d in ok if batch // d >= min_grid] or ok
    fits = [d for d in cands if d * seq_len <= max_rows] or cands[:1]
    reach = [d for d in fits if d * seq_len >= target_rows]
    return reach[0] if reach else fits[-1]


def conformer_block(x, params, *, num_heads, kernel_size, interctc_params=None,
                    batch_block=None):
    """One Conformer block (optionally fused with the InterCTC residual module)."""
    B, T, D = x.shape
    if batch_block is None:
        batch_block = _pick_batch_block(B, T)
    assert B % batch_block == 0
    grid = (B // batch_block,)
    mb = batch_block * T
    pad = (kernel_size - 1) // 2

    x2 = x.reshape(B * T, D)
    kern_params = list(params)
    with_interctc = interctc_params is not None
    if with_interctc:
        kern_params += list(interctc_params)
        vp = interctc_params[0].shape[1]

    if with_interctc:
        out_shape = (jax.ShapeDtypeStruct((B * T, D), x.dtype),
                     jax.ShapeDtypeStruct((B * T, vp), jnp.float32))
        out_specs = (pl.BlockSpec((mb, D), lambda g: (g, 0)),
                     pl.BlockSpec((mb, vp), lambda g: (g, 0)))
    else:
        out_shape = jax.ShapeDtypeStruct((B * T, D), x.dtype)
        out_specs = pl.BlockSpec((mb, D), lambda g: (g, 0))

    kern = functools.partial(
        _conformer_block_kernel,
        num_heads=num_heads,
        kernel_size=kernel_size,
        seq_len=T,
        n_params=len(kern_params),
        with_interctc=with_interctc,
    )
    # zero-padded GLU staging buffer for the depthwise conv (one per core)
    scratch_shapes = [pltpu.VMEM((batch_block, T + 2 * pad, D), jnp.float32)]

    def _run(single_buffer_weights):
        in_specs = [pl.BlockSpec((mb, D), lambda g: (g, 0))]
        in_specs += [_weight_spec(w.shape, single_buffer_weights)
                     for w in kern_params]
        return pl.pallas_call(
            kern,
            out_shape=out_shape,
            grid_spec=pltpu.PrefetchScalarGridSpec(
                num_scalar_prefetch=0,
                grid=grid,
                in_specs=in_specs,
                out_specs=out_specs,
                scratch_shapes=scratch_shapes,
            ),
            compiler_params=pltpu.CompilerParams(
                dimension_semantics=("parallel",),   # batch chunks independent
                vmem_limit_bytes=_default_vmem_limit(),
            ),
        )(x2, *kern_params)

    try:
        result = _run(True)
    except Exception:
        # pl.Buffered(1) single-buffering not supported on this jax build /
        # backend -- fall back to default double-buffered weight specs.
        result = _run(False)

    if with_interctc:
        x_out, logits = result
        return x_out.reshape(B, T, D), logits.reshape(B, T, vp)
    return result.reshape(B, T, D)


# ---------------------------------------------------------------------------
# Parameter initialization (deterministic, synthetic, "PyTorch-layout-like")
# and preparation into kernel-ready form (bf16, fused QKV, folded BN, ...)
# ---------------------------------------------------------------------------
def init_raw_block_params(key, d_model, ff_ratio, kernel_size):
    d_ff = ff_ratio * d_model
    ks = jax.random.split(key, 11)
    nrm = lambda k, s: 0.02 * jax.random.normal(k, s, jnp.float32)
    ones = lambda n: jnp.ones((1, n), jnp.float32)
    zeros = lambda n: jnp.zeros((1, n), jnp.float32)
    return dict(
        ln1_g=ones(d_model), ln1_b=zeros(d_model),
        ffn1_w1=nrm(ks[0], (d_model, d_ff)), ffn1_b1=zeros(d_ff),
        ffn1_w2=nrm(ks[1], (d_ff, d_model)), ffn1_b2=zeros(d_model),
        ln_att_g=ones(d_model), ln_att_b=zeros(d_model),
        wq=nrm(ks[2], (d_model, d_model)), bq=zeros(d_model),
        wk=nrm(ks[3], (d_model, d_model)), bk=zeros(d_model),
        wv=nrm(ks[4], (d_model, d_model)), bv=zeros(d_model),
        wo=nrm(ks[5], (d_model, d_model)), bo=zeros(d_model),
        ln_conv_g=ones(d_model), ln_conv_b=zeros(d_model),
        pw1_w=nrm(ks[6], (d_model, 2 * d_model)), pw1_b=zeros(2 * d_model),
        # depthwise conv weight stored as (K, D); a real PyTorch checkpoint has
        # shape (D, 1, K) and must be transposed to this layout when loading.
        dw_w=nrm(ks[7], (kernel_size, d_model)), dw_b=zeros(d_model),
        bn_g=ones(d_model), bn_b=zeros(d_model),
        bn_mean=zeros(d_model), bn_var=jnp.ones((1, d_model), jnp.float32),
        pw2_w=nrm(ks[8], (d_model, d_model)), pw2_b=zeros(d_model),
        ln2_g=ones(d_model), ln2_b=zeros(d_model),
        ffn2_w1=nrm(ks[9], (d_model, d_ff)), ffn2_b1=zeros(d_ff),
        ffn2_w2=nrm(ks[10], (d_ff, d_model)), ffn2_b2=zeros(d_model),
        lnf_g=ones(d_model), lnf_b=zeros(d_model),
    )


def prepare_block_params(r, num_heads):
    """Convert raw params into the kernel-ready list (order matters)."""
    bf = lambda w: w.astype(jnp.bfloat16)
    d_model = r["ln1_g"].shape[-1]
    dh = d_model // num_heads
    scale = 1.0 / math.sqrt(dh)
    # fused QKV weight, layout [Q | K | V], 1/sqrt(dh) folded into Q
    w_qkv = jnp.concatenate([r["wq"] * scale, r["wk"], r["wv"]], axis=1)
    b_qkv = jnp.concatenate([r["bq"] * scale, r["bk"], r["bv"]], axis=1)
    # BatchNorm1d (eval) + depthwise bias folded into per-channel scale/bias
    bn_scale = r["bn_g"] * jax.lax.rsqrt(r["bn_var"] + BN_EPS)
    bn_bias = (r["dw_b"] - r["bn_mean"]) * bn_scale + r["bn_b"]
    assert r["dw_w"].ndim == 2 and r["dw_w"].shape[-1] == d_model, (
        "depthwise conv weight must be (K, D); transpose PyTorch's (D, 1, K)")
    params = [
        # FFN1 (LN + two linears)
        r["ln1_g"], r["ln1_b"],
        bf(r["ffn1_w1"]), r["ffn1_b1"], bf(r["ffn1_w2"]), r["ffn1_b2"],
        # MHSA (fused QKV + single output projection)
        r["ln_att_g"], r["ln_att_b"],
        bf(w_qkv), b_qkv, bf(r["wo"]), r["bo"],
        # Conv module (GLU halves pre-split, BN folded)
        r["ln_conv_g"], r["ln_conv_b"],
        bf(r["pw1_w"][:, :d_model]), r["pw1_b"][:, :d_model],
        bf(r["pw1_w"][:, d_model:]), r["pw1_b"][:, d_model:],
        r["dw_w"], bn_scale, bn_bias,
        bf(r["pw2_w"]), r["pw2_b"],
        # FFN2
        r["ln2_g"], r["ln2_b"],
        bf(r["ffn2_w1"]), r["ffn2_b1"], bf(r["ffn2_w2"]), r["ffn2_b2"],
        # final LayerNorm
        r["lnf_g"], r["lnf_b"],
    ]
    assert len(params) == N_BLOCK_PARAMS
    return params


def init_raw_interctc_params(key, d_model, vocab_size):
    k1, k2 = jax.random.split(key)
    return dict(
        wp=0.02 * jax.random.normal(k1, (d_model, vocab_size), jnp.float32),
        bp=jnp.zeros((1, vocab_size), jnp.float32),
        wb=0.02 * jax.random.normal(k2, (vocab_size, d_model), jnp.float32),
        bb=jnp.zeros((1, d_model), jnp.float32),
    )


def prepare_interctc_params(r):
    """Pad vocab to a lane multiple; padded columns get bias -1e30 so they are
    exactly zero after softmax and never affect the residual projection."""
    d_model, vocab = r["wp"].shape
    vp = ((vocab + LANE - 1) // LANE) * LANE
    wp = jnp.zeros((d_model, vp), jnp.float32).at[:, :vocab].set(r["wp"])
    bp = jnp.full((1, vp), -1e30, jnp.float32).at[:, :vocab].set(r["bp"])
    wb = jnp.zeros((vp, d_model), jnp.float32).at[:vocab, :].set(r["wb"])
    params = [wp.astype(jnp.bfloat16), bp, wb.astype(jnp.bfloat16), r["bb"]]
    assert len(params) == N_INTERCTC_PARAMS
    return params


# ---------------------------------------------------------------------------
# Top-level forward (mirrors ConformerInterCTC.forward)
# ---------------------------------------------------------------------------
def conformer_interctc_forward(x, lengths, block_params_list, interctc_params_list,
                               interctc_blocks, *, num_heads, kernel_size,
                               vocab_size, loss_prefix="ctc"):
    # pos_embedding is None -> skipped ; Dropout is identity (eval) ; mask is None.
    interctc_outputs = {}
    j = 0
    for i, bp in enumerate(block_params_list):
        if i + 1 in interctc_blocks:
            x, logits = conformer_block(
                x, bp, num_heads=num_heads, kernel_size=kernel_size,
                interctc_params=interctc_params_list[j])
            j += 1
            interctc_outputs[loss_prefix + "_" + str(i)] = [
                logits[..., :vocab_size], lengths]
        else:
            x = conformer_block(x, bp, num_heads=num_heads, kernel_size=kernel_size)
        # all blocks here have stride == 1 -> mask / lengths unchanged
    return x, lengths, interctc_outputs


if __name__ == "__main__":
    # Small config consistent with the module: dim_model=32, num_blocks=2,
    # interctc_blocks=[1], vocab_size=16, 4 heads, kernel_size=31, ff_ratio=4.
    B, T, D, V = 2, 16, 32, 16
    NUM_BLOCKS = 2
    INTERCTC_BLOCKS = [1]
    NUM_HEADS = 4
    KERNEL_SIZE = 31
    FF_RATIO = 4

    key = jax.random.PRNGKey(0)
    k_x, k_blocks, k_inter = jax.random.split(key, 3)

    x = jax.random.normal(k_x, (B, T, D), jnp.float32)
    lengths = jnp.array([T, T - 4], jnp.int32)

    block_keys = jax.random.split(k_blocks, NUM_BLOCKS)
    block_params = [
        prepare_block_params(
            init_raw_block_params(block_keys[i], D, FF_RATIO, KERNEL_SIZE),
            NUM_HEADS)
        for i in range(NUM_BLOCKS)
    ]
    inter_keys = jax.random.split(k_inter, len(INTERCTC_BLOCKS))
    inter_params = [
        prepare_interctc_params(init_raw_interctc_params(inter_keys[i], D, V))
        for i in range(len(INTERCTC_BLOCKS))
    ]

    out_x, out_lengths, interctc_outputs = conformer_interctc_forward(
        x, lengths, block_params, inter_params, INTERCTC_BLOCKS,
        num_heads=NUM_HEADS, kernel_size=KERNEL_SIZE, vocab_size=V,
        loss_prefix="ctc",
    )

    jax.block_until_ready(out_x)
    for key_name, (logits, lens) in interctc_outputs.items():
        jax.block_until_ready(logits)

    assert out_x.shape == (B, T, D)
    assert out_lengths.shape == (B,)
    assert "ctc_0" in interctc_outputs
    assert interctc_outputs["ctc_0"][0].shape == (B, T, V)
    assert bool(jnp.all(jnp.isfinite(out_x)))
    assert bool(jnp.all(jnp.isfinite(interctc_outputs["ctc_0"][0])))

    print("KERNEL_OK")
</pallas_src>

<mosaic_0001>
module attributes {stable_mosaic.version = 11 : i64} {
  func.func @_conformer_block_kernel(%arg0: i32, %arg1: memref<16x32xf32, #tpu.memory_space<vmem>>, %arg2: memref<1x32xf32, #tpu.memory_space<vmem>>, %arg3: memref<1x32xf32, #tpu.memory_space<vmem>>, %arg4: memref<32x128xbf16, #tpu.memory_space<vmem>>, %arg5: memref<1x128xf32, #tpu.memory_space<vmem>>, %arg6: memref<128x32xbf16, #tpu.memory_space<vmem>>, %arg7: memref<1x32xf32, #tpu.memory_space<vmem>>, %arg8: memref<1x32xf32, #tpu.memory_space<vmem>>, %arg9: memref<1x32xf32, #tpu.memory_space<vmem>>, %arg10: memref<32x96xbf16, #tpu.memory_space<vmem>>, %arg11: memref<1x96xf32, #tpu.memory_space<vmem>>, %arg12: memref<32x32xbf16, #tpu.memory_space<vmem>>, %arg13: memref<1x32xf32, #tpu.memory_space<vmem>>, %arg14: memref<1x32xf32, #tpu.memory_space<vmem>>, %arg15: memref<1x32xf32, #tpu.memory_space<vmem>>, %arg16: memref<32x32xbf16, #tpu.memory_space<vmem>>, %arg17: memref<1x32xf32, #tpu.memory_space<vmem>>, %arg18: memref<32x32xbf16, #tpu.memory_space<vmem>>, %arg19: memref<1x32xf32, #tpu.memory_space<vmem>>, %arg20: memref<31x32xf32, #tpu.memory_space<vmem>>, %arg21: memref<1x32xf32, #tpu.memory_space<vmem>>, %arg22: memref<1x32xf32, #tpu.memory_space<vmem>>, %arg23: memref<32x32xbf16, #tpu.memory_space<vmem>>, %arg24: memref<1x32xf32, #tpu.memory_space<vmem>>, %arg25: memref<1x32xf32, #tpu.memory_space<vmem>>, %arg26: memref<1x32xf32, #tpu.memory_space<vmem>>, %arg27: memref<32x128xbf16, #tpu.memory_space<vmem>>, %arg28: memref<1x128xf32, #tpu.memory_space<vmem>>, %arg29: memref<128x32xbf16, #tpu.memory_space<vmem>>, %arg30: memref<1x32xf32, #tpu.memory_space<vmem>>, %arg31: memref<1x32xf32, #tpu.memory_space<vmem>>, %arg32: memref<1x32xf32, #tpu.memory_space<vmem>>, %arg33: memref<32x128xbf16, #tpu.memory_space<vmem>>, %arg34: memref<1x128xf32, #tpu.memory_space<vmem>>, %arg35: memref<128x32xbf16, #tpu.memory_space<vmem>>, %arg36: memref<1x32xf32, #tpu.memory_space<vmem>>, %arg37: memref<16x32xf32, #tpu.memory_space<vmem>>, %arg38: memref<16x128xf32, #tpu.memory_space<vmem>>, %arg39: memref<1x46x32xf32, #tpu.memory_space<vmem>>) attributes {dimension_semantics = [#tpu.dimension_semantics<parallel>], iteration_bounds = array<i64: 2>, scalar_prefetch = 0 : i64, scratch_operands = 1 : i64, tpu.core_type = #tpu.core_type<tc>, window_params = [{transform_indices = @transform_0, window_bounds = array<i64: 16, 32>}, {pipeline_mode = #tpu.pipeline_mode<synchronous>, transform_indices = @transform_1, window_bounds = array<i64: 1, 32>}, {pipeline_mode = #tpu.pipeline_mode<synchronous>, transform_indices = @transform_2, window_bounds = array<i64: 1, 32>}, {pipeline_mode = #tpu.pipeline_mode<synchronous>, transform_indices = @transform_3, window_bounds = array<i64: 32, 128>}, {pipeline_mode = #tpu.pipeline_mode<synchronous>, transform_indices = @transform_4, window_bounds = array<i64: 1, 128>}, {pipeline_mode = #tpu.pipeline_mode<synchronous>, transform_indices = @transform_5, window_bounds = array<i64: 128, 32>}, {pipeline_mode = #tpu.pipeline_mode<synchronous>, transform_indices = @transform_6, window_bounds = array<i64: 1, 32>}, {pipeline_mode = #tpu.pipeline_mode<synchronous>, transform_indices = @transform_7, window_bounds = array<i64: 1, 32>}, {pipeline_mode = #tpu.pipeline_mode<synchronous>, transform_indices = @transform_8, window_bounds = array<i64: 1, 32>}, {pipeline_mode = #tpu.pipeline_mode<synchronous>, transform_indices = @transform_9, window_bounds = array<i64: 32, 96>}, {pipeline_mode = #tpu.pipeline_mode<synchronous>, transform_indices = @transform_10, window_bounds = array<i64: 1, 96>}, {pipeline_mode = #tpu.pipeline_mode<synchronous>, transform_indices = @transform_11, window_bounds = array<i64: 32, 32>}, {pipeline_mode = #tpu.pipeline_mode<synchronous>, transform_indices = @transform_12, window_bounds = array<i64: 1, 32>}, {pipeline_mode = #tpu.pipeline_mode<synchronous>, transform_indices = @transform_13, window_bounds = array<i64: 1, 32>}, {pipeline_mode = #tpu.pipeline_mode<synchronous>, transform_indices = @transform_14, window_bounds = array<i64: 1, 32>}, {pipeline_mode = #tpu.pipeline_mode<synchronous>, transform_indices = @transform_15, window_bounds = array<i64: 32, 32>}, {pipeline_mode = #tpu.pipeline_mode<synchronous>, transform_indices = @transform_16, window_bounds = array<i64: 1, 32>}, {pipeline_mode = #tpu.pipeline_mode<synchronous>, transform_indices = @transform_17, window_bounds = array<i64: 32, 32>}, {pipeline_mode = #tpu.pipeline_mode<synchronous>, transform_indices = @transform_18, window_bounds = array<i64: 1, 32>}, {pipeline_mode = #tpu.pipeline_mode<synchronous>, transform_indices = @transform_19, window_bounds = array<i64: 31, 32>}, {pipeline_mode = #tpu.pipeline_mode<synchronous>, transform_indices = @transform_20, window_bounds = array<i64: 1, 32>}, {pipeline_mode = #tpu.pipeline_mode<synchronous>, transform_indices = @transform_21, window_bounds = array<i64: 1, 32>}, {pipeline_mode = #tpu.pipeline_mode<synchronous>, transform_indices = @transform_22, window_bounds = array<i64: 32, 32>}, {pipeline_mode = #tpu.pipeline_mode<synchronous>, transform_indices = @transform_23, window_bounds = array<i64: 1, 32>}, {pipeline_mode = #tpu.pipeline_mode<synchronous>, transform_indices = @transform_24, window_bounds = array<i64: 1, 32>}, {pipeline_mode = #tpu.pipeline_mode<synchronous>, transform_indices = @transform_25, window_bounds = array<i64: 1, 32>}, {pipeline_mode = #tpu.pipeline_mode<synchronous>, transform_indices = @transform_26, window_bounds = array<i64: 32, 128>}, {pipeline_mode = #tpu.pipeline_mode<synchronous>, transform_indices = @transform_27, window_bounds = array<i64: 1, 128>}, {pipeline_mode = #tpu.pipeline_mode<synchronous>, transform_indices = @transform_28, window_bounds = array<i64: 128, 32>}, {pipeline_mode = #tpu.pipeline_mode<synchronous>, transform_indices = @transform_29, window_bounds = array<i64: 1, 32>}, {pipeline_mode = #tpu.pipeline_mode<synchronous>, transform_indices = @transform_30, window_bounds = array<i64: 1, 32>}, {pipeline_mode = #tpu.pipeline_mode<synchronous>, transform_indices = @transform_31, window_bounds = array<i64: 1, 32>}, {pipeline_mode = #tpu.pipeline_mode<synchronous>, transform_indices = @transform_32, window_bounds = array<i64: 32, 128>}, {pipeline_mode = #tpu.pipeline_mode<synchronous>, transform_indices = @transform_33, window_bounds = array<i64: 1, 128>}, {pipeline_mode = #tpu.pipeline_mode<synchronous>, transform_indices = @transform_34, window_bounds = array<i64: 128, 32>}, {pipeline_mode = #tpu.pipeline_mode<synchronous>, transform_indices = @transform_35, window_bounds = array<i64: 1, 32>}, {transform_indices = @transform_36, window_bounds = array<i64: 16, 32>}, {transform_indices = @transform_37, window_bounds = array<i64: 16, 128>}]} {
    %c0 = arith.constant 0 : index
    %c0_0 = arith.constant 0 : index
    %0 = vector.load %arg1[%c0, %c0_0] : memref<16x32xf32, #tpu.memory_space<vmem>>, vector<16x32xf32>
    %c0_1 = arith.constant 0 : index
    %c0_2 = arith.constant 0 : index
    %1 = vector.load %arg2[%c0_1, %c0_2] : memref<1x32xf32, #tpu.memory_space<vmem>>, vector<1x32xf32>
    %c0_3 = arith.constant 0 : index
    %c0_4 = arith.constant 0 : index
    %2 = vector.load %arg3[%c0_3, %c0_4] : memref<1x32xf32, #tpu.memory_space<vmem>>, vector<1x32xf32>
    %cst = arith.constant dense<0.000000e+00> : vector<16xf32>
    %3 = vector.multi_reduction <add>, %0, %cst [1] : vector<16x32xf32> to vector<16xf32>
    %4 = vector.shape_cast %3 : vector<16xf32> to vector<16x1xf32>
    %cst_5 = arith.constant 3.200000e+01 : f32
    %5 = vector.broadcast %cst_5 : f32 to vector<16x1xf32>
    %6 = arith.divf %4, %5 : vector<16x1xf32>
    %7 = vector.broadcast %6 : vector<16x1xf32> to vector<16x32xf32>
    %8 = arith.subf %0, %7 : vector<16x32xf32>
    %9 = arith.mulf %8, %8 : vector<16x32xf32>
    %cst_6 = arith.constant dense<0.000000e+00> : vector<16xf32>
    %10 = vector.multi_reduction <add>, %9, %cst_6 [1] : vector<16x32xf32> to vector<16xf32>
    %11 = vector.shape_cast %10 : vector<16xf32> to vector<16x1xf32>
    %cst_7 = arith.constant 3.200000e+01 : f32
    %12 = vector.broadcast %cst_7 : f32 to vector<16x1xf32>
    %13 = arith.divf %11, %12 : vector<16x1xf32>
    %14 = vector.broadcast %6 : vector<16x1xf32> to vector<16x32xf32>
    %15 = arith.subf %0, %14 : vector<16x32xf32>
    %cst_8 = arith.constant 9.99999974E-6 : f32
    %16 = vector.broadcast %cst_8 : f32 to vector<16x1xf32>
    %17 = arith.addf %13, %16 : vector<16x1xf32>
    %18 = math.rsqrt %17 : vector<16x1xf32>
    %19 = vector.broadcast %18 : vector<16x1xf32> to vector<16x32xf32>
    %20 = arith.mulf %15, %19 : vector<16x32xf32>
    %21 = vector.broadcast %1 : vector<1x32xf32> to vector<16x32xf32>
    %22 = arith.mulf %20, %21 : vector<16x32xf32>
    %23 = vector.broadcast %2 : vector<1x32xf32> to vector<16x32xf32>
    %24 = arith.addf %22, %23 : vector<16x32xf32>
    %25 = arith.truncf %24 : vector<16x32xf32> to vector<16x32xbf16>
    %cst_9 = arith.constant 0.000000e+00 : f32
    %26 = vector.broadcast %cst_9 : f32 to vector<16x32xf32>
    %c0_10 = arith.constant 0 : index
    %c0_11 = arith.constant 0 : index
    %27 = vector.load %arg4[%c0_10, %c0_11] : memref<32x128xbf16, #tpu.memory_space<vmem>>, vector<32x128xbf16>
    %cst_12 = arith.constant dense<0.000000e+00> : vector<16x128xf32>
    %28 = tpu.matmul %25, %27, %cst_12 {dimension_numbers = #tpu.dot_dimension_numbers<[1], [0], [0], [1], [0, 0, 1, 1], [], []>} : vector<16x32xbf16>, vector<32x128xbf16>, vector<16x128xf32> -> vector<16x128xf32>
    %c0_13 = arith.constant 0 : index
    %c0_14 = arith.constant 0 : index
    %29 = vector.load %arg5[%c0_13, %c0_14] : memref<1x128xf32, #tpu.memory_space<vmem>>, vector<1x128xf32>
    %30 = vector.broadcast %29 : vector<1x128xf32> to vector<16x128xf32>
    %31 = arith.addf %28, %30 : vector<16x128xf32>
    %32 = arith.negf %31 : vector<16x128xf32>
    %33 = math.exp %32 : vector<16x128xf32>
    %cst_15 = arith.constant 1.000000e+00 : f32
    %34 = vector.broadcast %cst_15 : f32 to vector<16x128xf32>
    %35 = arith.addf %34, %33 : vector<16x128xf32>
    %36 = arith.divf %34, %35 : vector<16x128xf32>
    %37 = arith.mulf %31, %36 : vector<16x128xf32>
    %38 = arith.truncf %37 : vector<16x128xf32> to vector<16x128xbf16>
    %c0_16 = arith.constant 0 : index
    %c0_17 = arith.constant 0 : index
    %39 = vector.load %arg6[%c0_16, %c0_17] : memref<128x32xbf16, #tpu.memory_space<vmem>>, vector<128x32xbf16>
    %cst_18 = arith.constant dense<0.000000e+00> : vector<16x32xf32>
    %40 = tpu.matmul %38, %39, %cst_18 {dimension_numbers = #tpu.dot_dimension_numbers<[1], [0], [0], [1], [0, 0, 1, 1], [], []>} : vector<16x128xbf16>, vector<128x32xbf16>, vector<16x32xf32> -> vector<16x32xf32>
    %41 = arith.addf %26, %40 : vector<16x32xf32>
    %c0_19 = arith.constant 0 : index
    %c0_20 = arith.constant 0 : index
    %42 = vector.load %arg7[%c0_19, %c0_20] : memref<1x32xf32, #tpu.memory_space<vmem>>, vector<1x32xf32>
    %43 = vector.broadcast %42 : vector<1x32xf32> to vector<16x32xf32>
    %44 = arith.addf %41, %43 : vector<16x32xf32>
    %cst_21 = arith.constant 5.000000e-01 : f32
    %45 = vector.broadcast %cst_21 : f32 to vector<16x32xf32>
    %46 = arith.mulf %45, %44 : vector<16x32xf32>
    %47 = arith.addf %0, %46 : vector<16x32xf32>
    %c0_22 = arith.constant 0 : index
    %c0_23 = arith.constant 0 : index
    %48 = vector.load %arg8[%c0_22, %c0_23] : memref<1x32xf32, #tpu.memory_space<vmem>>, vector<1x32xf32>
    %c0_24 = arith.constant 0 : index
    %c0_25 = arith.constant 0 : index
    %49 = vector.load %arg9[%c0_24, %c0_25] : memref<1x32xf32, #tpu.memory_space<vmem>>, vector<1x32xf32>
    %cst_26 = arith.constant dense<0.000000e+00> : vector<16xf32>
    %50 = vector.multi_reduction <add>, %47, %cst_26 [1] : vector<16x32xf32> to vector<16xf32>
    %51 = vector.shape_cast %50 : vector<16xf32> to vector<16x1xf32>
    %cst_27 = arith.constant 3.200000e+01 : f32
    %52 = vector.broadcast %cst_27 : f32 to vector<16x1xf32>
    %53 = arith.divf %51, %52 : vector<16x1xf32>
    %54 = vector.broadcast %53 : vector<16x1xf32> to vector<16x32xf32>
    %55 = arith.subf %47, %54 : vector<16x32xf32>
    %56 = arith.mulf %55, %55 : vector<16x32xf32>
    %cst_28 = arith.constant dense<0.000000e+00> : vector<16xf32>
    %57 = vector.multi_reduction <add>, %56, %cst_28 [1] : vector<16x32xf32> to vector<16xf32>
    %58 = vector.shape_cast %57 : vector<16xf32> to vector<16x1xf32>
    %cst_29 = arith.constant 3.200000e+01 : f32
    %59 = vector.broadcast %cst_29 : f32 to vector<16x1xf32>
    %60 = arith.divf %58, %59 : vector<16x1xf32>
    %61 = vector.broadcast %53 : vector<16x1xf32> to vector<16x32xf32>
    %62 = arith.subf %47, %61 : vector<16x32xf32>
    %cst_30 = arith.constant 9.99999974E-6 : f32
    %63 = vector.broadcast %cst_30 : f32 to vector<16x1xf32>
    %64 = arith.addf %60, %63 : vector<16x1xf32>
    %65 = math.rsqrt %64 : vector<16x1xf32>
    %66 = vector.broadcast %65 : vector<16x1xf32> to vector<16x32xf32>
    %67 = arith.mulf %62, %66 : vector<16x32xf32>
    %68 = vector.broadcast %48 : vector<1x32xf32> to vector<16x32xf32>
    %69 = arith.mulf %67, %68 : vector<16x32xf32>
    %70 = vector.broadcast %49 : vector<1x32xf32> to vector<16x32xf32>
    %71 = arith.addf %69, %70 : vector<16x32xf32>
    %72 = arith.truncf %71 : vector<16x32xf32> to vector<16x32xbf16>
    %c0_31 = arith.constant 0 : index
    %c0_32 = arith.constant 0 : index
    %73 = vector.load %arg10[%c0_31, %c0_32] : memref<32x96xbf16, #tpu.memory_space<vmem>>, vector<32x96xbf16>
    %cst_33 = arith.constant dense<0.000000e+00> : vector<16x96xf32>
    %74 = tpu.matmul %72, %73, %cst_33 {dimension_numbers = #tpu.dot_dimension_numbers<[1], [0], [0], [1], [0, 0, 1, 1], [], []>} : vector<16x32xbf16>, vector<32x96xbf16>, vector<16x96xf32> -> vector<16x96xf32>
    %c0_34 = arith.constant 0 : index
    %c0_35 = arith.constant 0 : index
    %75 = vector.load %arg11[%c0_34, %c0_35] : memref<1x96xf32, #tpu.memory_space<vmem>>, vector<1x96xf32>
    %76 = vector.broadcast %75 : vector<1x96xf32> to vector<16x96xf32>
    %77 = arith.addf %74, %76 : vector<16x96xf32>
    %78 = vector.extract_strided_slice %77 {offsets = [0, 0], sizes = [16, 8], strides = [1, 1]} : vector<16x96xf32> to vector<16x8xf32>
    %79 = vector.shape_cast %78 : vector<16x8xf32> to vector<1x16x8xf32>
    %80 = vector.extract_strided_slice %77 {offsets = [0, 32], sizes = [16, 8], strides = [1, 1]} : vector<16x96xf32> to vector<16x8xf32>
    %81 = vector.shape_cast %80 : vector<16x8xf32> to vector<1x16x8xf32>
    %82 = vector.extract_strided_slice %77 {offsets = [0, 64], sizes = [16, 8], strides = [1, 1]} : vector<16x96xf32> to vector<16x8xf32>
    %83 = vector.shape_cast %82 : vector<16x8xf32> to vector<1x16x8xf32>
    %84 = arith.truncf %79 : vector<1x16x8xf32> to vector<1x16x8xbf16>
    %85 = arith.truncf %81 : vector<1x16x8xf32> to vector<1x16x8xbf16>
    "tpu.trace_start"() <{level = 10 : i32, message = "bqd,bkd->bqk"}> : () -> ()
    %cst_36 = arith.constant dense<0.000000e+00> : vector<1x16x16xf32>
    %86 = tpu.matmul %84, %85, %cst_36 {dimension_numbers = #tpu.dot_dimension_numbers<[2], [2], [1], [1], [0, 0, 0, 1, 1, 1], [0], [0]>} : vector<1x16x8xbf16>, vector<1x16x8xbf16>, vector<1x16x16xf32> -> vector<1x16x16xf32>
    "tpu.trace_stop"() : () -> ()
    %cst_37 = arith.constant dense<0xFF800000> : vector<1x16xf32>
    %87 = vector.multi_reduction <maximumf>, %86, %cst_37 [2] : vector<1x16x16xf32> to vector<1x16xf32>
    %88 = vector.shape_cast %87 : vector<1x16xf32> to vector<1x16x1xf32>
    %89 = vector.broadcast %88 : vector<1x16x1xf32> to vector<1x16x16xf32>
    %90 = arith.subf %86, %89 : vector<1x16x16xf32>
    %91 = math.exp %90 : vector<1x16x16xf32>
    %cst_38 = arith.constant dense<0.000000e+00> : vector<1x16xf32>
    %92 = vector.multi_reduction <add>, %91, %cst_38 [2] : vector<1x16x16xf32> to vector<1x16xf32>
    %93 = vector.shape_cast %92 : vector<1x16xf32> to vector<1x16x1xf32>
    %94 = tpu.reciprocal %93 {approx = true} : vector<1x16x1xf32> -> vector<1x16x1xf32>
    %95 = vector.broadcast %94 : vector<1x16x1xf32> to vector<1x16x16xf32>
    %96 = arith.mulf %91, %95 : vector<1x16x16xf32>
    %97 = arith.truncf %96 : vector<1x16x16xf32> to vector<1x16x16xbf16>
    %98 = arith.truncf %83 : vector<1x16x8xf32> to vector<1x16x8xbf16>
    "tpu.trace_start"() <{level = 10 : i32, message = "bqk,bkd->bqd"}> : () -> ()
    %cst_39 = arith.constant dense<0.000000e+00> : vector<1x16x8xf32>
    %99 = tpu.matmul %97, %98, %cst_39 {dimension_numbers = #tpu.dot_dimension_numbers<[2], [1], [1], [2], [0, 0, 0, 1, 1, 2], [0], [0]>} : vector<1x16x16xbf16>, vector<1x16x8xbf16>, vector<1x16x8xf32> -> vector<1x16x8xf32>
    "tpu.trace_stop"() : () -> ()
    %100 = vector.shape_cast %99 : vector<1x16x8xf32> to vector<16x8xf32>
    %101 = vector.extract_strided_slice %77 {offsets = [0, 8], sizes = [16, 8], strides = [1, 1]} : vector<16x96xf32> to vector<16x8xf32>
    %102 = vector.shape_cast %101 : vector<16x8xf32> to vector<1x16x8xf32>
    %103 = vector.extract_strided_slice %77 {offsets = [0, 40], sizes = [16, 8], strides = [1, 1]} : vector<16x96xf32> to vector<16x8xf32>
    %104 = vector.shape_cast %103 : vector<16x8xf32> to vector<1x16x8xf32>
    %105 = vector.extract_strided_slice %77 {offsets = [0, 72], sizes = [16, 8], strides = [1, 1]} : vector<16x96xf32> to vector<16x8xf32>
    %106 = vector.shape_cast %105 : vector<16x8xf32> to vector<1x16x8xf32>
    %107 = arith.truncf %102 : vector<1x16x8xf32> to vector<1x16x8xbf16>
    %108 = arith.truncf %104 : vector<1x16x8xf32> to vector<1x16x8xbf16>
    "tpu.trace_start"() <{level = 10 : i32, message = "bqd,bkd->bqk"}> : () -> ()
    %cst_40 = arith.constant dense<0.000000e+00> : vector<1x16x16xf32>
    %109 = tpu.matmul %107, %108, %cst_40 {dimension_numbers = #tpu.dot_dimension_numbers<[2], [2], [1], [1], [0, 0, 0, 1, 1, 1], [0], [0]>} : vector<1x16x8xbf16>, vector<1x16x8xbf16>, vector<1x16x16xf32> -> vector<1x16x16xf32>
    "tpu.trace_stop"() : () -> ()
    %cst_41 = arith.constant dense<0xFF800000> : vector<1x16xf32>
    %110 = vector.multi_reduction <maximumf>, %109, %cst_41 [2] : vector<1x16x16xf32> to vector<1x16xf32>
    %111 = vector.shape_cast %110 : vector<1x16xf32> to vector<1x16x1xf32>
    %112 = vector.broadcast %111 : vector<1x16x1xf32> to vector<1x16x16xf32>
    %113 = arith.subf %109, %112 : vector<1x16x16xf32>
    %114 = math.exp %113 : vector<1x16x16xf32>
    %cst_42 = arith.constant dense<0.000000e+00> : vector<1x16xf32>
    %115 = vector.multi_reduction <add>, %114, %cst_42 [2] : vector<1x16x16xf32> to vector<1x16xf32>
    %116 = vector.shape_cast %115 : vector<1x16xf32> to vector<1x16x1xf32>
    %117 = tpu.reciprocal %116 {approx = true} : vector<1x16x1xf32> -> vector<1x16x1xf32>
    %118 = vector.broadcast %117 : vector<1x16x1xf32> to vector<1x16x16xf32>
    %119 = arith.mulf %114, %118 : vector<1x16x16xf32>
    %120 = arith.truncf %119 : vector<1x16x16xf32> to vector<1x16x16xbf16>
    %121 = arith.truncf %106 : vector<1x16x8xf32> to vector<1x16x8xbf16>
    "tpu.trace_start"() <{level = 10 : i32, message = "bqk,bkd->bqd"}> : () -> ()
    %cst_43 = arith.constant dense<0.000000e+00> : vector<1x16x8xf32>
    %122 = tpu.matmul %120, %121, %cst_43 {dimension_numbers = #tpu.dot_dimension_numbers<[2], [1], [1], [2], [0, 0, 0, 1, 1, 2], [0], [0]>} : vector<1x16x16xbf16>, vector<1x16x8xbf16>, vector<1x16x8xf32> -> vector<1x16x8xf32>
    "tpu.trace_stop"() : () -> ()
    %123 = vector.shape_cast %122 : vector<1x16x8xf32> to vector<16x8xf32>
    %124 = vector.extract_strided_slice %77 {offsets = [0, 16], sizes = [16, 8], strides = [1, 1]} : vector<16x96xf32> to vector<16x8xf32>
    %125 = vector.shape_cast %124 : vector<16x8xf32> to vector<1x16x8xf32>
    %126 = vector.extract_strided_slice %77 {offsets = [0, 48], sizes = [16, 8], strides = [1, 1]} : vector<16x96xf32> to vector<16x8xf32>
    %127 = vector.shape_cast %126 : vector<16x8xf32> to vector<1x16x8xf32>
    %128 = vector.extract_strided_slice %77 {offsets = [0, 80], sizes = [16, 8], strides = [1, 1]} : vector<16x96xf32> to vector<16x8xf32>
    %129 = vector.shape_cast %128 : vector<16x8xf32> to vector<1x16x8xf32>
    %130 = arith.truncf %125 : vector<1x16x8xf32> to vector<1x16x8xbf16>
    %131 = arith.truncf %127 : vector<1x16x8xf32> to vector<1x16x8xbf16>
    "tpu.trace_start"() <{level = 10 : i32, message = "bqd,bkd->bqk"}> : () -> ()
    %cst_44 = arith.constant dense<0.000000e+00> : vector<1x16x16xf32>
    %132 = tpu.matmul %130, %131, %cst_44 {dimension_numbers = #tpu.dot_dimension_numbers<[2], [2], [1], [1], [0, 0, 0, 1, 1, 1], [0], [0]>} : vector<1x16x8xbf16>, vector<1x16x8xbf16>, vector<1x16x16xf32> -> vector<1x16x16xf32>
    "tpu.trace_stop"() : () -> ()
    %cst_45 = arith.constant dense<0xFF800000> : vector<1x16xf32>
    %133 = vector.multi_reduction <maximumf>, %132, %cst_45 [2] : vector<1x16x16xf32> to vector<1x16xf32>
    %134 = vector.shape_cast %133 : vector<1x16xf32> to vector<1x16x1xf32>
    %135 = vector.broadcast %134 : vector<1x16x1xf32> to vector<1x16x16xf32>
    %136 = arith.subf %132, %135 : vector<1x16x16xf32>
    %137 = math.exp %136 : vector<1x16x16xf32>
    %cst_46 = arith.constant dense<0.000000e+00> : vector<1x16xf32>
    %138 = vector.multi_reduction <add>, %137, %cst_46 [2] : vector<1x16x16xf32> to vector<1x16xf32>
    %139 = vector.shape_cast %138 : vector<1x16xf32> to vector<1x16x1xf32>
    %140 = tpu.reciprocal %139 {approx = true} : vector<1x16x1xf32> -> vector<1x16x1xf32>
    %141 = vector.broadcast %140 : vector<1x16x1xf32> to vector<1x16x16xf32>
    %142 = arith.mulf %137, %141 : vector<1x16x16xf32>
    %143 = arith.truncf %142 : vector<1x16x16xf32> to vector<1x16x16xbf16>
    %144 = arith.truncf %129 : vector<1x16x8xf32> to vector<1x16x8xbf16>
    "tpu.trace_start"() <{level = 10 : i32, message = "bqk,bkd->bqd"}> : () -> ()
    %cst_47 = arith.constant dense<0.000000e+00> : vector<1x16x8xf32>
    %145 = tpu.matmul %143, %144, %cst_47 {dimension_numbers = #tpu.dot_dimension_numbers<[2], [1], [1], [2], [0, 0, 0, 1, 1, 2], [0], [0]>} : vector<1x16x16xbf16>, vector<1x16x8xbf16>, vector<1x16x8xf32> -> vector<1x16x8xf32>
    "tpu.trace_stop"() : () -> ()
    %146 = vector.shape_cast %145 : vector<1x16x8xf32> to vector<16x8xf32>
    %147 = vector.extract_strided_slice %77 {offsets = [0, 24], sizes = [16, 8], strides = [1, 1]} : vector<16x96xf32> to vector<16x8xf32>
    %148 = vector.shape_cast %147 : vector<16x8xf32> to vector<1x16x8xf32>
    %149 = vector.extract_strided_slice %77 {offsets = [0, 56], sizes = [16, 8], strides = [1, 1]} : vector<16x96xf32> to vector<16x8xf32>
    %150 = vector.shape_cast %149 : vector<16x8xf32> to vector<1x16x8xf32>
    %151 = vector.extract_strided_slice %77 {offsets = [0, 88], sizes = [16, 8], strides = [1, 1]} : vector<16x96xf32> to vector<16x8xf32>
    %152 = vector.shape_cast %151 : vector<16x8xf32> to vector<1x16x8xf32>
    %153 = arith.truncf %148 : vector<1x16x8xf32> to vector<1x16x8xbf16>
    %154 = arith.truncf %150 : vector<1x16x8xf32> to vector<1x16x8xbf16>
    "tpu.trace_start"() <{level = 10 : i32, message = "bqd,bkd->bqk"}> : () -> ()
    %cst_48 = arith.constant dense<0.000000e+00> : vector<1x16x16xf32>
    %155 = tpu.matmul %153, %154, %cst_48 {dimension_numbers = #tpu.dot_dimension_numbers<[2], [2], [1], [1], [0, 0, 0, 1, 1, 1], [0], [0]>} : vector<1x16x8xbf16>, vector<1x16x8xbf16>, vector<1x16x16xf32> -> vector<1x16x16xf32>
    "tpu.trace_stop"() : () -> ()
    %cst_49 = arith.constant dense<0xFF800000> : vector<1x16xf32>
    %156 = vector.multi_reduction <maximumf>, %155, %cst_49 [2] : vector<1x16x16xf32> to vector<1x16xf32>
    %157 = vector.shape_cast %156 : vector<1x16xf32> to vector<1x16x1xf32>
    %158 = vector.broadcast %157 : vector<1x16x1xf32> to vector<1x16x16xf32>
    %159 = arith.subf %155, %158 : vector<1x16x16xf32>
    %160 = math.exp %159 : vector<1x16x16xf32>
    %cst_50 = arith.constant dense<0.000000e+00> : vector<1x16xf32>
    %161 = vector.multi_reduction <add>, %160, %cst_50 [2] : vector<1x16x16xf32> to vector<1x16xf32>
    %162 = vector.shape_cast %161 : vector<1x16xf32> to vector<1x16x1xf32>
    %163 = tpu.reciprocal %162 {approx = true} : vector<1x16x1xf32> -> vector<1x16x1xf32>
    %164 = vector.broadcast %163 : vector<1x16x1xf32> to vector<1x16x16xf32>
    %165 = arith.mulf %160, %164 : vector<1x16x16xf32>
    %166 = arith.truncf %165 : vector<1x16x16xf32> to vector<1x16x16xbf16>
    %167 = arith.truncf %152 : vector<1x16x8xf32> to vector<1x16x8xbf16>
    "tpu.trace_start"() <{level = 10 : i32, message = "bqk,bkd->bqd"}> : () -> ()
    %cst_51 = arith.constant dense<0.000000e+00> : vector<1x16x8xf32>
    %168 = tpu.matmul %166, %167, %cst_51 {dimension_numbers = #tpu.dot_dimension_numbers<[2], [1], [1], [2], [0, 0, 0, 1, 1, 2], [0], [0]>} : vector<1x16x16xbf16>, vector<1x16x8xbf16>, vector<1x16x8xf32> -> vector<1x16x8xf32>
    "tpu.trace_stop"() : () -> ()
    %169 = vector.shape_cast %168 : vector<1x16x8xf32> to vector<16x8xf32>
    %170 = tpu.concatenate %100, %123, %146, %169 in 1 : vector<16x8xf32>, vector<16x8xf32>, vector<16x8xf32>, vector<16x8xf32> -> vector<16x32xf32>
    %171 = arith.truncf %170 : vector<16x32xf32> to vector<16x32xbf16>
    %c0_52 = arith.constant 0 : index
    %c0_53 = arith.constant 0 : index
    %172 = vector.load %arg12[%c0_52, %c0_53] : memref<32x32xbf16, #tpu.memory_space<vmem>>, vector<32x32xbf16>
    %cst_54 = arith.constant dense<0.000000e+00> : vector<16x32xf32>
    %173 = tpu.matmul %171, %172, %cst_54 {dimension_numbers = #tpu.dot_dimension_numbers<[1], [0], [0], [1], [0, 0, 1, 1], [], []>} : vector<16x32xbf16>, vector<32x32xbf16>, vector<16x32xf32> -> vector<16x32xf32>
    %c0_55 = arith.constant 0 : index
    %c0_56 = arith.constant 0 : index
    %174 = vector.load %arg13[%c0_55, %c0_56] : memref<1x32xf32, #tpu.memory_space<vmem>>, vector<1x32xf32>
    %175 = vector.broadcast %174 : vector<1x32xf32> to vector<16x32xf32>
    %176 = arith.addf %173, %175 : vector<16x32xf32>
    %177 = arith.addf %47, %176 : vector<16x32xf32>
    %c0_57 = arith.constant 0 : index
    %c0_58 = arith.constant 0 : index
    %178 = vector.load %arg14[%c0_57, %c0_58] : memref<1x32xf32, #tpu.memory_space<vmem>>, vector<1x32xf32>
    %c0_59 = arith.constant 0 : index
    %c0_60 = arith.constant 0 : index
    %179 = vector.load %arg15[%c0_59, %c0_60] : memref<1x32xf32, #tpu.memory_space<vmem>>, vector<1x32xf32>
    %cst_61 = arith.constant dense<0.000000e+00> : vector<16xf32>
    %180 = vector.multi_reduction <add>, %177, %cst_61 [1] : vector<16x32xf32> to vector<16xf32>
    %181 = vector.shape_cast %180 : vector<16xf32> to vector<16x1xf32>
    %cst_62 = arith.constant 3.200000e+01 : f32
    %182 = vector.broadcast %cst_62 : f32 to vector<16x1xf32>
    %183 = arith.divf %181, %182 : vector<16x1xf32>
    %184 = vector.broadcast %183 : vector<16x1xf32> to vector<16x32xf32>
    %185 = arith.subf %177, %184 : vector<16x32xf32>
    %186 = arith.mulf %185, %185 : vector<16x32xf32>
    %cst_63 = arith.constant dense<0.000000e+00> : vector<16xf32>
    %187 = vector.multi_reduction <add>, %186, %cst_63 [1] : vector<16x32xf32> to vector<16xf32>
    %188 = vector.shape_cast %187 : vector<16xf32> to vector<16x1xf32>
    %cst_64 = arith.constant 3.200000e+01 : f32
    %189 = vector.broadcast %cst_64 : f32 to vector<16x1xf32>
    %190 = arith.divf %188, %189 : vector<16x1xf32>
    %191 = vector.broadcast %183 : vector<16x1xf32> to vector<16x32xf32>
    %192 = arith.subf %177, %191 : vector<16x32xf32>
    %cst_65 = arith.constant 9.99999974E-6 : f32
    %193 = vector.broadcast %cst_65 : f32 to vector<16x1xf32>
    %194 = arith.addf %190, %193 : vector<16x1xf32>
    %195 = math.rsqrt %194 : vector<16x1xf32>
    %196 = vector.broadcast %195 : vector<16x1xf32> to vector<16x32xf32>
    %197 = arith.mulf %192, %196 : vector<16x32xf32>
    %198 = vector.broadcast %178 : vector<1x32xf32> to vector<16x32xf32>
    %199 = arith.mulf %197, %198 : vector<16x32xf32>
    %200 = vector.broadcast %179 : vector<1x32xf32> to vector<16x32xf32>
    %201 = arith.addf %199, %200 : vector<16x32xf32>
    %202 = arith.truncf %201 : vector<16x32xf32> to vector<16x32xbf16>
    %c0_66 = arith.constant 0 : index
    %c0_67 = arith.constant 0 : index
    %203 = vector.load %arg16[%c0_66, %c0_67] : memref<32x32xbf16, #tpu.memory_space<vmem>>, vector<32x32xbf16>
    %cst_68 = arith.constant dense<0.000000e+00> : vector<16x32xf32>
    %204 = tpu.matmul %202, %203, %cst_68 {dimension_numbers = #tpu.dot_dimension_numbers<[1], [0], [0], [1], [0, 0, 1, 1], [], []>} : vector<16x32xbf16>, vector<32x32xbf16>, vector<16x32xf32> -> vector<16x32xf32>
    %c0_69 = arith.constant 0 : index
    %c0_70 = arith.constant 0 : index
    %205 = vector.load %arg17[%c0_69, %c0_70] : memref<1x32xf32, #tpu.memory_space<vmem>>, vector<1x32xf32>
    %206 = vector.broadcast %205 : vector<1x32xf32> to vector<16x32xf32>
    %207 = arith.addf %204, %206 : vector<16x32xf32>
    %c0_71 = arith.constant 0 : index
    %c0_72 = arith.constant 0 : index
    %208 = vector.load %arg18[%c0_71, %c0_72] : memref<32x32xbf16, #tpu.memory_space<vmem>>, vector<32x32xbf16>
    %cst_73 = arith.constant dense<0.000000e+00> : vector<16x32xf32>
    %209 = tpu.matmul %202, %208, %cst_73 {dimension_numbers = #tpu.dot_dimension_numbers<[1], [0], [0], [1], [0, 0, 1, 1], [], []>} : vector<16x32xbf16>, vector<32x32xbf16>, vector<16x32xf32> -> vector<16x32xf32>
    %c0_74 = arith.constant 0 : index
    %c0_75 = arith.constant 0 : index
    %210 = vector.load %arg19[%c0_74, %c0_75] : memref<1x32xf32, #tpu.memory_space<vmem>>, vector<1x32xf32>
    %211 = vector.broadcast %210 : vector<1x32xf32> to vector<16x32xf32>
    %212 = arith.addf %209, %211 : vector<16x32xf32>
    %213 = arith.negf %212 : vector<16x32xf32>
    %214 = math.exp %213 : vector<16x32xf32>
    %cst_76 = arith.constant 1.000000e+00 : f32
    %215 = vector.broadcast %cst_76 : f32 to vector<16x32xf32>
    %216 = arith.addf %215, %214 : vector<16x32xf32>
    %217 = arith.divf %215, %216 : vector<16x32xf32>
    %218 = arith.mulf %207, %217 : vector<16x32xf32>
    %cst_77 = arith.constant 0.000000e+00 : f32
    %219 = vector.broadcast %cst_77 : f32 to vector<1x15x32xf32>
    %c0_78 = arith.constant 0 : index
    %c0_79 = arith.constant 0 : index
    %c0_80 = arith.constant 0 : index
    %220 = vector.load %arg39[%c0_78, %c0_79, %c0_80] : memref<1x46x32xf32, #tpu.memory_space<vmem>>, vector<1x15x32xf32>
    tpu.vector_store %arg39[%c0_78, %c0_79, %c0_80], %219 {strides = array<i32>} : memref<1x46x32xf32, #tpu.memory_space<vmem>>, vector<1x15x32xf32>,
    %c0_81 = arith.constant 0 : index
    %c31 = arith.constant 31 : index
    %c0_82 = arith.constant 0 : index
    %221 = vector.load %arg39[%c0_81, %c31, %c0_82] : memref<1x46x32xf32, #tpu.memory_space<vmem>>, vector<1x15x32xf32>
    tpu.vector_store %arg39[%c0_81, %c31, %c0_82], %219 {strides = array<i32>} : memref<1x46x32xf32, #tpu.memory_space<vmem>>, vector<1x15x32xf32>,
    %222 = vector.shape_cast %218 : vector<16x32xf32> to vector<1x16x32xf32>
    %c0_83 = arith.constant 0 : index
    %c15 = arith.constant 15 : index
    %c0_84 = arith.constant 0 : index
    %223 = vector.load %arg39[%c0_83, %c15, %c0_84] : memref<1x46x32xf32, #tpu.memory_space<vmem>>, vector<1x16x32xf32>
    tpu.vector_store %arg39[%c0_83, %c15, %c0_84], %222 {strides = array<i32>} : memref<1x46x32xf32, #tpu.memory_space<vmem>>, vector<1x16x32xf32>,
    %c0_85 = arith.constant 0 : index
    %c0_86 = arith.constant 0 : index
    %224 = vector.load %arg20[%c0_85, %c0_86] : memref<31x32xf32, #tpu.memory_space<vmem>>, vector<31x32xf32>
    %cst_87 = arith.constant 0.000000e+00 : f32
    %225 = vector.broadcast %cst_87 : f32 to vector<1x16x32xf32>
    %c0_88 = arith.constant 0 : index
    %c0_89 = arith.constant 0 : index
    %c0_90 = arith.constant 0 : index
    %226 = vector.load %arg39[%c0_88, %c0_89, %c0_90] : memref<1x46x32xf32, #tpu.memory_space<vmem>>, vector<1x16x32xf32>
    %227 = vector.extract_strided_slice %224 {offsets = [0, 0], sizes = [1, 32], strides = [1, 1]} : vector<31x32xf32> to vector<1x32xf32>
    %228 = vector.shape_cast %227 : vector<1x32xf32> to vector<32xf32>
    %229 = vector.shape_cast %228 : vector<32xf32> to vector<1x1x32xf32>
    %230 = vector.broadcast %229 : vector<1x1x32xf32> to vector<1x16x32xf32>
    %231 = arith.mulf %226, %230 : vector<1x16x32xf32>
    %232 = arith.addf %225, %231 : vector<1x16x32xf32>
    %c0_91 = arith.constant 0 : index
    %c1 = arith.constant 1 : index
    %c0_92 = arith.constant 0 : index
    %233 = vector.load %arg39[%c0_91, %c1, %c0_92] : memref<1x46x32xf32, #tpu.memory_space<vmem>>, vector<1x16x32xf32>
    %234 = vector.extract_strided_slice %224 {offsets = [1, 0], sizes = [1, 32], strides = [1, 1]} : vector<31x32xf32> to vector<1x32xf32>
    %235 = vector.shape_cast %234 : vector<1x32xf32> to vector<32xf32>
    %236 = vector.shape_cast %235 : vector<32xf32> to vector<1x1x32xf32>
    %237 = vector.broadcast %236 : vector<1x1x32xf32> to vector<1x16x32xf32>
    %238 = arith.mulf %233, %237 : vector<1x16x32xf32>
    %239 = arith.addf %232, %238 : vector<1x16x32xf32>
    %c0_93 = arith.constant 0 : index
    %c2 = arith.constant 2 : index
    %c0_94 = arith.constant 0 : index
    %240 = vector.load %arg39[%c0_93, %c2, %c0_94] : memref<1x46x32xf32, #tpu.memory_space<vmem>>, vector<1x16x32xf32>
    %241 = vector.extract_strided_slice %224 {offsets = [2, 0], sizes = [1, 32], strides = [1, 1]} : vector<31x32xf32> to vector<1x32xf32>
    %242 = vector.shape_cast %241 : vector<1x32xf32> to vector<32xf32>
    %243 = vector.shape_cast %242 : vector<32xf32> to vector<1x1x32xf32>
    %244 = vector.broadcast %243 : vector<1x1x32xf32> to vector<1x16x32xf32>
    %245 = arith.mulf %240, %244 : vector<1x16x32xf32>
    %246 = arith.addf %239, %245 : vector<1x16x32xf32>
    %c0_95 = arith.constant 0 : index
    %c3 = arith.constant 3 : index
    %c0_96 = arith.constant 0 : index
    %247 = vector.load %arg39[%c0_95, %c3, %c0_96] : memref<1x46x32xf32, #tpu.memory_space<vmem>>, vector<1x16x32xf32>
    %248 = vector.extract_strided_slice %224 {offsets = [3, 0], sizes = [1, 32], strides = [1, 1]} : vector<31x32xf32> to vector<1x32xf32>
    %249 = vector.shape_cast %248 : vector<1x32xf32> to vector<32xf32>
    %250 = vector.shape_cast %249 : vector<32xf32> to vector<1x1x32xf32>
    %251 = vector.broadcast %250 : vector<1x1x32xf32> to vector<1x16x32xf32>
    %252 = arith.mulf %247, %251 : vector<1x16x32xf32>
    %253 = arith.addf %246, %252 : vector<1x16x32xf32>
    %c0_97 = arith.constant 0 : index
    %c4 = arith.constant 4 : index
    %c0_98 = arith.constant 0 : index
    %254 = vector.load %arg39[%c0_97, %c4, %c0_98] : memref<1x46x32xf32, #tpu.memory_space<vmem>>, vector<1x16x32xf32>
    %255 = vector.extract_strided_slice %224 {offsets = [4, 0], sizes = [1, 32], strides = [1, 1]} : vector<31x32xf32> to vector<1x32xf32>
    %256 = vector.shape_cast %255 : vector<1x32xf32> to vector<32xf32>
    %257 = vector.shape_cast %256 : vector<32xf32> to vector<1x1x32xf32>
    %258 = vector.broadcast %257 : vector<1x1x32xf32> to vector<1x16x32xf32>
    %259 = arith.mulf %254, %258 : vector<1x16x32xf32>
    %260 = arith.addf %253, %259 : vector<1x16x32xf32>
    %c0_99 = arith.constant 0 : index
    %c5 = arith.constant 5 : index
    %c0_100 = arith.constant 0 : index
    %261 = vector.load %arg39[%c0_99, %c5, %c0_100] : memref<1x46x32xf32, #tpu.memory_space<vmem>>, vector<1x16x32xf32>
    %262 = vector.extract_strided_slice %224 {offsets = [5, 0], sizes = [1, 32], strides = [1, 1]} : vector<31x32xf32> to vector<1x32xf32>
    %263 = vector.shape_cast %262 : vector<1x32xf32> to vector<32xf32>
    %264 = vector.shape_cast %263 : vector<32xf32> to vector<1x1x32xf32>
    %265 = vector.broadcast %264 : vector<1x1x32xf32> to vector<1x16x32xf32>
    %266 = arith.mulf %261, %265 : vector<1x16x32xf32>
    %267 = arith.addf %260, %266 : vector<1x16x32xf32>
    %c0_101 = arith.constant 0 : index
    %c6 = arith.constant 6 : index
    %c0_102 = arith.constant 0 : index
    %268 = vector.load %arg39[%c0_101, %c6, %c0_102] : memref<1x46x32xf32, #tpu.memory_space<vmem>>, vector<1x16x32xf32>
    %269 = vector.extract_strided_slice %224 {offsets = [6, 0], sizes = [1, 32], strides = [1, 1]} : vector<31x32xf32> to vector<1x32xf32>
    %270 = vector.shape_cast %269 : vector<1x32xf32> to vector<32xf32>
    %271 = vector.shape_cast %270 : vector<32xf32> to vector<1x1x32xf32>
    %272 = vector.broadcast %271 : vector<1x1x32xf32> to vector<1x16x32xf32>
    %273 = arith.mulf %268, %272 : vector<1x16x32xf32>
    %274 = arith.addf %267, %273 : vector<1x16x32xf32>
    %c0_103 = arith.constant 0 : index
    %c7 = arith.constant 7 : index
    %c0_104 = arith.constant 0 : index
    %275 = vector.load %arg39[%c0_103, %c7, %c0_104] : memref<1x46x32xf32, #tpu.memory_space<vmem>>, vector<1x16x32xf32>
    %276 = vector.extract_strided_slice %224 {offsets = [7, 0], sizes = [1, 32], strides = [1, 1]} : vector<31x32xf32> to vector<1x32xf32>
    %277 = vector.shape_cast %276 : vector<1x32xf32> to vector<32xf32>
    %278 = vector.shape_cast %277 : vector<32xf32> to vector<1x1x32xf32>
    %279 = vector.broadcast %278 : vector<1x1x32xf32> to vector<1x16x32xf32>
    %280 = arith.mulf %275, %279 : vector<1x16x32xf32>
    %281 = arith.addf %274, %280 : vector<1x16x32xf32>
    %c0_105 = arith.constant 0 : index
    %c8 = arith.constant 8 : index
    %c0_106 = arith.constant 0 : index
    %282 = vector.load %arg39[%c0_105, %c8, %c0_106] : memref<1x46x32xf32, #tpu.memory_space<vmem>>, vector<1x16x32xf32>
    %283 = vector.extract_strided_slice %224 {offsets = [8, 0], sizes = [1, 32], strides = [1, 1]} : vector<31x32xf32> to vector<1x32xf32>
    %284 = vector.shape_cast %283 : vector<1x32xf32> to vector<32xf32>
    %285 = vector.shape_cast %284 : vector<32xf32> to vector<1x1x32xf32>
    %286 = vector.broadcast %285 : vector<1x1x32xf32> to vector<1x16x32xf32>
    %287 = arith.mulf %282, %286 : vector<1x16x32xf32>
    %288 = arith.addf %281, %287 : vector<1x16x32xf32>
    %c0_107 = arith.constant 0 : index
    %c9 = arith.constant 9 : index
    %c0_108 = arith.constant 0 : index
    %289 = vector.load %arg39[%c0_107, %c9, %c0_108] : memref<1x46x32xf32, #tpu.memory_space<vmem>>, vector<1x16x32xf32>
    %290 = vector.extract_strided_slice %224 {offsets = [9, 0], sizes = [1, 32], strides = [1, 1]} : vector<31x32xf32> to vector<1x32xf32>
    %291 = vector.shape_cast %290 : vector<1x32xf32> to vector<32xf32>
    %292 = vector.shape_cast %291 : vector<32xf32> to vector<1x1x32xf32>
    %293 = vector.broadcast %292 : vector<1x1x32xf32> to vector<1x16x32xf32>
    %294 = arith.mulf %289, %293 : vector<1x16x32xf32>
    %295 = arith.addf %288, %294 : vector<1x16x32xf32>
    %c0_109 = arith.constant 0 : index
    %c10 = arith.constant 10 : index
    %c0_110 = arith.constant 0 : index
    %296 = vector.load %arg39[%c0_109, %c10, %c0_110] : memref<1x46x32xf32, #tpu.memory_space<vmem>>, vector<1x16x32xf32>
    %297 = vector.extract_strided_slice %224 {offsets = [10, 0], sizes = [1, 32], strides = [1, 1]} : vector<31x32xf32> to vector<1x32xf32>
    %298 = vector.shape_cast %297 : vector<1x32xf32> to vector<32xf32>
    %299 = vector.shape_cast %298 : vector<32xf32> to vector<1x1x32xf32>
    %300 = vector.broadcast %299 : vector<1x1x32xf32> to vector<1x16x32xf32>
    %301 = arith.mulf %296, %300 : vector<1x16x32xf32>
    %302 = arith.addf %295, %301 : vector<1x16x32xf32>
    %c0_111 = arith.constant 0 : index
    %c11 = arith.constant 11 : index
    %c0_112 = arith.constant 0 : index
    %303 = vector.load %arg39[%c0_111, %c11, %c0_112] : memref<1x46x32xf32, #tpu.memory_space<vmem>>, vector<1x16x32xf32>
    %304 = vector.extract_strided_slice %224 {offsets = [11, 0], sizes = [1, 32], strides = [1, 1]} : vector<31x32xf32> to vector<1x32xf32>
    %305 = vector.shape_cast %304 : vector<1x32xf32> to vector<32xf32>
    %306 = vector.shape_cast %305 : vector<32xf32> to vector<1x1x32xf32>
    %307 = vector.broadcast %306 : vector<1x1x32xf32> to vector<1x16x32xf32>
    %308 = arith.mulf %303, %307 : vector<1x16x32xf32>
    %309 = arith.addf %302, %308 : vector<1x16x32xf32>
    %c0_113 = arith.constant 0 : index
    %c12 = arith.constant 12 : index
    %c0_114 = arith.constant 0 : index
    %310 = vector.load %arg39[%c0_113, %c12, %c0_114] : memref<1x46x32xf32, #tpu.memory_space<vmem>>, vector<1x16x32xf32>
    %311 = vector.extract_strided_slice %224 {offsets = [12, 0], sizes = [1, 32], strides = [1, 1]} : vector<31x32xf32> to vector<1x32xf32>
    %312 = vector.shape_cast %311 : vector<1x32xf32> to vector<32xf32>
    %313 = vector.shape_cast %312 : vector<32xf32> to vector<1x1x32xf32>
    %314 = vector.broadcast %313 : vector<1x1x32xf32> to vector<1x16x32xf32>
    %315 = arith.mulf %310, %314 : vector<1x16x32xf32>
    %316 = arith.addf %309, %315 : vector<1x16x32xf32>
    %c0_115 = arith.constant 0 : index
    %c13 = arith.constant 13 : index
    %c0_116 = arith.constant 0 : index
    %317 = vector.load %arg39[%c0_115, %c13, %c0_116] : memref<1x46x32xf32, #tpu.memory_space<vmem>>, vector<1x16x32xf32>
    %318 = vector.extract_strided_slice %224 {offsets = [13, 0], sizes = [1, 32], strides = [1, 1]} : vector<31x32xf32> to vector<1x32xf32>
    %319 = vector.shape_cast %318 : vector<1x32xf32> to vector<32xf32>
    %320 = vector.shape_cast %319 : vector<32xf32> to vector<1x1x32xf32>
    %321 = vector.broadcast %320 : vector<1x1x32xf32> to vector<1x16x32xf32>
    %322 = arith.mulf %317, %321 : vector<1x16x32xf32>
    %323 = arith.addf %316, %322 : vector<1x16x32xf32>
    %c0_117 = arith.constant 0 : index
    %c14 = arith.constant 14 : index
    %c0_118 = arith.constant 0 : index
    %324 = vector.load %arg39[%c0_117, %c14, %c0_118] : memref<1x46x32xf32, #tpu.memory_space<vmem>>, vector<1x16x32xf32>
    %325 = vector.extract_strided_slice %224 {offsets = [14, 0], sizes = [1, 32], strides = [1, 1]} : vector<31x32xf32> to vector<1x32xf32>
    %326 = vector.shape_cast %325 : vector<1x32xf32> to vector<32xf32>
    %327 = vector.shape_cast %326 : vector<32xf32> to vector<1x1x32xf32>
    %328 = vector.broadcast %327 : vector<1x1x32xf32> to vector<1x16x32xf32>
    %329 = arith.mulf %324, %328 : vector<1x16x32xf32>
    %330 = arith.addf %323, %329 : vector<1x16x32xf32>
    %c0_119 = arith.constant 0 : index
    %c15_120 = arith.constant 15 : index
    %c0_121 = arith.constant 0 : index
    %331 = vector.load %arg39[%c0_119, %c15_120, %c0_121] : memref<1x46x32xf32, #tpu.memory_space<vmem>>, vector<1x16x32xf32>
    %332 = vector.extract_strided_slice %224 {offsets = [15, 0], sizes = [1, 32], strides = [1, 1]} : vector<31x32xf32> to vector<1x32xf32>
    %333 = vector.shape_cast %332 : vector<1x32xf32> to vector<32xf32>
    %334 = vector.shape_cast %333 : vector<32xf32> to vector<1x1x32xf32>
    %335 = vector.broadcast %334 : vector<1x1x32xf32> to vector<1x16x32xf32>
    %336 = arith.mulf %331, %335 : vector<1x16x32xf32>
    %337 = arith.addf %330, %336 : vector<1x16x32xf32>
    %c0_122 = arith.constant 0 : index
    %c16 = arith.constant 16 : index
    %c0_123 = arith.constant 0 : index
    %338 = vector.load %arg39[%c0_122, %c16, %c0_123] : memref<1x46x32xf32, #tpu.memory_space<vmem>>, vector<1x16x32xf32>
    %339 = vector.extract_strided_slice %224 {offsets = [16, 0], sizes = [1, 32], strides = [1, 1]} : vector<31x32xf32> to vector<1x32xf32>
    %340 = vector.shape_cast %339 : vector<1x32xf32> to vector<32xf32>
    %341 = vector.shape_cast %340 : vector<32xf32> to vector<1x1x32xf32>
    %342 = vector.broadcast %341 : vector<1x1x32xf32> to vector<1x16x32xf32>
    %343 = arith.mulf %338, %342 : vector<1x16x32xf32>
    %344 = arith.addf %337, %343 : vector<1x16x32xf32>
    %c0_124 = arith.constant 0 : index
    %c17 = arith.constant 17 : index
    %c0_125 = arith.constant 0 : index
    %345 = vector.load %arg39[%c0_124, %c17, %c0_125] : memref<1x46x32xf32, #tpu.memory_space<vmem>>, vector<1x16x32xf32>
    %346 = vector.extract_strided_slice %224 {offsets = [17, 0], sizes = [1, 32], strides = [1, 1]} : vector<31x32xf32> to vector<1x32xf32>
    %347 = vector.shape_cast %346 : vector<1x32xf32> to vector<32xf32>
    %348 = vector.shape_cast %347 : vector<32xf32> to vector<1x1x32xf32>
    %349 = vector.broadcast %348 : vector<1x1x32xf32> to vector<1x16x32xf32>
    %350 = arith.mulf %345, %349 : vector<1x16x32xf32>
    %351 = arith.addf %344, %350 : vector<1x16x32xf32>
    %c0_126 = arith.constant 0 : index
    %c18 = arith.constant 18 : index
    %c0_127 = arith.constant 0 : index
    %352 = vector.load %arg39[%c0_126, %c18, %c0_127] : memref<1x46x32xf32, #tpu.memory_space<vmem>>, vector<1x16x32xf32>
    %353 = vector.extract_strided_slice %224 {offsets = [18, 0], sizes = [1, 32], strides = [1, 1]} : vector<31x32xf32> to vector<1x32xf32>
    %354 = vector.shape_cast %353 : vector<1x32xf32> to vector<32xf32>
    %355 = vector.shape_cast %354 : vector<32xf32> to vector<1x1x32xf32>
    %356 = vector.broadcast %355 : vector<1x1x32xf32> to vector<1x16x32xf32>
    %357 = arith.mulf %352, %356 : vector<1x16x32xf32>
    %358 = arith.addf %351, %357 : vector<1x16x32xf32>
    %c0_128 = arith.constant 0 : index
    %c19 = arith.constant 19 : index
    %c0_129 = arith.constant 0 : index
    %359 = vector.load %arg39[%c0_128, %c19, %c0_129] : memref<1x46x32xf32, #tpu.memory_space<vmem>>, vector<1x16x32xf32>
    %360 = vector.extract_strided_slice %224 {offsets = [19, 0], sizes = [1, 32], strides = [1, 1]} : vector<31x32xf32> to vector<1x32xf32>
    %361 = vector.shape_cast %360 : vector<1x32xf32> to vector<32xf32>
    %362 = vector.shape_cast %361 : vector<32xf32> to vector<1x1x32xf32>
    %363 = vector.broadcast %362 : vector<1x1x32xf32> to vector<1x16x32xf32>
    %364 = arith.mulf %359, %363 : vector<1x16x32xf32>
    %365 = arith.addf %358, %364 : vector<1x16x32xf32>
    %c0_130 = arith.constant 0 : index
    %c20 = arith.constant 20 : index
    %c0_131 = arith.constant 0 : index
    %366 = vector.load %arg39[%c0_130, %c20, %c0_131] : memref<1x46x32xf32, #tpu.memory_space<vmem>>, vector<1x16x32xf32>
    %367 = vector.extract_strided_slice %224 {offsets = [20, 0], sizes = [1, 32], strides = [1, 1]} : vector<31x32xf32> to vector<1x32xf32>
    %368 = vector.shape_cast %367 : vector<1x32xf32> to vector<32xf32>
    %369 = vector.shape_cast %368 : vector<32xf32> to vector<1x1x32xf32>
    %370 = vector.broadcast %369 : vector<1x1x32xf32> to vector<1x16x32xf32>
    %371 = arith.mulf %366, %370 : vector<1x16x32xf32>
    %372 = arith.addf %365, %371 : vector<1x16x32xf32>
    %c0_132 = arith.constant 0 : index
    %c21 = arith.constant 21 : index
    %c0_133 = arith.constant 0 : index
    %373 = vector.load %arg39[%c0_132, %c21, %c0_133] : memref<1x46x32xf32, #tpu.memory_space<vmem>>, vector<1x16x32xf32>
    %374 = vector.extract_strided_slice %224 {offsets = [21, 0], sizes = [1, 32], strides = [1, 1]} : vector<31x32xf32> to vector<1x32xf32>
    %375 = vector.shape_cast %374 : vector<1x32xf32> to vector<32xf32>
    %376 = vector.shape_cast %375 : vector<32xf32> to vector<1x1x32xf32>
    %377 = vector.broadcast %376 : vector<1x1x32xf32> to vector<1x16x32xf32>
    %378 = arith.mulf %373, %377 : vector<1x16x32xf32>
    %379 = arith.addf %372, %378 : vector<1x16x32xf32>
    %c0_134 = arith.constant 0 : index
    %c22 = arith.constant 22 : index
    %c0_135 = arith.constant 0 : index
    %380 = vector.load %arg39[%c0_134, %c22, %c0_135] : memref<1x46x32xf32, #tpu.memory_space<vmem>>, vector<1x16x32xf32>
    %381 = vector.extract_strided_slice %224 {offsets = [22, 0], sizes = [1, 32], strides = [1, 1]} : vector<31x32xf32> to vector<1x32xf32>
    %382 = vector.shape_cast %381 : vector<1x32xf32> to vector<32xf32>
    %383 = vector.shape_cast %382 : vector<32xf32> to vector<1x1x32xf32>
    %384 = vector.broadcast %383 : vector<1x1x32xf32> to vector<1x16x32xf32>
    %385 = arith.mulf %380, %384 : vector<1x16x32xf32>
    %386 = arith.addf %379, %385 : vector<1x16x32xf32>
    %c0_136 = arith.constant 0 : index
    %c23 = arith.constant 23 : index
    %c0_137 = arith.constant 0 : index
    %387 = vector.load %arg39[%c0_136, %c23, %c0_137] : memref<1x46x32xf32, #tpu.memory_space<vmem>>, vector<1x16x32xf32>
    %388 = vector.extract_strided_slice %224 {offsets = [23, 0], sizes = [1, 32], strides = [1, 1]} : vector<31x32xf32> to vector<1x32xf32>
    %389 = vector.shape_cast %388 : vector<1x32xf32> to vector<32xf32>
    %390 = vector.shape_cast %389 : vector<32xf32> to vector<1x1x32xf32>
    %391 = vector.broadcast %390 : vector<1x1x32xf32> to vector<1x16x32xf32>
    %392 = arith.mulf %387, %391 : vector<1x16x32xf32>
    %393 = arith.addf %386, %392 : vector<1x16x32xf32>
    %c0_138 = arith.constant 0 : index
    %c24 = arith.constant 24 : index
    %c0_139 = arith.constant 0 : index
    %394 = vector.load %arg39[%c0_138, %c24, %c0_139] : memref<1x46x32xf32, #tpu.memory_space<vmem>>, vector<1x16x32xf32>
    %395 = vector.extract_strided_slice %224 {offsets = [24, 0], sizes = [1, 32], strides = [1, 1]} : vector<31x32xf32> to vector<1x32xf32>
    %396 = vector.shape_cast %395 : vector<1x32xf32> to vector<32xf32>
    %397 = vector.shape_cast %396 : vector<32xf32> to vector<1x1x32xf32>
    %398 = vector.broadcast %397 : vector<1x1x32xf32> to vector<1x16x32xf32>
    %399 = arith.mulf %394, %398 : vector<1x16x32xf32>
    %400 = arith.addf %393, %399 : vector<1x16x32xf32>
    %c0_140 = arith.constant 0 : index
    %c25 = arith.constant 25 : index
    %c0_141 = arith.constant 0 : index
    %401 = vector.load %arg39[%c0_140, %c25, %c0_141] : memref<1x46x32xf32, #tpu.memory_space<vmem>>, vector<1x16x32xf32>
    %402 = vector.extract_strided_slice %224 {offsets = [25, 0], sizes = [1, 32], strides = [1, 1]} : vector<31x32xf32> to vector<1x32xf32>
    %403 = vector.shape_cast %402 : vector<1x32xf32> to vector<32xf32>
    %404 = vector.shape_cast %403 : vector<32xf32> to vector<1x1x32xf32>
    %405 = vector.broadcast %404 : vector<1x1x32xf32> to vector<1x16x32xf32>
    %406 = arith.mulf %401, %405 : vector<1x16x32xf32>
    %407 = arith.addf %400, %406 : vector<1x16x32xf32>
    %c0_142 = arith.constant 0 : index
    %c26 = arith.constant 26 : index
    %c0_143 = arith.constant 0 : index
    %408 = vector.load %arg39[%c0_142, %c26, %c0_143] : memref<1x46x32xf32, #tpu.memory_space<vmem>>, vector<1x16x32xf32>
    %409 = vector.extract_strided_slice %224 {offsets = [26, 0], sizes = [1, 32], strides = [1, 1]} : vector<31x32xf32> to vector<1x32xf32>
    %410 = vector.shape_cast %409 : vector<1x32xf32> to vector<32xf32>
    %411 = vector.shape_cast %410 : vector<32xf32> to vector<1x1x32xf32>
    %412 = vector.broadcast %411 : vector<1x1x32xf32> to vector<1x16x32xf32>
    %413 = arith.mulf %408, %412 : vector<1x16x32xf32>
    %414 = arith.addf %407, %413 : vector<1x16x32xf32>
    %c0_144 = arith.constant 0 : index
    %c27 = arith.constant 27 : index
    %c0_145 = arith.constant 0 : index
    %415 = vector.load %arg39[%c0_144, %c27, %c0_145] : memref<1x46x32xf32, #tpu.memory_space<vmem>>, vector<1x16x32xf32>
    %416 = vector.extract_strided_slice %224 {offsets = [27, 0], sizes = [1, 32], strides = [1, 1]} : vector<31x32xf32> to vector<1x32xf32>
    %417 = vector.shape_cast %416 : vector<1x32xf32> to vector<32xf32>
    %418 = vector.shape_cast %417 : vector<32xf32> to vector<1x1x32xf32>
    %419 = vector.broadcast %418 : vector<1x1x32xf32> to vector<1x16x32xf32>
    %420 = arith.mulf %415, %419 : vector<1x16x32xf32>
    %421 = arith.addf %414, %420 : vector<1x16x32xf32>
    %c0_146 = arith.constant 0 : index
    %c28 = arith.constant 28 : index
    %c0_147 = arith.constant 0 : index
    %422 = vector.load %arg39[%c0_146, %c28, %c0_147] : memref<1x46x32xf32, #tpu.memory_space<vmem>>, vector<1x16x32xf32>
    %423 = vector.extract_strided_slice %224 {offsets = [28, 0], sizes = [1, 32], strides = [1, 1]} : vector<31x32xf32> to vector<1x32xf32>
    %424 = vector.shape_cast %423 : vector<1x32xf32> to vector<32xf32>
    %425 = vector.shape_cast %424 : vector<32xf32> to vector<1x1x32xf32>
    %426 = vector.broadcast %425 : vector<1x1x32xf32> to vector<1x16x32xf32>
    %427 = arith.mulf %422, %426 : vector<1x16x32xf32>
    %428 = arith.addf %421, %427 : vector<1x16x32xf32>
    %c0_148 = arith.constant 0 : index
    %c29 = arith.constant 29 : index
    %c0_149 = arith.constant 0 : index
    %429 = vector.load %arg39[%c0_148, %c29, %c0_149] : memref<1x46x32xf32, #tpu.memory_space<vmem>>, vector<1x16x32xf32>
    %430 = vector.extract_strided_slice %224 {offsets = [29, 0], sizes = [1, 32], strides = [1, 1]} : vector<31x32xf32> to vector<1x32xf32>
    %431 = vector.shape_cast %430 : vector<1x32xf32> to vector<32xf32>
    %432 = vector.shape_cast %431 : vector<32xf32> to vector<1x1x32xf32>
    %433 = vector.broadcast %432 : vector<1x1x32xf32> to vector<1x16x32xf32>
    %434 = arith.mulf %429, %433 : vector<1x16x32xf32>
    %435 = arith.addf %428, %434 : vector<1x16x32xf32>
    %c0_150 = arith.constant 0 : index
    %c30 = arith.constant 30 : index
    %c0_151 = arith.constant 0 : index
    %436 = vector.load %arg39[%c0_150, %c30, %c0_151] : memref<1x46x32xf32, #tpu.memory_space<vmem>>, vector<1x16x32xf32>
    %437 = vector.extract_strided_slice %224 {offsets = [30, 0], sizes = [1, 32], strides = [1, 1]} : vector<31x32xf32> to vector<1x32xf32>
    %438 = vector.shape_cast %437 : vector<1x32xf32> to vector<32xf32>
    %439 = vector.shape_cast %438 : vector<32xf32> to vector<1x1x32xf32>
    %440 = vector.broadcast %439 : vector<1x1x32xf32> to vector<1x16x32xf32>
    %441 = arith.mulf %436, %440 : vector<1x16x32xf32>
    %442 = arith.addf %435, %441 : vector<1x16x32xf32>
    %443 = vector.shape_cast %442 : vector<1x16x32xf32> to vector<16x32xf32>
    %c0_152 = arith.constant 0 : index
    %c0_153 = arith.constant 0 : index
    %444 = vector.load %arg21[%c0_152, %c0_153] : memref<1x32xf32, #tpu.memory_space<vmem>>, vector<1x32xf32>
    %445 = vector.broadcast %444 : vector<1x32xf32> to vector<16x32xf32>
    %446 = arith.mulf %443, %445 : vector<16x32xf32>
    %c0_154 = arith.constant 0 : index
    %c0_155 = arith.constant 0 : index
    %447 = vector.load %arg22[%c0_154, %c0_155] : memref<1x32xf32, #tpu.memory_space<vmem>>, vector<1x32xf32>
    %448 = vector.broadcast %447 : vector<1x32xf32> to vector<16x32xf32>
    %449 = arith.addf %446, %448 : vector<16x32xf32>
    %450 = arith.negf %449 : vector<16x32xf32>
    %451 = math.exp %450 : vector<16x32xf32>
    %cst_156 = arith.constant 1.000000e+00 : f32
    %452 = vector.broadcast %cst_156 : f32 to vector<16x32xf32>
    %453 = arith.addf %452, %451 : vector<16x32xf32>
    %454 = arith.divf %452, %453 : vector<16x32xf32>
    %455 = arith.mulf %449, %454 : vector<16x32xf32>
    %456 = arith.truncf %455 : vector<16x32xf32> to vector<16x32xbf16>
    %c0_157 = arith.constant 0 : index
    %c0_158 = arith.constant 0 : index
    %457 = vector.load %arg23[%c0_157, %c0_158] : memref<32x32xbf16, #tpu.memory_space<vmem>>, vector<32x32xbf16>
    %cst_159 = arith.constant dense<0.000000e+00> : vector<16x32xf32>
    %458 = tpu.matmul %456, %457, %cst_159 {dimension_numbers = #tpu.dot_dimension_numbers<[1], [0], [0], [1], [0, 0, 1, 1], [], []>} : vector<16x32xbf16>, vector<32x32xbf16>, vector<16x32xf32> -> vector<16x32xf32>
    %c0_160 = arith.constant 0 : index
    %c0_161 = arith.constant 0 : index
    %459 = vector.load %arg24[%c0_160, %c0_161] : memref<1x32xf32, #tpu.memory_space<vmem>>, vector<1x32xf32>
    %460 = vector.broadcast %459 : vector<1x32xf32> to vector<16x32xf32>
    %461 = arith.addf %458, %460 : vector<16x32xf32>
    %462 = arith.addf %177, %461 : vector<16x32xf32>
    %c0_162 = arith.constant 0 : index
    %c0_163 = arith.constant 0 : index
    %463 = vector.load %arg25[%c0_162, %c0_163] : memref<1x32xf32, #tpu.memory_space<vmem>>, vector<1x32xf32>
    %c0_164 = arith.constant 0 : index
    %c0_165 = arith.constant 0 : index
    %464 = vector.load %arg26[%c0_164, %c0_165] : memref<1x32xf32, #tpu.memory_space<vmem>>, vector<1x32xf32>
    %cst_166 = arith.constant dense<0.000000e+00> : vector<16xf32>
    %465 = vector.multi_reduction <add>, %462, %cst_166 [1] : vector<16x32xf32> to vector<16xf32>
    %466 = vector.shape_cast %465 : vector<16xf32> to vector<16x1xf32>
    %cst_167 = arith.constant 3.200000e+01 : f32
    %467 = vector.broadcast %cst_167 : f32 to vector<16x1xf32>
    %468 = arith.divf %466, %467 : vector<16x1xf32>
    %469 = vector.broadcast %468 : vector<16x1xf32> to vector<16x32xf32>
    %470 = arith.subf %462, %469 : vector<16x32xf32>
    %471 = arith.mulf %470, %470 : vector<16x32xf32>
    %cst_168 = arith.constant dense<0.000000e+00> : vector<16xf32>
    %472 = vector.multi_reduction <add>, %471, %cst_168 [1] : vector<16x32xf32> to vector<16xf32>
    %473 = vector.shape_cast %472 : vector<16xf32> to vector<16x1xf32>
    %cst_169 = arith.constant 3.200000e+01 : f32
    %474 = vector.broadcast %cst_169 : f32 to vector<16x1xf32>
    %475 = arith.divf %473, %474 : vector<16x1xf32>
    %476 = vector.broadcast %468 : vector<16x1xf32> to vector<16x32xf32>
    %477 = arith.subf %462, %476 : vector<16x32xf32>
    %cst_170 = arith.constant 9.99999974E-6 : f32
    %478 = vector.broadcast %cst_170 : f32 to vector<16x1xf32>
    %479 = arith.addf %475, %478 : vector<16x1xf32>
    %480 = math.rsqrt %479 : vector<16x1xf32>
    %481 = vector.broadcast %480 : vector<16x1xf32> to vector<16x32xf32>
    %482 = arith.mulf %477, %481 : vector<16x32xf32>
    %483 = vector.broadcast %463 : vector<1x32xf32> to vector<16x32xf32>
    %484 = arith.mulf %482, %483 : vector<16x32xf32>
    %485 = vector.broadcast %464 : vector<1x32xf32> to vector<16x32xf32>
    %486 = arith.addf %484, %485 : vector<16x32xf32>
    %487 = arith.truncf %486 : vector<16x32xf32> to vector<16x32xbf16>
    %cst_171 = arith.constant 0.000000e+00 : f32
    %488 = vector.broadcast %cst_171 : f32 to vector<16x32xf32>
    %c0_172 = arith.constant 0 : index
    %c0_173 = arith.constant 0 : index
    %489 = vector.load %arg27[%c0_172, %c0_173] : memref<32x128xbf16, #tpu.memory_space<vmem>>, vector<32x128xbf16>
    %cst_174 = arith.constant dense<0.000000e+00> : vector<16x128xf32>
    %490 = tpu.matmul %487, %489, %cst_174 {dimension_numbers = #tpu.dot_dimension_numbers<[1], [0], [0], [1], [0, 0, 1, 1], [], []>} : vector<16x32xbf16>, vector<32x128xbf16>, vector<16x128xf32> -> vector<16x128xf32>
    %c0_175 = arith.constant 0 : index
    %c0_176 = arith.constant 0 : index
    %491 = vector.load %arg28[%c0_175, %c0_176] : memref<1x128xf32, #tpu.memory_space<vmem>>, vector<1x128xf32>
    %492 = vector.broadcast %491 : vector<1x128xf32> to vector<16x128xf32>
    %493 = arith.addf %490, %492 : vector<16x128xf32>
    %494 = arith.negf %493 : vector<16x128xf32>
    %495 = math.exp %494 : vector<16x128xf32>
    %cst_177 = arith.constant 1.000000e+00 : f32
    %496 = vector.broadcast %cst_177 : f32 to vector<16x128xf32>
    %497 = arith.addf %496, %495 : vector<16x128xf32>
    %498 = arith.divf %496, %497 : vector<16x128xf32>
    %499 = arith.mulf %493, %498 : vector<16x128xf32>
    %500 = arith.truncf %499 : vector<16x128xf32> to vector<16x128xbf16>
    %c0_178 = arith.constant 0 : index
    %c0_179 = arith.constant 0 : index
    %501 = vector.load %arg29[%c0_178, %c0_179] : memref<128x32xbf16, #tpu.memory_space<vmem>>, vector<128x32xbf16>
    %cst_180 = arith.constant dense<0.000000e+00> : vector<16x32xf32>
    %502 = tpu.matmul %500, %501, %cst_180 {dimension_numbers = #tpu.dot_dimension_numbers<[1], [0], [0], [1], [0, 0, 1, 1], [], []>} : vector<16x128xbf16>, vector<128x32xbf16>, vector<16x32xf32> -> vector<16x32xf32>
    %503 = arith.addf %488, %502 : vector<16x32xf32>
    %c0_181 = arith.constant 0 : index
    %c0_182 = arith.constant 0 : index
    %504 = vector.load %arg30[%c0_181, %c0_182] : memref<1x32xf32, #tpu.memory_space<vmem>>, vector<1x32xf32>
    %505 = vector.broadcast %504 : vector<1x32xf32> to vector<16x32xf32>
    %506 = arith.addf %503, %505 : vector<16x32xf32>
    %cst_183 = arith.constant 5.000000e-01 : f32
    %507 = vector.broadcast %cst_183 : f32 to vector<16x32xf32>
    %508 = arith.mulf %507, %506 : vector<16x32xf32>
    %509 = arith.addf %462, %508 : vector<16x32xf32>
    %c0_184 = arith.constant 0 : index
    %c0_185 = arith.constant 0 : index
    %510 = vector.load %arg31[%c0_184, %c0_185] : memref<1x32xf32, #tpu.memory_space<vmem>>, vector<1x32xf32>
    %c0_186 = arith.constant 0 : index
    %c0_187 = arith.constant 0 : index
    %511 = vector.load %arg32[%c0_186, %c0_187] : memref<1x32xf32, #tpu.memory_space<vmem>>, vector<1x32xf32>
    %cst_188 = arith.constant dense<0.000000e+00> : vector<16xf32>
    %512 = vector.multi_reduction <add>, %509, %cst_188 [1] : vector<16x32xf32> to vector<16xf32>
    %513 = vector.shape_cast %512 : vector<16xf32> to vector<16x1xf32>
    %cst_189 = arith.constant 3.200000e+01 : f32
    %514 = vector.broadcast %cst_189 : f32 to vector<16x1xf32>
    %515 = arith.divf %513, %514 : vector<16x1xf32>
    %516 = vector.broadcast %515 : vector<16x1xf32> to vector<16x32xf32>
    %517 = arith.subf %509, %516 : vector<16x32xf32>
    %518 = arith.mulf %517, %517 : vector<16x32xf32>
    %cst_190 = arith.constant dense<0.000000e+00> : vector<16xf32>
    %519 = vector.multi_reduction <add>, %518, %cst_190 [1] : vector<16x32xf32> to vector<16xf32>
    %520 = vector.shape_cast %519 : vector<16xf32> to vector<16x1xf32>
    %cst_191 = arith.constant 3.200000e+01 : f32
    %521 = vector.broadcast %cst_191 : f32 to vector<16x1xf32>
    %522 = arith.divf %520, %521 : vector<16x1xf32>
    %523 = vector.broadcast %515 : vector<16x1xf32> to vector<16x32xf32>
    %524 = arith.subf %509, %523 : vector<16x32xf32>
    %cst_192 = arith.constant 9.99999974E-6 : f32
    %525 = vector.broadcast %cst_192 : f32 to vector<16x1xf32>
    %526 = arith.addf %522, %525 : vector<16x1xf32>
    %527 = math.rsqrt %526 : vector<16x1xf32>
    %528 = vector.broadcast %527 : vector<16x1xf32> to vector<16x32xf32>
    %529 = arith.mulf %524, %528 : vector<16x32xf32>
    %530 = vector.broadcast %510 : vector<1x32xf32> to vector<16x32xf32>
    %531 = arith.mulf %529, %530 : vector<16x32xf32>
    %532 = vector.broadcast %511 : vector<1x32xf32> to vector<16x32xf32>
    %533 = arith.addf %531, %532 : vector<16x32xf32>
    %534 = arith.truncf %533 : vector<16x32xf32> to vector<16x32xbf16>
    %c0_193 = arith.constant 0 : index
    %c0_194 = arith.constant 0 : index
    %535 = vector.load %arg33[%c0_193, %c0_194] : memref<32x128xbf16, #tpu.memory_space<vmem>>, vector<32x128xbf16>
    %cst_195 = arith.constant dense<0.000000e+00> : vector<16x128xf32>
    %536 = tpu.matmul %534, %535, %cst_195 {dimension_numbers = #tpu.dot_dimension_numbers<[1], [0], [0], [1], [0, 0, 1, 1], [], []>} : vector<16x32xbf16>, vector<32x128xbf16>, vector<16x128xf32> -> vector<16x128xf32>
    %c0_196 = arith.constant 0 : index
    %c0_197 = arith.constant 0 : index
    %537 = vector.load %arg34[%c0_196, %c0_197] : memref<1x128xf32, #tpu.memory_space<vmem>>, vector<1x128xf32>
    %538 = vector.broadcast %537 : vector<1x128xf32> to vector<16x128xf32>
    %539 = arith.addf %536, %538 : vector<16x128xf32>
    %cst_198 = arith.constant dense<0xFF800000> : vector<16xf32>
    %540 = vector.multi_reduction <maximumf>, %539, %cst_198 [1] : vector<16x128xf32> to vector<16xf32>
    %541 = vector.shape_cast %540 : vector<16xf32> to vector<16x1xf32>
    %542 = vector.broadcast %541 : vector<16x1xf32> to vector<16x128xf32>
    %543 = arith.subf %539, %542 : vector<16x128xf32>
    %544 = math.exp %543 : vector<16x128xf32>
    %cst_199 = arith.constant dense<0.000000e+00> : vector<16xf32>
    %545 = vector.multi_reduction <add>, %544, %cst_199 [1] : vector<16x128xf32> to vector<16xf32>
    %546 = vector.shape_cast %545 : vector<16xf32> to vector<16x1xf32>
    %547 = vector.broadcast %546 : vector<16x1xf32> to vector<16x128xf32>
    %548 = arith.divf %544, %547 : vector<16x128xf32>
    %549 = arith.truncf %548 : vector<16x128xf32> to vector<16x128xbf16>
    %c0_200 = arith.constant 0 : index
    %c0_201 = arith.constant 0 : index
    %550 = vector.load %arg35[%c0_200, %c0_201] : memref<128x32xbf16, #tpu.memory_space<vmem>>, vector<128x32xbf16>
    %cst_202 = arith.constant dense<0.000000e+00> : vector<16x32xf32>
    %551 = tpu.matmul %549, %550, %cst_202 {dimension_numbers = #tpu.dot_dimension_numbers<[1], [0], [0], [1], [0, 0, 1, 1], [], []>} : vector<16x128xbf16>, vector<128x32xbf16>, vector<16x32xf32> -> vector<16x32xf32>
    %c0_203 = arith.constant 0 : index
    %c0_204 = arith.constant 0 : index
    %552 = vector.load %arg36[%c0_203, %c0_204] : memref<1x32xf32, #tpu.memory_space<vmem>>, vector<1x32xf32>
    %553 = vector.broadcast %552 : vector<1x32xf32> to vector<16x32xf32>
    %554 = arith.addf %551, %553 : vector<16x32xf32>
    %555 = arith.addf %533, %554 : vector<16x32xf32>
    %c0_205 = arith.constant 0 : index
    %c0_206 = arith.constant 0 : index
    %556 = vector.load %arg37[%c0_205, %c0_206] : memref<16x32xf32, #tpu.memory_space<vmem>>, vector<16x32xf32>
    tpu.vector_store %arg37[%c0_205, %c0_206], %555 {strides = array<i32>} : memref<16x32xf32, #tpu.memory_space<vmem>>, vector<16x32xf32>,
    %c0_207 = arith.constant 0 : index
    %c0_208 = arith.constant 0 : index
    %557 = vector.load %arg38[%c0_207, %c0_208] : memref<16x128xf32, #tpu.memory_space<vmem>>, vector<16x128xf32>
    tpu.vector_store %arg38[%c0_207, %c0_208], %539 {strides = array<i32>} : memref<16x128xf32, #tpu.memory_space<vmem>>, vector<16x128xf32>,
    return
  }
  func.func @transform_0(%arg0: i32) -> (i32, i32) {
    %c0_i32 = arith.constant 0 : i32
    %c0_i32_0 = arith.constant 0 : i32
    return %arg0, %c0_i32 : i32, i32
  }
  func.func @transform_1(%arg0: i32) -> (i32, i32) {
    %c0_i32 = arith.constant 0 : i32
    %c0_i32_0 = arith.constant 0 : i32
    %c0_i32_1 = arith.constant 0 : i32
    return %c0_i32, %c0_i32_0 : i32, i32
  }
  func.func @transform_2(%arg0: i32) -> (i32, i32) {
    %c0_i32 = arith.constant 0 : i32
    %c0_i32_0 = arith.constant 0 : i32
    %c0_i32_1 = arith.constant 0 : i32
    return %c0_i32, %c0_i32_0 : i32, i32
  }
  func.func @transform_3(%arg0: i32) -> (i32, i32) {
    %c0_i32 = arith.constant 0 : i32
    %c0_i32_0 = arith.constant 0 : i32
    %c0_i32_1 = arith.constant 0 : i32
    return %c0_i32, %c0_i32_0 : i32, i32
  }
  func.func @transform_4(%arg0: i32) -> (i32, i32) {
    %c0_i32 = arith.constant 0 : i32
    %c0_i32_0 = arith.constant 0 : i32
    %c0_i32_1 = arith.constant 0 : i32
    return %c0_i32, %c0_i32_0 : i32, i32
  }
  func.func @transform_5(%arg0: i32) -> (i32, i32) {
    %c0_i32 = arith.constant 0 : i32
    %c0_i32_0 = arith.constant 0 : i32
    %c0_i32_1 = arith.constant 0 : i32
    return %c0_i32, %c0_i32_0 : i32, i32
  }
  func.func @transform_6(%arg0: i32) -> (i32, i32) {
    %c0_i32 = arith.constant 0 : i32
    %c0_i32_0 = arith.constant 0 : i32
    %c0_i32_1 = arith.constant 0 : i32
    return %c0_i32, %c0_i32_0 : i32, i32
  }
  func.func @transform_7(%arg0: i32) -> (i32, i32) {
    %c0_i32 = arith.constant 0 : i32
    %c0_i32_0 = arith.constant 0 : i32
    %c0_i32_1 = arith.constant 0 : i32
    return %c0_i32, %c0_i32_0 : i32, i32
  }
  func.func @transform_8(%arg0: i32) -> (i32, i32) {
    %c0_i32 = arith.constant 0 : i32
    %c0_i32_0 = arith.constant 0 : i32
    %c0_i32_1 = arith.constant 0 : i32
    return %c0_i32, %c0_i32_0 : i32, i32
  }
  func.func @transform_9(%arg0: i32) -> (i32, i32) {
    %c0_i32 = arith.constant 0 : i32
    %c0_i32_0 = arith.constant 0 : i32
    %c0_i32_1 = arith.constant 0 : i32
    return %c0_i32, %c0_i32_0 : i32, i32
  }
  func.func @transform_10(%arg0: i32) -> (i32, i32) {
    %c0_i32 = arith.constant 0 : i32
    %c0_i32_0 = arith.constant 0 : i32
    %c0_i32_1 = arith.constant 0 : i32
    return %c0_i32, %c0_i32_0 : i32, i32
  }
  func.func @transform_11(%arg0: i32) -> (i32, i32) {
    %c0_i32 = arith.constant 0 : i32
    %c0_i32_0 = arith.constant 0 : i32
    %c0_i32_1 = arith.constant 0 : i32
    return %c0_i32, %c0_i32_0 : i32, i32
  }
  func.func @transform_12(%arg0: i32) -> (i32, i32) {
    %c0_i32 = arith.constant 0 : i32
    %c0_i32_0 = arith.constant 0 : i32
    %c0_i32_1 = arith.constant 0 : i32
    return %c0_i32, %c0_i32_0 : i32, i32
  }
  func.func @transform_13(%arg0: i32) -> (i32, i32) {
    %c0_i32 = arith.constant 0 : i32
    %c0_i32_0 = arith.constant 0 : i32
    %c0_i32_1 = arith.constant 0 : i32
    return %c0_i32, %c0_i32_0 : i32, i32
  }
  func.func @transform_14(%arg0: i32) -> (i32, i32) {
    %c0_i32 = arith.constant 0 : i32
    %c0_i32_0 = arith.constant 0 : i32
    %c0_i32_1 = arith.constant 0 : i32
    return %c0_i32, %c0_i32_0 : i32, i32
  }
  func.func @transform_15(%arg0: i32) -> (i32, i32) {
    %c0_i32 = arith.constant 0 : i32
    %c0_i32_0 = arith.constant 0 : i32
    %c0_i32_1 = arith.constant 0 : i32
    return %c0_i32, %c0_i32_0 : i32, i32
  }
  func.func @transform_16(%arg0: i32) -> (i32, i32) {
    %c0_i32 = arith.constant 0 : i32
    %c0_i32_0 = arith.constant 0 : i32
    %c0_i32_1 = arith.constant 0 : i32
    return %c0_i32, %c0_i32_0 : i32, i32
  }
  func.func @transform_17(%arg0: i32) -> (i32, i32) {
    %c0_i32 = arith.constant 0 : i32
    %c0_i32_0 = arith.constant 0 : i32
    %c0_i32_1 = arith.constant 0 : i32
    return %c0_i32, %c0_i32_0 : i32, i32
  }
  func.func @transform_18(%arg0: i32) -> (i32, i32) {
    %c0_i32 = arith.constant 0 : i32
    %c0_i32_0 = arith.constant 0 : i32
    %c0_i32_1 = arith.constant 0 : i32
    return %c0_i32, %c0_i32_0 : i32, i32
  }
  func.func @transform_19(%arg0: i32) -> (i32, i32) {
    %c0_i32 = arith.constant 0 : i32
    %c0_i32_0 = arith.constant 0 : i32
    %c0_i32_1 = arith.constant 0 : i32
    return %c0_i32, %c0_i32_0 : i32, i32
  }
  func.func @transform_20(%arg0: i32) -> (i32, i32) {
    %c0_i32 = arith.constant 0 : i32
    %c0_i32_0 = arith.constant 0 : i32
    %c0_i32_1 = arith.constant 0 : i32
    return %c0_i32, %c0_i32_0 : i32, i32
  }
  func.func @transform_21(%arg0: i32) -> (i32, i32) {
    %c0_i32 = arith.constant 0 : i32
    %c0_i32_0 = arith.constant 0 : i32
    %c0_i32_1 = arith.constant 0 : i32
    return %c0_i32, %c0_i32_0 : i32, i32
  }
  func.func @transform_22(%arg0: i32) -> (i32, i32) {
    %c0_i32 = arith.constant 0 : i32
    %c0_i32_0 = arith.constant 0 : i32
    %c0_i32_1 = arith.constant 0 : i32
    return %c0_i32, %c0_i32_0 : i32, i32
  }
  func.func @transform_23(%arg0: i32) -> (i32, i32) {
    %c0_i32 = arith.constant 0 : i32
    %c0_i32_0 = arith.constant 0 : i32
    %c0_i32_1 = arith.constant 0 : i32
    return %c0_i32, %c0_i32_0 : i32, i32
  }
  func.func @transform_24(%arg0: i32) -> (i32, i32) {
    %c0_i32 = arith.constant 0 : i32
    %c0_i32_0 = arith.constant 0 : i32
    %c0_i32_1 = arith.constant 0 : i32
    return %c0_i32, %c0_i32_0 : i32, i32
  }
  func.func @transform_25(%arg0: i32) -> (i32, i32) {
    %c0_i32 = arith.constant 0 : i32
    %c0_i32_0 = arith.constant 0 : i32
    %c0_i32_1 = arith.constant 0 : i32
    return %c0_i32, %c0_i32_0 : i32, i32
  }
  func.func @transform_26(%arg0: i32) -> (i32, i32) {
    %c0_i32 = arith.constant 0 : i32
    %c0_i32_0 = arith.constant 0 : i32
    %c0_i32_1 = arith.constant 0 : i32
    return %c0_i32, %c0_i32_0 : i32, i32
  }
  func.func @transform_27(%arg0: i32) -> (i32, i32) {
    %c0_i32 = arith.constant 0 : i32
    %c0_i32_0 = arith.constant 0 : i32
    %c0_i32_1 = arith.constant 0 : i32
    return %c0_i32, %c0_i32_0 : i32, i32
  }
  func.func @transform_28(%arg0: i32) -> (i32, i32) {
    %c0_i32 = arith.constant 0 : i32
    %c0_i32_0 = arith.constant 0 : i32
    %c0_i32_1 = arith.constant 0 : i32
    return %c0_i32, %c0_i32_0 : i32, i32
  }
  func.func @transform_29(%arg0: i32) -> (i32, i32) {
    %c0_i32 = arith.constant 0 : i32
    %c0_i32_0 = arith.constant 0 : i32
    %c0_i32_1 = arith.constant 0 : i32
    return %c0_i32, %c0_i32_0 : i32, i32
  }
  func.func @transform_30(%arg0: i32) -> (i32, i32) {
    %c0_i32 = arith.constant 0 : i32
    %c0_i32_0 = arith.constant 0 : i32
    %c0_i32_1 = arith.constant 0 : i32
    return %c0_i32, %c0_i32_0 : i32, i32
  }
  func.func @transform_31(%arg0: i32) -> (i32, i32) {
    %c0_i32 = arith.constant 0 : i32
    %c0_i32_0 = arith.constant 0 : i32
    %c0_i32_1 = arith.constant 0 : i32
    return %c0_i32, %c0_i32_0 : i32, i32
  }
  func.func @transform_32(%arg0: i32) -> (i32, i32) {
    %c0_i32 = arith.constant 0 : i32
    %c0_i32_0 = arith.constant 0 : i32
    %c0_i32_1 = arith.constant 0 : i32
    return %c0_i32, %c0_i32_0 : i32, i32
  }
  func.func @transform_33(%arg0: i32) -> (i32, i32) {
    %c0_i32 = arith.constant 0 : i32
    %c0_i32_0 = arith.constant 0 : i32
    %c0_i32_1 = arith.constant 0 : i32
    return %c0_i32, %c0_i32_0 : i32, i32
  }
  func.func @transform_34(%arg0: i32) -> (i32, i32) {
    %c0_i32 = arith.constant 0 : i32
    %c0_i32_0 = arith.constant 0 : i32
    %c0_i32_1 = arith.constant 0 : i32
    return %c0_i32, %c0_i32_0 : i32, i32
  }
  func.func @transform_35(%arg0: i32) -> (i32, i32) {
    %c0_i32 = arith.constant 0 : i32
    %c0_i32_0 = arith.constant 0 : i32
    %c0_i32_1 = arith.constant 0 : i32
    return %c0_i32, %c0_i32_0 : i32, i32
  }
  func.func @transform_36(%arg0: i32) -> (i32, i32) {
    %c0_i32 = arith.constant 0 : i32
    %c0_i32_0 = arith.constant 0 : i32
    return %arg0, %c0_i32 : i32, i32
  }
  func.func @transform_37(%arg0: i32) -> (i32, i32) {
    %c0_i32 = arith.constant 0 : i32
    %c0_i32_0 = arith.constant 0 : i32
    return %arg0, %c0_i32 : i32, i32
  }
}

module attributes {stable_mosaic.version = 11 : i64} {
  func.func @_conformer_block_kernel(%arg0: i32, %arg1: memref<16x32xf32, #tpu.memory_space<vmem>>, %arg2: memref<1x32xf32, #tpu.memory_space<vmem>>, %arg3: memref<1x32xf32, #tpu.memory_space<vmem>>, %arg4: memref<32x128xbf16, #tpu.memory_space<vmem>>, %arg5: memref<1x128xf32, #tpu.memory_space<vmem>>, %arg6: memref<128x32xbf16, #tpu.memory_space<vmem>>, %arg7: memref<1x32xf32, #tpu.memory_space<vmem>>, %arg8: memref<1x32xf32, #tpu.memory_space<vmem>>, %arg9: memref<1x32xf32, #tpu.memory_space<vmem>>, %arg10: memref<32x96xbf16, #tpu.memory_space<vmem>>, %arg11: memref<1x96xf32, #tpu.memory_space<vmem>>, %arg12: memref<32x32xbf16, #tpu.memory_space<vmem>>, %arg13: memref<1x32xf32, #tpu.memory_space<vmem>>, %arg14: memref<1x32xf32, #tpu.memory_space<vmem>>, %arg15: memref<1x32xf32, #tpu.memory_space<vmem>>, %arg16: memref<32x32xbf16, #tpu.memory_space<vmem>>, %arg17: memref<1x32xf32, #tpu.memory_space<vmem>>, %arg18: memref<32x32xbf16, #tpu.memory_space<vmem>>, %arg19: memref<1x32xf32, #tpu.memory_space<vmem>>, %arg20: memref<31x32xf32, #tpu.memory_space<vmem>>, %arg21: memref<1x32xf32, #tpu.memory_space<vmem>>, %arg22: memref<1x32xf32, #tpu.memory_space<vmem>>, %arg23: memref<32x32xbf16, #tpu.memory_space<vmem>>, %arg24: memref<1x32xf32, #tpu.memory_space<vmem>>, %arg25: memref<1x32xf32, #tpu.memory_space<vmem>>, %arg26: memref<1x32xf32, #tpu.memory_space<vmem>>, %arg27: memref<32x128xbf16, #tpu.memory_space<vmem>>, %arg28: memref<1x128xf32, #tpu.memory_space<vmem>>, %arg29: memref<128x32xbf16, #tpu.memory_space<vmem>>, %arg30: memref<1x32xf32, #tpu.memory_space<vmem>>, %arg31: memref<1x32xf32, #tpu.memory_space<vmem>>, %arg32: memref<1x32xf32, #tpu.memory_space<vmem>>, %arg33: memref<32x128xbf16, #tpu.memory_space<vmem>>, %arg34: memref<1x128xf32, #tpu.memory_space<vmem>>, %arg35: memref<128x32xbf16, #tpu.memory_space<vmem>>, %arg36: memref<1x32xf32, #tpu.memory_space<vmem>>, %arg37: memref<16x32xf32, #tpu.memory_space<vmem>>, %arg38: memref<16x128xf32, #tpu.memory_space<vmem>>, %arg39: memref<1x46x32xf32, #tpu.memory_space<vmem>>) attributes {dimension_semantics = [#tpu.dimension_semantics<parallel>], iteration_bounds = array<i64: 2>, scalar_prefetch = 0 : i64, scratch_operands = 1 : i64, tpu.core_type = #tpu.core_type<tc>, window_params = [{transform_indices = @transform_0, window_bounds = array<i64: 16, 32>}, {pipeline_mode = #tpu.pipeline_mode<synchronous>, transform_indices = @transform_1, window_bounds = array<i64: 1, 32>}, {pipeline_mode = #tpu.pipeline_mode<synchronous>, transform_indices = @transform_2, window_bounds = array<i64: 1, 32>}, {pipeline_mode = #tpu.pipeline_mode<synchronous>, transform_indices = @transform_3, window_bounds = array<i64: 32, 128>}, {pipeline_mode = #tpu.pipeline_mode<synchronous>, transform_indices = @transform_4, window_bounds = array<i64: 1, 128>}, {pipeline_mode = #tpu.pipeline_mode<synchronous>, transform_indices = @transform_5, window_bounds = array<i64: 128, 32>}, {pipeline_mode = #tpu.pipeline_mode<synchronous>, transform_indices = @transform_6, window_bounds = array<i64: 1, 32>}, {pipeline_mode = #tpu.pipeline_mode<synchronous>, transform_indices = @transform_7, window_bounds = array<i64: 1, 32>}, {pipeline_mode = #tpu.pipeline_mode<synchronous>, transform_indices = @transform_8, window_bounds = array<i64: 1, 32>}, {pipeline_mode = #tpu.pipeline_mode<synchronous>, transform_indices = @transform_9, window_bounds = array<i64: 32, 96>}, {pipeline_mode = #tpu.pipeline_mode<synchronous>, transform_indices = @transform_10, window_bounds = array<i64: 1, 96>}, {pipeline_mode = #tpu.pipeline_mode<synchronous>, transform_indices = @transform_11, window_bounds = array<i64: 32, 32>}, {pipeline_mode = #tpu.pipeline_mode<synchronous>, transform_indices = @transform_12, window_bounds = array<i64: 1, 32>}, {pipeline_mode = #tpu.pipeline_mode<synchronous>, transform_indices = @transform_13, window_bounds = array<i64: 1, 32>}, {pipeline_mode = #tpu.pipeline_mode<synchronous>, transform_indices = @transform_14, window_bounds = array<i64: 1, 32>}, {pipeline_mode = #tpu.pipeline_mode<synchronous>, transform_indices = @transform_15, window_bounds = array<i64: 32, 32>}, {pipeline_mode = #tpu.pipeline_mode<synchronous>, transform_indices = @transform_16, window_bounds = array<i64: 1, 32>}, {pipeline_mode = #tpu.pipeline_mode<synchronous>, transform_indices = @transform_17, window_bounds = array<i64: 32, 32>}, {pipeline_mode = #tpu.pipeline_mode<synchronous>, transform_indices = @transform_18, window_bounds = array<i64: 1, 32>}, {pipeline_mode = #tpu.pipeline_mode<synchronous>, transform_indices = @transform_19, window_bounds = array<i64: 31, 32>}, {pipeline_mode = #tpu.pipeline_mode<synchronous>, transform_indices = @transform_20, window_bounds = array<i64: 1, 32>}, {pipeline_mode = #tpu.pipeline_mode<synchronous>, transform_indices = @transform_21, window_bounds = array<i64: 1, 32>}, {pipeline_mode = #tpu.pipeline_mode<synchronous>, transform_indices = @transform_22, window_bounds = array<i64: 32, 32>}, {pipeline_mode = #tpu.pipeline_mode<synchronous>, transform_indices = @transform_23, window_bounds = array<i64: 1, 32>}, {pipeline_mode = #tpu.pipeline_mode<synchronous>, transform_indices = @transform_24, window_bounds = array<i64: 1, 32>}, {pipeline_mode = #tpu.pipeline_mode<synchronous>, transform_indices = @transform_25, window_bounds = array<i64: 1, 32>}, {pipeline_mode = #tpu.pipeline_mode<synchronous>, transform_indices = @transform_26, window_bounds = array<i64: 32, 128>}, {pipeline_mode = #tpu.pipeline_mode<synchronous>, transform_indices = @transform_27, window_bounds = array<i64: 1, 128>}, {pipeline_mode = #tpu.pipeline_mode<synchronous>, transform_indices = @transform_28, window_bounds = array<i64: 128, 32>}, {pipeline_mode = #tpu.pipeline_mode<synchronous>, transform_indices = @transform_29, window_bounds = array<i64: 1, 32>}, {pipeline_mode = #tpu.pipeline_mode<synchronous>, transform_indices = @transform_30, window_bounds = array<i64: 1, 32>}, {pipeline_mode = #tpu.pipeline_mode<synchronous>, transform_indices = @transform_31, window_bounds = array<i64: 1, 32>}, {pipeline_mode = #tpu.pipeline_mode<synchronous>, transform_indices = @transform_32, window_bounds = array<i64: 32, 128>}, {pipeline_mode = #tpu.pipeline_mode<synchronous>, transform_indices = @transform_33, window_bounds = array<i64: 1, 128>}, {pipeline_mode = #tpu.pipeline_mode<synchronous>, transform_indices = @transform_34, window_bounds = array<i64: 128, 32>}, {pipeline_mode = #tpu.pipeline_mode<synchronous>, transform_indices = @transform_35, window_bounds = array<i64: 1, 32>}, {transform_indices = @transform_36, window_bounds = array<i64: 16, 32>}, {transform_indices = @transform_37, window_bounds = array<i64: 16, 128>}]} {
    %c0 = arith.constant 0 : index
    %c0_0 = arith.constant 0 : index
    %0 = vector.load %arg1[%c0, %c0_0] : memref<16x32xf32, #tpu.memory_space<vmem>>, vector<16x32xf32>
    %c0_1 = arith.constant 0 : index
    %c0_2 = arith.constant 0 : index
    %1 = vector.load %arg2[%c0_1, %c0_2] : memref<1x32xf32, #tpu.memory_space<vmem>>, vector<1x32xf32>
    %c0_3 = arith.constant 0 : index
    %c0_4 = arith.constant 0 : index
    %2 = vector.load %arg3[%c0_3, %c0_4] : memref<1x32xf32, #tpu.memory_space<vmem>>, vector<1x32xf32>
    %cst = arith.constant dense<0.000000e+00> : vector<16xf32>
    %3 = vector.multi_reduction <add>, %0, %cst [1] : vector<16x32xf32> to vector<16xf32>
    %4 = vector.shape_cast %3 : vector<16xf32> to vector<16x1xf32>
    %cst_5 = arith.constant 3.200000e+01 : f32
    %5 = vector.broadcast %cst_5 : f32 to vector<16x1xf32>
    %6 = arith.divf %4, %5 : vector<16x1xf32>
    %7 = vector.broadcast %6 : vector<16x1xf32> to vector<16x32xf32>
    %8 = arith.subf %0, %7 : vector<16x32xf32>
    %9 = arith.mulf %8, %8 : vector<16x32xf32>
    %cst_6 = arith.constant dense<0.000000e+00> : vector<16xf32>
    %10 = vector.multi_reduction <add>, %9, %cst_6 [1] : vector<16x32xf32> to vector<16xf32>
    %11 = vector.shape_cast %10 : vector<16xf32> to vector<16x1xf32>
    %cst_7 = arith.constant 3.200000e+01 : f32
    %12 = vector.broadcast %cst_7 : f32 to vector<16x1xf32>
    %13 = arith.divf %11, %12 : vector<16x1xf32>
    %14 = vector.broadcast %6 : vector<16x1xf32> to vector<16x32xf32>
    %15 = arith.subf %0, %14 : vector<16x32xf32>
    %cst_8 = arith.constant 9.99999974E-6 : f32
    %16 = vector.broadcast %cst_8 : f32 to vector<16x1xf32>
    %17 = arith.addf %13, %16 : vector<16x1xf32>
    %18 = math.rsqrt %17 : vector<16x1xf32>
    %19 = vector.broadcast %18 : vector<16x1xf32> to vector<16x32xf32>
    %20 = arith.mulf %15, %19 : vector<16x32xf32>
    %21 = vector.broadcast %1 : vector<1x32xf32> to vector<16x32xf32>
    %22 = arith.mulf %20, %21 : vector<16x32xf32>
    %23 = vector.broadcast %2 : vector<1x32xf32> to vector<16x32xf32>
    %24 = arith.addf %22, %23 : vector<16x32xf32>
    %25 = arith.truncf %24 : vector<16x32xf32> to vector<16x32xbf16>
    %cst_9 = arith.constant 0.000000e+00 : f32
    %26 = vector.broadcast %cst_9 : f32 to vector<16x32xf32>
    %c0_10 = arith.constant 0 : index
    %c0_11 = arith.constant 0 : index
    %27 = vector.load %arg4[%c0_10, %c0_11] : memref<32x128xbf16, #tpu.memory_space<vmem>>, vector<32x128xbf16>
    %cst_12 = arith.constant dense<0.000000e+00> : vector<16x128xf32>
    %28 = tpu.matmul %25, %27, %cst_12 {dimension_numbers = #tpu.dot_dimension_numbers<[1], [0], [0], [1], [0, 0, 1, 1], [], []>} : vector<16x32xbf16>, vector<32x128xbf16>, vector<16x128xf32> -> vector<16x128xf32>
    %c0_13 = arith.constant 0 : index
    %c0_14 = arith.constant 0 : index
    %29 = vector.load %arg5[%c0_13, %c0_14] : memref<1x128xf32, #tpu.memory_space<vmem>>, vector<1x128xf32>
    %30 = vector.broadcast %29 : vector<1x128xf32> to vector<16x128xf32>
    %31 = arith.addf %28, %30 : vector<16x128xf32>
    %32 = arith.negf %31 : vector<16x128xf32>
    %33 = math.exp %32 : vector<16x128xf32>
    %cst_15 = arith.constant 1.000000e+00 : f32
    %34 = vector.broadcast %cst_15 : f32 to vector<16x128xf32>
    %35 = arith.addf %34, %33 : vector<16x128xf32>
    %36 = arith.divf %34, %35 : vector<16x128xf32>
    %37 = arith.mulf %31, %36 : vector<16x128xf32>
    %38 = arith.truncf %37 : vector<16x128xf32> to vector<16x128xbf16>
    %c0_16 = arith.constant 0 : index
    %c0_17 = arith.constant 0 : index
    %39 = vector.load %arg6[%c0_16, %c0_17] : memref<128x32xbf16, #tpu.memory_space<vmem>>, vector<128x32xbf16>
    %cst_18 = arith.constant dense<0.000000e+00> : vector<16x32xf32>
    %40 = tpu.matmul %38, %39, %cst_18 {dimension_numbers = #tpu.dot_dimension_numbers<[1], [0], [0], [1], [0, 0, 1, 1], [], []>} : vector<16x128xbf16>, vector<128x32xbf16>, vector<16x32xf32> -> vector<16x32xf32>
    %41 = arith.addf %26, %40 : vector<16x32xf32>
    %c0_19 = arith.constant 0 : index
    %c0_20 = arith.constant 0 : index
    %42 = vector.load %arg7[%c0_19, %c0_20] : memref<1x32xf32, #tpu.memory_space<vmem>>, vector<1x32xf32>
    %43 = vector.broadcast %42 : vector<1x32xf32> to vector<16x32xf32>
    %44 = arith.addf %41, %43 : vector<16x32xf32>
    %cst_21 = arith.constant 5.000000e-01 : f32
    %45 = vector.broadcast %cst_21 : f32 to vector<16x32xf32>
    %46 = arith.mulf %45, %44 : vector<16x32xf32>
    %47 = arith.addf %0, %46 : vector<16x32xf32>
    %c0_22 = arith.constant 0 : index
    %c0_23 = arith.constant 0 : index
    %48 = vector.load %arg8[%c0_22, %c0_23] : memref<1x32xf32, #tpu.memory_space<vmem>>, vector<1x32xf32>
    %c0_24 = arith.constant 0 : index
    %c0_25 = arith.constant 0 : index
    %49 = vector.load %arg9[%c0_24, %c0_25] : memref<1x32xf32, #tpu.memory_space<vmem>>, vector<1x32xf32>
    %cst_26 = arith.constant dense<0.000000e+00> : vector<16xf32>
    %50 = vector.multi_reduction <add>, %47, %cst_26 [1] : vector<16x32xf32> to vector<16xf32>
    %51 = vector.shape_cast %50 : vector<16xf32> to vector<16x1xf32>
    %cst_27 = arith.constant 3.200000e+01 : f32
    %52 = vector.broadcast %cst_27 : f32 to vector<16x1xf32>
    %53 = arith.divf %51, %52 : vector<16x1xf32>
    %54 = vector.broadcast %53 : vector<16x1xf32> to vector<16x32xf32>
    %55 = arith.subf %47, %54 : vector<16x32xf32>
    %56 = arith.mulf %55, %55 : vector<16x32xf32>
    %cst_28 = arith.constant dense<0.000000e+00> : vector<16xf32>
    %57 = vector.multi_reduction <add>, %56, %cst_28 [1] : vector<16x32xf32> to vector<16xf32>
    %58 = vector.shape_cast %57 : vector<16xf32> to vector<16x1xf32>
    %cst_29 = arith.constant 3.200000e+01 : f32
    %59 = vector.broadcast %cst_29 : f32 to vector<16x1xf32>
    %60 = arith.divf %58, %59 : vector<16x1xf32>
    %61 = vector.broadcast %53 : vector<16x1xf32> to vector<16x32xf32>
    %62 = arith.subf %47, %61 : vector<16x32xf32>
    %cst_30 = arith.constant 9.99999974E-6 : f32
    %63 = vector.broadcast %cst_30 : f32 to vector<16x1xf32>
    %64 = arith.addf %60, %63 : vector<16x1xf32>
    %65 = math.rsqrt %64 : vector<16x1xf32>
    %66 = vector.broadcast %65 : vector<16x1xf32> to vector<16x32xf32>
    %67 = arith.mulf %62, %66 : vector<16x32xf32>
    %68 = vector.broadcast %48 : vector<1x32xf32> to vector<16x32xf32>
    %69 = arith.mulf %67, %68 : vector<16x32xf32>
    %70 = vector.broadcast %49 : vector<1x32xf32> to vector<16x32xf32>
    %71 = arith.addf %69, %70 : vector<16x32xf32>
    %72 = arith.truncf %71 : vector<16x32xf32> to vector<16x32xbf16>
    %c0_31 = arith.constant 0 : index
    %c0_32 = arith.constant 0 : index
    %73 = vector.load %arg10[%c0_31, %c0_32] : memref<32x96xbf16, #tpu.memory_space<vmem>>, vector<32x96xbf16>
    %cst_33 = arith.constant dense<0.000000e+00> : vector<16x96xf32>
    %74 = tpu.matmul %72, %73, %cst_33 {dimension_numbers = #tpu.dot_dimension_numbers<[1], [0], [0], [1], [0, 0, 1, 1], [], []>} : vector<16x32xbf16>, vector<32x96xbf16>, vector<16x96xf32> -> vector<16x96xf32>
    %c0_34 = arith.constant 0 : index
    %c0_35 = arith.constant 0 : index
    %75 = vector.load %arg11[%c0_34, %c0_35] : memref<1x96xf32, #tpu.memory_space<vmem>>, vector<1x96xf32>
    %76 = vector.broadcast %75 : vector<1x96xf32> to vector<16x96xf32>
    %77 = arith.addf %74, %76 : vector<16x96xf32>
    %78 = vector.extract_strided_slice %77 {offsets = [0, 0], sizes = [16, 8], strides = [1, 1]} : vector<16x96xf32> to vector<16x8xf32>
    %79 = vector.shape_cast %78 : vector<16x8xf32> to vector<1x16x8xf32>
    %80 = vector.extract_strided_slice %77 {offsets = [0, 32], sizes = [16, 8], strides = [1, 1]} : vector<16x96xf32> to vector<16x8xf32>
    %81 = vector.shape_cast %80 : vector<16x8xf32> to vector<1x16x8xf32>
    %82 = vector.extract_strided_slice %77 {offsets = [0, 64], sizes = [16, 8], strides = [1, 1]} : vector<16x96xf32> to vector<16x8xf32>
    %83 = vector.shape_cast %82 : vector<16x8xf32> to vector<1x16x8xf32>
    %84 = arith.truncf %79 : vector<1x16x8xf32> to vector<1x16x8xbf16>
    %85 = arith.truncf %81 : vector<1x16x8xf32> to vector<1x16x8xbf16>
    "tpu.trace_start"() <{level = 10 : i32, message = "bqd,bkd->bqk"}> : () -> ()
    %cst_36 = arith.constant dense<0.000000e+00> : vector<1x16x16xf32>
    %86 = tpu.matmul %84, %85, %cst_36 {dimension_numbers = #tpu.dot_dimension_numbers<[2], [2], [1], [1], [0, 0, 0, 1, 1, 1], [0], [0]>} : vector<1x16x8xbf16>, vector<1x16x8xbf16>, vector<1x16x16xf32> -> vector<1x16x16xf32>
    "tpu.trace_stop"() : () -> ()
    %cst_37 = arith.constant dense<0xFF800000> : vector<1x16xf32>
    %87 = vector.multi_reduction <maximumf>, %86, %cst_37 [2] : vector<1x16x16xf32> to vector<1x16xf32>
    %88 = vector.shape_cast %87 : vector<1x16xf32> to vector<1x16x1xf32>
    %89 = vector.broadcast %88 : vector<1x16x1xf32> to vector<1x16x16xf32>
    %90 = arith.subf %86, %89 : vector<1x16x16xf32>
    %91 = math.exp %90 : vector<1x16x16xf32>
    %cst_38 = arith.constant dense<0.000000e+00> : vector<1x16xf32>
    %92 = vector.multi_reduction <add>, %91, %cst_38 [2] : vector<1x16x16xf32> to vector<1x16xf32>
    %93 = vector.shape_cast %92 : vector<1x16xf32> to vector<1x16x1xf32>
    %94 = tpu.reciprocal %93 {approx = true} : vector<1x16x1xf32> -> vector<1x16x1xf32>
    %95 = vector.broadcast %94 : vector<1x16x1xf32> to vector<1x16x16xf32>
    %96 = arith.mulf %91, %95 : vector<1x16x16xf32>
    %97 = arith.truncf %96 : vector<1x16x16xf32> to vector<1x16x16xbf16>
    %98 = arith.truncf %83 : vector<1x16x8xf32> to vector<1x16x8xbf16>
    "tpu.trace_start"() <{level = 10 : i32, message = "bqk,bkd->bqd"}> : () -> ()
    %cst_39 = arith.constant dense<0.000000e+00> : vector<1x16x8xf32>
    %99 = tpu.matmul %97, %98, %cst_39 {dimension_numbers = #tpu.dot_dimension_numbers<[2], [1], [1], [2], [0, 0, 0, 1, 1, 2], [0], [0]>} : vector<1x16x16xbf16>, vector<1x16x8xbf16>, vector<1x16x8xf32> -> vector<1x16x8xf32>
    "tpu.trace_stop"() : () -> ()
    %100 = vector.shape_cast %99 : vector<1x16x8xf32> to vector<16x8xf32>
    %101 = vector.extract_strided_slice %77 {offsets = [0, 8], sizes = [16, 8], strides = [1, 1]} : vector<16x96xf32> to vector<16x8xf32>
    %102 = vector.shape_cast %101 : vector<16x8xf32> to vector<1x16x8xf32>
    %103 = vector.extract_strided_slice %77 {offsets = [0, 40], sizes = [16, 8], strides = [1, 1]} : vector<16x96xf32> to vector<16x8xf32>
    %104 = vector.shape_cast %103 : vector<16x8xf32> to vector<1x16x8xf32>
    %105 = vector.extract_strided_slice %77 {offsets = [0, 72], sizes = [16, 8], strides = [1, 1]} : vector<16x96xf32> to vector<16x8xf32>
    %106 = vector.shape_cast %105 : vector<16x8xf32> to vector<1x16x8xf32>
    %107 = arith.truncf %102 : vector<1x16x8xf32> to vector<1x16x8xbf16>
    %108 = arith.truncf %104 : vector<1x16x8xf32> to vector<1x16x8xbf16>
    "tpu.trace_start"() <{level = 10 : i32, message = "bqd,bkd->bqk"}> : () -> ()
    %cst_40 = arith.constant dense<0.000000e+00> : vector<1x16x16xf32>
    %109 = tpu.matmul %107, %108, %cst_40 {dimension_numbers = #tpu.dot_dimension_numbers<[2], [2], [1], [1], [0, 0, 0, 1, 1, 1], [0], [0]>} : vector<1x16x8xbf16>, vector<1x16x8xbf16>, vector<1x16x16xf32> -> vector<1x16x16xf32>
    "tpu.trace_stop"() : () -> ()
    %cst_41 = arith.constant dense<0xFF800000> : vector<1x16xf32>
    %110 = vector.multi_reduction <maximumf>, %109, %cst_41 [2] : vector<1x16x16xf32> to vector<1x16xf32>
    %111 = vector.shape_cast %110 : vector<1x16xf32> to vector<1x16x1xf32>
    %112 = vector.broadcast %111 : vector<1x16x1xf32> to vector<1x16x16xf32>
    %113 = arith.subf %109, %112 : vector<1x16x16xf32>
    %114 = math.exp %113 : vector<1x16x16xf32>
    %cst_42 = arith.constant dense<0.000000e+00> : vector<1x16xf32>
    %115 = vector.multi_reduction <add>, %114, %cst_42 [2] : vector<1x16x16xf32> to vector<1x16xf32>
    %116 = vector.shape_cast %115 : vector<1x16xf32> to vector<1x16x1xf32>
    %117 = tpu.reciprocal %116 {approx = true} : vector<1x16x1xf32> -> vector<1x16x1xf32>
    %118 = vector.broadcast %117 : vector<1x16x1xf32> to vector<1x16x16xf32>
    %119 = arith.mulf %114, %118 : vector<1x16x16xf32>
    %120 = arith.truncf %119 : vector<1x16x16xf32> to vector<1x16x16xbf16>
    %121 = arith.truncf %106 : vector<1x16x8xf32> to vector<1x16x8xbf16>
    "tpu.trace_start"() <{level = 10 : i32, message = "bqk,bkd->bqd"}> : () -> ()
    %cst_43 = arith.constant dense<0.000000e+00> : vector<1x16x8xf32>
    %122 = tpu.matmul %120, %121, %cst_43 {dimension_numbers = #tpu.dot_dimension_numbers<[2], [1], [1], [2], [0, 0, 0, 1, 1, 2], [0], [0]>} : vector<1x16x16xbf16>, vector<1x16x8xbf16>, vector<1x16x8xf32> -> vector<1x16x8xf32>
    "tpu.trace_stop"() : () -> ()
    %123 = vector.shape_cast %122 : vector<1x16x8xf32> to vector<16x8xf32>
    %124 = vector.extract_strided_slice %77 {offsets = [0, 16], sizes = [16, 8], strides = [1, 1]} : vector<16x96xf32> to vector<16x8xf32>
    %125 = vector.shape_cast %124 : vector<16x8xf32> to vector<1x16x8xf32>
    %126 = vector.extract_strided_slice %77 {offsets = [0, 48], sizes = [16, 8], strides = [1, 1]} : vector<16x96xf32> to vector<16x8xf32>
    %127 = vector.shape_cast %126 : vector<16x8xf32> to vector<1x16x8xf32>
    %128 = vector.extract_strided_slice %77 {offsets = [0, 80], sizes = [16, 8], strides = [1, 1]} : vector<16x96xf32> to vector<16x8xf32>
    %129 = vector.shape_cast %128 : vector<16x8xf32> to vector<1x16x8xf32>
    %130 = arith.truncf %125 : vector<1x16x8xf32> to vector<1x16x8xbf16>
    %131 = arith.truncf %127 : vector<1x16x8xf32> to vector<1x16x8xbf16>
    "tpu.trace_start"() <{level = 10 : i32, message = "bqd,bkd->bqk"}> : () -> ()
    %cst_44 = arith.constant dense<0.000000e+00> : vector<1x16x16xf32>
    %132 = tpu.matmul %130, %131, %cst_44 {dimension_numbers = #tpu.dot_dimension_numbers<[2], [2], [1], [1], [0, 0, 0, 1, 1, 1], [0], [0]>} : vector<1x16x8xbf16>, vector<1x16x8xbf16>, vector<1x16x16xf32> -> vector<1x16x16xf32>
    "tpu.trace_stop"() : () -> ()
    %cst_45 = arith.constant dense<0xFF800000> : vector<1x16xf32>
    %133 = vector.multi_reduction <maximumf>, %132, %cst_45 [2] : vector<1x16x16xf32> to vector<1x16xf32>
    %134 = vector.shape_cast %133 : vector<1x16xf32> to vector<1x16x1xf32>
    %135 = vector.broadcast %134 : vector<1x16x1xf32> to vector<1x16x16xf32>
    %136 = arith.subf %132, %135 : vector<1x16x16xf32>
    %137 = math.exp %136 : vector<1x16x16xf32>
    %cst_46 = arith.constant dense<0.000000e+00> : vector<1x16xf32>
    %138 = vector.multi_reduction <add>, %137, %cst_46 [2] : vector<1x16x16xf32> to vector<1x16xf32>
    %139 = vector.shape_cast %138 : vector<1x16xf32> to vector<1x16x1xf32>
    %140 = tpu.reciprocal %139 {approx = true} : vector<1x16x1xf32> -> vector<1x16x1xf32>
    %141 = vector.broadcast %140 : vector<1x16x1xf32> to vector<1x16x16xf32>
    %142 = arith.mulf %137, %141 : vector<1x16x16xf32>
    %143 = arith.truncf %142 : vector<1x16x16xf32> to vector<1x16x16xbf16>
    %144 = arith.truncf %129 : vector<1x16x8xf32> to vector<1x16x8xbf16>
    "tpu.trace_start"() <{level = 10 : i32, message = "bqk,bkd->bqd"}> : () -> ()
    %cst_47 = arith.constant dense<0.000000e+00> : vector<1x16x8xf32>
    %145 = tpu.matmul %143, %144, %cst_47 {dimension_numbers = #tpu.dot_dimension_numbers<[2], [1], [1], [2], [0, 0, 0, 1, 1, 2], [0], [0]>} : vector<1x16x16xbf16>, vector<1x16x8xbf16>, vector<1x16x8xf32> -> vector<1x16x8xf32>
    "tpu.trace_stop"() : () -> ()
    %146 = vector.shape_cast %145 : vector<1x16x8xf32> to vector<16x8xf32>
    %147 = vector.extract_strided_slice %77 {offsets = [0, 24], sizes = [16, 8], strides = [1, 1]} : vector<16x96xf32> to vector<16x8xf32>
    %148 = vector.shape_cast %147 : vector<16x8xf32> to vector<1x16x8xf32>
    %149 = vector.extract_strided_slice %77 {offsets = [0, 56], sizes = [16, 8], strides = [1, 1]} : vector<16x96xf32> to vector<16x8xf32>
    %150 = vector.shape_cast %149 : vector<16x8xf32> to vector<1x16x8xf32>
    %151 = vector.extract_strided_slice %77 {offsets = [0, 88], sizes = [16, 8], strides = [1, 1]} : vector<16x96xf32> to vector<16x8xf32>
    %152 = vector.shape_cast %151 : vector<16x8xf32> to vector<1x16x8xf32>
    %153 = arith.truncf %148 : vector<1x16x8xf32> to vector<1x16x8xbf16>
    %154 = arith.truncf %150 : vector<1x16x8xf32> to vector<1x16x8xbf16>
    "tpu.trace_start"() <{level = 10 : i32, message = "bqd,bkd->bqk"}> : () -> ()
    %cst_48 = arith.constant dense<0.000000e+00> : vector<1x16x16xf32>
    %155 = tpu.matmul %153, %154, %cst_48 {dimension_numbers = #tpu.dot_dimension_numbers<[2], [2], [1], [1], [0, 0, 0, 1, 1, 1], [0], [0]>} : vector<1x16x8xbf16>, vector<1x16x8xbf16>, vector<1x16x16xf32> -> vector<1x16x16xf32>
    "tpu.trace_stop"() : () -> ()
    %cst_49 = arith.constant dense<0xFF800000> : vector<1x16xf32>
    %156 = vector.multi_reduction <maximumf>, %155, %cst_49 [2] : vector<1x16x16xf32> to vector<1x16xf32>
    %157 = vector.shape_cast %156 : vector<1x16xf32> to vector<1x16x1xf32>
    %158 = vector.broadcast %157 : vector<1x16x1xf32> to vector<1x16x16xf32>
    %159 = arith.subf %155, %158 : vector<1x16x16xf32>
    %160 = math.exp %159 : vector<1x16x16xf32>
    %cst_50 = arith.constant dense<0.000000e+00> : vector<1x16xf32>
    %161 = vector.multi_reduction <add>, %160, %cst_50 [2] : vector<1x16x16xf32> to vector<1x16xf32>
    %162 = vector.shape_cast %161 : vector<1x16xf32> to vector<1x16x1xf32>
    %163 = tpu.reciprocal %162 {approx = true} : vector<1x16x1xf32> -> vector<1x16x1xf32>
    %164 = vector.broadcast %163 : vector<1x16x1xf32> to vector<1x16x16xf32>
    %165 = arith.mulf %160, %164 : vector<1x16x16xf32>
    %166 = arith.truncf %165 : vector<1x16x16xf32> to vector<1x16x16xbf16>
    %167 = arith.truncf %152 : vector<1x16x8xf32> to vector<1x16x8xbf16>
    "tpu.trace_start"() <{level = 10 : i32, message = "bqk,bkd->bqd"}> : () -> ()
    %cst_51 = arith.constant dense<0.000000e+00> : vector<1x16x8xf32>
    %168 = tpu.matmul %166, %167, %cst_51 {dimension_numbers = #tpu.dot_dimension_numbers<[2], [1], [1], [2], [0, 0, 0, 1, 1, 2], [0], [0]>} : vector<1x16x16xbf16>, vector<1x16x8xbf16>, vector<1x16x8xf32> -> vector<1x16x8xf32>
    "tpu.trace_stop"() : () -> ()
    %169 = vector.shape_cast %168 : vector<1x16x8xf32> to vector<16x8xf32>
    %170 = tpu.concatenate %100, %123, %146, %169 in 1 : vector<16x8xf32>, vector<16x8xf32>, vector<16x8xf32>, vector<16x8xf32> -> vector<16x32xf32>
    %171 = arith.truncf %170 : vector<16x32xf32> to vector<16x32xbf16>
    %c0_52 = arith.constant 0 : index
    %c0_53 = arith.constant 0 : index
    %172 = vector.load %arg12[%c0_52, %c0_53] : memref<32x32xbf16, #tpu.memory_space<vmem>>, vector<32x32xbf16>
    %cst_54 = arith.constant dense<0.000000e+00> : vector<16x32xf32>
    %173 = tpu.matmul %171, %172, %cst_54 {dimension_numbers = #tpu.dot_dimension_numbers<[1], [0], [0], [1], [0, 0, 1, 1], [], []>} : vector<16x32xbf16>, vector<32x32xbf16>, vector<16x32xf32> -> vector<16x32xf32>
    %c0_55 = arith.constant 0 : index
    %c0_56 = arith.constant 0 : index
    %174 = vector.load %arg13[%c0_55, %c0_56] : memref<1x32xf32, #tpu.memory_space<vmem>>, vector<1x32xf32>
    %175 = vector.broadcast %174 : vector<1x32xf32> to vector<16x32xf32>
    %176 = arith.addf %173, %175 : vector<16x32xf32>
    %177 = arith.addf %47, %176 : vector<16x32xf32>
    %c0_57 = arith.constant 0 : index
    %c0_58 = arith.constant 0 : index
    %178 = vector.load %arg14[%c0_57, %c0_58] : memref<1x32xf32, #tpu.memory_space<vmem>>, vector<1x32xf32>
    %c0_59 = arith.constant 0 : index
    %c0_60 = arith.constant 0 : index
    %179 = vector.load %arg15[%c0_59, %c0_60] : memref<1x32xf32, #tpu.memory_space<vmem>>, vector<1x32xf32>
    %cst_61 = arith.constant dense<0.000000e+00> : vector<16xf32>
    %180 = vector.multi_reduction <add>, %177, %cst_61 [1] : vector<16x32xf32> to vector<16xf32>
    %181 = vector.shape_cast %180 : vector<16xf32> to vector<16x1xf32>
    %cst_62 = arith.constant 3.200000e+01 : f32
    %182 = vector.broadcast %cst_62 : f32 to vector<16x1xf32>
    %183 = arith.divf %181, %182 : vector<16x1xf32>
    %184 = vector.broadcast %183 : vector<16x1xf32> to vector<16x32xf32>
    %185 = arith.subf %177, %184 : vector<16x32xf32>
    %186 = arith.mulf %185, %185 : vector<16x32xf32>
    %cst_63 = arith.constant dense<0.000000e+00> : vector<16xf32>
    %187 = vector.multi_reduction <add>, %186, %cst_63 [1] : vector<16x32xf32> to vector<16xf32>
    %188 = vector.shape_cast %187 : vector<16xf32> to vector<16x1xf32>
    %cst_64 = arith.constant 3.200000e+01 : f32
    %189 = vector.broadcast %cst_64 : f32 to vector<16x1xf32>
    %190 = arith.divf %188, %189 : vector<16x1xf32>
    %191 = vector.broadcast %183 : vector<16x1xf32> to vector<16x32xf32>
    %192 = arith.subf %177, %191 : vector<16x32xf32>
    %cst_65 = arith.constant 9.99999974E-6 : f32
    %193 = vector.broadcast %cst_65 : f32 to vector<16x1xf32>
    %194 = arith.addf %190, %193 : vector<16x1xf32>
    %195 = math.rsqrt %194 : vector<16x1xf32>
    %196 = vector.broadcast %195 : vector<16x1xf32> to vector<16x32xf32>
    %197 = arith.mulf %192, %196 : vector<16x32xf32>
    %198 = vector.broadcast %178 : vector<1x32xf32> to vector<16x32xf32>
    %199 = arith.mulf %197, %198 : vector<16x32xf32>
    %200 = vector.broadcast %179 : vector<1x32xf32> to vector<16x32xf32>
    %201 = arith.addf %199, %200 : vector<16x32xf32>
    %202 = arith.truncf %201 : vector<16x32xf32> to vector<16x32xbf16>
    %c0_66 = arith.constant 0 : index
    %c0_67 = arith.constant 0 : index
    %203 = vector.load %arg16[%c0_66, %c0_67] : memref<32x32xbf16, #tpu.memory_space<vmem>>, vector<32x32xbf16>
    %cst_68 = arith.constant dense<0.000000e+00> : vector<16x32xf32>
    %204 = tpu.matmul %202, %203, %cst_68 {dimension_numbers = #tpu.dot_dimension_numbers<[1], [0], [0], [1], [0, 0, 1, 1], [], []>} : vector<16x32xbf16>, vector<32x32xbf16>, vector<16x32xf32> -> vector<16x32xf32>
    %c0_69 = arith.constant 0 : index
    %c0_70 = arith.constant 0 : index
    %205 = vector.load %arg17[%c0_69, %c0_70] : memref<1x32xf32, #tpu.memory_space<vmem>>, vector<1x32xf32>
    %206 = vector.broadcast %205 : vector<1x32xf32> to vector<16x32xf32>
    %207 = arith.addf %204, %206 : vector<16x32xf32>
    %c0_71 = arith.constant 0 : index
    %c0_72 = arith.constant 0 : index
    %208 = vector.load %arg18[%c0_71, %c0_72] : memref<32x32xbf16, #tpu.memory_space<vmem>>, vector<32x32xbf16>
    %cst_73 = arith.constant dense<0.000000e+00> : vector<16x32xf32>
    %209 = tpu.matmul %202, %208, %cst_73 {dimension_numbers = #tpu.dot_dimension_numbers<[1], [0], [0], [1], [0, 0, 1, 1], [], []>} : vector<16x32xbf16>, vector<32x32xbf16>, vector<16x32xf32> -> vector<16x32xf32>
    %c0_74 = arith.constant 0 : index
    %c0_75 = arith.constant 0 : index
    %210 = vector.load %arg19[%c0_74, %c0_75] : memref<1x32xf32, #tpu.memory_space<vmem>>, vector<1x32xf32>
    %211 = vector.broadcast %210 : vector<1x32xf32> to vector<16x32xf32>
    %212 = arith.addf %209, %211 : vector<16x32xf32>
    %213 = arith.negf %212 : vector<16x32xf32>
    %214 = math.exp %213 : vector<16x32xf32>
    %cst_76 = arith.constant 1.000000e+00 : f32
    %215 = vector.broadcast %cst_76 : f32 to vector<16x32xf32>
    %216 = arith.addf %215, %214 : vector<16x32xf32>
    %217 = arith.divf %215, %216 : vector<16x32xf32>
    %218 = arith.mulf %207, %217 : vector<16x32xf32>
    %cst_77 = arith.constant 0.000000e+00 : f32
    %219 = vector.broadcast %cst_77 : f32 to vector<1x15x32xf32>
    %c0_78 = arith.constant 0 : index
    %c0_79 = arith.constant 0 : index
    %c0_80 = arith.constant 0 : index
    %220 = vector.load %arg39[%c0_78, %c0_79, %c0_80] : memref<1x46x32xf32, #tpu.memory_space<vmem>>, vector<1x15x32xf32>
    tpu.vector_store %arg39[%c0_78, %c0_79, %c0_80], %219 {strides = array<i32>} : memref<1x46x32xf32, #tpu.memory_space<vmem>>, vector<1x15x32xf32>,
    %c0_81 = arith.constant 0 : index
    %c31 = arith.constant 31 : index
    %c0_82 = arith.constant 0 : index
    %221 = vector.load %arg39[%c0_81, %c31, %c0_82] : memref<1x46x32xf32, #tpu.memory_space<vmem>>, vector<1x15x32xf32>
    tpu.vector_store %arg39[%c0_81, %c31, %c0_82], %219 {strides = array<i32>} : memref<1x46x32xf32, #tpu.memory_space<vmem>>, vector<1x15x32xf32>,
    %222 = vector.shape_cast %218 : vector<16x32xf32> to vector<1x16x32xf32>
    %c0_83 = arith.constant 0 : index
    %c15 = arith.constant 15 : index
    %c0_84 = arith.constant 0 : index
    %223 = vector.load %arg39[%c0_83, %c15, %c0_84] : memref<1x46x32xf32, #tpu.memory_space<vmem>>, vector<1x16x32xf32>
    tpu.vector_store %arg39[%c0_83, %c15, %c0_84], %222 {strides = array<i32>} : memref<1x46x32xf32, #tpu.memory_space<vmem>>, vector<1x16x32xf32>,
    %c0_85 = arith.constant 0 : index
    %c0_86 = arith.constant 0 : index
    %224 = vector.load %arg20[%c0_85, %c0_86] : memref<31x32xf32, #tpu.memory_space<vmem>>, vector<31x32xf32>
    %cst_87 = arith.constant 0.000000e+00 : f32
    %225 = vector.broadcast %cst_87 : f32 to vector<1x16x32xf32>
    %c0_88 = arith.constant 0 : index
    %c0_89 = arith.constant 0 : index
    %c0_90 = arith.constant 0 : index
    %226 = vector.load %arg39[%c0_88, %c0_89, %c0_90] : memref<1x46x32xf32, #tpu.memory_space<vmem>>, vector<1x16x32xf32>
    %227 = vector.extract_strided_slice %224 {offsets = [0, 0], sizes = [1, 32], strides = [1, 1]} : vector<31x32xf32> to vector<1x32xf32>
    %228 = vector.shape_cast %227 : vector<1x32xf32> to vector<32xf32>
    %229 = vector.shape_cast %228 : vector<32xf32> to vector<1x1x32xf32>
    %230 = vector.broadcast %229 : vector<1x1x32xf32> to vector<1x16x32xf32>
    %231 = arith.mulf %226, %230 : vector<1x16x32xf32>
    %232 = arith.addf %225, %231 : vector<1x16x32xf32>
    %c0_91 = arith.constant 0 : index
    %c1 = arith.constant 1 : index
    %c0_92 = arith.constant 0 : index
    %233 = vector.load %arg39[%c0_91, %c1, %c0_92] : memref<1x46x32xf32, #tpu.memory_space<vmem>>, vector<1x16x32xf32>
    %234 = vector.extract_strided_slice %224 {offsets = [1, 0], sizes = [1, 32], strides = [1, 1]} : vector<31x32xf32> to vector<1x32xf32>
    %235 = vector.shape_cast %234 : vector<1x32xf32> to vector<32xf32>
    %236 = vector.shape_cast %235 : vector<32xf32> to vector<1x1x32xf32>
    %237 = vector.broadcast %236 : vector<1x1x32xf32> to vector<1x16x32xf32>
    %238 = arith.mulf %233, %237 : vector<1x16x32xf32>
    %239 = arith.addf %232, %238 : vector<1x16x32xf32>
    %c0_93 = arith.constant 0 : index
    %c2 = arith.constant 2 : index
    %c0_94 = arith.constant 0 : index
    %240 = vector.load %arg39[%c0_93, %c2, %c0_94] : memref<1x46x32xf32, #tpu.memory_space<vmem>>, vector<1x16x32xf32>
    %241 = vector.extract_strided_slice %224 {offsets = [2, 0], sizes = [1, 32], strides = [1, 1]} : vector<31x32xf32> to vector<1x32xf32>
    %242 = vector.shape_cast %241 : vector<1x32xf32> to vector<32xf32>
    %243 = vector.shape_cast %242 : vector<32xf32> to vector<1x1x32xf32>
    %244 = vector.broadcast %243 : vector<1x1x32xf32> to vector<1x16x32xf32>
    %245 = arith.mulf %240, %244 : vector<1x16x32xf32>
    %246 = arith.addf %239, %245 : vector<1x16x32xf32>
    %c0_95 = arith.constant 0 : index
    %c3 = arith.constant 3 : index
    %c0_96 = arith.constant 0 : index
    %247 = vector.load %arg39[%c0_95, %c3, %c0_96] : memref<1x46x32xf32, #tpu.memory_space<vmem>>, vector<1x16x32xf32>
    %248 = vector.extract_strided_slice %224 {offsets = [3, 0], sizes = [1, 32], strides = [1, 1]} : vector<31x32xf32> to vector<1x32xf32>
    %249 = vector.shape_cast %248 : vector<1x32xf32> to vector<32xf32>
    %250 = vector.shape_cast %249 : vector<32xf32> to vector<1x1x32xf32>
    %251 = vector.broadcast %250 : vector<1x1x32xf32> to vector<1x16x32xf32>
    %252 = arith.mulf %247, %251 : vector<1x16x32xf32>
    %253 = arith.addf %246, %252 : vector<1x16x32xf32>
    %c0_97 = arith.constant 0 : index
    %c4 = arith.constant 4 : index
    %c0_98 = arith.constant 0 : index
    %254 = vector.load %arg39[%c0_97, %c4, %c0_98] : memref<1x46x32xf32, #tpu.memory_space<vmem>>, vector<1x16x32xf32>
    %255 = vector.extract_strided_slice %224 {offsets = [4, 0], sizes = [1, 32], strides = [1, 1]} : vector<31x32xf32> to vector<1x32xf32>
    %256 = vector.shape_cast %255 : vector<1x32xf32> to vector<32xf32>
    %257 = vector.shape_cast %256 : vector<32xf32> to vector<1x1x32xf32>
    %258 = vector.broadcast %257 : vector<1x1x32xf32> to vector<1x16x32xf32>
    %259 = arith.mulf %254, %258 : vector<1x16x32xf32>
    %260 = arith.addf %253, %259 : vector<1x16x32xf32>
    %c0_99 = arith.constant 0 : index
    %c5 = arith.constant 5 : index
    %c0_100 = arith.constant 0 : index
    %261 = vector.load %arg39[%c0_99, %c5, %c0_100] : memref<1x46x32xf32, #tpu.memory_space<vmem>>, vector<1x16x32xf32>
    %262 = vector.extract_strided_slice %224 {offsets = [5, 0], sizes = [1, 32], strides = [1, 1]} : vector<31x32xf32> to vector<1x32xf32>
    %263 = vector.shape_cast %262 : vector<1x32xf32> to vector<32xf32>
    %264 = vector.shape_cast %263 : vector<32xf32> to vector<1x1x32xf32>
    %265 = vector.broadcast %264 : vector<1x1x32xf32> to vector<1x16x32xf32>
    %266 = arith.mulf %261, %265 : vector<1x16x32xf32>
    %267 = arith.addf %260, %266 : vector<1x16x32xf32>
    %c0_101 = arith.constant 0 : index
    %c6 = arith.constant 6 : index
    %c0_102 = arith.constant 0 : index
    %268 = vector.load %arg39[%c0_101, %c6, %c0_102] : memref<1x46x32xf32, #tpu.memory_space<vmem>>, vector<1x16x32xf32>
    %269 = vector.extract_strided_slice %224 {offsets = [6, 0], sizes = [1, 32], strides = [1, 1]} : vector<31x32xf32> to vector<1x32xf32>
    %270 = vector.shape_cast %269 : vector<1x32xf32> to vector<32xf32>
    %271 = vector.shape_cast %270 : vector<32xf32> to vector<1x1x32xf32>
    %272 = vector.broadcast %271 : vector<1x1x32xf32> to vector<1x16x32xf32>
    %273 = arith.mulf %268, %272 : vector<1x16x32xf32>
    %274 = arith.addf %267, %273 : vector<1x16x32xf32>
    %c0_103 = arith.constant 0 : index
    %c7 = arith.constant 7 : index
    %c0_104 = arith.constant 0 : index
    %275 = vector.load %arg39[%c0_103, %c7, %c0_104] : memref<1x46x32xf32, #tpu.memory_space<vmem>>, vector<1x16x32xf32>
    %276 = vector.extract_strided_slice %224 {offsets = [7, 0], sizes = [1, 32], strides = [1, 1]} : vector<31x32xf32> to vector<1x32xf32>
    %277 = vector.shape_cast %276 : vector<1x32xf32> to vector<32xf32>
    %278 = vector.shape_cast %277 : vector<32xf32> to vector<1x1x32xf32>
    %279 = vector.broadcast %278 : vector<1x1x32xf32> to vector<1x16x32xf32>
    %280 = arith.mulf %275, %279 : vector<1x16x32xf32>
    %281 = arith.addf %274, %280 : vector<1x16x32xf32>
    %c0_105 = arith.constant 0 : index
    %c8 = arith.constant 8 : index
    %c0_106 = arith.constant 0 : index
    %282 = vector.load %arg39[%c0_105, %c8, %c0_106] : memref<1x46x32xf32, #tpu.memory_space<vmem>>, vector<1x16x32xf32>
    %283 = vector.extract_strided_slice %224 {offsets = [8, 0], sizes = [1, 32], strides = [1, 1]} : vector<31x32xf32> to vector<1x32xf32>
    %284 = vector.shape_cast %283 : vector<1x32xf32> to vector<32xf32>
    %285 = vector.shape_cast %284 : vector<32xf32> to vector<1x1x32xf32>
    %286 = vector.broadcast %285 : vector<1x1x32xf32> to vector<1x16x32xf32>
    %287 = arith.mulf %282, %286 : vector<1x16x32xf32>
    %288 = arith.addf %281, %287 : vector<1x16x32xf32>
    %c0_107 = arith.constant 0 : index
    %c9 = arith.constant 9 : index
    %c0_108 = arith.constant 0 : index
    %289 = vector.load %arg39[%c0_107, %c9, %c0_108] : memref<1x46x32xf32, #tpu.memory_space<vmem>>, vector<1x16x32xf32>
    %290 = vector.extract_strided_slice %224 {offsets = [9, 0], sizes = [1, 32], strides = [1, 1]} : vector<31x32xf32> to vector<1x32xf32>
    %291 = vector.shape_cast %290 : vector<1x32xf32> to vector<32xf32>
    %292 = vector.shape_cast %291 : vector<32xf32> to vector<1x1x32xf32>
    %293 = vector.broadcast %292 : vector<1x1x32xf32> to vector<1x16x32xf32>
    %294 = arith.mulf %289, %293 : vector<1x16x32xf32>
    %295 = arith.addf %288, %294 : vector<1x16x32xf32>
    %c0_109 = arith.constant 0 : index
    %c10 = arith.constant 10 : index
    %c0_110 = arith.constant 0 : index
    %296 = vector.load %arg39[%c0_109, %c10, %c0_110] : memref<1x46x32xf32, #tpu.memory_space<vmem>>, vector<1x16x32xf32>
    %297 = vector.extract_strided_slice %224 {offsets = [10, 0], sizes = [1, 32], strides = [1, 1]} : vector<31x32xf32> to vector<1x32xf32>
    %298 = vector.shape_cast %297 : vector<1x32xf32> to vector<32xf32>
    %299 = vector.shape_cast %298 : vector<32xf32> to vector<1x1x32xf32>
    %300 = vector.broadcast %299 : vector<1x1x32xf32> to vector<1x16x32xf32>
    %301 = arith.mulf %296, %300 : vector<1x16x32xf32>
    %302 = arith.addf %295, %301 : vector<1x16x32xf32>
    %c0_111 = arith.constant 0 : index
    %c11 = arith.constant 11 : index
    %c0_112 = arith.constant 0 : index
    %303 = vector.load %arg39[%c0_111, %c11, %c0_112] : memref<1x46x32xf32, #tpu.memory_space<vmem>>, vector<1x16x32xf32>
    %304 = vector.extract_strided_slice %224 {offsets = [11, 0], sizes = [1, 32], strides = [1, 1]} : vector<31x32xf32> to vector<1x32xf32>
    %305 = vector.shape_cast %304 : vector<1x32xf32> to vector<32xf32>
    %306 = vector.shape_cast %305 : vector<32xf32> to vector<1x1x32xf32>
    %307 = vector.broadcast %306 : vector<1x1x32xf32> to vector<1x16x32xf32>
    %308 = arith.mulf %303, %307 : vector<1x16x32xf32>
    %309 = arith.addf %302, %308 : vector<1x16x32xf32>
    %c0_113 = arith.constant 0 : index
    %c12 = arith.constant 12 : index
    %c0_114 = arith.constant 0 : index
    %310 = vector.load %arg39[%c0_113, %c12, %c0_114] : memref<1x46x32xf32, #tpu.memory_space<vmem>>, vector<1x16x32xf32>
    %311 = vector.extract_strided_slice %224 {offsets = [12, 0], sizes = [1, 32], strides = [1, 1]} : vector<31x32xf32> to vector<1x32xf32>
    %312 = vector.shape_cast %311 : vector<1x32xf32> to vector<32xf32>
    %313 = vector.shape_cast %312 : vector<32xf32> to vector<1x1x32xf32>
    %314 = vector.broadcast %313 : vector<1x1x32xf32> to vector<1x16x32xf32>
    %315 = arith.mulf %310, %314 : vector<1x16x32xf32>
    %316 = arith.addf %309, %315 : vector<1x16x32xf32>
    %c0_115 = arith.constant 0 : index
    %c13 = arith.constant 13 : index
    %c0_116 = arith.constant 0 : index
    %317 = vector.load %arg39[%c0_115, %c13, %c0_116] : memref<1x46x32xf32, #tpu.memory_space<vmem>>, vector<1x16x32xf32>
    %318 = vector.extract_strided_slice %224 {offsets = [13, 0], sizes = [1, 32], strides = [1, 1]} : vector<31x32xf32> to vector<1x32xf32>
    %319 = vector.shape_cast %318 : vector<1x32xf32> to vector<32xf32>
    %320 = vector.shape_cast %319 : vector<32xf32> to vector<1x1x32xf32>
    %321 = vector.broadcast %320 : vector<1x1x32xf32> to vector<1x16x32xf32>
    %322 = arith.mulf %317, %321 : vector<1x16x32xf32>
    %323 = arith.addf %316, %322 : vector<1x16x32xf32>
    %c0_117 = arith.constant 0 : index
    %c14 = arith.constant 14 : index
    %c0_118 = arith.constant 0 : index
    %324 = vector.load %arg39[%c0_117, %c14, %c0_118] : memref<1x46x32xf32, #tpu.memory_space<vmem>>, vector<1x16x32xf32>
    %325 = vector.extract_strided_slice %224 {offsets = [14, 0], sizes = [1, 32], strides = [1, 1]} : vector<31x32xf32> to vector<1x32xf32>
    %326 = vector.shape_cast %325 : vector<1x32xf32> to vector<32xf32>
    %327 = vector.shape_cast %326 : vector<32xf32> to vector<1x1x32xf32>
    %328 = vector.broadcast %327 : vector<1x1x32xf32> to vector<1x16x32xf32>
    %329 = arith.mulf %324, %328 : vector<1x16x32xf32>
    %330 = arith.addf %323, %329 : vector<1x16x32xf32>
    %c0_119 = arith.constant 0 : index
    %c15_120 = arith.constant 15 : index
    %c0_121 = arith.constant 0 : index
    %331 = vector.load %arg39[%c0_119, %c15_120, %c0_121] : memref<1x46x32xf32, #tpu.memory_space<vmem>>, vector<1x16x32xf32>
    %332 = vector.extract_strided_slice %224 {offsets = [15, 0], sizes = [1, 32], strides = [1, 1]} : vector<31x32xf32> to vector<1x32xf32>
    %333 = vector.shape_cast %332 : vector<1x32xf32> to vector<32xf32>
    %334 = vector.shape_cast %333 : vector<32xf32> to vector<1x1x32xf32>
    %335 = vector.broadcast %334 : vector<1x1x32xf32> to vector<1x16x32xf32>
    %336 = arith.mulf %331, %335 : vector<1x16x32xf32>
    %337 = arith.addf %330, %336 : vector<1x16x32xf32>
    %c0_122 = arith.constant 0 : index
    %c16 = arith.constant 16 : index
    %c0_123 = arith.constant 0 : index
    %338 = vector.load %arg39[%c0_122, %c16, %c0_123] : memref<1x46x32xf32, #tpu.memory_space<vmem>>, vector<1x16x32xf32>
    %339 = vector.extract_strided_slice %224 {offsets = [16, 0], sizes = [1, 32], strides = [1, 1]} : vector<31x32xf32> to vector<1x32xf32>
    %340 = vector.shape_cast %339 : vector<1x32xf32> to vector<32xf32>
    %341 = vector.shape_cast %340 : vector<32xf32> to vector<1x1x32xf32>
    %342 = vector.broadcast %341 : vector<1x1x32xf32> to vector<1x16x32xf32>
    %343 = arith.mulf %338, %342 : vector<1x16x32xf32>
    %344 = arith.addf %337, %343 : vector<1x16x32xf32>
    %c0_124 = arith.constant 0 : index
    %c17 = arith.constant 17 : index
    %c0_125 = arith.constant 0 : index
    %345 = vector.load %arg39[%c0_124, %c17, %c0_125] : memref<1x46x32xf32, #tpu.memory_space<vmem>>, vector<1x16x32xf32>
    %346 = vector.extract_strided_slice %224 {offsets = [17, 0], sizes = [1, 32], strides = [1, 1]} : vector<31x32xf32> to vector<1x32xf32>
    %347 = vector.shape_cast %346 : vector<1x32xf32> to vector<32xf32>
    %348 = vector.shape_cast %347 : vector<32xf32> to vector<1x1x32xf32>
    %349 = vector.broadcast %348 : vector<1x1x32xf32> to vector<1x16x32xf32>
    %350 = arith.mulf %345, %349 : vector<1x16x32xf32>
    %351 = arith.addf %344, %350 : vector<1x16x32xf32>
    %c0_126 = arith.constant 0 : index
    %c18 = arith.constant 18 : index
    %c0_127 = arith.constant 0 : index
    %352 = vector.load %arg39[%c0_126, %c18, %c0_127] : memref<1x46x32xf32, #tpu.memory_space<vmem>>, vector<1x16x32xf32>
    %353 = vector.extract_strided_slice %224 {offsets = [18, 0], sizes = [1, 32], strides = [1, 1]} : vector<31x32xf32> to vector<1x32xf32>
    %354 = vector.shape_cast %353 : vector<1x32xf32> to vector<32xf32>
    %355 = vector.shape_cast %354 : vector<32xf32> to vector<1x1x32xf32>
    %356 = vector.broadcast %355 : vector<1x1x32xf32> to vector<1x16x32xf32>
    %357 = arith.mulf %352, %356 : vector<1x16x32xf32>
    %358 = arith.addf %351, %357 : vector<1x16x32xf32>
    %c0_128 = arith.constant 0 : index
    %c19 = arith.constant 19 : index
    %c0_129 = arith.constant 0 : index
    %359 = vector.load %arg39[%c0_128, %c19, %c0_129] : memref<1x46x32xf32, #tpu.memory_space<vmem>>, vector<1x16x32xf32>
    %360 = vector.extract_strided_slice %224 {offsets = [19, 0], sizes = [1, 32], strides = [1, 1]} : vector<31x32xf32> to vector<1x32xf32>
    %361 = vector.shape_cast %360 : vector<1x32xf32> to vector<32xf32>
    %362 = vector.shape_cast %361 : vector<32xf32> to vector<1x1x32xf32>
    %363 = vector.broadcast %362 : vector<1x1x32xf32> to vector<1x16x32xf32>
    %364 = arith.mulf %359, %363 : vector<1x16x32xf32>
    %365 = arith.addf %358, %364 : vector<1x16x32xf32>
    %c0_130 = arith.constant 0 : index
    %c20 = arith.constant 20 : index
    %c0_131 = arith.constant 0 : index
    %366 = vector.load %arg39[%c0_130, %c20, %c0_131] : memref<1x46x32xf32, #tpu.memory_space<vmem>>, vector<1x16x32xf32>
    %367 = vector.extract_strided_slice %224 {offsets = [20, 0], sizes = [1, 32], strides = [1, 1]} : vector<31x32xf32> to vector<1x32xf32>
    %368 = vector.shape_cast %367 : vector<1x32xf32> to vector<32xf32>
    %369 = vector.shape_cast %368 : vector<32xf32> to vector<1x1x32xf32>
    %370 = vector.broadcast %369 : vector<1x1x32xf32> to vector<1x16x32xf32>
    %371 = arith.mulf %366, %370 : vector<1x16x32xf32>
    %372 = arith.addf %365, %371 : vector<1x16x32xf32>
    %c0_132 = arith.constant 0 : index
    %c21 = arith.constant 21 : index
    %c0_133 = arith.constant 0 : index
    %373 = vector.load %arg39[%c0_132, %c21, %c0_133] : memref<1x46x32xf32, #tpu.memory_space<vmem>>, vector<1x16x32xf32>
    %374 = vector.extract_strided_slice %224 {offsets = [21, 0], sizes = [1, 32], strides = [1, 1]} : vector<31x32xf32> to vector<1x32xf32>
    %375 = vector.shape_cast %374 : vector<1x32xf32> to vector<32xf32>
    %376 = vector.shape_cast %375 : vector<32xf32> to vector<1x1x32xf32>
    %377 = vector.broadcast %376 : vector<1x1x32xf32> to vector<1x16x32xf32>
    %378 = arith.mulf %373, %377 : vector<1x16x32xf32>
    %379 = arith.addf %372, %378 : vector<1x16x32xf32>
    %c0_134 = arith.constant 0 : index
    %c22 = arith.constant 22 : index
    %c0_135 = arith.constant 0 : index
    %380 = vector.load %arg39[%c0_134, %c22, %c0_135] : memref<1x46x32xf32, #tpu.memory_space<vmem>>, vector<1x16x32xf32>
    %381 = vector.extract_strided_slice %224 {offsets = [22, 0], sizes = [1, 32], strides = [1, 1]} : vector<31x32xf32> to vector<1x32xf32>
    %382 = vector.shape_cast %381 : vector<1x32xf32> to vector<32xf32>
    %383 = vector.shape_cast %382 : vector<32xf32> to vector<1x1x32xf32>
    %384 = vector.broadcast %383 : vector<1x1x32xf32> to vector<1x16x32xf32>
    %385 = arith.mulf %380, %384 : vector<1x16x32xf32>
    %386 = arith.addf %379, %385 : vector<1x16x32xf32>
    %c0_136 = arith.constant 0 : index
    %c23 = arith.constant 23 : index
    %c0_137 = arith.constant 0 : index
    %387 = vector.load %arg39[%c0_136, %c23, %c0_137] : memref<1x46x32xf32, #tpu.memory_space<vmem>>, vector<1x16x32xf32>
    %388 = vector.extract_strided_slice %224 {offsets = [23, 0], sizes = [1, 32], strides = [1, 1]} : vector<31x32xf32> to vector<1x32xf32>
    %389 = vector.shape_cast %388 : vector<1x32xf32> to vector<32xf32>
    %390 = vector.shape_cast %389 : vector<32xf32> to vector<1x1x32xf32>
    %391 = vector.broadcast %390 : vector<1x1x32xf32> to vector<1x16x32xf32>
    %392 = arith.mulf %387, %391 : vector<1x16x32xf32>
    %393 = arith.addf %386, %392 : vector<1x16x32xf32>
    %c0_138 = arith.constant 0 : index
    %c24 = arith.constant 24 : index
    %c0_139 = arith.constant 0 : index
    %394 = vector.load %arg39[%c0_138, %c24, %c0_139] : memref<1x46x32xf32, #tpu.memory_space<vmem>>, vector<1x16x32xf32>
    %395 = vector.extract_strided_slice %224 {offsets = [24, 0], sizes = [1, 32], strides = [1, 1]} : vector<31x32xf32> to vector<1x32xf32>
    %396 = vector.shape_cast %395 : vector<1x32xf32> to vector<32xf32>
    %397 = vector.shape_cast %396 : vector<32xf32> to vector<1x1x32xf32>
    %398 = vector.broadcast %397 : vector<1x1x32xf32> to vector<1x16x32xf32>
    %399 = arith.mulf %394, %398 : vector<1x16x32xf32>
    %400 = arith.addf %393, %399 : vector<1x16x32xf32>
    %c0_140 = arith.constant 0 : index
    %c25 = arith.constant 25 : index
    %c0_141 = arith.constant 0 : index
    %401 = vector.load %arg39[%c0_140, %c25, %c0_141] : memref<1x46x32xf32, #tpu.memory_space<vmem>>, vector<1x16x32xf32>
    %402 = vector.extract_strided_slice %224 {offsets = [25, 0], sizes = [1, 32], strides = [1, 1]} : vector<31x32xf32> to vector<1x32xf32>
    %403 = vector.shape_cast %402 : vector<1x32xf32> to vector<32xf32>
    %404 = vector.shape_cast %403 : vector<32xf32> to vector<1x1x32xf32>
    %405 = vector.broadcast %404 : vector<1x1x32xf32> to vector<1x16x32xf32>
    %406 = arith.mulf %401, %405 : vector<1x16x32xf32>
    %407 = arith.addf %400, %406 : vector<1x16x32xf32>
    %c0_142 = arith.constant 0 : index
    %c26 = arith.constant 26 : index
    %c0_143 = arith.constant 0 : index
    %408 = vector.load %arg39[%c0_142, %c26, %c0_143] : memref<1x46x32xf32, #tpu.memory_space<vmem>>, vector<1x16x32xf32>
    %409 = vector.extract_strided_slice %224 {offsets = [26, 0], sizes = [1, 32], strides = [1, 1]} : vector<31x32xf32> to vector<1x32xf32>
    %410 = vector.shape_cast %409 : vector<1x32xf32> to vector<32xf32>
    %411 = vector.shape_cast %410 : vector<32xf32> to vector<1x1x32xf32>
    %412 = vector.broadcast %411 : vector<1x1x32xf32> to vector<1x16x32xf32>
    %413 = arith.mulf %408, %412 : vector<1x16x32xf32>
    %414 = arith.addf %407, %413 : vector<1x16x32xf32>
    %c0_144 = arith.constant 0 : index
    %c27 = arith.constant 27 : index
    %c0_145 = arith.constant 0 : index
    %415 = vector.load %arg39[%c0_144, %c27, %c0_145] : memref<1x46x32xf32, #tpu.memory_space<vmem>>, vector<1x16x32xf32>
    %416 = vector.extract_strided_slice %224 {offsets = [27, 0], sizes = [1, 32], strides = [1, 1]} : vector<31x32xf32> to vector<1x32xf32>
    %417 = vector.shape_cast %416 : vector<1x32xf32> to vector<32xf32>
    %418 = vector.shape_cast %417 : vector<32xf32> to vector<1x1x32xf32>
    %419 = vector.broadcast %418 : vector<1x1x32xf32> to vector<1x16x32xf32>
    %420 = arith.mulf %415, %419 : vector<1x16x32xf32>
    %421 = arith.addf %414, %420 : vector<1x16x32xf32>
    %c0_146 = arith.constant 0 : index
    %c28 = arith.constant 28 : index
    %c0_147 = arith.constant 0 : index
    %422 = vector.load %arg39[%c0_146, %c28, %c0_147] : memref<1x46x32xf32, #tpu.memory_space<vmem>>, vector<1x16x32xf32>
    %423 = vector.extract_strided_slice %224 {offsets = [28, 0], sizes = [1, 32], strides = [1, 1]} : vector<31x32xf32> to vector<1x32xf32>
    %424 = vector.shape_cast %423 : vector<1x32xf32> to vector<32xf32>
    %425 = vector.shape_cast %424 : vector<32xf32> to vector<1x1x32xf32>
    %426 = vector.broadcast %425 : vector<1x1x32xf32> to vector<1x16x32xf32>
    %427 = arith.mulf %422, %426 : vector<1x16x32xf32>
    %428 = arith.addf %421, %427 : vector<1x16x32xf32>
    %c0_148 = arith.constant 0 : index
    %c29 = arith.constant 29 : index
    %c0_149 = arith.constant 0 : index
    %429 = vector.load %arg39[%c0_148, %c29, %c0_149] : memref<1x46x32xf32, #tpu.memory_space<vmem>>, vector<1x16x32xf32>
    %430 = vector.extract_strided_slice %224 {offsets = [29, 0], sizes = [1, 32], strides = [1, 1]} : vector<31x32xf32> to vector<1x32xf32>
    %431 = vector.shape_cast %430 : vector<1x32xf32> to vector<32xf32>
    %432 = vector.shape_cast %431 : vector<32xf32> to vector<1x1x32xf32>
    %433 = vector.broadcast %432 : vector<1x1x32xf32> to vector<1x16x32xf32>
    %434 = arith.mulf %429, %433 : vector<1x16x32xf32>
    %435 = arith.addf %428, %434 : vector<1x16x32xf32>
    %c0_150 = arith.constant 0 : index
    %c30 = arith.constant 30 : index
    %c0_151 = arith.constant 0 : index
    %436 = vector.load %arg39[%c0_150, %c30, %c0_151] : memref<1x46x32xf32, #tpu.memory_space<vmem>>, vector<1x16x32xf32>
    %437 = vector.extract_strided_slice %224 {offsets = [30, 0], sizes = [1, 32], strides = [1, 1]} : vector<31x32xf32> to vector<1x32xf32>
    %438 = vector.shape_cast %437 : vector<1x32xf32> to vector<32xf32>
    %439 = vector.shape_cast %438 : vector<32xf32> to vector<1x1x32xf32>
    %440 = vector.broadcast %439 : vector<1x1x32xf32> to vector<1x16x32xf32>
    %441 = arith.mulf %436, %440 : vector<1x16x32xf32>
    %442 = arith.addf %435, %441 : vector<1x16x32xf32>
    %443 = vector.shape_cast %442 : vector<1x16x32xf32> to vector<16x32xf32>
    %c0_152 = arith.constant 0 : index
    %c0_153 = arith.constant 0 : index
    %444 = vector.load %arg21[%c0_152, %c0_153] : memref<1x32xf32, #tpu.memory_space<vmem>>, vector<1x32xf32>
    %445 = vector.broadcast %444 : vector<1x32xf32> to vector<16x32xf32>
    %446 = arith.mulf %443, %445 : vector<16x32xf32>
    %c0_154 = arith.constant 0 : index
    %c0_155 = arith.constant 0 : index
    %447 = vector.load %arg22[%c0_154, %c0_155] : memref<1x32xf32, #tpu.memory_space<vmem>>, vector<1x32xf32>
    %448 = vector.broadcast %447 : vector<1x32xf32> to vector<16x32xf32>
    %449 = arith.addf %446, %448 : vector<16x32xf32>
    %450 = arith.negf %449 : vector<16x32xf32>
    %451 = math.exp %450 : vector<16x32xf32>
    %cst_156 = arith.constant 1.000000e+00 : f32
    %452 = vector.broadcast %cst_156 : f32 to vector<16x32xf32>
    %453 = arith.addf %452, %451 : vector<16x32xf32>
    %454 = arith.divf %452, %453 : vector<16x32xf32>
    %455 = arith.mulf %449, %454 : vector<16x32xf32>
    %456 = arith.truncf %455 : vector<16x32xf32> to vector<16x32xbf16>
    %c0_157 = arith.constant 0 : index
    %c0_158 = arith.constant 0 : index
    %457 = vector.load %arg23[%c0_157, %c0_158] : memref<32x32xbf16, #tpu.memory_space<vmem>>, vector<32x32xbf16>
    %cst_159 = arith.constant dense<0.000000e+00> : vector<16x32xf32>
    %458 = tpu.matmul %456, %457, %cst_159 {dimension_numbers = #tpu.dot_dimension_numbers<[1], [0], [0], [1], [0, 0, 1, 1], [], []>} : vector<16x32xbf16>, vector<32x32xbf16>, vector<16x32xf32> -> vector<16x32xf32>
    %c0_160 = arith.constant 0 : index
    %c0_161 = arith.constant 0 : index
    %459 = vector.load %arg24[%c0_160, %c0_161] : memref<1x32xf32, #tpu.memory_space<vmem>>, vector<1x32xf32>
    %460 = vector.broadcast %459 : vector<1x32xf32> to vector<16x32xf32>
    %461 = arith.addf %458, %460 : vector<16x32xf32>
    %462 = arith.addf %177, %461 : vector<16x32xf32>
    %c0_162 = arith.constant 0 : index
    %c0_163 = arith.constant 0 : index
    %463 = vector.load %arg25[%c0_162, %c0_163] : memref<1x32xf32, #tpu.memory_space<vmem>>, vector<1x32xf32>
    %c0_164 = arith.constant 0 : index
    %c0_165 = arith.constant 0 : index
    %464 = vector.load %arg26[%c0_164, %c0_165] : memref<1x32xf32, #tpu.memory_space<vmem>>, vector<1x32xf32>
    %cst_166 = arith.constant dense<0.000000e+00> : vector<16xf32>
    %465 = vector.multi_reduction <add>, %462, %cst_166 [1] : vector<16x32xf32> to vector<16xf32>
    %466 = vector.shape_cast %465 : vector<16xf32> to vector<16x1xf32>
    %cst_167 = arith.constant 3.200000e+01 : f32
    %467 = vector.broadcast %cst_167 : f32 to vector<16x1xf32>
    %468 = arith.divf %466, %467 : vector<16x1xf32>
    %469 = vector.broadcast %468 : vector<16x1xf32> to vector<16x32xf32>
    %470 = arith.subf %462, %469 : vector<16x32xf32>
    %471 = arith.mulf %470, %470 : vector<16x32xf32>
    %cst_168 = arith.constant dense<0.000000e+00> : vector<16xf32>
    %472 = vector.multi_reduction <add>, %471, %cst_168 [1] : vector<16x32xf32> to vector<16xf32>
    %473 = vector.shape_cast %472 : vector<16xf32> to vector<16x1xf32>
    %cst_169 = arith.constant 3.200000e+01 : f32
    %474 = vector.broadcast %cst_169 : f32 to vector<16x1xf32>
    %475 = arith.divf %473, %474 : vector<16x1xf32>
    %476 = vector.broadcast %468 : vector<16x1xf32> to vector<16x32xf32>
    %477 = arith.subf %462, %476 : vector<16x32xf32>
    %cst_170 = arith.constant 9.99999974E-6 : f32
    %478 = vector.broadcast %cst_170 : f32 to vector<16x1xf32>
    %479 = arith.addf %475, %478 : vector<16x1xf32>
    %480 = math.rsqrt %479 : vector<16x1xf32>
    %481 = vector.broadcast %480 : vector<16x1xf32> to vector<16x32xf32>
    %482 = arith.mulf %477, %481 : vector<16x32xf32>
    %483 = vector.broadcast %463 : vector<1x32xf32> to vector<16x32xf32>
    %484 = arith.mulf %482, %483 : vector<16x32xf32>
    %485 = vector.broadcast %464 : vector<1x32xf32> to vector<16x32xf32>
    %486 = arith.addf %484, %485 : vector<16x32xf32>
    %487 = arith.truncf %486 : vector<16x32xf32> to vector<16x32xbf16>
    %cst_171 = arith.constant 0.000000e+00 : f32
    %488 = vector.broadcast %cst_171 : f32 to vector<16x32xf32>
    %c0_172 = arith.constant 0 : index
    %c0_173 = arith.constant 0 : index
    %489 = vector.load %arg27[%c0_172, %c0_173] : memref<32x128xbf16, #tpu.memory_space<vmem>>, vector<32x128xbf16>
    %cst_174 = arith.constant dense<0.000000e+00> : vector<16x128xf32>
    %490 = tpu.matmul %487, %489, %cst_174 {dimension_numbers = #tpu.dot_dimension_numbers<[1], [0], [0], [1], [0, 0, 1, 1], [], []>} : vector<16x32xbf16>, vector<32x128xbf16>, vector<16x128xf32> -> vector<16x128xf32>
    %c0_175 = arith.constant 0 : index
    %c0_176 = arith.constant 0 : index
    %491 = vector.load %arg28[%c0_175, %c0_176] : memref<1x128xf32, #tpu.memory_space<vmem>>, vector<1x128xf32>
    %492 = vector.broadcast %491 : vector<1x128xf32> to vector<16x128xf32>
    %493 = arith.addf %490, %492 : vector<16x128xf32>
    %494 = arith.negf %493 : vector<16x128xf32>
    %495 = math.exp %494 : vector<16x128xf32>
    %cst_177 = arith.constant 1.000000e+00 : f32
    %496 = vector.broadcast %cst_177 : f32 to vector<16x128xf32>
    %497 = arith.addf %496, %495 : vector<16x128xf32>
    %498 = arith.divf %496, %497 : vector<16x128xf32>
    %499 = arith.mulf %493, %498 : vector<16x128xf32>
    %500 = arith.truncf %499 : vector<16x128xf32> to vector<16x128xbf16>
    %c0_178 = arith.constant 0 : index
    %c0_179 = arith.constant 0 : index
    %501 = vector.load %arg29[%c0_178, %c0_179] : memref<128x32xbf16, #tpu.memory_space<vmem>>, vector<128x32xbf16>
    %cst_180 = arith.constant dense<0.000000e+00> : vector<16x32xf32>
    %502 = tpu.matmul %500, %501, %cst_180 {dimension_numbers = #tpu.dot_dimension_numbers<[1], [0], [0], [1], [0, 0, 1, 1], [], []>} : vector<16x128xbf16>, vector<128x32xbf16>, vector<16x32xf32> -> vector<16x32xf32>
    %503 = arith.addf %488, %502 : vector<16x32xf32>
    %c0_181 = arith.constant 0 : index
    %c0_182 = arith.constant 0 : index
    %504 = vector.load %arg30[%c0_181, %c0_182] : memref<1x32xf32, #tpu.memory_space<vmem>>, vector<1x32xf32>
    %505 = vector.broadcast %504 : vector<1x32xf32> to vector<16x32xf32>
    %506 = arith.addf %503, %505 : vector<16x32xf32>
    %cst_183 = arith.constant 5.000000e-01 : f32
    %507 = vector.broadcast %cst_183 : f32 to vector<16x32xf32>
    %508 = arith.mulf %507, %506 : vector<16x32xf32>
    %509 = arith.addf %462, %508 : vector<16x32xf32>
    %c0_184 = arith.constant 0 : index
    %c0_185 = arith.constant 0 : index
    %510 = vector.load %arg31[%c0_184, %c0_185] : memref<1x32xf32, #tpu.memory_space<vmem>>, vector<1x32xf32>
    %c0_186 = arith.constant 0 : index
    %c0_187 = arith.constant 0 : index
    %511 = vector.load %arg32[%c0_186, %c0_187] : memref<1x32xf32, #tpu.memory_space<vmem>>, vector<1x32xf32>
    %cst_188 = arith.constant dense<0.000000e+00> : vector<16xf32>
    %512 = vector.multi_reduction <add>, %509, %cst_188 [1] : vector<16x32xf32> to vector<16xf32>
    %513 = vector.shape_cast %512 : vector<16xf32> to vector<16x1xf32>
    %cst_189 = arith.constant 3.200000e+01 : f32
    %514 = vector.broadcast %cst_189 : f32 to vector<16x1xf32>
    %515 = arith.divf %513, %514 : vector<16x1xf32>
    %516 = vector.broadcast %515 : vector<16x1xf32> to vector<16x32xf32>
    %517 = arith.subf %509, %516 : vector<16x32xf32>
    %518 = arith.mulf %517, %517 : vector<16x32xf32>
    %cst_190 = arith.constant dense<0.000000e+00> : vector<16xf32>
    %519 = vector.multi_reduction <add>, %518, %cst_190 [1] : vector<16x32xf32> to vector<16xf32>
    %520 = vector.shape_cast %519 : vector<16xf32> to vector<16x1xf32>
    %cst_191 = arith.constant 3.200000e+01 : f32
    %521 = vector.broadcast %cst_191 : f32 to vector<16x1xf32>
    %522 = arith.divf %520, %521 : vector<16x1xf32>
    %523 = vector.broadcast %515 : vector<16x1xf32> to vector<16x32xf32>
    %524 = arith.subf %509, %523 : vector<16x32xf32>
    %cst_192 = arith.constant 9.99999974E-6 : f32
    %525 = vector.broadcast %cst_192 : f32 to vector<16x1xf32>
    %526 = arith.addf %522, %525 : vector<16x1xf32>
    %527 = math.rsqrt %526 : vector<16x1xf32>
    %528 = vector.broadcast %527 : vector<16x1xf32> to vector<16x32xf32>
    %529 = arith.mulf %524, %528 : vector<16x32xf32>
    %530 = vector.broadcast %510 : vector<1x32xf32> to vector<16x32xf32>
    %531 = arith.mulf %529, %530 : vector<16x32xf32>
    %532 = vector.broadcast %511 : vector<1x32xf32> to vector<16x32xf32>
    %533 = arith.addf %531, %532 : vector<16x32xf32>
    %534 = arith.truncf %533 : vector<16x32xf32> to vector<16x32xbf16>
    %c0_193 = arith.constant 0 : index
    %c0_194 = arith.constant 0 : index
    %535 = vector.load %arg33[%c0_193, %c0_194] : memref<32x128xbf16, #tpu.memory_space<vmem>>, vector<32x128xbf16>
    %cst_195 = arith.constant dense<0.000000e+00> : vector<16x128xf32>
    %536 = tpu.matmul %534, %535, %cst_195 {dimension_numbers = #tpu.dot_dimension_numbers<[1], [0], [0], [1], [0, 0, 1, 1], [], []>} : vector<16x32xbf16>, vector<32x128xbf16>, vector<16x128xf32> -> vector<16x128xf32>
    %c0_196 = arith.constant 0 : index
    %c0_197 = arith.constant 0 : index
    %537 = vector.load %arg34[%c0_196, %c0_197] : memref<1x128xf32, #tpu.memory_space<vmem>>, vector<1x128xf32>
    %538 = vector.broadcast %537 : vector<1x128xf32> to vector<16x128xf32>
    %539 = arith.addf %536, %538 : vector<16x128xf32>
    %cst_198 = arith.constant dense<0xFF800000> : vector<16xf32>
    %540 = vector.multi_reduction <maximumf>, %539, %cst_198 [1] : vector<16x128xf32> to vector<16xf32>
    %541 = vector.shape_cast %540 : vector<16xf32> to vector<16x1xf32>
    %542 = vector.broadcast %541 : vector<16x1xf32> to vector<16x128xf32>
    %543 = arith.subf %539, %542 : vector<16x128xf32>
    %544 = math.exp %543 : vector<16x128xf32>
    %cst_199 = arith.constant dense<0.000000e+00> : vector<16xf32>
    %545 = vector.multi_reduction <add>, %544, %cst_199 [1] : vector<16x128xf32> to vector<16xf32>
    %546 = vector.shape_cast %545 : vector<16xf32> to vector<16x1xf32>
    %547 = vector.broadcast %546 : vector<16x1xf32> to vector<16x128xf32>
    %548 = arith.divf %544, %547 : vector<16x128xf32>
    %549 = arith.truncf %548 : vector<16x128xf32> to vector<16x128xbf16>
    %c0_200 = arith.constant 0 : index
    %c0_201 = arith.constant 0 : index
    %550 = vector.load %arg35[%c0_200, %c0_201] : memref<128x32xbf16, #tpu.memory_space<vmem>>, vector<128x32xbf16>
    %cst_202 = arith.constant dense<0.000000e+00> : vector<16x32xf32>
    %551 = tpu.matmul %549, %550, %cst_202 {dimension_numbers = #tpu.dot_dimension_numbers<[1], [0], [0], [1], [0, 0, 1, 1], [], []>} : vector<16x128xbf16>, vector<128x32xbf16>, vector<16x32xf32> -> vector<16x32xf32>
    %c0_203 = arith.constant 0 : index
    %c0_204 = arith.constant 0 : index
    %552 = vector.load %arg36[%c0_203, %c0_204] : memref<1x32xf32, #tpu.memory_space<vmem>>, vector<1x32xf32>
    %553 = vector.broadcast %552 : vector<1x32xf32> to vector<16x32xf32>
    %554 = arith.addf %551, %553 : vector<16x32xf32>
    %555 = arith.addf %533, %554 : vector<16x32xf32>
    %c0_205 = arith.constant 0 : index
    %c0_206 = arith.constant 0 : index
    %556 = vector.load %arg37[%c0_205, %c0_206] : memref<16x32xf32, #tpu.memory_space<vmem>>, vector<16x32xf32>
    tpu.vector_store %arg37[%c0_205, %c0_206], %555 {strides = array<i32>} : memref<16x32xf32, #tpu.memory_space<vmem>>, vector<16x32xf32>,
    %c0_207 = arith.constant 0 : index
    %c0_208 = arith.constant 0 : index
    %557 = vector.load %arg38[%c0_207, %c0_208] : memref<16x128xf32, #tpu.memory_space<vmem>>, vector<16x128xf32>
    tpu.vector_store %arg38[%c0_207, %c0_208], %539 {strides = array<i32>} : memref<16x128xf32, #tpu.memory_space<vmem>>, vector<16x128xf32>,
    return
  }
  func.func @transform_0(%arg0: i32) -> (i32, i32) {
    %c0_i32 = arith.constant 0 : i32
    %c0_i32_0 = arith.constant 0 : i32
    return %arg0, %c0_i32 : i32, i32
  }
  func.func @transform_1(%arg0: i32) -> (i32, i32) {
    %c0_i32 = arith.constant 0 : i32
    %c0_i32_0 = arith.constant 0 : i32
    %c0_i32_1 = arith.constant 0 : i32
    return %c0_i32, %c0_i32_0 : i32, i32
  }
  func.func @transform_2(%arg0: i32) -> (i32, i32) {
    %c0_i32 = arith.constant 0 : i32
    %c0_i32_0 = arith.constant 0 : i32
    %c0_i32_1 = arith.constant 0 : i32
    return %c0_i32, %c0_i32_0 : i32, i32
  }
  func.func @transform_3(%arg0: i32) -> (i32, i32) {
    %c0_i32 = arith.constant 0 : i32
    %c0_i32_0 = arith.constant 0 : i32
    %c0_i32_1 = arith.constant 0 : i32
    return %c0_i32, %c0_i32_0 : i32, i32
  }
  func.func @transform_4(%arg0: i32) -> (i32, i32) {
    %c0_i32 = arith.constant 0 : i32
    %c0_i32_0 = arith.constant 0 : i32
    %c0_i32_1 = arith.constant 0 : i32
    return %c0_i32, %c0_i32_0 : i32, i32
  }
  func.func @transform_5(%arg0: i32) -> (i32, i32) {
    %c0_i32 = arith.constant 0 : i32
    %c0_i32_0 = arith.constant 0 : i32
    %c0_i32_1 = arith.constant 0 : i32
    return %c0_i32, %c0_i32_0 : i32, i32
  }
  func.func @transform_6(%arg0: i32) -> (i32, i32) {
    %c0_i32 = arith.constant 0 : i32
    %c0_i32_0 = arith.constant 0 : i32
    %c0_i32_1 = arith.constant 0 : i32
    return %c0_i32, %c0_i32_0 : i32, i32
  }
  func.func @transform_7(%arg0: i32) -> (i32, i32) {
    %c0_i32 = arith.constant 0 : i32
    %c0_i32_0 = arith.constant 0 : i32
    %c0_i32_1 = arith.constant 0 : i32
    return %c0_i32, %c0_i32_0 : i32, i32
  }
  func.func @transform_8(%arg0: i32) -> (i32, i32) {
    %c0_i32 = arith.constant 0 : i32
    %c0_i32_0 = arith.constant 0 : i32
    %c0_i32_1 = arith.constant 0 : i32
    return %c0_i32, %c0_i32_0 : i32, i32
  }
  func.func @transform_9(%arg0: i32) -> (i32, i32) {
    %c0_i32 = arith.constant 0 : i32
    %c0_i32_0 = arith.constant 0 : i32
    %c0_i32_1 = arith.constant 0 : i32
    return %c0_i32, %c0_i32_0 : i32, i32
  }
  func.func @transform_10(%arg0: i32) -> (i32, i32) {
    %c0_i32 = arith.constant 0 : i32
    %c0_i32_0 = arith.constant 0 : i32
    %c0_i32_1 = arith.constant 0 : i32
    return %c0_i32, %c0_i32_0 : i32, i32
  }
  func.func @transform_11(%arg0: i32) -> (i32, i32) {
    %c0_i32 = arith.constant 0 : i32
    %c0_i32_0 = arith.constant 0 : i32
    %c0_i32_1 = arith.constant 0 : i32
    return %c0_i32, %c0_i32_0 : i32, i32
  }
  func.func @transform_12(%arg0: i32) -> (i32, i32) {
    %c0_i32 = arith.constant 0 : i32
    %c0_i32_0 = arith.constant 0 : i32
    %c0_i32_1 = arith.constant 0 : i32
    return %c0_i32, %c0_i32_0 : i32, i32
  }
  func.func @transform_13(%arg0: i32) -> (i32, i32) {
    %c0_i32 = arith.constant 0 : i32
    %c0_i32_0 = arith.constant 0 : i32
    %c0_i32_1 = arith.constant 0 : i32
    return %c0_i32, %c0_i32_0 : i32, i32
  }
  func.func @transform_14(%arg0: i32) -> (i32, i32) {
    %c0_i32 = arith.constant 0 : i32
    %c0_i32_0 = arith.constant 0 : i32
    %c0_i32_1 = arith.constant 0 : i32
    return %c0_i32, %c0_i32_0 : i32, i32
  }
  func.func @transform_15(%arg0: i32) -> (i32, i32) {
    %c0_i32 = arith.constant 0 : i32
    %c0_i32_0 = arith.constant 0 : i32
    %c0_i32_1 = arith.constant 0 : i32
    return %c0_i32, %c0_i32_0 : i32, i32
  }
  func.func @transform_16(%arg0: i32) -> (i32, i32) {
    %c0_i32 = arith.constant 0 : i32
    %c0_i32_0 = arith.constant 0 : i32
    %c0_i32_1 = arith.constant 0 : i32
    return %c0_i32, %c0_i32_0 : i32, i32
  }
  func.func @transform_17(%arg0: i32) -> (i32, i32) {
    %c0_i32 = arith.constant 0 : i32
    %c0_i32_0 = arith.constant 0 : i32
    %c0_i32_1 = arith.constant 0 : i32
    return %c0_i32, %c0_i32_0 : i32, i32
  }
  func.func @transform_18(%arg0: i32) -> (i32, i32) {
    %c0_i32 = arith.constant 0 : i32
    %c0_i32_0 = arith.constant 0 : i32
    %c0_i32_1 = arith.constant 0 : i32
    return %c0_i32, %c0_i32_0 : i32, i32
  }
  func.func @transform_19(%arg0: i32) -> (i32, i32) {
    %c0_i32 = arith.constant 0 : i32
    %c0_i32_0 = arith.constant 0 : i32
    %c0_i32_1 = arith.constant 0 : i32
    return %c0_i32, %c0_i32_0 : i32, i32
  }
  func.func @transform_20(%arg0: i32) -> (i32, i32) {
    %c0_i32 = arith.constant 0 : i32
    %c0_i32_0 = arith.constant 0 : i32
    %c0_i32_1 = arith.constant 0 : i32
    return %c0_i32, %c0_i32_0 : i32, i32
  }
  func.func @transform_21(%arg0: i32) -> (i32, i32) {
    %c0_i32 = arith.constant 0 : i32
    %c0_i32_0 = arith.constant 0 : i32
    %c0_i32_1 = arith.constant 0 : i32
    return %c0_i32, %c0_i32_0 : i32, i32
  }
  func.func @transform_22(%arg0: i32) -> (i32, i32) {
    %c0_i32 = arith.constant 0 : i32
    %c0_i32_0 = arith.constant 0 : i32
    %c0_i32_1 = arith.constant 0 : i32
    return %c0_i32, %c0_i32_0 : i32, i32
  }
  func.func @transform_23(%arg0: i32) -> (i32, i32) {
    %c0_i32 = arith.constant 0 : i32
    %c0_i32_0 = arith.constant 0 : i32
    %c0_i32_1 = arith.constant 0 : i32
    return %c0_i32, %c0_i32_0 : i32, i32
  }
  func.func @transform_24(%arg0: i32) -> (i32, i32) {
    %c0_i32 = arith.constant 0 : i32
    %c0_i32_0 = arith.constant 0 : i32
    %c0_i32_1 = arith.constant 0 : i32
    return %c0_i32, %c0_i32_0 : i32, i32
  }
  func.func @transform_25(%arg0: i32) -> (i32, i32) {
    %c0_i32 = arith.constant 0 : i32
    %c0_i32_0 = arith.constant 0 : i32
    %c0_i32_1 = arith.constant 0 : i32
    return %c0_i32, %c0_i32_0 : i32, i32
  }
  func.func @transform_26(%arg0: i32) -> (i32, i32) {
    %c0_i32 = arith.constant 0 : i32
    %c0_i32_0 = arith.constant 0 : i32
    %c0_i32_1 = arith.constant 0 : i32
    return %c0_i32, %c0_i32_0 : i32, i32
  }
  func.func @transform_27(%arg0: i32) -> (i32, i32) {
    %c0_i32 = arith.constant 0 : i32
    %c0_i32_0 = arith.constant 0 : i32
    %c0_i32_1 = arith.constant 0 : i32
    return %c0_i32, %c0_i32_0 : i32, i32
  }
  func.func @transform_28(%arg0: i32) -> (i32, i32) {
    %c0_i32 = arith.constant 0 : i32
    %c0_i32_0 = arith.constant 0 : i32
    %c0_i32_1 = arith.constant 0 : i32
    return %c0_i32, %c0_i32_0 : i32, i32
  }
  func.func @transform_29(%arg0: i32) -> (i32, i32) {
    %c0_i32 = arith.constant 0 : i32
    %c0_i32_0 = arith.constant 0 : i32
    %c0_i32_1 = arith.constant 0 : i32
    return %c0_i32, %c0_i32_0 : i32, i32
  }
  func.func @transform_30(%arg0: i32) -> (i32, i32) {
    %c0_i32 = arith.constant 0 : i32
    %c0_i32_0 = arith.constant 0 : i32
    %c0_i32_1 = arith.constant 0 : i32
    return %c0_i32, %c0_i32_0 : i32, i32
  }
  func.func @transform_31(%arg0: i32) -> (i32, i32) {
    %c0_i32 = arith.constant 0 : i32
    %c0_i32_0 = arith.constant 0 : i32
    %c0_i32_1 = arith.constant 0 : i32
    return %c0_i32, %c0_i32_0 : i32, i32
  }
  func.func @transform_32(%arg0: i32) -> (i32, i32) {
    %c0_i32 = arith.constant 0 : i32
    %c0_i32_0 = arith.constant 0 : i32
    %c0_i32_1 = arith.constant 0 : i32
    return %c0_i32, %c0_i32_0 : i32, i32
  }
  func.func @transform_33(%arg0: i32) -> (i32, i32) {
    %c0_i32 = arith.constant 0 : i32
    %c0_i32_0 = arith.constant 0 : i32
    %c0_i32_1 = arith.constant 0 : i32
    return %c0_i32, %c0_i32_0 : i32, i32
  }
  func.func @transform_34(%arg0: i32) -> (i32, i32) {
    %c0_i32 = arith.constant 0 : i32
    %c0_i32_0 = arith.constant 0 : i32
    %c0_i32_1 = arith.constant 0 : i32
    return %c0_i32, %c0_i32_0 : i32, i32
  }
  func.func @transform_35(%arg0: i32) -> (i32, i32) {
    %c0_i32 = arith.constant 0 : i32
    %c0_i32_0 = arith.constant 0 : i32
    %c0_i32_1 = arith.constant 0 : i32
    return %c0_i32, %c0_i32_0 : i32, i32
  }
  func.func @transform_36(%arg0: i32) -> (i32, i32) {
    %c0_i32 = arith.constant 0 : i32
    %c0_i32_0 = arith.constant 0 : i32
    return %arg0, %c0_i32 : i32, i32
  }
  func.func @transform_37(%arg0: i32) -> (i32, i32) {
    %c0_i32 = arith.constant 0 : i32
    %c0_i32_0 = arith.constant 0 : i32
    return %arg0, %c0_i32 : i32, i32
  }
}

</mosaic_0001>

<llo_original>
// kernel: tpu_custom_call.1
$region0: #{tpu_custom_call.1}
  #allocation0 [shape = 'u32[]', space=smem, size = 0x4, offset = 0x4, fixed_abs, tag = 'smem constant byte address 0x4 - core index']
  #allocation1 [shape = 'u32[144,128]{1,0:T(1,128)}', space=vmem, size = 0x12000, scoped, tag = 'internal scratch']
  #allocation2 [shape = 'f32[1,46,32]{2,1,0:T(8,128)}', space=vmem, size = 0x6000, scoped, tag = 'scratch operand']
  %s0 = inlined_call_operand.smem [shape: u32[38], index: -1, kind: input, shape index: {}]
  %s1 = sld [smem:[%s0]]
  %s2 = scalar_lea.smem %s0, 1
  %s3 = sld [smem:[%s2]]
  %s4 = scalar_lea.smem %s0, 2
  %s5 = sld [smem:[%s4]]
  %s6 = scalar_lea.smem %s0, 3
  %s7 = sld [smem:[%s6]]
  %s8 = scalar_lea.smem %s0, 4
  %s9 = sld [smem:[%s8]]
  %s10 = scalar_lea.smem %s0, 5
  %s11 = sld [smem:[%s10]]
  %s12 = scalar_lea.smem %s0, 6
  %s13 = sld [smem:[%s12]]
  %s14 = scalar_lea.smem %s0, 7
  %s15 = sld [smem:[%s14]]
  %s16 = scalar_lea.smem %s0, 8
  %s17 = sld [smem:[%s16]]
  %s18 = scalar_lea.smem %s0, 9
  %s19 = sld [smem:[%s18]]
  %s20 = scalar_lea.smem %s0, 10
  %s21 = sld [smem:[%s20]]
  %s22 = scalar_lea.smem %s0, 11
  %s23 = sld [smem:[%s22]]
  %s24 = scalar_lea.smem %s0, 12
  %s25 = sld [smem:[%s24]]
  %s26 = scalar_lea.smem %s0, 13
  %s27 = sld [smem:[%s26]]
  %s28 = scalar_lea.smem %s0, 14
  %s29 = sld [smem:[%s28]]
  %s30 = scalar_lea.smem %s0, 15
  %s31 = sld [smem:[%s30]]
  %s32 = scalar_lea.smem %s0, 16
  %s33 = sld [smem:[%s32]]
  %s34 = scalar_lea.smem %s0, 17
  %s35 = sld [smem:[%s34]]
  %s36 = scalar_lea.smem %s0, 18
  %s37 = sld [smem:[%s36]]
  %s38 = scalar_lea.smem %s0, 19
  %s39 = sld [smem:[%s38]]
  %s40 = scalar_lea.smem %s0, 20
  %s41 = sld [smem:[%s40]]
  %s42 = scalar_lea.smem %s0, 21
  %s43 = sld [smem:[%s42]]
  %s44 = scalar_lea.smem %s0, 22
  %s45 = sld [smem:[%s44]]
  %s46 = scalar_lea.smem %s0, 23
  %s47 = sld [smem:[%s46]]
  %s48 = scalar_lea.smem %s0, 24
  %s49 = sld [smem:[%s48]]
  %s50 = scalar_lea.smem %s0, 25
  %s51 = sld [smem:[%s50]]
  %s52 = scalar_lea.smem %s0, 26
  %s53 = sld [smem:[%s52]]
  %s54 = scalar_lea.smem %s0, 27
  %s55 = sld [smem:[%s54]]
  %s56 = scalar_lea.smem %s0, 28
  %s57 = sld [smem:[%s56]]
  %s58 = scalar_lea.smem %s0, 29
  %s59 = sld [smem:[%s58]]
  %s60 = scalar_lea.smem %s0, 30
  %s61 = sld [smem:[%s60]]
  %s62 = scalar_lea.smem %s0, 31
  %s63 = sld [smem:[%s62]]
  %s64 = scalar_lea.smem %s0, 32
  %s65 = sld [smem:[%s64]]
  %s66 = scalar_lea.smem %s0, 33
  %s67 = sld [smem:[%s66]]
  %s68 = scalar_lea.smem %s0, 34
  %s69 = sld [smem:[%s68]]
  %s70 = scalar_lea.smem %s0, 35
  %s71 = sld [smem:[%s70]]
  %s72 = scalar_lea.smem %s0, 36
  %s73 = sld [smem:[%s72]]
  %s74 = scalar_lea.smem %s0, 37
  %s75 = sld [smem:[%s74]]
  %76 = xla_tuple %s73, %s75
  %s77 = sld [smem:[#allocation0]]
  $region185: #{tpu_custom_call.1} parent=0
    _
  %s79 = ssub.s32 1, %s77
  %s80 = scalar_select 0, %s79, %s77
  $region1: #{tpu_custom_call.1} parent=0
    #allocation3 [shape = 'u8[16384]{0}', space=vmem, size = 0x4000, scoped, tag = 'output window, operand 0']
    #allocation4 [shape = 's32[2]{0}', space=sflag, size = 0x8, scoped, tag = 'scoped memory for tpu_custom_call.1']
    #allocation5 [shape = 'u8[16384]{0}', space=vmem, size = 0x4000, scoped, tag = 'output window, operand 1']
    #allocation6 [shape = 's32[2]{0}', space=sflag, size = 0x8, scoped, tag = 'scoped memory for tpu_custom_call.1']
    %81 = vsyncpa [#allocation4], 0
    %s82 = scalar_lea.sflag [#allocation4], 1
    %83 = vsyncpa %s82, 0
    %84 = vsyncpa [#allocation6], 0
    %s85 = scalar_lea.sflag [#allocation6], 1
    %86 = vsyncpa %s85, 0
    loop: start=0, step=1, limit=4
    $region2: #{tpu_custom_call.1} parent=1 // loop_pre_header
      _
    $region3: #{tpu_custom_call.1} parent=1 // loop_header
      %s88 = sphi 0, %s92
      %p89 = scmp.ge.s32.totalorder %s88, 4
      %s98 = sphi 0, %s100
      %s101 = sphi 0, %s98
      %s102 = sphi 0, %s101
      %s118 = sphi 0, %s102
      %s122 = sphi 0, %s122
      %s124 = sphi 0, %s122
      %s125 = sphi 0, %s124
      %s139 = sphi 0, %s125
      %s143 = sphi 0, %s143
      %s145 = sphi 0, %s143
      %s146 = sphi 0, %s145
      %s160 = sphi 0, %s146
      %s164 = sphi 0, %s164
      %s166 = sphi 0, %s164
      %s167 = sphi 0, %s166
      %s181 = sphi 0, %s167
      %s185 = sphi 0, %s185
      %s187 = sphi 0, %s185
      %s188 = sphi 0, %s187
      %s202 = sphi 0, %s188
      %s206 = sphi 0, %s206
      %s208 = sphi 0, %s206
      %s209 = sphi 0, %s208
      %s223 = sphi 0, %s209
      %s227 = sphi 0, %s227
      %s229 = sphi 0, %s227
      %s230 = sphi 0, %s229
      %s244 = sphi 0, %s230
      %s248 = sphi 0, %s248
      %s250 = sphi 0, %s248
      %s251 = sphi 0, %s250
      %s265 = sphi 0, %s251
      %s269 = sphi 0, %s269
      %s271 = sphi 0, %s269
      %s272 = sphi 0, %s271
      %s286 = sphi 0, %s272
      %s290 = sphi 0, %s290
      %s292 = sphi 0, %s290
      %s293 = sphi 0, %s292
      %s307 = sphi 0, %s293
      %s311 = sphi 0, %s311
      %s313 = sphi 0, %s311
      %s314 = sphi 0, %s313
      %s328 = sphi 0, %s314
      %s332 = sphi 0, %s332
      %s334 = sphi 0, %s332
      %s335 = sphi 0, %s334
      %s349 = sphi 0, %s335
      %s353 = sphi 0, %s353
      %s355 = sphi 0, %s353
      %s356 = sphi 0, %s355
      %s370 = sphi 0, %s356
      %s374 = sphi 0, %s374
      %s376 = sphi 0, %s374
      %s377 = sphi 0, %s376
      %s391 = sphi 0, %s377
      %s395 = sphi 0, %s395
      %s397 = sphi 0, %s395
      %s398 = sphi 0, %s397
      %s412 = sphi 0, %s398
      %s416 = sphi 0, %s416
      %s418 = sphi 0, %s416
      %s419 = sphi 0, %s418
      %s433 = sphi 0, %s419
      %s437 = sphi 0, %s437
      %s439 = sphi 0, %s437
      %s440 = sphi 0, %s439
      %s454 = sphi 0, %s440
      %s458 = sphi 0, %s458
      %s460 = sphi 0, %s458
      %s461 = sphi 0, %s460
      %s475 = sphi 0, %s461
      %s479 = sphi 0, %s479
      %s481 = sphi 0, %s479
      %s482 = sphi 0, %s481
      %s496 = sphi 0, %s482
      %s500 = sphi 0, %s500
      %s502 = sphi 0, %s500
      %s503 = sphi 0, %s502
      %s517 = sphi 0, %s503
      %s521 = sphi 0, %s521
      %s523 = sphi 0, %s521
      %s524 = sphi 0, %s523
      %s538 = sphi 0, %s524
      %s542 = sphi 0, %s542
      %s544 = sphi 0, %s542
      %s545 = sphi 0, %s544
      %s559 = sphi 0, %s545
      %s563 = sphi 0, %s563
      %s565 = sphi 0, %s563
      %s566 = sphi 0, %s565
      %s580 = sphi 0, %s566
      %s584 = sphi 0, %s584
      %s586 = sphi 0, %s584
      %s587 = sphi 0, %s586
      %s601 = sphi 0, %s587
      %s605 = sphi 0, %s605
      %s607 = sphi 0, %s605
      %s608 = sphi 0, %s607
      %s622 = sphi 0, %s608
      %s626 = sphi 0, %s626
      %s628 = sphi 0, %s626
      %s629 = sphi 0, %s628
      %s643 = sphi 0, %s629
      %s647 = sphi 0, %s647
      %s649 = sphi 0, %s647
      %s650 = sphi 0, %s649
      %s664 = sphi 0, %s650
      %s668 = sphi 0, %s668
      %s670 = sphi 0, %s668
      %s671 = sphi 0, %s670
      %s685 = sphi 0, %s671
      %s689 = sphi 0, %s689
      %s691 = sphi 0, %s689
      %s692 = sphi 0, %s691
      %s706 = sphi 0, %s692
      %s710 = sphi 0, %s710
      %s712 = sphi 0, %s710
      %s713 = sphi 0, %s712
      %s727 = sphi 0, %s713
      %s731 = sphi 0, %s731
      %s733 = sphi 0, %s731
      %s734 = sphi 0, %s733
      %s748 = sphi 0, %s734
      %s752 = sphi 0, %s752
      %s754 = sphi 0, %s752
      %s755 = sphi 0, %s754
      %s769 = sphi 0, %s755
      %s773 = sphi 0, %s773
      %s775 = sphi 0, %s773
      %s776 = sphi 0, %s775
      %s790 = sphi 0, %s776
      %s794 = sphi 0, %s794
      %s796 = sphi 0, %s794
      %s797 = sphi 0, %s796
      %s811 = sphi 0, %s797
      %s815 = sphi 0, %s815
      %s817 = sphi 0, %s815
      %s818 = sphi 0, %s817
      %s832 = sphi 0, %s818
      %s836 = sphi 0, %s836
      %s838 = sphi 0, %s836
      %s839 = sphi 0, %s838
      %s853 = sphi 0, %s839
      %s859 = sphi 0, %s861
      %s862 = sphi 0, %s859
      %s863 = sphi 0, %s862
      %s879 = sphi 0, %s863
      %s885 = sphi 0, %s887
      %s888 = sphi 0, %s885
      %s889 = sphi 0, %s888
      %s905 = sphi 0, %s889
    $region4: #{tpu_custom_call.1} parent=1 // loop_header_branch
      %91 = sbr.rel (%p89) target = $region8
    $region5: #{tpu_custom_call.1} parent=1 // loop_body
      %s93 = ssub.s32 %s88, 1
      %s94 = ssub.s32 %s88, 2
      %s95 = sadd.s32 %s88, 1
      %s96 = ssub.s32 %s88, %s95
      %p97 = scmp.eq.s32.totalorder %s96, 0
      %s99 = sadd.s32 %s98, 1
      %s100 = scalar_select %p97, %s98, %s99
      %p103 = pneg %p97
      %p104 = scmp.eq.s32.totalorder %s88, 1
      %p105 = por %p103, %p104
      %p106 = scmp.ne.s32.totalorder %s98, %s101
      %p107 = scmp.eq.s32.totalorder %s88, 0
      %p108 = por %p106, %p107
      %p109 = scmp.ne.s32.totalorder %s98, %s101
      %p110 = scmp.eq.s32.totalorder %s93, 1
      %p111 = por %p109, %p110
      %p112 = scmp.ne.s32.totalorder %s101, %s102
      %p113 = scmp.eq.s32.totalorder %s93, 0
      %p114 = por %p112, %p113
      %p115 = scmp.ne.s32.totalorder %s101, %s102
      %p116 = scmp.eq.s32.totalorder %s94, 1
      %p117 = por %p115, %p116
      %p119 = scmp.ne.s32.totalorder %s102, %s118
      %p120 = scmp.eq.s32.totalorder %s94, 0
      %p121 = por %p119, %p120
      %s123 = sadd.s32 %s122, 1
      %p126 = scmp.eq.s32.totalorder %s88, 1
      %p127 = scmp.ne.s32.totalorder %s122, %s124
      %p128 = scmp.eq.s32.totalorder %s88, 0
      %p129 = por %p127, %p128
      %p130 = scmp.ne.s32.totalorder %s122, %s124
      %p131 = scmp.eq.s32.totalorder %s93, 1
      %p132 = por %p130, %p131
      %p133 = scmp.ne.s32.totalorder %s124, %s125
      %p134 = scmp.eq.s32.totalorder %s93, 0
      %p135 = por %p133, %p134
      %p136 = scmp.ne.s32.totalorder %s124, %s125
      %p137 = scmp.eq.s32.totalorder %s94, 1
      %p138 = por %p136, %p137
      %p140 = scmp.ne.s32.totalorder %s125, %s139
      %p141 = scmp.eq.s32.totalorder %s94, 0
      %p142 = por %p140, %p141
      %s144 = sadd.s32 %s143, 1
      %p147 = scmp.eq.s32.totalorder %s88, 1
      %p148 = scmp.ne.s32.totalorder %s143, %s145
      %p149 = scmp.eq.s32.totalorder %s88, 0
      %p150 = por %p148, %p149
      %p151 = scmp.ne.s32.totalorder %s143, %s145
      %p152 = scmp.eq.s32.totalorder %s93, 1
      %p153 = por %p151, %p152
      %p154 = scmp.ne.s32.totalorder %s145, %s146
      %p155 = scmp.eq.s32.totalorder %s93, 0
      %p156 = por %p154, %p155
      %p157 = scmp.ne.s32.totalorder %s145, %s146
      %p158 = scmp.eq.s32.totalorder %s94, 1
      %p159 = por %p157, %p158
      %p161 = scmp.ne.s32.totalorder %s146, %s160
      %p162 = scmp.eq.s32.totalorder %s94, 0
      %p163 = por %p161, %p162
      %s165 = sadd.s32 %s164, 1
      %p168 = scmp.eq.s32.totalorder %s88, 1
      %p169 = scmp.ne.s32.totalorder %s164, %s166
      %p170 = scmp.eq.s32.totalorder %s88, 0
      %p171 = por %p169, %p170
      %p172 = scmp.ne.s32.totalorder %s164, %s166
      %p173 = scmp.eq.s32.totalorder %s93, 1
      %p174 = por %p172, %p173
      %p175 = scmp.ne.s32.totalorder %s166, %s167
      %p176 = scmp.eq.s32.totalorder %s93, 0
      %p177 = por %p175, %p176
      %p178 = scmp.ne.s32.totalorder %s166, %s167
      %p179 = scmp.eq.s32.totalorder %s94, 1
      %p180 = por %p178, %p179
      %p182 = scmp.ne.s32.totalorder %s167, %s181
      %p183 = scmp.eq.s32.totalorder %s94, 0
      %p184 = por %p182, %p183
      %s186 = sadd.s32 %s185, 1
      %p189 = scmp.eq.s32.totalorder %s88, 1
      %p190 = scmp.ne.s32.totalorder %s185, %s187
      %p191 = scmp.eq.s32.totalorder %s88, 0
      %p192 = por %p190, %p191
      %p193 = scmp.ne.s32.totalorder %s185, %s187
      %p194 = scmp.eq.s32.totalorder %s93, 1
      %p195 = por %p193, %p194
      %p196 = scmp.ne.s32.totalorder %s187, %s188
      %p197 = scmp.eq.s32.totalorder %s93, 0
      %p198 = por %p196, %p197
      %p199 = scmp.ne.s32.totalorder %s187, %s188
      %p200 = scmp.eq.s32.totalorder %s94, 1
      %p201 = por %p199, %p200
      %p203 = scmp.ne.s32.totalorder %s188, %s202
      %p204 = scmp.eq.s32.totalorder %s94, 0
      %p205 = por %p203, %p204
      %s207 = sadd.s32 %s206, 1
      %p210 = scmp.eq.s32.totalorder %s88, 1
      %p211 = scmp.ne.s32.totalorder %s206, %s208
      %p212 = scmp.eq.s32.totalorder %s88, 0
      %p213 = por %p211, %p212
      %p214 = scmp.ne.s32.totalorder %s206, %s208
      %p215 = scmp.eq.s32.totalorder %s93, 1
      %p216 = por %p214, %p215
      %p217 = scmp.ne.s32.totalorder %s208, %s209
      %p218 = scmp.eq.s32.totalorder %s93, 0
      %p219 = por %p217, %p218
      %p220 = scmp.ne.s32.totalorder %s208, %s209
      %p221 = scmp.eq.s32.totalorder %s94, 1
      %p222 = por %p220, %p221
      %p224 = scmp.ne.s32.totalorder %s209, %s223
      %p225 = scmp.eq.s32.totalorder %s94, 0
      %p226 = por %p224, %p225
      %s228 = sadd.s32 %s227, 1
      %p231 = scmp.eq.s32.totalorder %s88, 1
      %p232 = scmp.ne.s32.totalorder %s227, %s229
      %p233 = scmp.eq.s32.totalorder %s88, 0
      %p234 = por %p232, %p233
      %p235 = scmp.ne.s32.totalorder %s227, %s229
      %p236 = scmp.eq.s32.totalorder %s93, 1
      %p237 = por %p235, %p236
      %p238 = scmp.ne.s32.totalorder %s229, %s230
      %p239 = scmp.eq.s32.totalorder %s93, 0
      %p240 = por %p238, %p239
      %p241 = scmp.ne.s32.totalorder %s229, %s230
      %p242 = scmp.eq.s32.totalorder %s94, 1
      %p243 = por %p241, %p242
      %p245 = scmp.ne.s32.totalorder %s230, %s244
      %p246 = scmp.eq.s32.totalorder %s94, 0
      %p247 = por %p245, %p246
      %s249 = sadd.s32 %s248, 1
      %p252 = scmp.eq.s32.totalorder %s88, 1
      %p253 = scmp.ne.s32.totalorder %s248, %s250
      %p254 = scmp.eq.s32.totalorder %s88, 0
      %p255 = por %p253, %p254
      %p256 = scmp.ne.s32.totalorder %s248, %s250
      %p257 = scmp.eq.s32.totalorder %s93, 1
      %p258 = por %p256, %p257
      %p259 = scmp.ne.s32.totalorder %s250, %s251
      %p260 = scmp.eq.s32.totalorder %s93, 0
      %p261 = por %p259, %p260
      %p262 = scmp.ne.s32.totalorder %s250, %s251
      %p263 = scmp.eq.s32.totalorder %s94, 1
      %p264 = por %p262, %p263
      %p266 = scmp.ne.s32.totalorder %s251, %s265
      %p267 = scmp.eq.s32.totalorder %s94, 0
      %p268 = por %p266, %p267
      %s270 = sadd.s32 %s269, 1
      %p273 = scmp.eq.s32.totalorder %s88, 1
      %p274 = scmp.ne.s32.totalorder %s269, %s271
      %p275 = scmp.eq.s32.totalorder %s88, 0
      %p276 = por %p274, %p275
      %p277 = scmp.ne.s32.totalorder %s269, %s271
      %p278 = scmp.eq.s32.totalorder %s93, 1
      %p279 = por %p277, %p278
      %p280 = scmp.ne.s32.totalorder %s271, %s272
      %p281 = scmp.eq.s32.totalorder %s93, 0
      %p282 = por %p280, %p281
      %p283 = scmp.ne.s32.totalorder %s271, %s272
      %p284 = scmp.eq.s32.totalorder %s94, 1
      %p285 = por %p283, %p284
      %p287 = scmp.ne.s32.totalorder %s272, %s286
      %p288 = scmp.eq.s32.totalorder %s94, 0
      %p289 = por %p287, %p288
      %s291 = sadd.s32 %s290, 1
      %p294 = scmp.eq.s32.totalorder %s88, 1
      %p295 = scmp.ne.s32.totalorder %s290, %s292
      %p296 = scmp.eq.s32.totalorder %s88, 0
      %p297 = por %p295, %p296
      %p298 = scmp.ne.s32.totalorder %s290, %s292
      %p299 = scmp.eq.s32.totalorder %s93, 1
      %p300 = por %p298, %p299
      %p301 = scmp.ne.s32.totalorder %s292, %s293
      %p302 = scmp.eq.s32.totalorder %s93, 0
      %p303 = por %p301, %p302
      %p304 = scmp.ne.s32.totalorder %s292, %s293
      %p305 = scmp.eq.s32.totalorder %s94, 1
      %p306 = por %p304, %p305
      %p308 = scmp.ne.s32.totalorder %s293, %s307
      %p309 = scmp.eq.s32.totalorder %s94, 0
      %p310 = por %p308, %p309
      %s312 = sadd.s32 %s311, 1
      %p315 = scmp.eq.s32.totalorder %s88, 1
      %p316 = scmp.ne.s32.totalorder %s311, %s313
      %p317 = scmp.eq.s32.totalorder %s88, 0
      %p318 = por %p316, %p317
      %p319 = scmp.ne.s32.totalorder %s311, %s313
      %p320 = scmp.eq.s32.totalorder %s93, 1
      %p321 = por %p319, %p320
      %p322 = scmp.ne.s32.totalorder %s313, %s314
      %p323 = scmp.eq.s32.totalorder %s93, 0
      %p324 = por %p322, %p323
      %p325 = scmp.ne.s32.totalorder %s313, %s314
      %p326 = scmp.eq.s32.totalorder %s94, 1
      %p327 = por %p325, %p326
      %p329 = scmp.ne.s32.totalorder %s314, %s328
      %p330 = scmp.eq.s32.totalorder %s94, 0
      %p331 = por %p329, %p330
      %s333 = sadd.s32 %s332, 1
      %p336 = scmp.eq.s32.totalorder %s88, 1
      %p337 = scmp.ne.s32.totalorder %s332, %s334
      %p338 = scmp.eq.s32.totalorder %s88, 0
      %p339 = por %p337, %p338
      %p340 = scmp.ne.s32.totalorder %s332, %s334
      %p341 = scmp.eq.s32.totalorder %s93, 1
      %p342 = por %p340, %p341
      %p343 = scmp.ne.s32.totalorder %s334, %s335
      %p344 = scmp.eq.s32.totalorder %s93, 0
      %p345 = por %p343, %p344
      %p346 = scmp.ne.s32.totalorder %s334, %s335
      %p347 = scmp.eq.s32.totalorder %s94, 1
      %p348 = por %p346, %p347
      %p350 = scmp.ne.s32.totalorder %s335, %s349
      %p351 = scmp.eq.s32.totalorder %s94, 0
      %p352 = por %p350, %p351
      %s354 = sadd.s32 %s353, 1
      %p357 = scmp.eq.s32.totalorder %s88, 1
      %p358 = scmp.ne.s32.totalorder %s353, %s355
      %p359 = scmp.eq.s32.totalorder %s88, 0
      %p360 = por %p358, %p359
      %p361 = scmp.ne.s32.totalorder %s353, %s355
      %p362 = scmp.eq.s32.totalorder %s93, 1
      %p363 = por %p361, %p362
      %p364 = scmp.ne.s32.totalorder %s355, %s356
      %p365 = scmp.eq.s32.totalorder %s93, 0
      %p366 = por %p364, %p365
      %p367 = scmp.ne.s32.totalorder %s355, %s356
      %p368 = scmp.eq.s32.totalorder %s94, 1
      %p369 = por %p367, %p368
      %p371 = scmp.ne.s32.totalorder %s356, %s370
      %p372 = scmp.eq.s32.totalorder %s94, 0
      %p373 = por %p371, %p372
      %s375 = sadd.s32 %s374, 1
      %p378 = scmp.eq.s32.totalorder %s88, 1
      %p379 = scmp.ne.s32.totalorder %s374, %s376
      %p380 = scmp.eq.s32.totalorder %s88, 0
      %p381 = por %p379, %p380
      %p382 = scmp.ne.s32.totalorder %s374, %s376
      %p383 = scmp.eq.s32.totalorder %s93, 1
      %p384 = por %p382, %p383
      %p385 = scmp.ne.s32.totalorder %s376, %s377
      %p386 = scmp.eq.s32.totalorder %s93, 0
      %p387 = por %p385, %p386
      %p388 = scmp.ne.s32.totalorder %s376, %s377
      %p389 = scmp.eq.s32.totalorder %s94, 1
      %p390 = por %p388, %p389
      %p392 = scmp.ne.s32.totalorder %s377, %s391
      %p393 = scmp.eq.s32.totalorder %s94, 0
      %p394 = por %p392, %p393
      %s396 = sadd.s32 %s395, 1
      %p399 = scmp.eq.s32.totalorder %s88, 1
      %p400 = scmp.ne.s32.totalorder %s395, %s397
      %p401 = scmp.eq.s32.totalorder %s88, 0
      %p402 = por %p400, %p401
      %p403 = scmp.ne.s32.totalorder %s395, %s397
      %p404 = scmp.eq.s32.totalorder %s93, 1
      %p405 = por %p403, %p404
      %p406 = scmp.ne.s32.totalorder %s397, %s398
      %p407 = scmp.eq.s32.totalorder %s93, 0
      %p408 = por %p406, %p407
      %p409 = scmp.ne.s32.totalorder %s397, %s398
      %p410 = scmp.eq.s32.totalorder %s94, 1
      %p411 = por %p409, %p410
      %p413 = scmp.ne.s32.totalorder %s398, %s412
      %p414 = scmp.eq.s32.totalorder %s94, 0
      %p415 = por %p413, %p414
      %s417 = sadd.s32 %s416, 1
      %p420 = scmp.eq.s32.totalorder %s88, 1
      %p421 = scmp.ne.s32.totalorder %s416, %s418
      %p422 = scmp.eq.s32.totalorder %s88, 0
      %p423 = por %p421, %p422
      %p424 = scmp.ne.s32.totalorder %s416, %s418
      %p425 = scmp.eq.s32.totalorder %s93, 1
      %p426 = por %p424, %p425
      %p427 = scmp.ne.s32.totalorder %s418, %s419
      %p428 = scmp.eq.s32.totalorder %s93, 0
      %p429 = por %p427, %p428
      %p430 = scmp.ne.s32.totalorder %s418, %s419
      %p431 = scmp.eq.s32.totalorder %s94, 1
      %p432 = por %p430, %p431
      %p434 = scmp.ne.s32.totalorder %s419, %s433
      %p435 = scmp.eq.s32.totalorder %s94, 0
      %p436 = por %p434, %p435
      %s438 = sadd.s32 %s437, 1
      %p441 = scmp.eq.s32.totalorder %s88, 1
      %p442 = scmp.ne.s32.totalorder %s437, %s439
      %p443 = scmp.eq.s32.totalorder %s88, 0
      %p444 = por %p442, %p443
      %p445 = scmp.ne.s32.totalorder %s437, %s439
      %p446 = scmp.eq.s32.totalorder %s93, 1
      %p447 = por %p445, %p446
      %p448 = scmp.ne.s32.totalorder %s439, %s440
      %p449 = scmp.eq.s32.totalorder %s93, 0
      %p450 = por %p448, %p449
      %p451 = scmp.ne.s32.totalorder %s439, %s440
      %p452 = scmp.eq.s32.totalorder %s94, 1
      %p453 = por %p451, %p452
      %p455 = scmp.ne.s32.totalorder %s440, %s454
      %p456 = scmp.eq.s32.totalorder %s94, 0
      %p457 = por %p455, %p456
      %s459 = sadd.s32 %s458, 1
      %p462 = scmp.eq.s32.totalorder %s88, 1
      %p463 = scmp.ne.s32.totalorder %s458, %s460
      %p464 = scmp.eq.s32.totalorder %s88, 0
      %p465 = por %p463, %p464
      %p466 = scmp.ne.s32.totalorder %s458, %s460
      %p467 = scmp.eq.s32.totalorder %s93, 1
      %p468 = por %p466, %p467
      %p469 = scmp.ne.s32.totalorder %s460, %s461
      %p470 = scmp.eq.s32.totalorder %s93, 0
      %p471 = por %p469, %p470
      %p472 = scmp.ne.s32.totalorder %s460, %s461
      %p473 = scmp.eq.s32.totalorder %s94, 1
      %p474 = por %p472, %p473
      %p476 = scmp.ne.s32.totalorder %s461, %s475
      %p477 = scmp.eq.s32.totalorder %s94, 0
      %p478 = por %p476, %p477
      %s480 = sadd.s32 %s479, 1
      %p483 = scmp.eq.s32.totalorder %s88, 1
      %p484 = scmp.ne.s32.totalorder %s479, %s481
      %p485 = scmp.eq.s32.totalorder %s88, 0
      %p486 = por %p484, %p485
      %p487 = scmp.ne.s32.totalorder %s479, %s481
      %p488 = scmp.eq.s32.totalorder %s93, 1
      %p489 = por %p487, %p488
      %p490 = scmp.ne.s32.totalorder %s481, %s482
      %p491 = scmp.eq.s32.totalorder %s93, 0
      %p492 = por %p490, %p491
      %p493 = scmp.ne.s32.totalorder %s481, %s482
      %p494 = scmp.eq.s32.totalorder %s94, 1
      %p495 = por %p493, %p494
      %p497 = scmp.ne.s32.totalorder %s482, %s496
      %p498 = scmp.eq.s32.totalorder %s94, 0
      %p499 = por %p497, %p498
      %s501 = sadd.s32 %s500, 1
      %p504 = scmp.eq.s32.totalorder %s88, 1
      %p505 = scmp.ne.s32.totalorder %s500, %s502
      %p506 = scmp.eq.s32.totalorder %s88, 0
      %p507 = por %p505, %p506
      %p508 = scmp.ne.s32.totalorder %s500, %s502
      %p509 = scmp.eq.s32.totalorder %s93, 1
      %p510 = por %p508, %p509
      %p511 = scmp.ne.s32.totalorder %s502, %s503
      %p512 = scmp.eq.s32.totalorder %s93, 0
      %p513 = por %p511, %p512
      %p514 = scmp.ne.s32.totalorder %s502, %s503
      %p515 = scmp.eq.s32.totalorder %s94, 1
      %p516 = por %p514, %p515
      %p518 = scmp.ne.s32.totalorder %s503, %s517
      %p519 = scmp.eq.s32.totalorder %s94, 0
      %p520 = por %p518, %p519
      %s522 = sadd.s32 %s521, 1
      %p525 = scmp.eq.s32.totalorder %s88, 1
      %p526 = scmp.ne.s32.totalorder %s521, %s523
      %p527 = scmp.eq.s32.totalorder %s88, 0
      %p528 = por %p526, %p527
      %p529 = scmp.ne.s32.totalorder %s521, %s523
      %p530 = scmp.eq.s32.totalorder %s93, 1
      %p531 = por %p529, %p530
      %p532 = scmp.ne.s32.totalorder %s523, %s524
      %p533 = scmp.eq.s32.totalorder %s93, 0
      %p534 = por %p532, %p533
      %p535 = scmp.ne.s32.totalorder %s523, %s524
      %p536 = scmp.eq.s32.totalorder %s94, 1
      %p537 = por %p535, %p536
      %p539 = scmp.ne.s32.totalorder %s524, %s538
      %p540 = scmp.eq.s32.totalorder %s94, 0
      %p541 = por %p539, %p540
      %s543 = sadd.s32 %s542, 1
      %p546 = scmp.eq.s32.totalorder %s88, 1
      %p547 = scmp.ne.s32.totalorder %s542, %s544
      %p548 = scmp.eq.s32.totalorder %s88, 0
      %p549 = por %p547, %p548
      %p550 = scmp.ne.s32.totalorder %s542, %s544
      %p551 = scmp.eq.s32.totalorder %s93, 1
      %p552 = por %p550, %p551
      %p553 = scmp.ne.s32.totalorder %s544, %s545
      %p554 = scmp.eq.s32.totalorder %s93, 0
      %p555 = por %p553, %p554
      %p556 = scmp.ne.s32.totalorder %s544, %s545
      %p557 = scmp.eq.s32.totalorder %s94, 1
      %p558 = por %p556, %p557
      %p560 = scmp.ne.s32.totalorder %s545, %s559
      %p561 = scmp.eq.s32.totalorder %s94, 0
      %p562 = por %p560, %p561
      %s564 = sadd.s32 %s563, 1
      %p567 = scmp.eq.s32.totalorder %s88, 1
      %p568 = scmp.ne.s32.totalorder %s563, %s565
      %p569 = scmp.eq.s32.totalorder %s88, 0
      %p570 = por %p568, %p569
      %p571 = scmp.ne.s32.totalorder %s563, %s565
      %p572 = scmp.eq.s32.totalorder %s93, 1
      %p573 = por %p571, %p572
      %p574 = scmp.ne.s32.totalorder %s565, %s566
      %p575 = scmp.eq.s32.totalorder %s93, 0
      %p576 = por %p574, %p575
      %p577 = scmp.ne.s32.totalorder %s565, %s566
      %p578 = scmp.eq.s32.totalorder %s94, 1
      %p579 = por %p577, %p578
      %p581 = scmp.ne.s32.totalorder %s566, %s580
      %p582 = scmp.eq.s32.totalorder %s94, 0
      %p583 = por %p581, %p582
      %s585 = sadd.s32 %s584, 1
      %p588 = scmp.eq.s32.totalorder %s88, 1
      %p589 = scmp.ne.s32.totalorder %s584, %s586
      %p590 = scmp.eq.s32.totalorder %s88, 0
      %p591 = por %p589, %p590
      %p592 = scmp.ne.s32.totalorder %s584, %s586
      %p593 = scmp.eq.s32.totalorder %s93, 1
      %p594 = por %p592, %p593
      %p595 = scmp.ne.s32.totalorder %s586, %s587
      %p596 = scmp.eq.s32.totalorder %s93, 0
      %p597 = por %p595, %p596
      %p598 = scmp.ne.s32.totalorder %s586, %s587
      %p599 = scmp.eq.s32.totalorder %s94, 1
      %p600 = por %p598, %p599
      %p602 = scmp.ne.s32.totalorder %s587, %s601
      %p603 = scmp.eq.s32.totalorder %s94, 0
      %p604 = por %p602, %p603
      %s606 = sadd.s32 %s605, 1
      %p609 = scmp.eq.s32.totalorder %s88, 1
      %p610 = scmp.ne.s32.totalorder %s605, %s607
      %p611 = scmp.eq.s32.totalorder %s88, 0
      %p612 = por %p610, %p611
      %p613 = scmp.ne.s32.totalorder %s605, %s607
      %p614 = scmp.eq.s32.totalorder %s93, 1
      %p615 = por %p613, %p614
      %p616 = scmp.ne.s32.totalorder %s607, %s608
      %p617 = scmp.eq.s32.totalorder %s93, 0
      %p618 = por %p616, %p617
      %p619 = scmp.ne.s32.totalorder %s607, %s608
      %p620 = scmp.eq.s32.totalorder %s94, 1
      %p621 = por %p619, %p620
      %p623 = scmp.ne.s32.totalorder %s608, %s622
      %p624 = scmp.eq.s32.totalorder %s94, 0
      %p625 = por %p623, %p624
      %s627 = sadd.s32 %s626, 1
      %p630 = scmp.eq.s32.totalorder %s88, 1
      %p631 = scmp.ne.s32.totalorder %s626, %s628
      %p632 = scmp.eq.s32.totalorder %s88, 0
      %p633 = por %p631, %p632
      %p634 = scmp.ne.s32.totalorder %s626, %s628
      %p635 = scmp.eq.s32.totalorder %s93, 1
      %p636 = por %p634, %p635
      %p637 = scmp.ne.s32.totalorder %s628, %s629
      %p638 = scmp.eq.s32.totalorder %s93, 0
      %p639 = por %p637, %p638
      %p640 = scmp.ne.s32.totalorder %s628, %s629
      %p641 = scmp.eq.s32.totalorder %s94, 1
      %p642 = por %p640, %p641
      %p644 = scmp.ne.s32.totalorder %s629, %s643
      %p645 = scmp.eq.s32.totalorder %s94, 0
      %p646 = por %p644, %p645
      %s648 = sadd.s32 %s647, 1
      %p651 = scmp.eq.s32.totalorder %s88, 1
      %p652 = scmp.ne.s32.totalorder %s647, %s649
      %p653 = scmp.eq.s32.totalorder %s88, 0
      %p654 = por %p652, %p653
      %p655 = scmp.ne.s32.totalorder %s647, %s649
      %p656 = scmp.eq.s32.totalorder %s93, 1
      %p657 = por %p655, %p656
      %p658 = scmp.ne.s32.totalorder %s649, %s650
      %p659 = scmp.eq.s32.totalorder %s93, 0
      %p660 = por %p658, %p659
      %p661 = scmp.ne.s32.totalorder %s649, %s650
      %p662 = scmp.eq.s32.totalorder %s94, 1
      %p663 = por %p661, %p662
      %p665 = scmp.ne.s32.totalorder %s650, %s664
      %p666 = scmp.eq.s32.totalorder %s94, 0
      %p667 = por %p665, %p666
      %s669 = sadd.s32 %s668, 1
      %p672 = scmp.eq.s32.totalorder %s88, 1
      %p673 = scmp.ne.s32.totalorder %s668, %s670
      %p674 = scmp.eq.s32.totalorder %s88, 0
      %p675 = por %p673, %p674
      %p676 = scmp.ne.s32.totalorder %s668, %s670
      %p677 = scmp.eq.s32.totalorder %s93, 1
      %p678 = por %p676, %p677
      %p679 = scmp.ne.s32.totalorder %s670, %s671
      %p680 = scmp.eq.s32.totalorder %s93, 0
      %p681 = por %p679, %p680
      %p682 = scmp.ne.s32.totalorder %s670, %s671
      %p683 = scmp.eq.s32.totalorder %s94, 1
      %p684 = por %p682, %p683
      %p686 = scmp.ne.s32.totalorder %s671, %s685
      %p687 = scmp.eq.s32.totalorder %s94, 0
      %p688 = por %p686, %p687
      %s690 = sadd.s32 %s689, 1
      %p693 = scmp.eq.s32.totalorder %s88, 1
      %p694 = scmp.ne.s32.totalorder %s689, %s691
      %p695 = scmp.eq.s32.totalorder %s88, 0
      %p696 = por %p694, %p695
      %p697 = scmp.ne.s32.totalorder %s689, %s691
      %p698 = scmp.eq.s32.totalorder %s93, 1
      %p699 = por %p697, %p698
      %p700 = scmp.ne.s32.totalorder %s691, %s692
      %p701 = scmp.eq.s32.totalorder %s93, 0
      %p702 = por %p700, %p701
      %p703 = scmp.ne.s32.totalorder %s691, %s692
      %p704 = scmp.eq.s32.totalorder %s94, 1
      %p705 = por %p703, %p704
      %p707 = scmp.ne.s32.totalorder %s692, %s706
      %p708 = scmp.eq.s32.totalorder %s94, 0
      %p709 = por %p707, %p708
      %s711 = sadd.s32 %s710, 1
      %p714 = scmp.eq.s32.totalorder %s88, 1
      %p715 = scmp.ne.s32.totalorder %s710, %s712
      %p716 = scmp.eq.s32.totalorder %s88, 0
      %p717 = por %p715, %p716
      %p718 = scmp.ne.s32.totalorder %s710, %s712
      %p719 = scmp.eq.s32.totalorder %s93, 1
      %p720 = por %p718, %p719
      %p721 = scmp.ne.s32.totalorder %s712, %s713
      %p722 = scmp.eq.s32.totalorder %s93, 0
      %p723 = por %p721, %p722
      %p724 = scmp.ne.s32.totalorder %s712, %s713
      %p725 = scmp.eq.s32.totalorder %s94, 1
      %p726 = por %p724, %p725
      %p728 = scmp.ne.s32.totalorder %s713, %s727
      %p729 = scmp.eq.s32.totalorder %s94, 0
      %p730 = por %p728, %p729
      %s732 = sadd.s32 %s731, 1
      %p735 = scmp.eq.s32.totalorder %s88, 1
      %p736 = scmp.ne.s32.totalorder %s731, %s733
      %p737 = scmp.eq.s32.totalorder %s88, 0
      %p738 = por %p736, %p737
      %p739 = scmp.ne.s32.totalorder %s731, %s733
      %p740 = scmp.eq.s32.totalorder %s93, 1
      %p741 = por %p739, %p740
      %p742 = scmp.ne.s32.totalorder %s733, %s734
      %p743 = scmp.eq.s32.totalorder %s93, 0
      %p744 = por %p742, %p743
      %p745 = scmp.ne.s32.totalorder %s733, %s734
      %p746 = scmp.eq.s32.totalorder %s94, 1
      %p747 = por %p745, %p746
      %p749 = scmp.ne.s32.totalorder %s734, %s748
      %p750 = scmp.eq.s32.totalorder %s94, 0
      %p751 = por %p749, %p750
      %s753 = sadd.s32 %s752, 1
      %p756 = scmp.eq.s32.totalorder %s88, 1
      %p757 = scmp.ne.s32.totalorder %s752, %s754
      %p758 = scmp.eq.s32.totalorder %s88, 0
      %p759 = por %p757, %p758
      %p760 = scmp.ne.s32.totalorder %s752, %s754
      %p761 = scmp.eq.s32.totalorder %s93, 1
      %p762 = por %p760, %p761
      %p763 = scmp.ne.s32.totalorder %s754, %s755
      %p764 = scmp.eq.s32.totalorder %s93, 0
      %p765 = por %p763, %p764
      %p766 = scmp.ne.s32.totalorder %s754, %s755
      %p767 = scmp.eq.s32.totalorder %s94, 1
      %p768 = por %p766, %p767
      %p770 = scmp.ne.s32.totalorder %s755, %s769
      %p771 = scmp.eq.s32.totalorder %s94, 0
      %p772 = por %p770, %p771
      %s774 = sadd.s32 %s773, 1
      %p777 = scmp.eq.s32.totalorder %s88, 1
      %p778 = scmp.ne.s32.totalorder %s773, %s775
      %p779 = scmp.eq.s32.totalorder %s88, 0
      %p780 = por %p778, %p779
      %p781 = scmp.ne.s32.totalorder %s773, %s775
      %p782 = scmp.eq.s32.totalorder %s93, 1
      %p783 = por %p781, %p782
      %p784 = scmp.ne.s32.totalorder %s775, %s776
      %p785 = scmp.eq.s32.totalorder %s93, 0
      %p786 = por %p784, %p785
      %p787 = scmp.ne.s32.totalorder %s775, %s776
      %p788 = scmp.eq.s32.totalorder %s94, 1
      %p789 = por %p787, %p788
      %p791 = scmp.ne.s32.totalorder %s776, %s790
      %p792 = scmp.eq.s32.totalorder %s94, 0
      %p793 = por %p791, %p792
      %s795 = sadd.s32 %s794, 1
      %p798 = scmp.eq.s32.totalorder %s88, 1
      %p799 = scmp.ne.s32.totalorder %s794, %s796
      %p800 = scmp.eq.s32.totalorder %s88, 0
      %p801 = por %p799, %p800
      %p802 = scmp.ne.s32.totalorder %s794, %s796
      %p803 = scmp.eq.s32.totalorder %s93, 1
      %p804 = por %p802, %p803
      %p805 = scmp.ne.s32.totalorder %s796, %s797
      %p806 = scmp.eq.s32.totalorder %s93, 0
      %p807 = por %p805, %p806
      %p808 = scmp.ne.s32.totalorder %s796, %s797
      %p809 = scmp.eq.s32.totalorder %s94, 1
      %p810 = por %p808, %p809
      %p812 = scmp.ne.s32.totalorder %s797, %s811
      %p813 = scmp.eq.s32.totalorder %s94, 0
      %p814 = por %p812, %p813
      %s816 = sadd.s32 %s815, 1
      %p819 = scmp.eq.s32.totalorder %s88, 1
      %p820 = scmp.ne.s32.totalorder %s815, %s817
      %p821 = scmp.eq.s32.totalorder %s88, 0
      %p822 = por %p820, %p821
      %p823 = scmp.ne.s32.totalorder %s815, %s817
      %p824 = scmp.eq.s32.totalorder %s93, 1
      %p825 = por %p823, %p824
      %p826 = scmp.ne.s32.totalorder %s817, %s818
      %p827 = scmp.eq.s32.totalorder %s93, 0
      %p828 = por %p826, %p827
      %p829 = scmp.ne.s32.totalorder %s817, %s818
      %p830 = scmp.eq.s32.totalorder %s94, 1
      %p831 = por %p829, %p830
      %p833 = scmp.ne.s32.totalorder %s818, %s832
      %p834 = scmp.eq.s32.totalorder %s94, 0
      %p835 = por %p833, %p834
      %s837 = sadd.s32 %s836, 1
      %p840 = scmp.eq.s32.totalorder %s88, 1
      %p841 = scmp.ne.s32.totalorder %s836, %s838
      %p842 = scmp.eq.s32.totalorder %s88, 0
      %p843 = por %p841, %p842
      %p844 = scmp.ne.s32.totalorder %s836, %s838
      %p845 = scmp.eq.s32.totalorder %s93, 1
      %p846 = por %p844, %p845
      %p847 = scmp.ne.s32.totalorder %s838, %s839
      %p848 = scmp.eq.s32.totalorder %s93, 0
      %p849 = por %p847, %p848
      %p850 = scmp.ne.s32.totalorder %s838, %s839
      %p851 = scmp.eq.s32.totalorder %s94, 1
      %p852 = por %p850, %p851
      %p854 = scmp.ne.s32.totalorder %s839, %s853
      %p855 = scmp.eq.s32.totalorder %s94, 0
      %p856 = por %p854, %p855
      %s857 = ssub.s32 %s88, %s95
      %p858 = scmp.eq.s32.totalorder %s857, 0
      %s860 = sadd.s32 %s859, 1
      %s861 = scalar_select %p858, %s859, %s860
      %p864 = pneg %p858
      %p865 = scmp.eq.s32.totalorder %s88, 1
      %p866 = por %p864, %p865
      %p867 = scmp.ne.s32.totalorder %s859, %s862
      %p868 = scmp.eq.s32.totalorder %s88, 0
      %p869 = por %p867, %p868
      %p870 = scmp.ne.s32.totalorder %s859, %s862
      %p871 = scmp.eq.s32.totalorder %s93, 1
      %p872 = por %p870, %p871
      %p873 = scmp.ne.s32.totalorder %s862, %s863
      %p874 = scmp.eq.s32.totalorder %s93, 0
      %p875 = por %p873, %p874
      %p876 = scmp.ne.s32.totalorder %s862, %s863
      %p877 = scmp.eq.s32.totalorder %s94, 1
      %p878 = por %p876, %p877
      %p880 = scmp.ne.s32.totalorder %s863, %s879
      %p881 = scmp.eq.s32.totalorder %s94, 0
      %p882 = por %p880, %p881
      %s883 = ssub.s32 %s88, %s95
      %p884 = scmp.eq.s32.totalorder %s883, 0
      %s886 = sadd.s32 %s885, 1
      %s887 = scalar_select %p884, %s885, %s886
      %p890 = pneg %p884
      %p891 = scmp.eq.s32.totalorder %s88, 1
      %p892 = por %p890, %p891
      %p893 = scmp.ne.s32.totalorder %s885, %s888
      %p894 = scmp.eq.s32.totalorder %s88, 0
      %p895 = por %p893, %p894
      %p896 = scmp.ne.s32.totalorder %s885, %s888
      %p897 = scmp.eq.s32.totalorder %s93, 1
      %p898 = por %p896, %p897
      %p899 = scmp.ne.s32.totalorder %s888, %s889
      %p900 = scmp.eq.s32.totalorder %s93, 0
      %p901 = por %p899, %p900
      %p902 = scmp.ne.s32.totalorder %s888, %s889
      %p903 = scmp.eq.s32.totalorder %s94, 1
      %p904 = por %p902, %p903
      %p906 = scmp.ne.s32.totalorder %s889, %s905
      %p907 = scmp.eq.s32.totalorder %s94, 0
      %p908 = por %p906, %p907
      %p909 = scmp.le.s32.totalorder 1, %s88
      %p910 = scmp.lt.s32.totalorder %s88, 3
      %p911 = pnand %p909, %p910
      %p912 = pneg %p911
      // Predicated region
      $region9: #{tpu_custom_call.1} parent=5 // pred_check
        _
      $region10: #{tpu_custom_call.1} parent=5 // pred_check_branch
        %914 = sbr.rel (%p911) target = $region12
      $region11: #{tpu_custom_call.1} parent=5 // pred_region
        %s915 = ssub.s32 %s88, 1
        // Predicated region
        $region13: #{tpu_custom_call.1} parent=11 // pred_check
          %p916 = pneg %p135
        $region14: #{tpu_custom_call.1} parent=11 // pred_check_branch
          %918 = sbr.rel (%p916) target = $region16
        $region15: #{tpu_custom_call.1} parent=11 // pred_region
          _
        $region16: #{tpu_custom_call.1} parent=11 // pred_fallthru
          _
        // Predicated region
        $region17: #{tpu_custom_call.1} parent=11 // pred_check
          %p919 = pneg %p156
        $region18: #{tpu_custom_call.1} parent=11 // pred_check_branch
          %921 = sbr.rel (%p919) target = $region20
        $region19: #{tpu_custom_call.1} parent=11 // pred_region
          _
        $region20: #{tpu_custom_call.1} parent=11 // pred_fallthru
          _
        // Predicated region
        $region21: #{tpu_custom_call.1} parent=11 // pred_check
          %p922 = pneg %p177
        $region22: #{tpu_custom_call.1} parent=11 // pred_check_branch
          %924 = sbr.rel (%p922) target = $region24
        $region23: #{tpu_custom_call.1} parent=11 // pred_region
          _
        $region24: #{tpu_custom_call.1} parent=11 // pred_fallthru
          _
        // Predicated region
        $region25: #{tpu_custom_call.1} parent=11 // pred_check
          %p925 = pneg %p198
        $region26: #{tpu_custom_call.1} parent=11 // pred_check_branch
          %927 = sbr.rel (%p925) target = $region28
        $region27: #{tpu_custom_call.1} parent=11 // pred_region
          _
        $region28: #{tpu_custom_call.1} parent=11 // pred_fallthru
          _
        // Predicated region
        $region29: #{tpu_custom_call.1} parent=11 // pred_check
          %p928 = pneg %p219
        $region30: #{tpu_custom_call.1} parent=11 // pred_check_branch
          %930 = sbr.rel (%p928) target = $region32
        $region31: #{tpu_custom_call.1} parent=11 // pred_region
          _
        $region32: #{tpu_custom_call.1} parent=11 // pred_fallthru
          _
        // Predicated region
        $region33: #{tpu_custom_call.1} parent=11 // pred_check
          %p931 = pneg %p240
        $region34: #{tpu_custom_call.1} parent=11 // pred_check_branch
          %933 = sbr.rel (%p931) target = $region36
        $region35: #{tpu_custom_call.1} parent=11 // pred_region
          _
        $region36: #{tpu_custom_call.1} parent=11 // pred_fallthru
          _
        // Predicated region
        $region37: #{tpu_custom_call.1} parent=11 // pred_check
          %p934 = pneg %p261
        $region38: #{tpu_custom_call.1} parent=11 // pred_check_branch
          %936 = sbr.rel (%p934) target = $region40
        $region39: #{tpu_custom_call.1} parent=11 // pred_region
          _
        $region40: #{tpu_custom_call.1} parent=11 // pred_fallthru
          _
        // Predicated region
        $region41: #{tpu_custom_call.1} parent=11 // pred_check
          %p937 = pneg %p282
        $region42: #{tpu_custom_call.1} parent=11 // pred_check_branch
          %939 = sbr.rel (%p937) target = $region44
        $region43: #{tpu_custom_call.1} parent=11 // pred_region
          _
        $region44: #{tpu_custom_call.1} parent=11 // pred_fallthru
          _
        // Predicated region
        $region45: #{tpu_custom_call.1} parent=11 // pred_check
          %p940 = pneg %p303
        $region46: #{tpu_custom_call.1} parent=11 // pred_check_branch
          %942 = sbr.rel (%p940) target = $region48
        $region47: #{tpu_custom_call.1} parent=11 // pred_region
          _
        $region48: #{tpu_custom_call.1} parent=11 // pred_fallthru
          _
        // Predicated region
        $region49: #{tpu_custom_call.1} parent=11 // pred_check
          %p943 = pneg %p324
        $region50: #{tpu_custom_call.1} parent=11 // pred_check_branch
          %945 = sbr.rel (%p943) target = $region52
        $region51: #{tpu_custom_call.1} parent=11 // pred_region
          _
        $region52: #{tpu_custom_call.1} parent=11 // pred_fallthru
          _
        // Predicated region
        $region53: #{tpu_custom_call.1} parent=11 // pred_check
          %p946 = pneg %p345
        $region54: #{tpu_custom_call.1} parent=11 // pred_check_branch
          %948 = sbr.rel (%p946) target = $region56
        $region55: #{tpu_custom_call.1} parent=11 // pred_region
          _
        $region56: #{tpu_custom_call.1} parent=11 // pred_fallthru
          _
        // Predicated region
        $region57: #{tpu_custom_call.1} parent=11 // pred_check
          %p949 = pneg %p366
        $region58: #{tpu_custom_call.1} parent=11 // pred_check_branch
          %951 = sbr.rel (%p949) target = $region60
        $region59: #{tpu_custom_call.1} parent=11 // pred_region
          _
        $region60: #{tpu_custom_call.1} parent=11 // pred_fallthru
          _
        // Predicated region
        $region61: #{tpu_custom_call.1} parent=11 // pred_check
          %p952 = pneg %p387
        $region62: #{tpu_custom_call.1} parent=11 // pred_check_branch
          %954 = sbr.rel (%p952) target = $region64
        $region63: #{tpu_custom_call.1} parent=11 // pred_region
          _
        $region64: #{tpu_custom_call.1} parent=11 // pred_fallthru
          _
        // Predicated region
        $region65: #{tpu_custom_call.1} parent=11 // pred_check
          %p955 = pneg %p408
        $region66: #{tpu_custom_call.1} parent=11 // pred_check_branch
          %957 = sbr.rel (%p955) target = $region68
        $region67: #{tpu_custom_call.1} parent=11 // pred_region
          _
        $region68: #{tpu_custom_call.1} parent=11 // pred_fallthru
          _
        // Predicated region
        $region69: #{tpu_custom_call.1} parent=11 // pred_check
          %p958 = pneg %p429
        $region70: #{tpu_custom_call.1} parent=11 // pred_check_branch
          %960 = sbr.rel (%p958) target = $region72
        $region71: #{tpu_custom_call.1} parent=11 // pred_region
          _
        $region72: #{tpu_custom_call.1} parent=11 // pred_fallthru
          _
        // Predicated region
        $region73: #{tpu_custom_call.1} parent=11 // pred_check
          %p961 = pneg %p450
        $region74: #{tpu_custom_call.1} parent=11 // pred_check_branch
          %963 = sbr.rel (%p961) target = $region76
        $region75: #{tpu_custom_call.1} parent=11 // pred_region
          _
        $region76: #{tpu_custom_call.1} parent=11 // pred_fallthru
          _
        // Predicated region
        $region77: #{tpu_custom_call.1} parent=11 // pred_check
          %p964 = pneg %p471
        $region78: #{tpu_custom_call.1} parent=11 // pred_check_branch
          %966 = sbr.rel (%p964) target = $region80
        $region79: #{tpu_custom_call.1} parent=11 // pred_region
          _
        $region80: #{tpu_custom_call.1} parent=11 // pred_fallthru
          _
        // Predicated region
        $region81: #{tpu_custom_call.1} parent=11 // pred_check
          %p967 = pneg %p492
        $region82: #{tpu_custom_call.1} parent=11 // pred_check_branch
          %969 = sbr.rel (%p967) target = $region84
        $region83: #{tpu_custom_call.1} parent=11 // pred_region
          _
        $region84: #{tpu_custom_call.1} parent=11 // pred_fallthru
          _
        // Predicated region
        $region85: #{tpu_custom_call.1} parent=11 // pred_check
          %p970 = pneg %p513
        $region86: #{tpu_custom_call.1} parent=11 // pred_check_branch
          %972 = sbr.rel (%p970) target = $region88
        $region87: #{tpu_custom_call.1} parent=11 // pred_region
          _
        $region88: #{tpu_custom_call.1} parent=11 // pred_fallthru
          _
        // Predicated region
        $region89: #{tpu_custom_call.1} parent=11 // pred_check
          %p973 = pneg %p534
        $region90: #{tpu_custom_call.1} parent=11 // pred_check_branch
          %975 = sbr.rel (%p973) target = $region92
        $region91: #{tpu_custom_call.1} parent=11 // pred_region
          _
        $region92: #{tpu_custom_call.1} parent=11 // pred_fallthru
          _
        // Predicated region
        $region93: #{tpu_custom_call.1} parent=11 // pred_check
          %p976 = pneg %p555
        $region94: #{tpu_custom_call.1} parent=11 // pred_check_branch
          %978 = sbr.rel (%p976) target = $region96
        $region95: #{tpu_custom_call.1} parent=11 // pred_region
          _
        $region96: #{tpu_custom_call.1} parent=11 // pred_fallthru
          _
        // Predicated region
        $region97: #{tpu_custom_call.1} parent=11 // pred_check
          %p979 = pneg %p576
        $region98: #{tpu_custom_call.1} parent=11 // pred_check_branch
          %981 = sbr.rel (%p979) target = $region100
        $region99: #{tpu_custom_call.1} parent=11 // pred_region
          _
        $region100: #{tpu_custom_call.1} parent=11 // pred_fallthru
          _
        // Predicated region
        $region101: #{tpu_custom_call.1} parent=11 // pred_check
          %p982 = pneg %p597
        $region102: #{tpu_custom_call.1} parent=11 // pred_check_branch
          %984 = sbr.rel (%p982) target = $region104
        $region103: #{tpu_custom_call.1} parent=11 // pred_region
          _
        $region104: #{tpu_custom_call.1} parent=11 // pred_fallthru
          _
        // Predicated region
        $region105: #{tpu_custom_call.1} parent=11 // pred_check
          %p985 = pneg %p618
        $region106: #{tpu_custom_call.1} parent=11 // pred_check_branch
          %987 = sbr.rel (%p985) target = $region108
        $region107: #{tpu_custom_call.1} parent=11 // pred_region
          _
        $region108: #{tpu_custom_call.1} parent=11 // pred_fallthru
          _
        // Predicated region
        $region109: #{tpu_custom_call.1} parent=11 // pred_check
          %p988 = pneg %p639
        $region110: #{tpu_custom_call.1} parent=11 // pred_check_branch
          %990 = sbr.rel (%p988) target = $region112
        $region111: #{tpu_custom_call.1} parent=11 // pred_region
          _
        $region112: #{tpu_custom_call.1} parent=11 // pred_fallthru
          _
        // Predicated region
        $region113: #{tpu_custom_call.1} parent=11 // pred_check
          %p991 = pneg %p660
        $region114: #{tpu_custom_call.1} parent=11 // pred_check_branch
          %993 = sbr.rel (%p991) target = $region116
        $region115: #{tpu_custom_call.1} parent=11 // pred_region
          _
        $region116: #{tpu_custom_call.1} parent=11 // pred_fallthru
          _
        // Predicated region
        $region117: #{tpu_custom_call.1} parent=11 // pred_check
          %p994 = pneg %p681
        $region118: #{tpu_custom_call.1} parent=11 // pred_check_branch
          %996 = sbr.rel (%p994) target = $region120
        $region119: #{tpu_custom_call.1} parent=11 // pred_region
          _
        $region120: #{tpu_custom_call.1} parent=11 // pred_fallthru
          _
        // Predicated region
        $region121: #{tpu_custom_call.1} parent=11 // pred_check
          %p997 = pneg %p702
        $region122: #{tpu_custom_call.1} parent=11 // pred_check_branch
          %999 = sbr.rel (%p997) target = $region124
        $region123: #{tpu_custom_call.1} parent=11 // pred_region
          _
        $region124: #{tpu_custom_call.1} parent=11 // pred_fallthru
          _
        // Predicated region
        $region125: #{tpu_custom_call.1} parent=11 // pred_check
          %p1000 = pneg %p723
        $region126: #{tpu_custom_call.1} parent=11 // pred_check_branch
          %1002 = sbr.rel (%p1000) target = $region128
        $region127: #{tpu_custom_call.1} parent=11 // pred_region
          _
        $region128: #{tpu_custom_call.1} parent=11 // pred_fallthru
          _
        // Predicated region
        $region129: #{tpu_custom_call.1} parent=11 // pred_check
          %p1003 = pneg %p744
        $region130: #{tpu_custom_call.1} parent=11 // pred_check_branch
          %1005 = sbr.rel (%p1003) target = $region132
        $region131: #{tpu_custom_call.1} parent=11 // pred_region
          _
        $region132: #{tpu_custom_call.1} parent=11 // pred_fallthru
          _
        // Predicated region
        $region133: #{tpu_custom_call.1} parent=11 // pred_check
          %p1006 = pneg %p765
        $region134: #{tpu_custom_call.1} parent=11 // pred_check_branch
          %1008 = sbr.rel (%p1006) target = $region136
        $region135: #{tpu_custom_call.1} parent=11 // pred_region
          _
        $region136: #{tpu_custom_call.1} parent=11 // pred_fallthru
          _
        // Predicated region
        $region137: #{tpu_custom_call.1} parent=11 // pred_check
          %p1009 = pneg %p786
        $region138: #{tpu_custom_call.1} parent=11 // pred_check_branch
          %1011 = sbr.rel (%p1009) target = $region140
        $region139: #{tpu_custom_call.1} parent=11 // pred_region
          _
        $region140: #{tpu_custom_call.1} parent=11 // pred_fallthru
          _
        // Predicated region
        $region141: #{tpu_custom_call.1} parent=11 // pred_check
          %p1012 = pneg %p807
        $region142: #{tpu_custom_call.1} parent=11 // pred_check_branch
          %1014 = sbr.rel (%p1012) target = $region144
        $region143: #{tpu_custom_call.1} parent=11 // pred_region
          _
        $region144: #{tpu_custom_call.1} parent=11 // pred_fallthru
          _
        // Predicated region
        $region145: #{tpu_custom_call.1} parent=11 // pred_check
          %p1015 = pneg %p828
        $region146: #{tpu_custom_call.1} parent=11 // pred_check_branch
          %1017 = sbr.rel (%p1015) target = $region148
        $region147: #{tpu_custom_call.1} parent=11 // pred_region
          _
        $region148: #{tpu_custom_call.1} parent=11 // pred_fallthru
          _
        // Predicated region
        $region149: #{tpu_custom_call.1} parent=11 // pred_check
          %p1018 = pneg %p849
        $region150: #{tpu_custom_call.1} parent=11 // pred_check_branch
          %1020 = sbr.rel (%p1018) target = $region152
        $region151: #{tpu_custom_call.1} parent=11 // pred_region
          _
        $region152: #{tpu_custom_call.1} parent=11 // pred_fallthru
          _
      $region12: #{tpu_custom_call.1} parent=5 // pred_fallthru
        _
      %p1021 = scmp.lt.s32.totalorder %s88, 2
      // Predicated region
      $region153: #{tpu_custom_call.1} parent=5 // pred_check
        %p1022 = pneg %p1021
      $region154: #{tpu_custom_call.1} parent=5 // pred_check_branch
        %1024 = sbr.rel (%p1022) target = $region156
      $region155: #{tpu_custom_call.1} parent=5 // pred_region
        // Predicated region
        $region157: #{tpu_custom_call.1} parent=155 // pred_check
          %p1025 = pneg %p108
        $region158: #{tpu_custom_call.1} parent=155 // pred_check_branch
          %1027 = sbr.rel (%p1025) target = $region160
        $region159: #{tpu_custom_call.1} parent=155 // pred_region
          %s1028 = smul.u32 2, %s88
          %p1029 = scmp.lt.s32.totalorder %s1028, 3
          %s1030 = scalar_select %p1029, %s1028, 3
          %s1031 = smul.addr %s1030, 8
          %s1032 = scalar_lea.vmem %s1, %s1031
          %s1033 = smul.u32 2, %s88
        $region160: #{tpu_custom_call.1} parent=155 // pred_fallthru
          _
      $region156: #{tpu_custom_call.1} parent=5 // pred_fallthru
        _
      %p1034 = scmp.le.s32.totalorder 1, %s88
      %p1035 = scmp.lt.s32.totalorder %s88, 3
      %p1036 = pnand %p1034, %p1035
      %p1037 = pneg %p1036
      // Predicated region
      $region161: #{tpu_custom_call.1} parent=5 // pred_check
        _
      $region162: #{tpu_custom_call.1} parent=5 // pred_check_branch
        %1039 = sbr.rel (%p1036) target = $region164
      $region163: #{tpu_custom_call.1} parent=5 // pred_region
        %s1040 = ssub.s32 %s88, 1
        %s1041 = smul.u32 2, %s93
        %p1042 = scmp.lt.s32.totalorder %s1041, 3
        %s1043 = scalar_select %p1042, %s1041, 3
        %s1044 = smul.addr %s1043, 8
        %s1045 = scalar_lea.vmem %s1, %s1044
        %p1046 = pneg %p114
        %p1047 = pneg %p111
        %p1048 = pneg %p135
        %p1049 = pneg %p132
        %p1050 = pneg %p156
        %p1051 = pneg %p153
        %p1052 = pneg %p177
        %p1053 = pneg %p174
        %p1054 = pneg %p198
        %p1055 = pneg %p195
        %p1056 = pneg %p219
        %p1057 = pneg %p216
        %p1058 = pneg %p240
        %p1059 = pneg %p237
        %p1060 = pneg %p261
        %p1061 = pneg %p258
        %p1062 = pneg %p282
        %p1063 = pneg %p279
        %p1064 = pneg %p303
        %p1065 = pneg %p300
        %p1066 = pneg %p324
        %p1067 = pneg %p321
        %p1068 = pneg %p345
        %p1069 = pneg %p342
        %p1070 = pneg %p366
        %p1071 = pneg %p363
        %p1072 = pneg %p387
        %p1073 = pneg %p384
        %p1074 = pneg %p408
        %p1075 = pneg %p405
        %p1076 = pneg %p429
        %p1077 = pneg %p426
        %p1078 = pneg %p450
        %p1079 = pneg %p447
        %p1080 = pneg %p471
        %p1081 = pneg %p468
        %p1082 = pneg %p492
        %p1083 = pneg %p489
        %p1084 = pneg %p513
        %p1085 = pneg %p510
        %p1086 = pneg %p534
        %p1087 = pneg %p531
        %p1088 = pneg %p555
        %p1089 = pneg %p552
        %p1090 = pneg %p576
        %p1091 = pneg %p573
        %p1092 = pneg %p597
        %p1093 = pneg %p594
        %p1094 = pneg %p618
        %p1095 = pneg %p615
        %p1096 = pneg %p639
        %p1097 = pneg %p636
        %p1098 = pneg %p660
        %p1099 = pneg %p657
        %p1100 = pneg %p681
        %p1101 = pneg %p678
        %p1102 = pneg %p702
        %p1103 = pneg %p699
        %p1104 = pneg %p723
        %p1105 = pneg %p720
        %p1106 = pneg %p744
        %p1107 = pneg %p741
        %p1108 = pneg %p765
        %p1109 = pneg %p762
        %p1110 = pneg %p786
        %p1111 = pneg %p783
        %p1112 = pneg %p807
        %p1113 = pneg %p804
        %p1114 = pneg %p828
        %p1115 = pneg %p825
        %p1116 = pneg %p849
        %p1117 = pneg %p846
        %p1118 = pneg %p875
        %p1119 = pneg %p872
        %s1120 = sand.u32 %s862, 1
        %s1121 = scalar_lea.sflag [#allocation4], %s1120
        %s1122 = sand.u32 %s862, 1
        %s1123 = smul.addr %s1122, 16
        %s1124 = scalar_lea.vmem [#allocation3], %s1123
        %p1125 = pneg %p901
        %p1126 = pneg %p898
        %s1127 = sand.u32 %s888, 1
        %s1128 = scalar_lea.sflag [#allocation6], %s1127
        %s1129 = sand.u32 %s888, 1
        %s1130 = smul.addr %s1129, 16
        %s1131 = scalar_lea.vmem [#allocation5], %s1130
        %s1132 = smul.u32 2, %s93
        %p1133 = scmp.lt.s32.totalorder %s1132, 3
        %s1134 = scalar_select %p1133, %s1132, 3
        %s1135 = smul.addr %s1134, 8
        %s1136 = scalar_lea.vmem %s1, %s1135
        %s1137 = smul.u32 2, %s93
        %s1138 = smul.u32 2, %s93
        %s1139 = smul.u32 2, %s93
        %v1141 = vld [vmem:[%s1136] sm:$0xff]
        %v1142 = vld [vmem:[%s1136 + $0x8] sm:$0xff]
        %v1143 = vld [vmem:[%s3] sm:$0x1]
        %v1144 = vld [vmem:[%s5] sm:$0x1]
        %vm1145 = vcmask 261120
        %v1146 = vsel %vm1145, %v1141, 0.0
        %1147 = vadd.xlane.f32.xlu0 %v1146
        %v1148 = vpop.xlane.xlu0 %1147
        %v1149 = vsel %vm1145, %v1142, 0.0
        %1150 = vadd.xlane.f32.xlu0 %v1149
        %v1151 = vpop.xlane.xlu0 %1150
        %v1152 = vrcp.pop 32.0
        %v1153 = vmul.f32 %v1148, %v1152
        %v1154 = vmul.f32 %v1151, %v1152
        %v1155 = vsub.f32 %v1141, %v1153
        %v1156 = vsub.f32 %v1142, %v1154
        %v1157 = vmul.f32 %v1155, %v1155
        %v1158 = vmul.f32 %v1156, %v1156
        %v1159 = vsel %vm1145, %v1157, 0.0
        %1160 = vadd.xlane.f32.xlu0 %v1159
        %v1161 = vpop.xlane.xlu0 %1160
        %v1162 = vsel %vm1145, %v1158, 0.0
        %1163 = vadd.xlane.f32.xlu0 %v1162
        %v1164 = vpop.xlane.xlu0 %1163
        %v1165 = vmul.f32 %v1161, %v1152
        %v1166 = vmul.f32 %v1164, %v1152
        %v1167 = vadd.f32 %v1165, 1e-05
        %v1168 = vadd.f32 %v1166, 1e-05
        %v1169 = vrsqrt.pop %v1167
        %v1170 = vrsqrt.pop %v1168
        %v1171 = vmul.f32 %v1155, %v1169
        %v1172 = vmul.f32 %v1156, %v1170
        %v1174 = vlaneseq
        %v1175 = vshrl.u32 %v1174, 7
        %v1176 = vsub.s32 0, %v1175
        %v1177 = vrot.slane %v1143, %v1176
        %v1179 = vmul.f32 %v1171, %v1177
        %v1180 = vmul.f32 %v1172, %v1177
        %v1182 = vlaneseq
        %v1183 = vshrl.u32 %v1182, 7
        %v1184 = vsub.s32 0, %v1183
        %v1185 = vrot.slane %v1144, %v1184
        %v1187 = vadd.f32 %v1179, %v1185
        %v1188 = vadd.f32 %v1180, %v1185
        %v1189 = vpack.c.bf16 %v1188, %v1187
        %v1190 = vld [vmem:[%s7] sm:$0xf]
        %v1191 = vld [vmem:[%s7 + $0x4] sm:$0xf]
        %v1192 = vld [vmem:[%s7 + $0x8] sm:$0xf]
        %v1193 = vld [vmem:[%s7 + $0xc] sm:$0xf]
        %v1194 = vld [vmem:[%s9] sm:$0x1]
        %v1196 = vlaneseq
        %v1197 = vshrl.u32 %v1196, 7
        %v1198 = vsub.s32 0, %v1197
        %v1199 = vrot.slane %v1194, %v1198
        %v1205 = vunpack.c.l.b16 %v1190
        %v1206 = vunpack.c.l.b16 %v1191
        %v1207 = vunpack.c.l.b16 %v1192
        %v1208 = vunpack.c.l.b16 %v1193
        %v1209 = vpack.c.b16 %v1206, %v1205
        %v1210 = vpack.c.b16 %v1208, %v1207
        %v1214 = vsel %vm1145, %v1189, 0
        %1216 = vmatprep.subr.bf16.mxu0 0
        %1217 = vmatpush1.bf16.msra.mxu0 0
        %1218 = vmatprep.subr.bf16.mxu0 0
        %1219 = vmatpush1.bf16.msra.mxu0 0
        %1220 = vmatprep.subr.bf16.mxu0 0
        %1221 = vmatpush1.bf16.msra.mxu0 0
        %1222 = vmatprep.subr.bf16.mxu0 0
        %1223 = vmatpush1.bf16.msra.mxu0 0
        %1224 = vmatprep.subr.bf16.mxu0 0
        %1225 = vmatpush1.bf16.msra.mxu0 0
        %1226 = vmatprep.subr.bf16.mxu0 0
        %1227 = vmatpush1.bf16.msra.mxu0 0
        %1228 = vmatprep.subr.bf16.mxu0 0
        %1229 = vmatpush1.bf16.msra.mxu0 %v1210
        %1230 = vmatprep.subr.bf16.mxu0 0
        %1231 = vmatpush1.bf16.msra.mxu0 %v1209
        %1232 = vmatprep.subr.bf16.mxu0 0
        %1233 = vmatpush2.bf16.msra.mxu0 0
        %1234 = vmatprep.subr.bf16.mxu0 0
        %1235 = vmatpush2.bf16.msra.mxu0 0
        %1236 = vmatprep.subr.bf16.mxu0 0
        %1237 = vmatpush2.bf16.msra.mxu0 0
        %1238 = vmatprep.subr.bf16.mxu0 0
        %1239 = vmatpush2.bf16.msra.mxu0 0
        %1240 = vmatprep.subr.bf16.mxu0 0
        %1241 = vmatpush2.bf16.msra.mxu0 0
        %1242 = vmatprep.subr.bf16.mxu0 0
        %1243 = vmatpush2.bf16.msra.mxu0 0
        %1244 = vmatprep.subr.bf16.mxu0 0
        %1245 = vmatpush2.bf16.msra.mxu0 0
        %1246 = vmatprep.subr.bf16.mxu0 0
        %1247 = vmatpush2.bf16.msra.mxu0 0
        %1248 = vmatprep.mubr.bf16.mxu0 0
        %1249 = vmatmul.mubr.bf16.gmra.mxu0 %v1214
        %v1250 = vpop.f32.mrf.mxu0
        %v1251 = vadd.f32 %v1199, %v1250
        %v1252 = vpop.f32.mrf.mxu0
        %v1253 = vpop.f32.mrf.mxu0
        %v1254 = vadd.f32 %v1199, %v1253
        %v1255 = vpop.f32.mrf.mxu0
        %1256 = vdwg.mxu0
        %v1257 = vxor.u32 %v1251, 2147483648
        %v1258 = vxor.u32 %v1254, 2147483648
        %v1259 = vmul.f32 %v1257, 1.442695
        %v1260 = vpow.pop %v1259
        %v1261 = vmul.f32 %v1258, 1.442695
        %v1262 = vpow.pop %v1261
        %v1263 = vadd.f32 %v1260, 1.0
        %v1264 = vadd.f32 %v1262, 1.0
        %v1265 = vrcp.pop %v1263
        %v1266 = vmul.f32 1.0, %v1265
        %v1267 = vrcp.pop %v1264
        %v1268 = vmul.f32 1.0, %v1267
        %v1269 = vmul.f32 %v1251, %v1266
        %v1270 = vmul.f32 %v1254, %v1268
        %v1271 = vpack.c.bf16 %v1270, %v1269
        %v1272 = vld [vmem:[%s11] sm:$0xf]
        %v1273 = vld [vmem:[%s11 + $0x4] sm:$0xf]
        %v1274 = vld [vmem:[%s11 + $0x8] sm:$0xf]
        %v1275 = vld [vmem:[%s11 + $0xc] sm:$0xf]
        %v1276 = vld [vmem:[%s11 + $0x10] sm:$0xf]
        %v1277 = vld [vmem:[%s11 + $0x14] sm:$0xf]
        %v1278 = vld [vmem:[%s11 + $0x18] sm:$0xf]
        %v1279 = vld [vmem:[%s11 + $0x1c] sm:$0xf]
        %v1280 = vld [vmem:[%s11 + $0x20] sm:$0xf]
        %v1281 = vld [vmem:[%s11 + $0x24] sm:$0xf]
        %v1282 = vld [vmem:[%s11 + $0x28] sm:$0xf]
        %v1283 = vld [vmem:[%s11 + $0x2c] sm:$0xf]
        %v1284 = vld [vmem:[%s11 + $0x30] sm:$0xf]
        %v1285 = vld [vmem:[%s11 + $0x34] sm:$0xf]
        %v1286 = vld [vmem:[%s11 + $0x38] sm:$0xf]
        %v1287 = vld [vmem:[%s11 + $0x3c] sm:$0xf]
        %v1288 = vld [vmem:[%s13] sm:$0x1]
        %v1290 = vlaneseq
        %v1291 = vshrl.u32 %v1290, 7
        %v1292 = vsub.s32 0, %v1291
        %v1293 = vrot.slane %v1288, %v1292
        %v1311 = vunpack.c.l.b16 %v1272
        %v1312 = vunpack.c.l.b16 %v1273
        %v1313 = vunpack.c.l.b16 %v1274
        %v1314 = vunpack.c.l.b16 %v1275
        %v1315 = vunpack.c.l.b16 %v1276
        %v1316 = vunpack.c.l.b16 %v1277
        %v1317 = vunpack.c.l.b16 %v1278
        %v1318 = vunpack.c.l.b16 %v1279
        %v1319 = vunpack.c.l.b16 %v1280
        %v1320 = vunpack.c.l.b16 %v1281
        %v1321 = vunpack.c.l.b16 %v1282
        %v1322 = vunpack.c.l.b16 %v1283
        %v1323 = vunpack.c.l.b16 %v1284
        %v1324 = vunpack.c.l.b16 %v1285
        %v1325 = vunpack.c.l.b16 %v1286
        %v1326 = vunpack.c.l.b16 %v1287
        %v1327 = vpack.c.b16 %v1312, %v1311
        %v1328 = vpack.c.b16 %v1314, %v1313
        %v1329 = vpack.c.b16 %v1316, %v1315
        %v1330 = vpack.c.b16 %v1318, %v1317
        %v1331 = vpack.c.b16 %v1320, %v1319
        %v1332 = vpack.c.b16 %v1322, %v1321
        %v1333 = vpack.c.b16 %v1324, %v1323
        %v1334 = vpack.c.b16 %v1326, %v1325
        %1343 = vmatprep.subr.bf16.mxu0 0
        %1344 = vmatpush1.bf16.msra.mxu0 %v1334
        %1345 = vmatprep.subr.bf16.mxu0 0
        %1346 = vmatpush1.bf16.msra.mxu0 %v1333
        %1347 = vmatprep.subr.bf16.mxu0 0
        %1348 = vmatpush1.bf16.msra.mxu0 %v1332
        %1349 = vmatprep.subr.bf16.mxu0 0
        %1350 = vmatpush1.bf16.msra.mxu0 %v1331
        %1351 = vmatprep.subr.bf16.mxu0 0
        %1352 = vmatpush1.bf16.msra.mxu0 %v1330
        %1353 = vmatprep.subr.bf16.mxu0 0
        %1354 = vmatpush1.bf16.msra.mxu0 %v1329
        %1355 = vmatprep.subr.bf16.mxu0 0
        %1356 = vmatpush1.bf16.msra.mxu0 %v1328
        %1357 = vmatprep.subr.bf16.mxu0 0
        %1358 = vmatpush1.bf16.msra.mxu0 %v1327
        %1359 = vmatprep.subr.bf16.mxu0 0
        %1360 = vmatpush2.bf16.msra.mxu0 0
        %1361 = vmatprep.subr.bf16.mxu0 0
        %1362 = vmatpush2.bf16.msra.mxu0 0
        %1363 = vmatprep.subr.bf16.mxu0 0
        %1364 = vmatpush2.bf16.msra.mxu0 0
        %1365 = vmatprep.subr.bf16.mxu0 0
        %1366 = vmatpush2.bf16.msra.mxu0 0
        %1367 = vmatprep.subr.bf16.mxu0 0
        %1368 = vmatpush2.bf16.msra.mxu0 0
        %1369 = vmatprep.subr.bf16.mxu0 0
        %1370 = vmatpush2.bf16.msra.mxu0 0
        %1371 = vmatprep.subr.bf16.mxu0 0
        %1372 = vmatpush2.bf16.msra.mxu0 0
        %1373 = vmatprep.subr.bf16.mxu0 0
        %1374 = vmatpush2.bf16.msra.mxu0 0
        %1375 = vmatprep.mubr.bf16.mxu0 0
        %1376 = vmatmul.mubr.bf16.gmra.mxu0 %v1271
        %v1377 = vpop.f32.mrf.mxu0
        %v1378 = vadd.f32 %v1293, %v1377
        %v1379 = vpop.f32.mrf.mxu0
        %v1380 = vpop.f32.mrf.mxu0
        %v1381 = vadd.f32 %v1293, %v1380
        %v1382 = vpop.f32.mrf.mxu0
        %1383 = vdwg.mxu0
        %v1384 = vmul.f32 %v1378, 0.5
        %v1385 = vmul.f32 %v1381, 0.5
        %v1386 = vadd.f32 %v1141, %v1384
        %v1387 = vadd.f32 %v1142, %v1385
        %v1388 = vld [vmem:[%s15] sm:$0x1]
        %v1389 = vld [vmem:[%s17] sm:$0x1]
        %v1390 = vsel %vm1145, %v1386, 0.0
        %1391 = vadd.xlane.f32.xlu0 %v1390
        %v1392 = vpop.xlane.xlu0 %1391
        %v1393 = vsel %vm1145, %v1387, 0.0
        %1394 = vadd.xlane.f32.xlu0 %v1393
        %v1395 = vpop.xlane.xlu0 %1394
        %v1396 = vmul.f32 %v1392, %v1152
        %v1397 = vmul.f32 %v1395, %v1152
        %v1398 = vsub.f32 %v1386, %v1396
        %v1399 = vsub.f32 %v1387, %v1397
        %v1400 = vmul.f32 %v1398, %v1398
        %v1401 = vmul.f32 %v1399, %v1399
        %v1402 = vsel %vm1145, %v1400, 0.0
        %1403 = vadd.xlane.f32.xlu0 %v1402
        %v1404 = vpop.xlane.xlu0 %1403
        %v1405 = vsel %vm1145, %v1401, 0.0
        %1406 = vadd.xlane.f32.xlu0 %v1405
        %v1407 = vpop.xlane.xlu0 %1406
        %v1408 = vmul.f32 %v1404, %v1152
        %v1409 = vmul.f32 %v1407, %v1152
        %v1410 = vadd.f32 %v1408, 1e-05
        %v1411 = vadd.f32 %v1409, 1e-05
        %v1412 = vrsqrt.pop %v1410
        %v1413 = vrsqrt.pop %v1411
        %v1414 = vmul.f32 %v1398, %v1412
        %v1415 = vmul.f32 %v1399, %v1413
        %v1417 = vlaneseq
        %v1418 = vshrl.u32 %v1417, 7
        %v1419 = vsub.s32 0, %v1418
        %v1420 = vrot.slane %v1388, %v1419
        %v1422 = vmul.f32 %v1414, %v1420
        %v1423 = vmul.f32 %v1415, %v1420
        %v1425 = vlaneseq
        %v1426 = vshrl.u32 %v1425, 7
        %v1427 = vsub.s32 0, %v1426
        %v1428 = vrot.slane %v1389, %v1427
        %v1430 = vadd.f32 %v1422, %v1428
        %v1431 = vadd.f32 %v1423, %v1428
        %v1432 = vpack.c.bf16 %v1431, %v1430
        %v1433 = vld [vmem:[%s19] sm:$0xf]
        %v1434 = vld [vmem:[%s19 + $0x4] sm:$0xf]
        %v1435 = vld [vmem:[%s19 + $0x8] sm:$0xf]
        %v1436 = vld [vmem:[%s19 + $0xc] sm:$0xf]
        %v1437 = vld [vmem:[%s21] sm:$0x1]
        %v1439 = vlaneseq
        %v1440 = vshrl.u32 %v1439, 7
        %v1441 = vsub.s32 0, %v1440
        %v1442 = vrot.slane %v1437, %v1441
        %v1448 = vunpack.c.l.b16 %v1433
        %v1449 = vunpack.c.l.b16 %v1434
        %v1450 = vunpack.c.l.b16 %v1435
        %v1451 = vunpack.c.l.b16 %v1436
        %v1452 = vpack.c.b16 %v1449, %v1448
        %v1453 = vpack.c.b16 %v1451, %v1450
        %v1457 = vsel %vm1145, %v1432, 0
        %1459 = vmatprep.subr.bf16.mxu0 0
        %1460 = vmatpush1.bf16.msra.mxu0 0
        %1461 = vmatprep.subr.bf16.mxu0 0
        %1462 = vmatpush1.bf16.msra.mxu0 0
        %1463 = vmatprep.subr.bf16.mxu0 0
        %1464 = vmatpush1.bf16.msra.mxu0 0
        %1465 = vmatprep.subr.bf16.mxu0 0
        %1466 = vmatpush1.bf16.msra.mxu0 0
        %1467 = vmatprep.subr.bf16.mxu0 0
        %1468 = vmatpush1.bf16.msra.mxu0 0
        %1469 = vmatprep.subr.bf16.mxu0 0
        %1470 = vmatpush1.bf16.msra.mxu0 0
        %1471 = vmatprep.subr.bf16.mxu0 0
        %1472 = vmatpush1.bf16.msra.mxu0 %v1453
        %1473 = vmatprep.subr.bf16.mxu0 0
        %1474 = vmatpush1.bf16.msra.mxu0 %v1452
        %1475 = vmatprep.subr.bf16.mxu0 0
        %1476 = vmatpush2.bf16.msra.mxu0 0
        %1477 = vmatprep.subr.bf16.mxu0 0
        %1478 = vmatpush2.bf16.msra.mxu0 0
        %1479 = vmatprep.subr.bf16.mxu0 0
        %1480 = vmatpush2.bf16.msra.mxu0 0
        %1481 = vmatprep.subr.bf16.mxu0 0
        %1482 = vmatpush2.bf16.msra.mxu0 0
        %1483 = vmatprep.subr.bf16.mxu0 0
        %1484 = vmatpush2.bf16.msra.mxu0 0
        %1485 = vmatprep.subr.bf16.mxu0 0
        %1486 = vmatpush2.bf16.msra.mxu0 0
        %1487 = vmatprep.subr.bf16.mxu0 0
        %1488 = vmatpush2.bf16.msra.mxu0 0
        %1489 = vmatprep.subr.bf16.mxu0 0
        %1490 = vmatpush2.bf16.msra.mxu0 0
        %1491 = vmatprep.mubr.bf16.mxu0 0
        %1492 = vmatmul.mubr.bf16.gmra.mxu0 %v1457
        %v1493 = vpop.f32.mrf.mxu0
        %v1494 = vadd.f32 %v1442, %v1493
        %v1495 = vpop.f32.mrf.mxu0
        %v1496 = vpop.f32.mrf.mxu0
        %v1497 = vadd.f32 %v1442, %v1496
        %v1498 = vpop.f32.mrf.mxu0
        %1499 = vdwg.mxu0
        %v1500 = vpack.c.bf16 %v1497, %v1494
        %1502 = vrot.lane.b32.xlu0 %v1500, 96
        %v1503 = vpop.permute.xlu0 %1502
        %vm1504 = vcmask 64512
        %v1506 = vsel %vm1504, %v1500, 0
        %v1509 = vsel %vm1504, %v1503, 0
        %1511 = vmatprep.subr.bf16.mxu0 0
        %1512 = vmatpush1.bf16.xpose.msra.mxu0 0
        %1513 = vmatprep.subr.bf16.mxu0 0
        %1514 = vmatpush1.bf16.xpose.msra.mxu0 0
        %1515 = vmatprep.subr.bf16.mxu0 0
        %1516 = vmatpush1.bf16.xpose.msra.mxu0 0
        %1517 = vmatprep.subr.bf16.mxu0 0
        %1518 = vmatpush1.bf16.xpose.msra.mxu0 0
        %1519 = vmatprep.subr.bf16.mxu0 0
        %1520 = vmatpush1.bf16.xpose.msra.mxu0 0
        %1521 = vmatprep.subr.bf16.mxu0 0
        %1522 = vmatpush1.bf16.xpose.msra.mxu0 0
        %1523 = vmatprep.subr.bf16.mxu0 0
        %1524 = vmatpush1.bf16.xpose.msra.mxu0 0
        %1525 = vmatprep.subr.bf16.mxu0 0
        %1526 = vmatpush1.bf16.xpose.msra.mxu0 %v1509
        %1527 = vmatprep.subr.bf16.mxu0 0
        %1528 = vmatpush2.bf16.xpose.msra.mxu0 0
        %1529 = vmatprep.subr.bf16.mxu0 0
        %1530 = vmatpush2.bf16.xpose.msra.mxu0 0
        %1531 = vmatprep.subr.bf16.mxu0 0
        %1532 = vmatpush2.bf16.xpose.msra.mxu0 0
        %1533 = vmatprep.subr.bf16.mxu0 0
        %1534 = vmatpush2.bf16.xpose.msra.mxu0 0
        %1535 = vmatprep.subr.bf16.mxu0 0
        %1536 = vmatpush2.bf16.xpose.msra.mxu0 0
        %1537 = vmatprep.subr.bf16.mxu0 0
        %1538 = vmatpush2.bf16.xpose.msra.mxu0 0
        %1539 = vmatprep.subr.bf16.mxu0 0
        %1540 = vmatpush2.bf16.xpose.msra.mxu0 0
        %1541 = vmatprep.subr.bf16.mxu0 0
        %1542 = vmatpush2.bf16.xpose.msra.mxu0 0
        %1543 = vmatprep.mubr.bf16.mxu0 0
        %1544 = vmatmul.mubr.bf16.gmra.mxu0 %v1506
        %v1545 = vpop.f32.mrf.mxu0
        %v1546 = vadd.f32 0.0, %v1545
        %v1547 = vpop.f32.mrf.mxu0
        %v1548 = vpop.f32.mrf.mxu0
        %v1549 = vadd.f32 0.0, %v1548
        %v1550 = vpop.f32.mrf.mxu0
        %1551 = vdwg.mxu0
        %vm1552 = vcmask 130048
        %v1553 = vsel %vm1552, %v1546, -inf
        %1554 = vmax.xlane.f32.xlu0 %v1553
        %v1555 = vpop.xlane.xlu0 %1554
        %v1556 = vsel %vm1552, %v1549, -inf
        %1557 = vmax.xlane.f32.xlu0 %v1556
        %v1558 = vpop.xlane.xlu0 %1557
        %v1559 = vsub.f32 %v1546, %v1555
        %v1560 = vsub.f32 %v1549, %v1558
        %v1561 = vmul.f32 %v1559, 1.442695
        %v1562 = vpow.pop %v1561
        %v1563 = vmul.f32 %v1560, 1.442695
        %v1564 = vpow.pop %v1563
        %v1565 = vsel %vm1552, %v1562, 0.0
        %1566 = vadd.xlane.f32.xlu0 %v1565
        %v1567 = vpop.xlane.xlu0 %1566
        %v1568 = vsel %vm1552, %v1564, 0.0
        %1569 = vadd.xlane.f32.xlu0 %v1568
        %v1570 = vpop.xlane.xlu0 %1569
        %v1571 = vrcp.pop %v1567
        %v1572 = vrcp.pop %v1570
        %v1573 = vmul.f32 %v1562, %v1571
        %v1574 = vmul.f32 %v1564, %v1572
        %v1575 = vpack.c.bf16 %v1574, %v1573
        %1576 = vrot.lane.b32.xlu0 %v1500, 64
        %v1577 = vpop.permute.xlu0 %1576
        %v1580 = vsel %vm1552, %v1575, 0
        %1582 = vmatprep.subr.bf16.mxu0 0
        %1583 = vmatpush1.bf16.msra.mxu0 0
        %1584 = vmatprep.subr.bf16.mxu0 0
        %1585 = vmatpush1.bf16.msra.mxu0 0
        %1586 = vmatprep.subr.bf16.mxu0 0
        %1587 = vmatpush1.bf16.msra.mxu0 0
        %1588 = vmatprep.subr.bf16.mxu0 0
        %1589 = vmatpush1.bf16.msra.mxu0 0
        %1590 = vmatprep.subr.bf16.mxu0 0
        %1591 = vmatpush1.bf16.msra.mxu0 0
        %1592 = vmatprep.subr.bf16.mxu0 0
        %1593 = vmatpush1.bf16.msra.mxu0 0
        %1594 = vmatprep.subr.bf16.mxu0 0
        %1595 = vmatpush1.bf16.msra.mxu0 0
        %1596 = vmatprep.subr.bf16.mxu0 0
        %1597 = vmatpush1.bf16.msra.mxu0 %v1577
        %1598 = vmatprep.subr.bf16.mxu0 0
        %1599 = vmatpush2.bf16.msra.mxu0 0
        %1600 = vmatprep.subr.bf16.mxu0 0
        %1601 = vmatpush2.bf16.msra.mxu0 0
        %1602 = vmatprep.subr.bf16.mxu0 0
        %1603 = vmatpush2.bf16.msra.mxu0 0
        %1604 = vmatprep.subr.bf16.mxu0 0
        %1605 = vmatpush2.bf16.msra.mxu0 0
        %1606 = vmatprep.subr.bf16.mxu0 0
        %1607 = vmatpush2.bf16.msra.mxu0 0
        %1608 = vmatprep.subr.bf16.mxu0 0
        %1609 = vmatpush2.bf16.msra.mxu0 0
        %1610 = vmatprep.subr.bf16.mxu0 0
        %1611 = vmatpush2.bf16.msra.mxu0 0
        %1612 = vmatprep.subr.bf16.mxu0 0
        %1613 = vmatpush2.bf16.msra.mxu0 0
        %1614 = vmatprep.mubr.bf16.mxu0 0
        %1615 = vmatmul.mubr.bf16.gmra.mxu0 %v1580
        %v1616 = vpop.f32.mrf.mxu0
        %v1617 = vadd.f32 0.0, %v1616
        %v1618 = vpop.f32.mrf.mxu0
        %v1619 = vpop.f32.mrf.mxu0
        %v1620 = vadd.f32 0.0, %v1619
        %v1621 = vpop.f32.mrf.mxu0
        %1622 = vdwg.mxu0
        %1623 = vrot.lane.b32.xlu0 %v1500, 120
        %v1624 = vpop.permute.xlu0 %1623
        %1625 = vrot.lane.b32.xlu0 %v1500, 88
        %v1626 = vpop.permute.xlu0 %1625
        %v1628 = vsel %vm1504, %v1624, 0
        %v1631 = vsel %vm1504, %v1626, 0
        %1633 = vmatprep.subr.bf16.mxu0 0
        %1634 = vmatpush1.bf16.xpose.msra.mxu0 0
        %1635 = vmatprep.subr.bf16.mxu0 0
        %1636 = vmatpush1.bf16.xpose.msra.mxu0 0
        %1637 = vmatprep.subr.bf16.mxu0 0
        %1638 = vmatpush1.bf16.xpose.msra.mxu0 0
        %1639 = vmatprep.subr.bf16.mxu0 0
        %1640 = vmatpush1.bf16.xpose.msra.mxu0 0
        %1641 = vmatprep.subr.bf16.mxu0 0
        %1642 = vmatpush1.bf16.xpose.msra.mxu0 0
        %1643 = vmatprep.subr.bf16.mxu0 0
        %1644 = vmatpush1.bf16.xpose.msra.mxu0 0
        %1645 = vmatprep.subr.bf16.mxu0 0
        %1646 = vmatpush1.bf16.xpose.msra.mxu0 0
        %1647 = vmatprep.subr.bf16.mxu0 0
        %1648 = vmatpush1.bf16.xpose.msra.mxu0 %v1631
        %1649 = vmatprep.subr.bf16.mxu0 0
        %1650 = vmatpush2.bf16.xpose.msra.mxu0 0
        %1651 = vmatprep.subr.bf16.mxu0 0
        %1652 = vmatpush2.bf16.xpose.msra.mxu0 0
        %1653 = vmatprep.subr.bf16.mxu0 0
        %1654 = vmatpush2.bf16.xpose.msra.mxu0 0
        %1655 = vmatprep.subr.bf16.mxu0 0
        %1656 = vmatpush2.bf16.xpose.msra.mxu0 0
        %1657 = vmatprep.subr.bf16.mxu0 0
        %1658 = vmatpush2.bf16.xpose.msra.mxu0 0
        %1659 = vmatprep.subr.bf16.mxu0 0
        %1660 = vmatpush2.bf16.xpose.msra.mxu0 0
        %1661 = vmatprep.subr.bf16.mxu0 0
        %1662 = vmatpush2.bf16.xpose.msra.mxu0 0
        %1663 = vmatprep.subr.bf16.mxu0 0
        %1664 = vmatpush2.bf16.xpose.msra.mxu0 0
        %1665 = vmatprep.mubr.bf16.mxu0 0
        %1666 = vmatmul.mubr.bf16.gmra.mxu0 %v1628
        %v1667 = vpop.f32.mrf.mxu0
        %v1668 = vadd.f32 0.0, %v1667
        %v1669 = vpop.f32.mrf.mxu0
        %v1670 = vpop.f32.mrf.mxu0
        %v1671 = vadd.f32 0.0, %v1670
        %v1672 = vpop.f32.mrf.mxu0
        %1673 = vdwg.mxu0
        %v1674 = vsel %vm1552, %v1668, -inf
        %1675 = vmax.xlane.f32.xlu0 %v1674
        %v1676 = vpop.xlane.xlu0 %1675
        %v1677 = vsel %vm1552, %v1671, -inf
        %1678 = vmax.xlane.f32.xlu0 %v1677
        %v1679 = vpop.xlane.xlu0 %1678
        %v1680 = vsub.f32 %v1668, %v1676
        %v1681 = vsub.f32 %v1671, %v1679
        %v1682 = vmul.f32 %v1680, 1.442695
        %v1683 = vpow.pop %v1682
        %v1684 = vmul.f32 %v1681, 1.442695
        %v1685 = vpow.pop %v1684
        %v1686 = vsel %vm1552, %v1683, 0.0
        %1687 = vadd.xlane.f32.xlu0 %v1686
        %v1688 = vpop.xlane.xlu0 %1687
        %v1689 = vsel %vm1552, %v1685, 0.0
        %1690 = vadd.xlane.f32.xlu0 %v1689
        %v1691 = vpop.xlane.xlu0 %1690
        %v1692 = vrcp.pop %v1688
        %v1693 = vrcp.pop %v1691
        %v1694 = vmul.f32 %v1683, %v1692
        %v1695 = vmul.f32 %v1685, %v1693
        %v1696 = vpack.c.bf16 %v1695, %v1694
        %1697 = vrot.lane.b32.xlu0 %v1500, 56
        %v1698 = vpop.permute.xlu0 %1697
        %v1701 = vsel %vm1552, %v1696, 0
        %1703 = vmatprep.subr.bf16.mxu0 0
        %1704 = vmatpush1.bf16.msra.mxu0 0
        %1705 = vmatprep.subr.bf16.mxu0 0
        %1706 = vmatpush1.bf16.msra.mxu0 0
        %1707 = vmatprep.subr.bf16.mxu0 0
        %1708 = vmatpush1.bf16.msra.mxu0 0
        %1709 = vmatprep.subr.bf16.mxu0 0
        %1710 = vmatpush1.bf16.msra.mxu0 0
        %1711 = vmatprep.subr.bf16.mxu0 0
        %1712 = vmatpush1.bf16.msra.mxu0 0
        %1713 = vmatprep.subr.bf16.mxu0 0
        %1714 = vmatpush1.bf16.msra.mxu0 0
        %1715 = vmatprep.subr.bf16.mxu0 0
        %1716 = vmatpush1.bf16.msra.mxu0 0
        %1717 = vmatprep.subr.bf16.mxu0 0
        %1718 = vmatpush1.bf16.msra.mxu0 %v1698
        %1719 = vmatprep.subr.bf16.mxu0 0
        %1720 = vmatpush2.bf16.msra.mxu0 0
        %1721 = vmatprep.subr.bf16.mxu0 0
        %1722 = vmatpush2.bf16.msra.mxu0 0
        %1723 = vmatprep.subr.bf16.mxu0 0
        %1724 = vmatpush2.bf16.msra.mxu0 0
        %1725 = vmatprep.subr.bf16.mxu0 0
        %1726 = vmatpush2.bf16.msra.mxu0 0
        %1727 = vmatprep.subr.bf16.mxu0 0
        %1728 = vmatpush2.bf16.msra.mxu0 0
        %1729 = vmatprep.subr.bf16.mxu0 0
        %1730 = vmatpush2.bf16.msra.mxu0 0
        %1731 = vmatprep.subr.bf16.mxu0 0
        %1732 = vmatpush2.bf16.msra.mxu0 0
        %1733 = vmatprep.subr.bf16.mxu0 0
        %1734 = vmatpush2.bf16.msra.mxu0 0
        %1735 = vmatprep.mubr.bf16.mxu0 0
        %1736 = vmatmul.mubr.bf16.gmra.mxu0 %v1701
        %v1737 = vpop.f32.mrf.mxu0
        %v1738 = vadd.f32 0.0, %v1737
        %v1739 = vpop.f32.mrf.mxu0
        %v1740 = vpop.f32.mrf.mxu0
        %v1741 = vadd.f32 0.0, %v1740
        %v1742 = vpop.f32.mrf.mxu0
        %1743 = vdwg.mxu0
        %1744 = vrot.lane.b32.xlu0 %v1500, 112
        %v1745 = vpop.permute.xlu0 %1744
        %1746 = vrot.lane.b32.xlu0 %v1500, 80
        %v1747 = vpop.permute.xlu0 %1746
        %v1749 = vsel %vm1504, %v1745, 0
        %v1752 = vsel %vm1504, %v1747, 0
        %1754 = vmatprep.subr.bf16.mxu0 0
        %1755 = vmatpush1.bf16.xpose.msra.mxu0 0
        %1756 = vmatprep.subr.bf16.mxu0 0
        %1757 = vmatpush1.bf16.xpose.msra.mxu0 0
        %1758 = vmatprep.subr.bf16.mxu0 0
        %1759 = vmatpush1.bf16.xpose.msra.mxu0 0
        %1760 = vmatprep.subr.bf16.mxu0 0
        %1761 = vmatpush1.bf16.xpose.msra.mxu0 0
        %1762 = vmatprep.subr.bf16.mxu0 0
        %1763 = vmatpush1.bf16.xpose.msra.mxu0 0
        %1764 = vmatprep.subr.bf16.mxu0 0
        %1765 = vmatpush1.bf16.xpose.msra.mxu0 0
        %1766 = vmatprep.subr.bf16.mxu0 0
        %1767 = vmatpush1.bf16.xpose.msra.mxu0 0
        %1768 = vmatprep.subr.bf16.mxu0 0
        %1769 = vmatpush1.bf16.xpose.msra.mxu0 %v1752
        %1770 = vmatprep.subr.bf16.mxu0 0
        %1771 = vmatpush2.bf16.xpose.msra.mxu0 0
        %1772 = vmatprep.subr.bf16.mxu0 0
        %1773 = vmatpush2.bf16.xpose.msra.mxu0 0
        %1774 = vmatprep.subr.bf16.mxu0 0
        %1775 = vmatpush2.bf16.xpose.msra.mxu0 0
        %1776 = vmatprep.subr.bf16.mxu0 0
        %1777 = vmatpush2.bf16.xpose.msra.mxu0 0
        %1778 = vmatprep.subr.bf16.mxu0 0
        %1779 = vmatpush2.bf16.xpose.msra.mxu0 0
        %1780 = vmatprep.subr.bf16.mxu0 0
        %1781 = vmatpush2.bf16.xpose.msra.mxu0 0
        %1782 = vmatprep.subr.bf16.mxu0 0
        %1783 = vmatpush2.bf16.xpose.msra.mxu0 0
        %1784 = vmatprep.subr.bf16.mxu0 0
        %1785 = vmatpush2.bf16.xpose.msra.mxu0 0
        %1786 = vmatprep.mubr.bf16.mxu0 0
        %1787 = vmatmul.mubr.bf16.gmra.mxu0 %v1749
        %v1788 = vpop.f32.mrf.mxu0
        %v1789 = vadd.f32 0.0, %v1788
        %v1790 = vpop.f32.mrf.mxu0
        %v1791 = vpop.f32.mrf.mxu0
        %v1792 = vadd.f32 0.0, %v1791
        %v1793 = vpop.f32.mrf.mxu0
        %1794 = vdwg.mxu0
        %v1795 = vsel %vm1552, %v1789, -inf
        %1796 = vmax.xlane.f32.xlu0 %v1795
        %v1797 = vpop.xlane.xlu0 %1796
        %v1798 = vsel %vm1552, %v1792, -inf
        %1799 = vmax.xlane.f32.xlu0 %v1798
        %v1800 = vpop.xlane.xlu0 %1799
        %v1801 = vsub.f32 %v1789, %v1797
        %v1802 = vsub.f32 %v1792, %v1800
        %v1803 = vmul.f32 %v1801, 1.442695
        %v1804 = vpow.pop %v1803
        %v1805 = vmul.f32 %v1802, 1.442695
        %v1806 = vpow.pop %v1805
        %v1807 = vsel %vm1552, %v1804, 0.0
        %1808 = vadd.xlane.f32.xlu0 %v1807
        %v1809 = vpop.xlane.xlu0 %1808
        %v1810 = vsel %vm1552, %v1806, 0.0
        %1811 = vadd.xlane.f32.xlu0 %v1810
        %v1812 = vpop.xlane.xlu0 %1811
        %v1813 = vrcp.pop %v1809
        %v1814 = vrcp.pop %v1812
        %v1815 = vmul.f32 %v1804, %v1813
        %v1816 = vmul.f32 %v1806, %v1814
        %v1817 = vpack.c.bf16 %v1816, %v1815
        %1818 = vrot.lane.b32.xlu0 %v1500, 48
        %v1819 = vpop.permute.xlu0 %1818
        %v1822 = vsel %vm1552, %v1817, 0
        %1824 = vmatprep.subr.bf16.mxu0 0
        %1825 = vmatpush1.bf16.msra.mxu0 0
        %1826 = vmatprep.subr.bf16.mxu0 0
        %1827 = vmatpush1.bf16.msra.mxu0 0
        %1828 = vmatprep.subr.bf16.mxu0 0
        %1829 = vmatpush1.bf16.msra.mxu0 0
        %1830 = vmatprep.subr.bf16.mxu0 0
        %1831 = vmatpush1.bf16.msra.mxu0 0
        %1832 = vmatprep.subr.bf16.mxu0 0
        %1833 = vmatpush1.bf16.msra.mxu0 0
        %1834 = vmatprep.subr.bf16.mxu0 0
        %1835 = vmatpush1.bf16.msra.mxu0 0
        %1836 = vmatprep.subr.bf16.mxu0 0
        %1837 = vmatpush1.bf16.msra.mxu0 0
        %1838 = vmatprep.subr.bf16.mxu0 0
        %1839 = vmatpush1.bf16.msra.mxu0 %v1819
        %1840 = vmatprep.subr.bf16.mxu0 0
        %1841 = vmatpush2.bf16.msra.mxu0 0
        %1842 = vmatprep.subr.bf16.mxu0 0
        %1843 = vmatpush2.bf16.msra.mxu0 0
        %1844 = vmatprep.subr.bf16.mxu0 0
        %1845 = vmatpush2.bf16.msra.mxu0 0
        %1846 = vmatprep.subr.bf16.mxu0 0
        %1847 = vmatpush2.bf16.msra.mxu0 0
        %1848 = vmatprep.subr.bf16.mxu0 0
        %1849 = vmatpush2.bf16.msra.mxu0 0
        %1850 = vmatprep.subr.bf16.mxu0 0
        %1851 = vmatpush2.bf16.msra.mxu0 0
        %1852 = vmatprep.subr.bf16.mxu0 0
        %1853 = vmatpush2.bf16.msra.mxu0 0
        %1854 = vmatprep.subr.bf16.mxu0 0
        %1855 = vmatpush2.bf16.msra.mxu0 0
        %1856 = vmatprep.mubr.bf16.mxu0 0
        %1857 = vmatmul.mubr.bf16.gmra.mxu0 %v1822
        %v1858 = vpop.f32.mrf.mxu0
        %v1859 = vadd.f32 0.0, %v1858
        %v1860 = vpop.f32.mrf.mxu0
        %v1861 = vpop.f32.mrf.mxu0
        %v1862 = vadd.f32 0.0, %v1861
        %v1863 = vpop.f32.mrf.mxu0
        %1864 = vdwg.mxu0
        %1865 = vrot.lane.b32.xlu0 %v1500, 104
        %v1866 = vpop.permute.xlu0 %1865
        %1867 = vrot.lane.b32.xlu0 %v1500, 72
        %v1868 = vpop.permute.xlu0 %1867
        %v1870 = vsel %vm1504, %v1866, 0
        %v1873 = vsel %vm1504, %v1868, 0
        %1875 = vmatprep.subr.bf16.mxu0 0
        %1876 = vmatpush1.bf16.xpose.msra.mxu0 0
        %1877 = vmatprep.subr.bf16.mxu0 0
        %1878 = vmatpush1.bf16.xpose.msra.mxu0 0
        %1879 = vmatprep.subr.bf16.mxu0 0
        %1880 = vmatpush1.bf16.xpose.msra.mxu0 0
        %1881 = vmatprep.subr.bf16.mxu0 0
        %1882 = vmatpush1.bf16.xpose.msra.mxu0 0
        %1883 = vmatprep.subr.bf16.mxu0 0
        %1884 = vmatpush1.bf16.xpose.msra.mxu0 0
        %1885 = vmatprep.subr.bf16.mxu0 0
        %1886 = vmatpush1.bf16.xpose.msra.mxu0 0
        %1887 = vmatprep.subr.bf16.mxu0 0
        %1888 = vmatpush1.bf16.xpose.msra.mxu0 0
        %1889 = vmatprep.subr.bf16.mxu0 0
        %1890 = vmatpush1.bf16.xpose.msra.mxu0 %v1873
        %1891 = vmatprep.subr.bf16.mxu0 0
        %1892 = vmatpush2.bf16.xpose.msra.mxu0 0
        %1893 = vmatprep.subr.bf16.mxu0 0
        %1894 = vmatpush2.bf16.xpose.msra.mxu0 0
        %1895 = vmatprep.subr.bf16.mxu0 0
        %1896 = vmatpush2.bf16.xpose.msra.mxu0 0
        %1897 = vmatprep.subr.bf16.mxu0 0
        %1898 = vmatpush2.bf16.xpose.msra.mxu0 0
        %1899 = vmatprep.subr.bf16.mxu0 0
        %1900 = vmatpush2.bf16.xpose.msra.mxu0 0
        %1901 = vmatprep.subr.bf16.mxu0 0
        %1902 = vmatpush2.bf16.xpose.msra.mxu0 0
        %1903 = vmatprep.subr.bf16.mxu0 0
        %1904 = vmatpush2.bf16.xpose.msra.mxu0 0
        %1905 = vmatprep.subr.bf16.mxu0 0
        %1906 = vmatpush2.bf16.xpose.msra.mxu0 0
        %1907 = vmatprep.mubr.bf16.mxu0 0
        %1908 = vmatmul.mubr.bf16.gmra.mxu0 %v1870
        %v1909 = vpop.f32.mrf.mxu0
        %v1910 = vadd.f32 0.0, %v1909
        %v1911 = vpop.f32.mrf.mxu0
        %v1912 = vpop.f32.mrf.mxu0
        %v1913 = vadd.f32 0.0, %v1912
        %v1914 = vpop.f32.mrf.mxu0
        %1915 = vdwg.mxu0
        %v1916 = vsel %vm1552, %v1910, -inf
        %1917 = vmax.xlane.f32.xlu0 %v1916
        %v1918 = vpop.xlane.xlu0 %1917
        %v1919 = vsel %vm1552, %v1913, -inf
        %1920 = vmax.xlane.f32.xlu0 %v1919
        %v1921 = vpop.xlane.xlu0 %1920
        %v1922 = vsub.f32 %v1910, %v1918
        %v1923 = vsub.f32 %v1913, %v1921
        %v1924 = vmul.f32 %v1922, 1.442695
        %v1925 = vpow.pop %v1924
        %v1926 = vmul.f32 %v1923, 1.442695
        %v1927 = vpow.pop %v1926
        %v1928 = vsel %vm1552, %v1925, 0.0
        %1929 = vadd.xlane.f32.xlu0 %v1928
        %v1930 = vpop.xlane.xlu0 %1929
        %v1931 = vsel %vm1552, %v1927, 0.0
        %1932 = vadd.xlane.f32.xlu0 %v1931
        %v1933 = vpop.xlane.xlu0 %1932
        %v1934 = vrcp.pop %v1930
        %v1935 = vrcp.pop %v1933
        %v1936 = vmul.f32 %v1925, %v1934
        %v1937 = vmul.f32 %v1927, %v1935
        %v1938 = vpack.c.bf16 %v1937, %v1936
        %1939 = vrot.lane.b32.xlu0 %v1500, 40
        %v1940 = vpop.permute.xlu0 %1939
        %v1943 = vsel %vm1552, %v1938, 0
        %1945 = vmatprep.subr.bf16.mxu0 0
        %1946 = vmatpush1.bf16.msra.mxu0 0
        %1947 = vmatprep.subr.bf16.mxu0 0
        %1948 = vmatpush1.bf16.msra.mxu0 0
        %1949 = vmatprep.subr.bf16.mxu0 0
        %1950 = vmatpush1.bf16.msra.mxu0 0
        %1951 = vmatprep.subr.bf16.mxu0 0
        %1952 = vmatpush1.bf16.msra.mxu0 0
        %1953 = vmatprep.subr.bf16.mxu0 0
        %1954 = vmatpush1.bf16.msra.mxu0 0
        %1955 = vmatprep.subr.bf16.mxu0 0
        %1956 = vmatpush1.bf16.msra.mxu0 0
        %1957 = vmatprep.subr.bf16.mxu0 0
        %1958 = vmatpush1.bf16.msra.mxu0 0
        %1959 = vmatprep.subr.bf16.mxu0 0
        %1960 = vmatpush1.bf16.msra.mxu0 %v1940
        %1961 = vmatprep.subr.bf16.mxu0 0
        %1962 = vmatpush2.bf16.msra.mxu0 0
        %1963 = vmatprep.subr.bf16.mxu0 0
        %1964 = vmatpush2.bf16.msra.mxu0 0
        %1965 = vmatprep.subr.bf16.mxu0 0
        %1966 = vmatpush2.bf16.msra.mxu0 0
        %1967 = vmatprep.subr.bf16.mxu0 0
        %1968 = vmatpush2.bf16.msra.mxu0 0
        %1969 = vmatprep.subr.bf16.mxu0 0
        %1970 = vmatpush2.bf16.msra.mxu0 0
        %1971 = vmatprep.subr.bf16.mxu0 0
        %1972 = vmatpush2.bf16.msra.mxu0 0
        %1973 = vmatprep.subr.bf16.mxu0 0
        %1974 = vmatpush2.bf16.msra.mxu0 0
        %1975 = vmatprep.subr.bf16.mxu0 0
        %1976 = vmatpush2.bf16.msra.mxu0 0
        %1977 = vmatprep.mubr.bf16.mxu0 0
        %1978 = vmatmul.mubr.bf16.gmra.mxu0 %v1943
        %v1979 = vpop.f32.mrf.mxu0
        %v1980 = vadd.f32 0.0, %v1979
        %v1981 = vpop.f32.mrf.mxu0
        %v1982 = vpop.f32.mrf.mxu0
        %v1983 = vadd.f32 0.0, %v1982
        %v1984 = vpop.f32.mrf.mxu0
        %1985 = vdwg.mxu0
        %1988 = vrot.lane.b32.xlu0 %v1738, 8
        %v1989 = vpop.permute.xlu0 %1988
        %1990 = vrot.lane.b32.xlu0 %v1741, 8
        %v1991 = vpop.permute.xlu0 %1990
        %1996 = vrot.lane.b32.xlu0 %v1859, 16
        %v1997 = vpop.permute.xlu0 %1996
        %1998 = vrot.lane.b32.xlu0 %v1862, 16
        %v1999 = vpop.permute.xlu0 %1998
        %2004 = vrot.lane.b32.xlu0 %v1980, 24
        %v2005 = vpop.permute.xlu0 %2004
        %2006 = vrot.lane.b32.xlu0 %v1983, 24
        %v2007 = vpop.permute.xlu0 %2006
        %v2010 = vsel %vm1504, %v1617, %v1989
        %v2011 = vsel %vm1504, %v1620, %v1991
        %v2012 = vsel %vm1552, %v2010, %v1997
        %v2013 = vsel %vm1552, %v2011, %v1999
        %vm2014 = vcmask 195584
        %v2015 = vsel %vm2014, %v2012, %v2005
        %v2016 = vsel %vm2014, %v2013, %v2007
        %v2017 = vpack.c.bf16 %v2016, %v2015
        %v2018 = vld [vmem:[%s23] sm:$0xf]
        %v2019 = vld [vmem:[%s23 + $0x4] sm:$0xf]
        %v2020 = vld [vmem:[%s23 + $0x8] sm:$0xf]
        %v2021 = vld [vmem:[%s23 + $0xc] sm:$0xf]
        %v2022 = vld [vmem:[%s25] sm:$0x1]
        %v2024 = vlaneseq
        %v2025 = vshrl.u32 %v2024, 7
        %v2026 = vsub.s32 0, %v2025
        %v2027 = vrot.slane %v2022, %v2026
        %v2033 = vunpack.c.l.b16 %v2018
        %v2034 = vunpack.c.l.b16 %v2019
        %v2035 = vunpack.c.l.b16 %v2020
        %v2036 = vunpack.c.l.b16 %v2021
        %v2037 = vpack.c.b16 %v2034, %v2033
        %v2038 = vpack.c.b16 %v2036, %v2035
        %v2042 = vsel %vm1145, %v2017, 0
        %2044 = vmatprep.subr.bf16.mxu0 0
        %2045 = vmatpush1.bf16.msra.mxu0 0
        %2046 = vmatprep.subr.bf16.mxu0 0
        %2047 = vmatpush1.bf16.msra.mxu0 0
        %2048 = vmatprep.subr.bf16.mxu0 0
        %2049 = vmatpush1.bf16.msra.mxu0 0
        %2050 = vmatprep.subr.bf16.mxu0 0
        %2051 = vmatpush1.bf16.msra.mxu0 0
        %2052 = vmatprep.subr.bf16.mxu0 0
        %2053 = vmatpush1.bf16.msra.mxu0 0
        %2054 = vmatprep.subr.bf16.mxu0 0
        %2055 = vmatpush1.bf16.msra.mxu0 0
        %2056 = vmatprep.subr.bf16.mxu0 0
        %2057 = vmatpush1.bf16.msra.mxu0 %v2038
        %2058 = vmatprep.subr.bf16.mxu0 0
        %2059 = vmatpush1.bf16.msra.mxu0 %v2037
        %2060 = vmatprep.subr.bf16.mxu0 0
        %2061 = vmatpush2.bf16.msra.mxu0 0
        %2062 = vmatprep.subr.bf16.mxu0 0
        %2063 = vmatpush2.bf16.msra.mxu0 0
        %2064 = vmatprep.subr.bf16.mxu0 0
        %2065 = vmatpush2.bf16.msra.mxu0 0
        %2066 = vmatprep.subr.bf16.mxu0 0
        %2067 = vmatpush2.bf16.msra.mxu0 0
        %2068 = vmatprep.subr.bf16.mxu0 0
        %2069 = vmatpush2.bf16.msra.mxu0 0
        %2070 = vmatprep.subr.bf16.mxu0 0
        %2071 = vmatpush2.bf16.msra.mxu0 0
        %2072 = vmatprep.subr.bf16.mxu0 0
        %2073 = vmatpush2.bf16.msra.mxu0 0
        %2074 = vmatprep.subr.bf16.mxu0 0
        %2075 = vmatpush2.bf16.msra.mxu0 0
        %2076 = vmatprep.mubr.bf16.mxu0 0
        %2077 = vmatmul.mubr.bf16.gmra.mxu0 %v2042
        %v2078 = vpop.f32.mrf.mxu0
        %v2079 = vadd.f32 %v2027, %v2078
        %v2080 = vpop.f32.mrf.mxu0
        %v2081 = vpop.f32.mrf.mxu0
        %v2082 = vadd.f32 %v2027, %v2081
        %v2083 = vpop.f32.mrf.mxu0
        %2084 = vdwg.mxu0
        %v2085 = vadd.f32 %v1386, %v2079
        %v2086 = vadd.f32 %v1387, %v2082
        %v2087 = vld [vmem:[%s27] sm:$0x1]
        %v2088 = vld [vmem:[%s29] sm:$0x1]
        %v2089 = vsel %vm1145, %v2085, 0.0
        %2090 = vadd.xlane.f32.xlu0 %v2089
        %v2091 = vpop.xlane.xlu0 %2090
        %v2092 = vsel %vm1145, %v2086, 0.0
        %2093 = vadd.xlane.f32.xlu0 %v2092
        %v2094 = vpop.xlane.xlu0 %2093
        %v2095 = vmul.f32 %v2091, %v1152
        %v2096 = vmul.f32 %v2094, %v1152
        %v2097 = vsub.f32 %v2085, %v2095
        %v2098 = vsub.f32 %v2086, %v2096
        %v2099 = vmul.f32 %v2097, %v2097
        %v2100 = vmul.f32 %v2098, %v2098
        %v2101 = vsel %vm1145, %v2099, 0.0
        %2102 = vadd.xlane.f32.xlu0 %v2101
        %v2103 = vpop.xlane.xlu0 %2102
        %v2104 = vsel %vm1145, %v2100, 0.0
        %2105 = vadd.xlane.f32.xlu0 %v2104
        %v2106 = vpop.xlane.xlu0 %2105
        %v2107 = vmul.f32 %v2103, %v1152
        %v2108 = vmul.f32 %v2106, %v1152
        %v2109 = vadd.f32 %v2107, 1e-05
        %v2110 = vadd.f32 %v2108, 1e-05
        %v2111 = vrsqrt.pop %v2109
        %v2112 = vrsqrt.pop %v2110
        %v2113 = vmul.f32 %v2097, %v2111
        %v2114 = vmul.f32 %v2098, %v2112
        %v2116 = vlaneseq
        %v2117 = vshrl.u32 %v2116, 7
        %v2118 = vsub.s32 0, %v2117
        %v2119 = vrot.slane %v2087, %v2118
        %v2121 = vmul.f32 %v2113, %v2119
        %v2122 = vmul.f32 %v2114, %v2119
        %v2124 = vlaneseq
        %v2125 = vshrl.u32 %v2124, 7
        %v2126 = vsub.s32 0, %v2125
        %v2127 = vrot.slane %v2088, %v2126
        %v2129 = vadd.f32 %v2121, %v2127
        %v2130 = vadd.f32 %v2122, %v2127
        %v2131 = vpack.c.bf16 %v2130, %v2129
        %v2132 = vld [vmem:[%s31] sm:$0xf]
        %v2133 = vld [vmem:[%s31 + $0x4] sm:$0xf]
        %v2134 = vld [vmem:[%s31 + $0x8] sm:$0xf]
        %v2135 = vld [vmem:[%s31 + $0xc] sm:$0xf]
        %v2136 = vld [vmem:[%s33] sm:$0x1]
        %v2138 = vlaneseq
        %v2139 = vshrl.u32 %v2138, 7
        %v2140 = vsub.s32 0, %v2139
        %v2141 = vrot.slane %v2136, %v2140
        %v2147 = vunpack.c.l.b16 %v2132
        %v2148 = vunpack.c.l.b16 %v2133
        %v2149 = vunpack.c.l.b16 %v2134
        %v2150 = vunpack.c.l.b16 %v2135
        %v2151 = vpack.c.b16 %v2148, %v2147
        %v2152 = vpack.c.b16 %v2150, %v2149
        %v2156 = vsel %vm1145, %v2131, 0
        %2158 = vmatprep.subr.bf16.mxu0 0
        %2159 = vmatpush1.bf16.msra.mxu0 0
        %2160 = vmatprep.subr.bf16.mxu0 0
        %2161 = vmatpush1.bf16.msra.mxu0 0
        %2162 = vmatprep.subr.bf16.mxu0 0
        %2163 = vmatpush1.bf16.msra.mxu0 0
        %2164 = vmatprep.subr.bf16.mxu0 0
        %2165 = vmatpush1.bf16.msra.mxu0 0
        %2166 = vmatprep.subr.bf16.mxu0 0
        %2167 = vmatpush1.bf16.msra.mxu0 0
        %2168 = vmatprep.subr.bf16.mxu0 0
        %2169 = vmatpush1.bf16.msra.mxu0 0
        %2170 = vmatprep.subr.bf16.mxu0 0
        %2171 = vmatpush1.bf16.msra.mxu0 %v2152
        %2172 = vmatprep.subr.bf16.mxu0 0
        %2173 = vmatpush1.bf16.msra.mxu0 %v2151
        %2174 = vmatprep.subr.bf16.mxu0 0
        %2175 = vmatpush2.bf16.msra.mxu0 0
        %2176 = vmatprep.subr.bf16.mxu0 0
        %2177 = vmatpush2.bf16.msra.mxu0 0
        %2178 = vmatprep.subr.bf16.mxu0 0
        %2179 = vmatpush2.bf16.msra.mxu0 0
        %2180 = vmatprep.subr.bf16.mxu0 0
        %2181 = vmatpush2.bf16.msra.mxu0 0
        %2182 = vmatprep.subr.bf16.mxu0 0
        %2183 = vmatpush2.bf16.msra.mxu0 0
        %2184 = vmatprep.subr.bf16.mxu0 0
        %2185 = vmatpush2.bf16.msra.mxu0 0
        %2186 = vmatprep.subr.bf16.mxu0 0
        %2187 = vmatpush2.bf16.msra.mxu0 0
        %2188 = vmatprep.subr.bf16.mxu0 0
        %2189 = vmatpush2.bf16.msra.mxu0 0
        %2190 = vmatprep.mubr.bf16.mxu0 0
        %2191 = vmatmul.mubr.bf16.gmra.mxu0 %v2156
        %v2192 = vpop.f32.mrf.mxu0
        %v2193 = vadd.f32 %v2141, %v2192
        %v2194 = vpop.f32.mrf.mxu0
        %v2195 = vpop.f32.mrf.mxu0
        %v2196 = vadd.f32 %v2141, %v2195
        %v2197 = vpop.f32.mrf.mxu0
        %2198 = vdwg.mxu0
        %v2199 = vld [vmem:[%s35] sm:$0xf]
        %v2200 = vld [vmem:[%s35 + $0x4] sm:$0xf]
        %v2201 = vld [vmem:[%s35 + $0x8] sm:$0xf]
        %v2202 = vld [vmem:[%s35 + $0xc] sm:$0xf]
        %v2203 = vld [vmem:[%s37] sm:$0x1]
        %v2205 = vlaneseq
        %v2206 = vshrl.u32 %v2205, 7
        %v2207 = vsub.s32 0, %v2206
        %v2208 = vrot.slane %v2203, %v2207
        %v2214 = vunpack.c.l.b16 %v2199
        %v2215 = vunpack.c.l.b16 %v2200
        %v2216 = vunpack.c.l.b16 %v2201
        %v2217 = vunpack.c.l.b16 %v2202
        %v2218 = vpack.c.b16 %v2215, %v2214
        %v2219 = vpack.c.b16 %v2217, %v2216
        %2222 = vmatprep.subr.bf16.mxu0 0
        %2223 = vmatpush1.bf16.msra.mxu0 0
        %2224 = vmatprep.subr.bf16.mxu0 0
        %2225 = vmatpush1.bf16.msra.mxu0 0
        %2226 = vmatprep.subr.bf16.mxu0 0
        %2227 = vmatpush1.bf16.msra.mxu0 0
        %2228 = vmatprep.subr.bf16.mxu0 0
        %2229 = vmatpush1.bf16.msra.mxu0 0
        %2230 = vmatprep.subr.bf16.mxu0 0
        %2231 = vmatpush1.bf16.msra.mxu0 0
        %2232 = vmatprep.subr.bf16.mxu0 0
        %2233 = vmatpush1.bf16.msra.mxu0 0
        %2234 = vmatprep.subr.bf16.mxu0 0
        %2235 = vmatpush1.bf16.msra.mxu0 %v2219
        %2236 = vmatprep.subr.bf16.mxu0 0
        %2237 = vmatpush1.bf16.msra.mxu0 %v2218
        %2238 = vmatprep.subr.bf16.mxu0 0
        %2239 = vmatpush2.bf16.msra.mxu0 0
        %2240 = vmatprep.subr.bf16.mxu0 0
        %2241 = vmatpush2.bf16.msra.mxu0 0
        %2242 = vmatprep.subr.bf16.mxu0 0
        %2243 = vmatpush2.bf16.msra.mxu0 0
        %2244 = vmatprep.subr.bf16.mxu0 0
        %2245 = vmatpush2.bf16.msra.mxu0 0
        %2246 = vmatprep.subr.bf16.mxu0 0
        %2247 = vmatpush2.bf16.msra.mxu0 0
        %2248 = vmatprep.subr.bf16.mxu0 0
        %2249 = vmatpush2.bf16.msra.mxu0 0
        %2250 = vmatprep.subr.bf16.mxu0 0
        %2251 = vmatpush2.bf16.msra.mxu0 0
        %2252 = vmatprep.subr.bf16.mxu0 0
        %2253 = vmatpush2.bf16.msra.mxu0 0
        %2254 = vmatprep.mubr.bf16.mxu0 0
        %2255 = vmatmul.mubr.bf16.gmra.mxu0 %v2156
        %v2256 = vpop.f32.mrf.mxu0
        %v2257 = vadd.f32 %v2208, %v2256
        %v2258 = vpop.f32.mrf.mxu0
        %v2259 = vpop.f32.mrf.mxu0
        %v2260 = vadd.f32 %v2208, %v2259
        %v2261 = vpop.f32.mrf.mxu0
        %2262 = vdwg.mxu0
        %v2263 = vxor.u32 %v2257, 2147483648
        %v2264 = vxor.u32 %v2260, 2147483648
        %v2265 = vmul.f32 %v2263, 1.442695
        %v2266 = vpow.pop %v2265
        %v2267 = vmul.f32 %v2264, 1.442695
        %v2268 = vpow.pop %v2267
        %v2269 = vadd.f32 %v2266, 1.0
        %v2270 = vadd.f32 %v2268, 1.0
        %v2271 = vrcp.pop %v2269
        %v2272 = vmul.f32 1.0, %v2271
        %v2273 = vrcp.pop %v2270
        %v2274 = vmul.f32 1.0, %v2273
        %v2275 = vmul.f32 %v2193, %v2272
        %v2276 = vmul.f32 %v2196, %v2274
        %2277 = vst.msk [vmem:[#allocation2] sm:$0xff] %vm1145, 0.0
        %vm2278 = vcmask 260096
        %2279 = vst.msk [vmem:[#allocation2 + $0x8] sm:$0x7f] %vm2278, 0.0
        %2280 = vst.msk [vmem:[#allocation2 + $0x1f] sm:$0xff] %vm1145, 0.0
        %2281 = vst.msk [vmem:[#allocation2 + $0x27] sm:$0x7f] %vm2278, 0.0
        %2282 = vst.msk [vmem:[#allocation2 + $0xf] sm:$0xff] %vm1145, %v2275
        %2283 = vst.msk [vmem:[#allocation2 + $0x17] sm:$0xff] %vm1145, %v2276
        %v2284 = vld [vmem:[%s39] sm:$0xff]
        %v2285 = vld [vmem:[%s39 + $0x8] sm:$0xff]
        %v2286 = vld [vmem:[%s39 + $0x10] sm:$0xff]
        %v2287 = vld [vmem:[%s39 + $0x18] sm:$0x7f]
        %v2288 = vld [vmem:[#allocation2] sm:$0xff]
        %v2289 = vld [vmem:[#allocation2 + $0x8] sm:$0xff]
        %v2290 = vlaneseq
        %v2291 = vshrl.u32 %v2290, 7
        %v2292 = vsub.s32 0, %v2291
        %v2293 = vrot.slane %v2284, %v2292
        %v2294 = vmul.f32 %v2288, %v2293
        %v2295 = vmul.f32 %v2289, %v2293
        %v2296 = vadd.f32 %v2294, 0.0
        %v2297 = vadd.f32 %v2295, 0.0
        %v2298 = vld [vmem:[#allocation2 + $0x1] sm:$0xff]
        %v2299 = vld [vmem:[#allocation2 + $0x9] sm:$0xff]
        %v2300 = vlaneseq
        %v2301 = vshrl.u32 %v2300, 7
        %v2302 = vsub.s32 1, %v2301
        %v2303 = vrot.slane %v2284, %v2302
        %v2304 = vmul.f32 %v2298, %v2303
        %v2305 = vmul.f32 %v2299, %v2303
        %v2306 = vadd.f32 %v2296, %v2304
        %v2307 = vadd.f32 %v2297, %v2305
        %v2308 = vld [vmem:[#allocation2 + $0x2] sm:$0xff]
        %v2309 = vld [vmem:[#allocation2 + $0xa] sm:$0xff]
        %v2310 = vlaneseq
        %v2311 = vshrl.u32 %v2310, 7
        %v2312 = vsub.s32 2, %v2311
        %v2313 = vrot.slane %v2284, %v2312
        %v2314 = vmul.f32 %v2308, %v2313
        %v2315 = vmul.f32 %v2309, %v2313
        %v2316 = vadd.f32 %v2306, %v2314
        %v2317 = vadd.f32 %v2307, %v2315
        %v2318 = vld [vmem:[#allocation2 + $0x3] sm:$0xff]
        %v2319 = vld [vmem:[#allocation2 + $0xb] sm:$0xff]
        %v2320 = vlaneseq
        %v2321 = vshrl.u32 %v2320, 7
        %v2322 = vsub.s32 3, %v2321
        %v2323 = vrot.slane %v2284, %v2322
        %v2324 = vmul.f32 %v2318, %v2323
        %v2325 = vmul.f32 %v2319, %v2323
        %v2326 = vadd.f32 %v2316, %v2324
        %v2327 = vadd.f32 %v2317, %v2325
        %v2328 = vld [vmem:[#allocation2 + $0x4] sm:$0xff]
        %v2329 = vld [vmem:[#allocation2 + $0xc] sm:$0xff]
        %v2330 = vlaneseq
        %v2331 = vshrl.u32 %v2330, 7
        %v2332 = vsub.s32 4, %v2331
        %v2333 = vrot.slane %v2284, %v2332
        %v2334 = vmul.f32 %v2328, %v2333
        %v2335 = vmul.f32 %v2329, %v2333
        %v2336 = vadd.f32 %v2326, %v2334
        %v2337 = vadd.f32 %v2327, %v2335
        %v2338 = vld [vmem:[#allocation2 + $0x5] sm:$0xff]
        %v2339 = vld [vmem:[#allocation2 + $0xd] sm:$0xff]
        %v2340 = vlaneseq
        %v2341 = vshrl.u32 %v2340, 7
        %v2342 = vsub.s32 5, %v2341
        %v2343 = vrot.slane %v2284, %v2342
        %v2344 = vmul.f32 %v2338, %v2343
        %v2345 = vmul.f32 %v2339, %v2343
        %v2346 = vadd.f32 %v2336, %v2344
        %v2347 = vadd.f32 %v2337, %v2345
        %v2348 = vld [vmem:[#allocation2 + $0x6] sm:$0xff]
        %v2349 = vld [vmem:[#allocation2 + $0xe] sm:$0xff]
        %v2350 = vlaneseq
        %v2351 = vshrl.u32 %v2350, 7
        %v2352 = vsub.s32 6, %v2351
        %v2353 = vrot.slane %v2284, %v2352
        %v2354 = vmul.f32 %v2348, %v2353
        %v2355 = vmul.f32 %v2349, %v2353
        %v2356 = vadd.f32 %v2346, %v2354
        %v2357 = vadd.f32 %v2347, %v2355
        %v2358 = vld [vmem:[#allocation2 + $0x7] sm:$0xff]
        %v2359 = vld [vmem:[#allocation2 + $0xf] sm:$0xff]
        %v2360 = vlaneseq
        %v2361 = vshrl.u32 %v2360, 7
        %v2362 = vsub.s32 7, %v2361
        %v2363 = vrot.slane %v2284, %v2362
        %v2364 = vmul.f32 %v2358, %v2363
        %v2365 = vmul.f32 %v2359, %v2363
        %v2366 = vadd.f32 %v2356, %v2364
        %v2367 = vadd.f32 %v2357, %v2365
        %v2368 = vld [vmem:[#allocation2 + $0x10] sm:$0xff]
        %v2369 = vlaneseq
        %v2370 = vshrl.u32 %v2369, 7
        %v2371 = vsub.s32 0, %v2370
        %v2372 = vrot.slane %v2285, %v2371
        %v2373 = vmul.f32 %v2289, %v2372
        %v2374 = vmul.f32 %v2368, %v2372
        %v2375 = vadd.f32 %v2366, %v2373
        %v2376 = vadd.f32 %v2367, %v2374
        %v2377 = vld [vmem:[#allocation2 + $0x11] sm:$0xff]
        %v2378 = vlaneseq
        %v2379 = vshrl.u32 %v2378, 7
        %v2380 = vsub.s32 1, %v2379
        %v2381 = vrot.slane %v2285, %v2380
        %v2382 = vmul.f32 %v2299, %v2381
        %v2383 = vmul.f32 %v2377, %v2381
        %v2384 = vadd.f32 %v2375, %v2382
        %v2385 = vadd.f32 %v2376, %v2383
        %v2386 = vld [vmem:[#allocation2 + $0x12] sm:$0xff]
        %v2387 = vlaneseq
        %v2388 = vshrl.u32 %v2387, 7
        %v2389 = vsub.s32 2, %v2388
        %v2390 = vrot.slane %v2285, %v2389
        %v2391 = vmul.f32 %v2309, %v2390
        %v2392 = vmul.f32 %v2386, %v2390
        %v2393 = vadd.f32 %v2384, %v2391
        %v2394 = vadd.f32 %v2385, %v2392
        %v2395 = vld [vmem:[#allocation2 + $0x13] sm:$0xff]
        %v2396 = vlaneseq
        %v2397 = vshrl.u32 %v2396, 7
        %v2398 = vsub.s32 3, %v2397
        %v2399 = vrot.slane %v2285, %v2398
        %v2400 = vmul.f32 %v2319, %v2399
        %v2401 = vmul.f32 %v2395, %v2399
        %v2402 = vadd.f32 %v2393, %v2400
        %v2403 = vadd.f32 %v2394, %v2401
        %v2404 = vld [vmem:[#allocation2 + $0x14] sm:$0xff]
        %v2405 = vlaneseq
        %v2406 = vshrl.u32 %v2405, 7
        %v2407 = vsub.s32 4, %v2406
        %v2408 = vrot.slane %v2285, %v2407
        %v2409 = vmul.f32 %v2329, %v2408
        %v2410 = vmul.f32 %v2404, %v2408
        %v2411 = vadd.f32 %v2402, %v2409
        %v2412 = vadd.f32 %v2403, %v2410
        %v2413 = vld [vmem:[#allocation2 + $0x15] sm:$0xff]
        %v2414 = vlaneseq
        %v2415 = vshrl.u32 %v2414, 7
        %v2416 = vsub.s32 5, %v2415
        %v2417 = vrot.slane %v2285, %v2416
        %v2418 = vmul.f32 %v2339, %v2417
        %v2419 = vmul.f32 %v2413, %v2417
        %v2420 = vadd.f32 %v2411, %v2418
        %v2421 = vadd.f32 %v2412, %v2419
        %v2422 = vld [vmem:[#allocation2 + $0x16] sm:$0xff]
        %v2423 = vlaneseq
        %v2424 = vshrl.u32 %v2423, 7
        %v2425 = vsub.s32 6, %v2424
        %v2426 = vrot.slane %v2285, %v2425
        %v2427 = vmul.f32 %v2349, %v2426
        %v2428 = vmul.f32 %v2422, %v2426
        %v2429 = vadd.f32 %v2420, %v2427
        %v2430 = vadd.f32 %v2421, %v2428
        %v2431 = vld [vmem:[#allocation2 + $0x17] sm:$0xff]
        %v2432 = vlaneseq
        %v2433 = vshrl.u32 %v2432, 7
        %v2434 = vsub.s32 7, %v2433
        %v2435 = vrot.slane %v2285, %v2434
        %v2436 = vmul.f32 %v2359, %v2435
        %v2437 = vmul.f32 %v2431, %v2435
        %v2438 = vadd.f32 %v2429, %v2436
        %v2439 = vadd.f32 %v2430, %v2437
        %v2440 = vld [vmem:[#allocation2 + $0x18] sm:$0xff]
        %v2441 = vlaneseq
        %v2442 = vshrl.u32 %v2441, 7
        %v2443 = vsub.s32 0, %v2442
        %v2444 = vrot.slane %v2286, %v2443
        %v2445 = vmul.f32 %v2368, %v2444
        %v2446 = vmul.f32 %v2440, %v2444
        %v2447 = vadd.f32 %v2438, %v2445
        %v2448 = vadd.f32 %v2439, %v2446
        %v2449 = vld [vmem:[#allocation2 + $0x19] sm:$0xff]
        %v2450 = vlaneseq
        %v2451 = vshrl.u32 %v2450, 7
        %v2452 = vsub.s32 1, %v2451
        %v2453 = vrot.slane %v2286, %v2452
        %v2454 = vmul.f32 %v2377, %v2453
        %v2455 = vmul.f32 %v2449, %v2453
        %v2456 = vadd.f32 %v2447, %v2454
        %v2457 = vadd.f32 %v2448, %v2455
        %v2458 = vld [vmem:[#allocation2 + $0x1a] sm:$0xff]
        %v2459 = vlaneseq
        %v2460 = vshrl.u32 %v2459, 7
        %v2461 = vsub.s32 2, %v2460
        %v2462 = vrot.slane %v2286, %v2461
        %v2463 = vmul.f32 %v2386, %v2462
        %v2464 = vmul.f32 %v2458, %v2462
        %v2465 = vadd.f32 %v2456, %v2463
        %v2466 = vadd.f32 %v2457, %v2464
        %v2467 = vld [vmem:[#allocation2 + $0x1b] sm:$0xff]
        %v2468 = vlaneseq
        %v2469 = vshrl.u32 %v2468, 7
        %v2470 = vsub.s32 3, %v2469
        %v2471 = vrot.slane %v2286, %v2470
        %v2472 = vmul.f32 %v2395, %v2471
        %v2473 = vmul.f32 %v2467, %v2471
        %v2474 = vadd.f32 %v2465, %v2472
        %v2475 = vadd.f32 %v2466, %v2473
        %v2476 = vld [vmem:[#allocation2 + $0x1c] sm:$0xff]
        %v2477 = vlaneseq
        %v2478 = vshrl.u32 %v2477, 7
        %v2479 = vsub.s32 4, %v2478
        %v2480 = vrot.slane %v2286, %v2479
        %v2481 = vmul.f32 %v2404, %v2480
        %v2482 = vmul.f32 %v2476, %v2480
        %v2483 = vadd.f32 %v2474, %v2481
        %v2484 = vadd.f32 %v2475, %v2482
        %v2485 = vld [vmem:[#allocation2 + $0x1d] sm:$0xff]
        %v2486 = vlaneseq
        %v2487 = vshrl.u32 %v2486, 7
        %v2488 = vsub.s32 5, %v2487
        %v2489 = vrot.slane %v2286, %v2488
        %v2490 = vmul.f32 %v2413, %v2489
        %v2491 = vmul.f32 %v2485, %v2489
        %v2492 = vadd.f32 %v2483, %v2490
        %v2493 = vadd.f32 %v2484, %v2491
        %v2494 = vld [vmem:[#allocation2 + $0x1e] sm:$0xff]
        %v2495 = vlaneseq
        %v2496 = vshrl.u32 %v2495, 7
        %v2497 = vsub.s32 6, %v2496
        %v2498 = vrot.slane %v2286, %v2497
        %v2499 = vmul.f32 %v2422, %v2498
        %v2500 = vmul.f32 %v2494, %v2498
        %v2501 = vadd.f32 %v2492, %v2499
        %v2502 = vadd.f32 %v2493, %v2500
        %v2503 = vld [vmem:[#allocation2 + $0x1f] sm:$0xff]
        %v2504 = vlaneseq
        %v2505 = vshrl.u32 %v2504, 7
        %v2506 = vsub.s32 7, %v2505
        %v2507 = vrot.slane %v2286, %v2506
        %v2508 = vmul.f32 %v2431, %v2507
        %v2509 = vmul.f32 %v2503, %v2507
        %v2510 = vadd.f32 %v2501, %v2508
        %v2511 = vadd.f32 %v2502, %v2509
        %v2512 = vld [vmem:[#allocation2 + $0x20] sm:$0xff]
        %v2513 = vlaneseq
        %v2514 = vshrl.u32 %v2513, 7
        %v2515 = vsub.s32 0, %v2514
        %v2516 = vrot.slane %v2287, %v2515
        %v2517 = vmul.f32 %v2440, %v2516
        %v2518 = vmul.f32 %v2512, %v2516
        %v2519 = vadd.f32 %v2510, %v2517
        %v2520 = vadd.f32 %v2511, %v2518
        %v2521 = vld [vmem:[#allocation2 + $0x21] sm:$0xff]
        %v2522 = vlaneseq
        %v2523 = vshrl.u32 %v2522, 7
        %v2524 = vsub.s32 1, %v2523
        %v2525 = vrot.slane %v2287, %v2524
        %v2526 = vmul.f32 %v2449, %v2525
        %v2527 = vmul.f32 %v2521, %v2525
        %v2528 = vadd.f32 %v2519, %v2526
        %v2529 = vadd.f32 %v2520, %v2527
        %v2530 = vld [vmem:[#allocation2 + $0x22] sm:$0xff]
        %v2531 = vlaneseq
        %v2532 = vshrl.u32 %v2531, 7
        %v2533 = vsub.s32 2, %v2532
        %v2534 = vrot.slane %v2287, %v2533
        %v2535 = vmul.f32 %v2458, %v2534
        %v2536 = vmul.f32 %v2530, %v2534
        %v2537 = vadd.f32 %v2528, %v2535
        %v2538 = vadd.f32 %v2529, %v2536
        %v2539 = vld [vmem:[#allocation2 + $0x23] sm:$0xff]
        %v2540 = vlaneseq
        %v2541 = vshrl.u32 %v2540, 7
        %v2542 = vsub.s32 3, %v2541
        %v2543 = vrot.slane %v2287, %v2542
        %v2544 = vmul.f32 %v2467, %v2543
        %v2545 = vmul.f32 %v2539, %v2543
        %v2546 = vadd.f32 %v2537, %v2544
        %v2547 = vadd.f32 %v2538, %v2545
        %v2548 = vld [vmem:[#allocation2 + $0x24] sm:$0xff]
        %v2549 = vlaneseq
        %v2550 = vshrl.u32 %v2549, 7
        %v2551 = vsub.s32 4, %v2550
        %v2552 = vrot.slane %v2287, %v2551
        %v2553 = vmul.f32 %v2476, %v2552
        %v2554 = vmul.f32 %v2548, %v2552
        %v2555 = vadd.f32 %v2546, %v2553
        %v2556 = vadd.f32 %v2547, %v2554
        %v2557 = vld [vmem:[#allocation2 + $0x25] sm:$0xff]
        %v2558 = vlaneseq
        %v2559 = vshrl.u32 %v2558, 7
        %v2560 = vsub.s32 5, %v2559
        %v2561 = vrot.slane %v2287, %v2560
        %v2562 = vmul.f32 %v2485, %v2561
        %v2563 = vmul.f32 %v2557, %v2561
        %v2564 = vadd.f32 %v2555, %v2562
        %v2565 = vadd.f32 %v2556, %v2563
        %v2566 = vld [vmem:[#allocation2 + $0x26] sm:$0xff]
        %v2567 = vlaneseq
        %v2568 = vshrl.u32 %v2567, 7
        %v2569 = vsub.s32 6, %v2568
        %v2570 = vrot.slane %v2287, %v2569
        %v2571 = vmul.f32 %v2494, %v2570
        %v2572 = vmul.f32 %v2566, %v2570
        %v2573 = vadd.f32 %v2564, %v2571
        %v2574 = vadd.f32 %v2565, %v2572
        %v2575 = vld [vmem:[%s41] sm:$0x1]
        %v2577 = vlaneseq
        %v2578 = vshrl.u32 %v2577, 7
        %v2579 = vsub.s32 0, %v2578
        %v2580 = vrot.slane %v2575, %v2579
        %v2582 = vmul.f32 %v2573, %v2580
        %v2583 = vmul.f32 %v2574, %v2580
        %v2584 = vld [vmem:[%s43] sm:$0x1]
        %v2586 = vlaneseq
        %v2587 = vshrl.u32 %v2586, 7
        %v2588 = vsub.s32 0, %v2587
        %v2589 = vrot.slane %v2584, %v2588
        %v2591 = vadd.f32 %v2582, %v2589
        %v2592 = vadd.f32 %v2583, %v2589
        %v2593 = vxor.u32 %v2591, 2147483648
        %v2594 = vxor.u32 %v2592, 2147483648
        %v2595 = vmul.f32 %v2593, 1.442695
        %v2596 = vpow.pop %v2595
        %v2597 = vmul.f32 %v2594, 1.442695
        %v2598 = vpow.pop %v2597
        %v2599 = vadd.f32 %v2596, 1.0
        %v2600 = vadd.f32 %v2598, 1.0
        %v2601 = vrcp.pop %v2599
        %v2602 = vmul.f32 1.0, %v2601
        %v2603 = vrcp.pop %v2600
        %v2604 = vmul.f32 1.0, %v2603
        %v2605 = vmul.f32 %v2591, %v2602
        %v2606 = vmul.f32 %v2592, %v2604
        %v2607 = vpack.c.bf16 %v2606, %v2605
        %v2608 = vld [vmem:[%s45] sm:$0xf]
        %v2609 = vld [vmem:[%s45 + $0x4] sm:$0xf]
        %v2610 = vld [vmem:[%s45 + $0x8] sm:$0xf]
        %v2611 = vld [vmem:[%s45 + $0xc] sm:$0xf]
        %v2612 = vld [vmem:[%s47] sm:$0x1]
        %v2614 = vlaneseq
        %v2615 = vshrl.u32 %v2614, 7
        %v2616 = vsub.s32 0, %v2615
        %v2617 = vrot.slane %v2612, %v2616
        %v2623 = vunpack.c.l.b16 %v2608
        %v2624 = vunpack.c.l.b16 %v2609
        %v2625 = vunpack.c.l.b16 %v2610
        %v2626 = vunpack.c.l.b16 %v2611
        %v2627 = vpack.c.b16 %v2624, %v2623
        %v2628 = vpack.c.b16 %v2626, %v2625
        %v2632 = vsel %vm1145, %v2607, 0
        %2634 = vmatprep.subr.bf16.mxu0 0
        %2635 = vmatpush1.bf16.msra.mxu0 0
        %2636 = vmatprep.subr.bf16.mxu0 0
        %2637 = vmatpush1.bf16.msra.mxu0 0
        %2638 = vmatprep.subr.bf16.mxu0 0
        %2639 = vmatpush1.bf16.msra.mxu0 0
        %2640 = vmatprep.subr.bf16.mxu0 0
        %2641 = vmatpush1.bf16.msra.mxu0 0
        %2642 = vmatprep.subr.bf16.mxu0 0
        %2643 = vmatpush1.bf16.msra.mxu0 0
        %2644 = vmatprep.subr.bf16.mxu0 0
        %2645 = vmatpush1.bf16.msra.mxu0 0
        %2646 = vmatprep.subr.bf16.mxu0 0
        %2647 = vmatpush1.bf16.msra.mxu0 %v2628
        %2648 = vmatprep.subr.bf16.mxu0 0
        %2649 = vmatpush1.bf16.msra.mxu0 %v2627
        %2650 = vmatprep.subr.bf16.mxu0 0
        %2651 = vmatpush2.bf16.msra.mxu0 0
        %2652 = vmatprep.subr.bf16.mxu0 0
        %2653 = vmatpush2.bf16.msra.mxu0 0
        %2654 = vmatprep.subr.bf16.mxu0 0
        %2655 = vmatpush2.bf16.msra.mxu0 0
        %2656 = vmatprep.subr.bf16.mxu0 0
        %2657 = vmatpush2.bf16.msra.mxu0 0
        %2658 = vmatprep.subr.bf16.mxu0 0
        %2659 = vmatpush2.bf16.msra.mxu0 0
        %2660 = vmatprep.subr.bf16.mxu0 0
        %2661 = vmatpush2.bf16.msra.mxu0 0
        %2662 = vmatprep.subr.bf16.mxu0 0
        %2663 = vmatpush2.bf16.msra.mxu0 0
        %2664 = vmatprep.subr.bf16.mxu0 0
        %2665 = vmatpush2.bf16.msra.mxu0 0
        %2666 = vmatprep.mubr.bf16.mxu0 0
        %2667 = vmatmul.mubr.bf16.gmra.mxu0 %v2632
        %v2668 = vpop.f32.mrf.mxu0
        %v2669 = vadd.f32 %v2617, %v2668
        %v2670 = vpop.f32.mrf.mxu0
        %v2671 = vpop.f32.mrf.mxu0
        %v2672 = vadd.f32 %v2617, %v2671
        %v2673 = vpop.f32.mrf.mxu0
        %2674 = vdwg.mxu0
        %v2675 = vadd.f32 %v2085, %v2669
        %v2676 = vadd.f32 %v2086, %v2672
        %v2677 = vld [vmem:[%s49] sm:$0x1]
        %v2678 = vld [vmem:[%s51] sm:$0x1]
        %v2679 = vsel %vm1145, %v2675, 0.0
        %2680 = vadd.xlane.f32.xlu0 %v2679
        %v2681 = vpop.xlane.xlu0 %2680
        %v2682 = vsel %vm1145, %v2676, 0.0
        %2683 = vadd.xlane.f32.xlu0 %v2682
        %v2684 = vpop.xlane.xlu0 %2683
        %v2685 = vmul.f32 %v2681, %v1152
        %v2686 = vmul.f32 %v2684, %v1152
        %v2687 = vsub.f32 %v2675, %v2685
        %v2688 = vsub.f32 %v2676, %v2686
        %v2689 = vmul.f32 %v2687, %v2687
        %v2690 = vmul.f32 %v2688, %v2688
        %v2691 = vsel %vm1145, %v2689, 0.0
        %2692 = vadd.xlane.f32.xlu0 %v2691
        %v2693 = vpop.xlane.xlu0 %2692
        %v2694 = vsel %vm1145, %v2690, 0.0
        %2695 = vadd.xlane.f32.xlu0 %v2694
        %v2696 = vpop.xlane.xlu0 %2695
        %v2697 = vmul.f32 %v2693, %v1152
        %v2698 = vmul.f32 %v2696, %v1152
        %v2699 = vadd.f32 %v2697, 1e-05
        %v2700 = vadd.f32 %v2698, 1e-05
        %v2701 = vrsqrt.pop %v2699
        %v2702 = vrsqrt.pop %v2700
        %v2703 = vmul.f32 %v2687, %v2701
        %v2704 = vmul.f32 %v2688, %v2702
        %v2706 = vlaneseq
        %v2707 = vshrl.u32 %v2706, 7
        %v2708 = vsub.s32 0, %v2707
        %v2709 = vrot.slane %v2677, %v2708
        %v2711 = vmul.f32 %v2703, %v2709
        %v2712 = vmul.f32 %v2704, %v2709
        %v2714 = vlaneseq
        %v2715 = vshrl.u32 %v2714, 7
        %v2716 = vsub.s32 0, %v2715
        %v2717 = vrot.slane %v2678, %v2716
        %v2719 = vadd.f32 %v2711, %v2717
        %v2720 = vadd.f32 %v2712, %v2717
        %v2721 = vpack.c.bf16 %v2720, %v2719
        %v2722 = vld [vmem:[%s53] sm:$0xf]
        %v2723 = vld [vmem:[%s53 + $0x4] sm:$0xf]
        %v2724 = vld [vmem:[%s53 + $0x8] sm:$0xf]
        %v2725 = vld [vmem:[%s53 + $0xc] sm:$0xf]
        %v2726 = vld [vmem:[%s55] sm:$0x1]
        %v2728 = vlaneseq
        %v2729 = vshrl.u32 %v2728, 7
        %v2730 = vsub.s32 0, %v2729
        %v2731 = vrot.slane %v2726, %v2730
        %v2737 = vunpack.c.l.b16 %v2722
        %v2738 = vunpack.c.l.b16 %v2723
        %v2739 = vunpack.c.l.b16 %v2724
        %v2740 = vunpack.c.l.b16 %v2725
        %v2741 = vpack.c.b16 %v2738, %v2737
        %v2742 = vpack.c.b16 %v2740, %v2739
        %v2746 = vsel %vm1145, %v2721, 0
        %2748 = vmatprep.subr.bf16.mxu0 0
        %2749 = vmatpush1.bf16.msra.mxu0 0
        %2750 = vmatprep.subr.bf16.mxu0 0
        %2751 = vmatpush1.bf16.msra.mxu0 0
        %2752 = vmatprep.subr.bf16.mxu0 0
        %2753 = vmatpush1.bf16.msra.mxu0 0
        %2754 = vmatprep.subr.bf16.mxu0 0
        %2755 = vmatpush1.bf16.msra.mxu0 0
        %2756 = vmatprep.subr.bf16.mxu0 0
        %2757 = vmatpush1.bf16.msra.mxu0 0
        %2758 = vmatprep.subr.bf16.mxu0 0
        %2759 = vmatpush1.bf16.msra.mxu0 0
        %2760 = vmatprep.subr.bf16.mxu0 0
        %2761 = vmatpush1.bf16.msra.mxu0 %v2742
        %2762 = vmatprep.subr.bf16.mxu0 0
        %2763 = vmatpush1.bf16.msra.mxu0 %v2741
        %2764 = vmatprep.subr.bf16.mxu0 0
        %2765 = vmatpush2.bf16.msra.mxu0 0
        %2766 = vmatprep.subr.bf16.mxu0 0
        %2767 = vmatpush2.bf16.msra.mxu0 0
        %2768 = vmatprep.subr.bf16.mxu0 0
        %2769 = vmatpush2.bf16.msra.mxu0 0
        %2770 = vmatprep.subr.bf16.mxu0 0
        %2771 = vmatpush2.bf16.msra.mxu0 0
        %2772 = vmatprep.subr.bf16.mxu0 0
        %2773 = vmatpush2.bf16.msra.mxu0 0
        %2774 = vmatprep.subr.bf16.mxu0 0
        %2775 = vmatpush2.bf16.msra.mxu0 0
        %2776 = vmatprep.subr.bf16.mxu0 0
        %2777 = vmatpush2.bf16.msra.mxu0 0
        %2778 = vmatprep.subr.bf16.mxu0 0
        %2779 = vmatpush2.bf16.msra.mxu0 0
        %2780 = vmatprep.mubr.bf16.mxu0 0
        %2781 = vmatmul.mubr.bf16.gmra.mxu0 %v2746
        %v2782 = vpop.f32.mrf.mxu0
        %v2783 = vadd.f32 %v2731, %v2782
        %v2784 = vpop.f32.mrf.mxu0
        %v2785 = vpop.f32.mrf.mxu0
        %v2786 = vadd.f32 %v2731, %v2785
        %v2787 = vpop.f32.mrf.mxu0
        %2788 = vdwg.mxu0
        %v2789 = vxor.u32 %v2783, 2147483648
        %v2790 = vxor.u32 %v2786, 2147483648
        %v2791 = vmul.f32 %v2789, 1.442695
        %v2792 = vpow.pop %v2791
        %v2793 = vmul.f32 %v2790, 1.442695
        %v2794 = vpow.pop %v2793
        %v2795 = vadd.f32 %v2792, 1.0
        %v2796 = vadd.f32 %v2794, 1.0
        %v2797 = vrcp.pop %v2795
        %v2798 = vmul.f32 1.0, %v2797
        %v2799 = vrcp.pop %v2796
        %v2800 = vmul.f32 1.0, %v2799
        %v2801 = vmul.f32 %v2783, %v2798
        %v2802 = vmul.f32 %v2786, %v2800
        %v2803 = vpack.c.bf16 %v2802, %v2801
        %v2804 = vld [vmem:[%s57] sm:$0xf]
        %v2805 = vld [vmem:[%s57 + $0x4] sm:$0xf]
        %v2806 = vld [vmem:[%s57 + $0x8] sm:$0xf]
        %v2807 = vld [vmem:[%s57 + $0xc] sm:$0xf]
        %v2808 = vld [vmem:[%s57 + $0x10] sm:$0xf]
        %v2809 = vld [vmem:[%s57 + $0x14] sm:$0xf]
        %v2810 = vld [vmem:[%s57 + $0x18] sm:$0xf]
        %v2811 = vld [vmem:[%s57 + $0x1c] sm:$0xf]
        %v2812 = vld [vmem:[%s57 + $0x20] sm:$0xf]
        %v2813 = vld [vmem:[%s57 + $0x24] sm:$0xf]
        %v2814 = vld [vmem:[%s57 + $0x28] sm:$0xf]
        %v2815 = vld [vmem:[%s57 + $0x2c] sm:$0xf]
        %v2816 = vld [vmem:[%s57 + $0x30] sm:$0xf]
        %v2817 = vld [vmem:[%s57 + $0x34] sm:$0xf]
        %v2818 = vld [vmem:[%s57 + $0x38] sm:$0xf]
        %v2819 = vld [vmem:[%s57 + $0x3c] sm:$0xf]
        %v2820 = vld [vmem:[%s59] sm:$0x1]
        %v2822 = vlaneseq
        %v2823 = vshrl.u32 %v2822, 7
        %v2824 = vsub.s32 0, %v2823
        %v2825 = vrot.slane %v2820, %v2824
        %v2843 = vunpack.c.l.b16 %v2804
        %v2844 = vunpack.c.l.b16 %v2805
        %v2845 = vunpack.c.l.b16 %v2806
        %v2846 = vunpack.c.l.b16 %v2807
        %v2847 = vunpack.c.l.b16 %v2808
        %v2848 = vunpack.c.l.b16 %v2809
        %v2849 = vunpack.c.l.b16 %v2810
        %v2850 = vunpack.c.l.b16 %v2811
        %v2851 = vunpack.c.l.b16 %v2812
        %v2852 = vunpack.c.l.b16 %v2813
        %v2853 = vunpack.c.l.b16 %v2814
        %v2854 = vunpack.c.l.b16 %v2815
        %v2855 = vunpack.c.l.b16 %v2816
        %v2856 = vunpack.c.l.b16 %v2817
        %v2857 = vunpack.c.l.b16 %v2818
        %v2858 = vunpack.c.l.b16 %v2819
        %v2859 = vpack.c.b16 %v2844, %v2843
        %v2860 = vpack.c.b16 %v2846, %v2845
        %v2861 = vpack.c.b16 %v2848, %v2847
        %v2862 = vpack.c.b16 %v2850, %v2849
        %v2863 = vpack.c.b16 %v2852, %v2851
        %v2864 = vpack.c.b16 %v2854, %v2853
        %v2865 = vpack.c.b16 %v2856, %v2855
        %v2866 = vpack.c.b16 %v2858, %v2857
        %2875 = vmatprep.subr.bf16.mxu0 0
        %2876 = vmatpush1.bf16.msra.mxu0 %v2866
        %2877 = vmatprep.subr.bf16.mxu0 0
        %2878 = vmatpush1.bf16.msra.mxu0 %v2865
        %2879 = vmatprep.subr.bf16.mxu0 0
        %2880 = vmatpush1.bf16.msra.mxu0 %v2864
        %2881 = vmatprep.subr.bf16.mxu0 0
        %2882 = vmatpush1.bf16.msra.mxu0 %v2863
        %2883 = vmatprep.subr.bf16.mxu0 0
        %2884 = vmatpush1.bf16.msra.mxu0 %v2862
        %2885 = vmatprep.subr.bf16.mxu0 0
        %2886 = vmatpush1.bf16.msra.mxu0 %v2861
        %2887 = vmatprep.subr.bf16.mxu0 0
        %2888 = vmatpush1.bf16.msra.mxu0 %v2860
        %2889 = vmatprep.subr.bf16.mxu0 0
        %2890 = vmatpush1.bf16.msra.mxu0 %v2859
        %2891 = vmatprep.subr.bf16.mxu0 0
        %2892 = vmatpush2.bf16.msra.mxu0 0
        %2893 = vmatprep.subr.bf16.mxu0 0
        %2894 = vmatpush2.bf16.msra.mxu0 0
        %2895 = vmatprep.subr.bf16.mxu0 0
        %2896 = vmatpush2.bf16.msra.mxu0 0
        %2897 = vmatprep.subr.bf16.mxu0 0
        %2898 = vmatpush2.bf16.msra.mxu0 0
        %2899 = vmatprep.subr.bf16.mxu0 0
        %2900 = vmatpush2.bf16.msra.mxu0 0
        %2901 = vmatprep.subr.bf16.mxu0 0
        %2902 = vmatpush2.bf16.msra.mxu0 0
        %2903 = vmatprep.subr.bf16.mxu0 0
        %2904 = vmatpush2.bf16.msra.mxu0 0
        %2905 = vmatprep.subr.bf16.mxu0 0
        %2906 = vmatpush2.bf16.msra.mxu0 0
        %2907 = vmatprep.mubr.bf16.mxu0 0
        %2908 = vmatmul.mubr.bf16.gmra.mxu0 %v2803
        %v2909 = vpop.f32.mrf.mxu0
        %v2910 = vadd.f32 %v2825, %v2909
        %v2911 = vpop.f32.mrf.mxu0
        %v2912 = vpop.f32.mrf.mxu0
        %v2913 = vadd.f32 %v2825, %v2912
        %v2914 = vpop.f32.mrf.mxu0
        %2915 = vdwg.mxu0
        %v2916 = vmul.f32 %v2910, 0.5
        %v2917 = vmul.f32 %v2913, 0.5
        %v2918 = vadd.f32 %v2675, %v2916
        %v2919 = vadd.f32 %v2676, %v2917
        %v2920 = vld [vmem:[%s61] sm:$0x1]
        %v2921 = vld [vmem:[%s63] sm:$0x1]
        %v2922 = vsel %vm1145, %v2918, 0.0
        %2923 = vadd.xlane.f32.xlu0 %v2922
        %v2924 = vpop.xlane.xlu0 %2923
        %v2925 = vsel %vm1145, %v2919, 0.0
        %2926 = vadd.xlane.f32.xlu0 %v2925
        %v2927 = vpop.xlane.xlu0 %2926
        %v2928 = vmul.f32 %v2924, %v1152
        %v2929 = vmul.f32 %v2927, %v1152
        %v2930 = vsub.f32 %v2918, %v2928
        %v2931 = vsub.f32 %v2919, %v2929
        %v2932 = vmul.f32 %v2930, %v2930
        %v2933 = vmul.f32 %v2931, %v2931
        %v2934 = vsel %vm1145, %v2932, 0.0
        %2935 = vadd.xlane.f32.xlu0 %v2934
        %v2936 = vpop.xlane.xlu0 %2935
        %v2937 = vsel %vm1145, %v2933, 0.0
        %2938 = vadd.xlane.f32.xlu0 %v2937
        %v2939 = vpop.xlane.xlu0 %2938
        %v2940 = vmul.f32 %v2936, %v1152
        %v2941 = vmul.f32 %v2939, %v1152
        %v2942 = vadd.f32 %v2940, 1e-05
        %v2943 = vadd.f32 %v2941, 1e-05
        %v2944 = vrsqrt.pop %v2942
        %v2945 = vrsqrt.pop %v2943
        %v2946 = vmul.f32 %v2930, %v2944
        %v2947 = vmul.f32 %v2931, %v2945
        %v2949 = vlaneseq
        %v2950 = vshrl.u32 %v2949, 7
        %v2951 = vsub.s32 0, %v2950
        %v2952 = vrot.slane %v2920, %v2951
        %v2954 = vmul.f32 %v2946, %v2952
        %v2955 = vmul.f32 %v2947, %v2952
        %v2957 = vlaneseq
        %v2958 = vshrl.u32 %v2957, 7
        %v2959 = vsub.s32 0, %v2958
        %v2960 = vrot.slane %v2921, %v2959
        %v2962 = vadd.f32 %v2954, %v2960
        %v2963 = vadd.f32 %v2955, %v2960
        %v2964 = vpack.c.bf16 %v2963, %v2962
        %v2965 = vld [vmem:[%s65] sm:$0xf]
        %v2966 = vld [vmem:[%s65 + $0x4] sm:$0xf]
        %v2967 = vld [vmem:[%s65 + $0x8] sm:$0xf]
        %v2968 = vld [vmem:[%s65 + $0xc] sm:$0xf]
        %v2969 = vld [vmem:[%s67] sm:$0x1]
        %v2971 = vlaneseq
        %v2972 = vshrl.u32 %v2971, 7
        %v2973 = vsub.s32 0, %v2972
        %v2974 = vrot.slane %v2969, %v2973
        %v2980 = vunpack.c.l.b16 %v2965
        %v2981 = vunpack.c.l.b16 %v2966
        %v2982 = vunpack.c.l.b16 %v2967
        %v2983 = vunpack.c.l.b16 %v2968
        %v2984 = vpack.c.b16 %v2981, %v2980
        %v2985 = vpack.c.b16 %v2983, %v2982
        %v2989 = vsel %vm1145, %v2964, 0
        %2991 = vmatprep.subr.bf16.mxu0 0
        %2992 = vmatpush1.bf16.msra.mxu0 0
        %2993 = vmatprep.subr.bf16.mxu0 0
        %2994 = vmatpush1.bf16.msra.mxu0 0
        %2995 = vmatprep.subr.bf16.mxu0 0
        %2996 = vmatpush1.bf16.msra.mxu0 0
        %2997 = vmatprep.subr.bf16.mxu0 0
        %2998 = vmatpush1.bf16.msra.mxu0 0
        %2999 = vmatprep.subr.bf16.mxu0 0
        %3000 = vmatpush1.bf16.msra.mxu0 0
        %3001 = vmatprep.subr.bf16.mxu0 0
        %3002 = vmatpush1.bf16.msra.mxu0 0
        %3003 = vmatprep.subr.bf16.mxu0 0
        %3004 = vmatpush1.bf16.msra.mxu0 %v2985
        %3005 = vmatprep.subr.bf16.mxu0 0
        %3006 = vmatpush1.bf16.msra.mxu0 %v2984
        %3007 = vmatprep.subr.bf16.mxu0 0
        %3008 = vmatpush2.bf16.msra.mxu0 0
        %3009 = vmatprep.subr.bf16.mxu0 0
        %3010 = vmatpush2.bf16.msra.mxu0 0
        %3011 = vmatprep.subr.bf16.mxu0 0
        %3012 = vmatpush2.bf16.msra.mxu0 0
        %3013 = vmatprep.subr.bf16.mxu0 0
        %3014 = vmatpush2.bf16.msra.mxu0 0
        %3015 = vmatprep.subr.bf16.mxu0 0
        %3016 = vmatpush2.bf16.msra.mxu0 0
        %3017 = vmatprep.subr.bf16.mxu0 0
        %3018 = vmatpush2.bf16.msra.mxu0 0
        %3019 = vmatprep.subr.bf16.mxu0 0
        %3020 = vmatpush2.bf16.msra.mxu0 0
        %3021 = vmatprep.subr.bf16.mxu0 0
        %3022 = vmatpush2.bf16.msra.mxu0 0
        %3023 = vmatprep.mubr.bf16.mxu0 0
        %3024 = vmatmul.mubr.bf16.gmra.mxu0 %v2989
        %v3025 = vpop.f32.mrf.mxu0
        %v3026 = vadd.f32 %v2974, %v3025
        %v3027 = vpop.f32.mrf.mxu0
        %v3028 = vpop.f32.mrf.mxu0
        %v3029 = vadd.f32 %v2974, %v3028
        %v3030 = vpop.f32.mrf.mxu0
        %3031 = vdwg.mxu0
        %3032 = vmax.xlane.f32.xlu0 %v3026
        %v3033 = vpop.xlane.xlu0 %3032
        %3034 = vmax.xlane.f32.xlu0 %v3029
        %v3035 = vpop.xlane.xlu0 %3034
        %v3036 = vsub.f32 %v3026, %v3033
        %v3037 = vsub.f32 %v3029, %v3035
        %v3038 = vmul.f32 %v3036, 1.442695
        %v3039 = vpow.pop %v3038
        %v3040 = vmul.f32 %v3037, 1.442695
        %v3041 = vpow.pop %v3040
        %3042 = vadd.xlane.f32.xlu0 %v3039
        %v3043 = vpop.xlane.xlu0 %3042
        %3044 = vadd.xlane.f32.xlu0 %v3041
        %v3045 = vpop.xlane.xlu0 %3044
        %v3046 = vrcp.pop %v3043
        %v3047 = vmul.f32 %v3039, %v3046
        %v3048 = vrcp.pop %v3045
        %v3049 = vmul.f32 %v3041, %v3048
        %v3050 = vpack.c.bf16 %v3049, %v3047
        %v3051 = vld [vmem:[%s69] sm:$0xf]
        %v3052 = vld [vmem:[%s69 + $0x4] sm:$0xf]
        %v3053 = vld [vmem:[%s69 + $0x8] sm:$0xf]
        %v3054 = vld [vmem:[%s69 + $0xc] sm:$0xf]
        %v3055 = vld [vmem:[%s69 + $0x10] sm:$0xf]
        %v3056 = vld [vmem:[%s69 + $0x14] sm:$0xf]
        %v3057 = vld [vmem:[%s69 + $0x18] sm:$0xf]
        %v3058 = vld [vmem:[%s69 + $0x1c] sm:$0xf]
        %v3059 = vld [vmem:[%s69 + $0x20] sm:$0xf]
        %v3060 = vld [vmem:[%s69 + $0x24] sm:$0xf]
        %v3061 = vld [vmem:[%s69 + $0x28] sm:$0xf]
        %v3062 = vld [vmem:[%s69 + $0x2c] sm:$0xf]
        %v3063 = vld [vmem:[%s69 + $0x30] sm:$0xf]
        %v3064 = vld [vmem:[%s69 + $0x34] sm:$0xf]
        %v3065 = vld [vmem:[%s69 + $0x38] sm:$0xf]
        %v3066 = vld [vmem:[%s69 + $0x3c] sm:$0xf]
        %v3067 = vld [vmem:[%s71] sm:$0x1]
        %v3069 = vlaneseq
        %v3070 = vshrl.u32 %v3069, 7
        %v3071 = vsub.s32 0, %v3070
        %v3072 = vrot.slane %v3067, %v3071
        %v3090 = vunpack.c.l.b16 %v3051
        %v3091 = vunpack.c.l.b16 %v3052
        %v3092 = vunpack.c.l.b16 %v3053
        %v3093 = vunpack.c.l.b16 %v3054
        %v3094 = vunpack.c.l.b16 %v3055
        %v3095 = vunpack.c.l.b16 %v3056
        %v3096 = vunpack.c.l.b16 %v3057
        %v3097 = vunpack.c.l.b16 %v3058
        %v3098 = vunpack.c.l.b16 %v3059
        %v3099 = vunpack.c.l.b16 %v3060
        %v3100 = vunpack.c.l.b16 %v3061
        %v3101 = vunpack.c.l.b16 %v3062
        %v3102 = vunpack.c.l.b16 %v3063
        %v3103 = vunpack.c.l.b16 %v3064
        %v3104 = vunpack.c.l.b16 %v3065
        %v3105 = vunpack.c.l.b16 %v3066
        %v3106 = vpack.c.b16 %v3091, %v3090
        %v3107 = vpack.c.b16 %v3093, %v3092
        %v3108 = vpack.c.b16 %v3095, %v3094
        %v3109 = vpack.c.b16 %v3097, %v3096
        %v3110 = vpack.c.b16 %v3099, %v3098
        %v3111 = vpack.c.b16 %v3101, %v3100
        %v3112 = vpack.c.b16 %v3103, %v3102
        %v3113 = vpack.c.b16 %v3105, %v3104
        %3122 = vmatprep.subr.bf16.mxu0 0
        %3123 = vmatpush1.bf16.msra.mxu0 %v3113
        %3124 = vmatprep.subr.bf16.mxu0 0
        %3125 = vmatpush1.bf16.msra.mxu0 %v3112
        %3126 = vmatprep.subr.bf16.mxu0 0
        %3127 = vmatpush1.bf16.msra.mxu0 %v3111
        %3128 = vmatprep.subr.bf16.mxu0 0
        %3129 = vmatpush1.bf16.msra.mxu0 %v3110
        %3130 = vmatprep.subr.bf16.mxu0 0
        %3131 = vmatpush1.bf16.msra.mxu0 %v3109
        %3132 = vmatprep.subr.bf16.mxu0 0
        %3133 = vmatpush1.bf16.msra.mxu0 %v3108
        %3134 = vmatprep.subr.bf16.mxu0 0
        %3135 = vmatpush1.bf16.msra.mxu0 %v3107
        %3136 = vmatprep.subr.bf16.mxu0 0
        %3137 = vmatpush1.bf16.msra.mxu0 %v3106
        %3138 = vmatprep.subr.bf16.mxu0 0
        %3139 = vmatpush2.bf16.msra.mxu0 0
        %3140 = vmatprep.subr.bf16.mxu0 0
        %3141 = vmatpush2.bf16.msra.mxu0 0
        %3142 = vmatprep.subr.bf16.mxu0 0
        %3143 = vmatpush2.bf16.msra.mxu0 0
        %3144 = vmatprep.subr.bf16.mxu0 0
        %3145 = vmatpush2.bf16.msra.mxu0 0
        %3146 = vmatprep.subr.bf16.mxu0 0
        %3147 = vmatpush2.bf16.msra.mxu0 0
        %3148 = vmatprep.subr.bf16.mxu0 0
        %3149 = vmatpush2.bf16.msra.mxu0 0
        %3150 = vmatprep.subr.bf16.mxu0 0
        %3151 = vmatpush2.bf16.msra.mxu0 0
        %3152 = vmatprep.subr.bf16.mxu0 0
        %3153 = vmatpush2.bf16.msra.mxu0 0
        %3154 = vmatprep.mubr.bf16.mxu0 0
        %3155 = vmatmul.mubr.bf16.gmra.mxu0 %v3050
        %v3156 = vpop.f32.mrf.mxu0
        %v3157 = vadd.f32 %v3072, %v3156
        %v3158 = vpop.f32.mrf.mxu0
        %v3159 = vpop.f32.mrf.mxu0
        %v3160 = vadd.f32 %v3072, %v3159
        %v3161 = vpop.f32.mrf.mxu0
        %3162 = vdwg.mxu0
        %v3163 = vadd.f32 %v2962, %v3157
        %v3164 = vadd.f32 %v2963, %v3160
        %3165 = vst.msk [vmem:[%s1124] sm:$0xff] %vm1145, %v3163
        %3166 = vst.msk [vmem:[%s1124 + $0x8] sm:$0xff] %vm1145, %v3164
        %3167 = vst [vmem:[%s1131] sm:$0xff] %v3026
        %3168 = vst [vmem:[%s1131 + $0x8] sm:$0xff] %v3029
        %s3169 = sand.u32 %s862, 1
        %s3170 = scalar_lea.sflag [#allocation4], %s3169
        %s3171 = sand.u32 %s862, 1
        %s3172 = smul.addr %s3171, 16
        %s3173 = scalar_lea.vmem [#allocation3], %s3172
        %s3174 = sand.u32 %s888, 1
        %s3175 = scalar_lea.sflag [#allocation6], %s3174
        %s3176 = sand.u32 %s888, 1
        %s3177 = smul.addr %s3176, 16
        %s3178 = scalar_lea.vmem [#allocation5], %s3177
        // Predicated region
        $region165: #{tpu_custom_call.1} parent=163 // pred_check
          %p3179 = pneg %p872
        $region166: #{tpu_custom_call.1} parent=163 // pred_check_branch
          %3181 = sbr.rel (%p3179) target = $region168
        $region167: #{tpu_custom_call.1} parent=163 // pred_region
          %s3182 = smul.u32 2, %s93
          %s3184 = ssub.s32 256, 256
          %3185 = vsyncadd %s3170, %s3184
          %s3186 = smul.addr %s3182, 128
          %s3187 = scalar_lea.hbm %s73, %s3186
          %s3188 = sshll.u32 %s3173, 4
          %s3189 = int_to_ptr.vmem [resolvable:$true] %s3188
          %3194 = dma.vmem_to_hbm [thread:$0]  %s3189, 256, %s3187, %s3170, 128, 128, 8
        $region168: #{tpu_custom_call.1} parent=163 // pred_fallthru
          _
        // Predicated region
        $region169: #{tpu_custom_call.1} parent=163 // pred_check
          %p3195 = pneg %p898
        $region170: #{tpu_custom_call.1} parent=163 // pred_check_branch
          %3197 = sbr.rel (%p3195) target = $region172
        $region171: #{tpu_custom_call.1} parent=163 // pred_region
          %s3198 = smul.u32 2, %s93
          %s3200 = ssub.s32 256, 256
          %3201 = vsyncadd %s3175, %s3200
          %s3202 = smul.addr %s3198, 128
          %s3203 = scalar_lea.hbm %s75, %s3202
          %s3204 = sshll.u32 %s3178, 4
          %s3205 = int_to_ptr.vmem [resolvable:$true] %s3204
          %3210 = dma.vmem_to_hbm [thread:$0]  %s3205, 256, %s3203, %s3175, 128, 128, 8
        $region172: #{tpu_custom_call.1} parent=163 // pred_fallthru
          _
      $region164: #{tpu_custom_call.1} parent=5 // pred_fallthru
        _
      %p3211 = scmp.le.s32.totalorder 2, %s88
      // Predicated region
      $region173: #{tpu_custom_call.1} parent=5 // pred_check
        %p3212 = pneg %p3211
      $region174: #{tpu_custom_call.1} parent=5 // pred_check_branch
        %3214 = sbr.rel (%p3212) target = $region176
      $region175: #{tpu_custom_call.1} parent=5 // pred_region
        %s3215 = ssub.s32 %s88, 2
        // Predicated region
        $region177: #{tpu_custom_call.1} parent=175 // pred_check
          %p3216 = pneg %p878
        $region178: #{tpu_custom_call.1} parent=175 // pred_check_branch
          %3218 = sbr.rel (%p3216) target = $region180
        $region179: #{tpu_custom_call.1} parent=175 // pred_region
          %s3219 = sand.u32 %s863, 1
          %s3220 = scalar_lea.sflag [#allocation4], %s3219
          %s3221 = sand.u32 %s863, 1
          %s3222 = smul.addr %s3221, 16
          %s3223 = scalar_lea.vmem [#allocation3], %s3222
          %3224 = dma.done %s3220, 256
        $region180: #{tpu_custom_call.1} parent=175 // pred_fallthru
          _
        // Predicated region
        $region181: #{tpu_custom_call.1} parent=175 // pred_check
          %p3225 = pneg %p904
        $region182: #{tpu_custom_call.1} parent=175 // pred_check_branch
          %3227 = sbr.rel (%p3225) target = $region184
        $region183: #{tpu_custom_call.1} parent=175 // pred_region
          %s3228 = sand.u32 %s889, 1
          %s3229 = scalar_lea.sflag [#allocation6], %s3228
          %s3230 = sand.u32 %s889, 1
          %s3231 = smul.addr %s3230, 16
          %s3232 = scalar_lea.vmem [#allocation5], %s3231
          %3233 = dma.done %s3229, 256
        $region184: #{tpu_custom_call.1} parent=175 // pred_fallthru
          _
      $region176: #{tpu_custom_call.1} parent=5 // pred_fallthru
        _
    $region6: #{tpu_custom_call.1} parent=1 // loop_footer
      %s92 = sadd.s32 1, %s88
    $region7: #{tpu_custom_call.1} parent=1 // loop_footer_branch
      %87 = sbr.rel target = $region3
    $region8: #{tpu_custom_call.1} parent=1 // loop_exit
      _
    %3234 = vsyncpa [#allocation4], 1
    %s3235 = scalar_lea.sflag [#allocation4], 1
    %3236 = vsyncpa %s3235, 1
    %3237 = vsyncpa [#allocation6], 1
    %s3238 = scalar_lea.sflag [#allocation6], 1
    %3239 = vsyncpa %s3238, 1

// kernel: tpu_custom_call.1
$region0: #{tpu_custom_call.1}
  #allocation0 [shape = 'u32[]', space=smem, size = 0x4, offset = 0x4, fixed_abs, tag = 'smem constant byte address 0x4 - core index']
  #allocation1 [shape = 'u32[144,128]{1,0:T(1,128)}', space=vmem, size = 0x12000, scoped, tag = 'internal scratch']
  #allocation2 [shape = 'f32[1,46,32]{2,1,0:T(8,128)}', space=vmem, size = 0x6000, scoped, tag = 'scratch operand']
  %s0 = inlined_call_operand.smem [shape: u32[38], index: -1, kind: input, shape index: {}]
  %s1 = sld [smem:[%s0]]
  %s2 = scalar_lea.smem %s0, 1
  %s3 = sld [smem:[%s2]]
  %s4 = scalar_lea.smem %s0, 2
  %s5 = sld [smem:[%s4]]
  %s6 = scalar_lea.smem %s0, 3
  %s7 = sld [smem:[%s6]]
  %s8 = scalar_lea.smem %s0, 4
  %s9 = sld [smem:[%s8]]
  %s10 = scalar_lea.smem %s0, 5
  %s11 = sld [smem:[%s10]]
  %s12 = scalar_lea.smem %s0, 6
  %s13 = sld [smem:[%s12]]
  %s14 = scalar_lea.smem %s0, 7
  %s15 = sld [smem:[%s14]]
  %s16 = scalar_lea.smem %s0, 8
  %s17 = sld [smem:[%s16]]
  %s18 = scalar_lea.smem %s0, 9
  %s19 = sld [smem:[%s18]]
  %s20 = scalar_lea.smem %s0, 10
  %s21 = sld [smem:[%s20]]
  %s22 = scalar_lea.smem %s0, 11
  %s23 = sld [smem:[%s22]]
  %s24 = scalar_lea.smem %s0, 12
  %s25 = sld [smem:[%s24]]
  %s26 = scalar_lea.smem %s0, 13
  %s27 = sld [smem:[%s26]]
  %s28 = scalar_lea.smem %s0, 14
  %s29 = sld [smem:[%s28]]
  %s30 = scalar_lea.smem %s0, 15
  %s31 = sld [smem:[%s30]]
  %s32 = scalar_lea.smem %s0, 16
  %s33 = sld [smem:[%s32]]
  %s34 = scalar_lea.smem %s0, 17
  %s35 = sld [smem:[%s34]]
  %s36 = scalar_lea.smem %s0, 18
  %s37 = sld [smem:[%s36]]
  %s38 = scalar_lea.smem %s0, 19
  %s39 = sld [smem:[%s38]]
  %s40 = scalar_lea.smem %s0, 20
  %s41 = sld [smem:[%s40]]
  %s42 = scalar_lea.smem %s0, 21
  %s43 = sld [smem:[%s42]]
  %s44 = scalar_lea.smem %s0, 22
  %s45 = sld [smem:[%s44]]
  %s46 = scalar_lea.smem %s0, 23
  %s47 = sld [smem:[%s46]]
  %s48 = scalar_lea.smem %s0, 24
  %s49 = sld [smem:[%s48]]
  %s50 = scalar_lea.smem %s0, 25
  %s51 = sld [smem:[%s50]]
  %s52 = scalar_lea.smem %s0, 26
  %s53 = sld [smem:[%s52]]
  %s54 = scalar_lea.smem %s0, 27
  %s55 = sld [smem:[%s54]]
  %s56 = scalar_lea.smem %s0, 28
  %s57 = sld [smem:[%s56]]
  %s58 = scalar_lea.smem %s0, 29
  %s59 = sld [smem:[%s58]]
  %s60 = scalar_lea.smem %s0, 30
  %s61 = sld [smem:[%s60]]
  %s62 = scalar_lea.smem %s0, 31
  %s63 = sld [smem:[%s62]]
  %s64 = scalar_lea.smem %s0, 32
  %s65 = sld [smem:[%s64]]
  %s66 = scalar_lea.smem %s0, 33
  %s67 = sld [smem:[%s66]]
  %s68 = scalar_lea.smem %s0, 34
  %s69 = sld [smem:[%s68]]
  %s70 = scalar_lea.smem %s0, 35
  %s71 = sld [smem:[%s70]]
  %s72 = scalar_lea.smem %s0, 36
  %s73 = sld [smem:[%s72]]
  %s74 = scalar_lea.smem %s0, 37
  %s75 = sld [smem:[%s74]]
  %76 = xla_tuple %s73, %s75
  %s77 = sld [smem:[#allocation0]]
  $region185: #{tpu_custom_call.1} parent=0
    _
  %s79 = ssub.s32 1, %s77
  %s80 = scalar_select 0, %s79, %s77
  $region1: #{tpu_custom_call.1} parent=0
    #allocation3 [shape = 'u8[16384]{0}', space=vmem, size = 0x4000, scoped, tag = 'output window, operand 0']
    #allocation4 [shape = 's32[2]{0}', space=sflag, size = 0x8, scoped, tag = 'scoped memory for tpu_custom_call.1']
    #allocation5 [shape = 'u8[16384]{0}', space=vmem, size = 0x4000, scoped, tag = 'output window, operand 1']
    #allocation6 [shape = 's32[2]{0}', space=sflag, size = 0x8, scoped, tag = 'scoped memory for tpu_custom_call.1']
    %81 = vsyncpa [#allocation4], 0
    %s82 = scalar_lea.sflag [#allocation4], 1
    %83 = vsyncpa %s82, 0
    %84 = vsyncpa [#allocation6], 0
    %s85 = scalar_lea.sflag [#allocation6], 1
    %86 = vsyncpa %s85, 0
    loop: start=0, step=1, limit=4
    $region2: #{tpu_custom_call.1} parent=1 // loop_pre_header
      _
    $region3: #{tpu_custom_call.1} parent=1 // loop_header
      %s88 = sphi 0, %s92
      %p89 = scmp.ge.s32.totalorder %s88, 4
      %s98 = sphi 0, %s100
      %s101 = sphi 0, %s98
      %s102 = sphi 0, %s101
      %s118 = sphi 0, %s102
      %s122 = sphi 0, %s122
      %s124 = sphi 0, %s122
      %s125 = sphi 0, %s124
      %s139 = sphi 0, %s125
      %s143 = sphi 0, %s143
      %s145 = sphi 0, %s143
      %s146 = sphi 0, %s145
      %s160 = sphi 0, %s146
      %s164 = sphi 0, %s164
      %s166 = sphi 0, %s164
      %s167 = sphi 0, %s166
      %s181 = sphi 0, %s167
      %s185 = sphi 0, %s185
      %s187 = sphi 0, %s185
      %s188 = sphi 0, %s187
      %s202 = sphi 0, %s188
      %s206 = sphi 0, %s206
      %s208 = sphi 0, %s206
      %s209 = sphi 0, %s208
      %s223 = sphi 0, %s209
      %s227 = sphi 0, %s227
      %s229 = sphi 0, %s227
      %s230 = sphi 0, %s229
      %s244 = sphi 0, %s230
      %s248 = sphi 0, %s248
      %s250 = sphi 0, %s248
      %s251 = sphi 0, %s250
      %s265 = sphi 0, %s251
      %s269 = sphi 0, %s269
      %s271 = sphi 0, %s269
      %s272 = sphi 0, %s271
      %s286 = sphi 0, %s272
      %s290 = sphi 0, %s290
      %s292 = sphi 0, %s290
      %s293 = sphi 0, %s292
      %s307 = sphi 0, %s293
      %s311 = sphi 0, %s311
      %s313 = sphi 0, %s311
      %s314 = sphi 0, %s313
      %s328 = sphi 0, %s314
      %s332 = sphi 0, %s332
      %s334 = sphi 0, %s332
      %s335 = sphi 0, %s334
      %s349 = sphi 0, %s335
      %s353 = sphi 0, %s353
      %s355 = sphi 0, %s353
      %s356 = sphi 0, %s355
      %s370 = sphi 0, %s356
      %s374 = sphi 0, %s374
      %s376 = sphi 0, %s374
      %s377 = sphi 0, %s376
      %s391 = sphi 0, %s377
      %s395 = sphi 0, %s395
      %s397 = sphi 0, %s395
      %s398 = sphi 0, %s397
      %s412 = sphi 0, %s398
      %s416 = sphi 0, %s416
      %s418 = sphi 0, %s416
      %s419 = sphi 0, %s418
      %s433 = sphi 0, %s419
      %s437 = sphi 0, %s437
      %s439 = sphi 0, %s437
      %s440 = sphi 0, %s439
      %s454 = sphi 0, %s440
      %s458 = sphi 0, %s458
      %s460 = sphi 0, %s458
      %s461 = sphi 0, %s460
      %s475 = sphi 0, %s461
      %s479 = sphi 0, %s479
      %s481 = sphi 0, %s479
      %s482 = sphi 0, %s481
      %s496 = sphi 0, %s482
      %s500 = sphi 0, %s500
      %s502 = sphi 0, %s500
      %s503 = sphi 0, %s502
      %s517 = sphi 0, %s503
      %s521 = sphi 0, %s521
      %s523 = sphi 0, %s521
      %s524 = sphi 0, %s523
      %s538 = sphi 0, %s524
      %s542 = sphi 0, %s542
      %s544 = sphi 0, %s542
      %s545 = sphi 0, %s544
      %s559 = sphi 0, %s545
      %s563 = sphi 0, %s563
      %s565 = sphi 0, %s563
      %s566 = sphi 0, %s565
      %s580 = sphi 0, %s566
      %s584 = sphi 0, %s584
      %s586 = sphi 0, %s584
      %s587 = sphi 0, %s586
      %s601 = sphi 0, %s587
      %s605 = sphi 0, %s605
      %s607 = sphi 0, %s605
      %s608 = sphi 0, %s607
      %s622 = sphi 0, %s608
      %s626 = sphi 0, %s626
      %s628 = sphi 0, %s626
      %s629 = sphi 0, %s628
      %s643 = sphi 0, %s629
      %s647 = sphi 0, %s647
      %s649 = sphi 0, %s647
      %s650 = sphi 0, %s649
      %s664 = sphi 0, %s650
      %s668 = sphi 0, %s668
      %s670 = sphi 0, %s668
      %s671 = sphi 0, %s670
      %s685 = sphi 0, %s671
      %s689 = sphi 0, %s689
      %s691 = sphi 0, %s689
      %s692 = sphi 0, %s691
      %s706 = sphi 0, %s692
      %s710 = sphi 0, %s710
      %s712 = sphi 0, %s710
      %s713 = sphi 0, %s712
      %s727 = sphi 0, %s713
      %s731 = sphi 0, %s731
      %s733 = sphi 0, %s731
      %s734 = sphi 0, %s733
      %s748 = sphi 0, %s734
      %s752 = sphi 0, %s752
      %s754 = sphi 0, %s752
      %s755 = sphi 0, %s754
      %s769 = sphi 0, %s755
      %s773 = sphi 0, %s773
      %s775 = sphi 0, %s773
      %s776 = sphi 0, %s775
      %s790 = sphi 0, %s776
      %s794 = sphi 0, %s794
      %s796 = sphi 0, %s794
      %s797 = sphi 0, %s796
      %s811 = sphi 0, %s797
      %s815 = sphi 0, %s815
      %s817 = sphi 0, %s815
      %s818 = sphi 0, %s817
      %s832 = sphi 0, %s818
      %s836 = sphi 0, %s836
      %s838 = sphi 0, %s836
      %s839 = sphi 0, %s838
      %s853 = sphi 0, %s839
      %s859 = sphi 0, %s861
      %s862 = sphi 0, %s859
      %s863 = sphi 0, %s862
      %s879 = sphi 0, %s863
      %s885 = sphi 0, %s887
      %s888 = sphi 0, %s885
      %s889 = sphi 0, %s888
      %s905 = sphi 0, %s889
    $region4: #{tpu_custom_call.1} parent=1 // loop_header_branch
      %91 = sbr.rel (%p89) target = $region8
    $region5: #{tpu_custom_call.1} parent=1 // loop_body
      %s93 = ssub.s32 %s88, 1
      %s94 = ssub.s32 %s88, 2
      %s95 = sadd.s32 %s88, 1
      %s96 = ssub.s32 %s88, %s95
      %p97 = scmp.eq.s32.totalorder %s96, 0
      %s99 = sadd.s32 %s98, 1
      %s100 = scalar_select %p97, %s98, %s99
      %p103 = pneg %p97
      %p104 = scmp.eq.s32.totalorder %s88, 1
      %p105 = por %p103, %p104
      %p106 = scmp.ne.s32.totalorder %s98, %s101
      %p107 = scmp.eq.s32.totalorder %s88, 0
      %p108 = por %p106, %p107
      %p109 = scmp.ne.s32.totalorder %s98, %s101
      %p110 = scmp.eq.s32.totalorder %s93, 1
      %p111 = por %p109, %p110
      %p112 = scmp.ne.s32.totalorder %s101, %s102
      %p113 = scmp.eq.s32.totalorder %s93, 0
      %p114 = por %p112, %p113
      %p115 = scmp.ne.s32.totalorder %s101, %s102
      %p116 = scmp.eq.s32.totalorder %s94, 1
      %p117 = por %p115, %p116
      %p119 = scmp.ne.s32.totalorder %s102, %s118
      %p120 = scmp.eq.s32.totalorder %s94, 0
      %p121 = por %p119, %p120
      %s123 = sadd.s32 %s122, 1
      %p126 = scmp.eq.s32.totalorder %s88, 1
      %p127 = scmp.ne.s32.totalorder %s122, %s124
      %p128 = scmp.eq.s32.totalorder %s88, 0
      %p129 = por %p127, %p128
      %p130 = scmp.ne.s32.totalorder %s122, %s124
      %p131 = scmp.eq.s32.totalorder %s93, 1
      %p132 = por %p130, %p131
      %p133 = scmp.ne.s32.totalorder %s124, %s125
      %p134 = scmp.eq.s32.totalorder %s93, 0
      %p135 = por %p133, %p134
      %p136 = scmp.ne.s32.totalorder %s124, %s125
      %p137 = scmp.eq.s32.totalorder %s94, 1
      %p138 = por %p136, %p137
      %p140 = scmp.ne.s32.totalorder %s125, %s139
      %p141 = scmp.eq.s32.totalorder %s94, 0
      %p142 = por %p140, %p141
      %s144 = sadd.s32 %s143, 1
      %p147 = scmp.eq.s32.totalorder %s88, 1
      %p148 = scmp.ne.s32.totalorder %s143, %s145
      %p149 = scmp.eq.s32.totalorder %s88, 0
      %p150 = por %p148, %p149
      %p151 = scmp.ne.s32.totalorder %s143, %s145
      %p152 = scmp.eq.s32.totalorder %s93, 1
      %p153 = por %p151, %p152
      %p154 = scmp.ne.s32.totalorder %s145, %s146
      %p155 = scmp.eq.s32.totalorder %s93, 0
      %p156 = por %p154, %p155
      %p157 = scmp.ne.s32.totalorder %s145, %s146
      %p158 = scmp.eq.s32.totalorder %s94, 1
      %p159 = por %p157, %p158
      %p161 = scmp.ne.s32.totalorder %s146, %s160
      %p162 = scmp.eq.s32.totalorder %s94, 0
      %p163 = por %p161, %p162
      %s165 = sadd.s32 %s164, 1
      %p168 = scmp.eq.s32.totalorder %s88, 1
      %p169 = scmp.ne.s32.totalorder %s164, %s166
      %p170 = scmp.eq.s32.totalorder %s88, 0
      %p171 = por %p169, %p170
      %p172 = scmp.ne.s32.totalorder %s164, %s166
      %p173 = scmp.eq.s32.totalorder %s93, 1
      %p174 = por %p172, %p173
      %p175 = scmp.ne.s32.totalorder %s166, %s167
      %p176 = scmp.eq.s32.totalorder %s93, 0
      %p177 = por %p175, %p176
      %p178 = scmp.ne.s32.totalorder %s166, %s167
      %p179 = scmp.eq.s32.totalorder %s94, 1
      %p180 = por %p178, %p179
      %p182 = scmp.ne.s32.totalorder %s167, %s181
      %p183 = scmp.eq.s32.totalorder %s94, 0
      %p184 = por %p182, %p183
      %s186 = sadd.s32 %s185, 1
      %p189 = scmp.eq.s32.totalorder %s88, 1
      %p190 = scmp.ne.s32.totalorder %s185, %s187
      %p191 = scmp.eq.s32.totalorder %s88, 0
      %p192 = por %p190, %p191
      %p193 = scmp.ne.s32.totalorder %s185, %s187
      %p194 = scmp.eq.s32.totalorder %s93, 1
      %p195 = por %p193, %p194
      %p196 = scmp.ne.s32.totalorder %s187, %s188
      %p197 = scmp.eq.s32.totalorder %s93, 0
      %p198 = por %p196, %p197
      %p199 = scmp.ne.s32.totalorder %s187, %s188
      %p200 = scmp.eq.s32.totalorder %s94, 1
      %p201 = por %p199, %p200
      %p203 = scmp.ne.s32.totalorder %s188, %s202
      %p204 = scmp.eq.s32.totalorder %s94, 0
      %p205 = por %p203, %p204
      %s207 = sadd.s32 %s206, 1
      %p210 = scmp.eq.s32.totalorder %s88, 1
      %p211 = scmp.ne.s32.totalorder %s206, %s208
      %p212 = scmp.eq.s32.totalorder %s88, 0
      %p213 = por %p211, %p212
      %p214 = scmp.ne.s32.totalorder %s206, %s208
      %p215 = scmp.eq.s32.totalorder %s93, 1
      %p216 = por %p214, %p215
      %p217 = scmp.ne.s32.totalorder %s208, %s209
      %p218 = scmp.eq.s32.totalorder %s93, 0
      %p219 = por %p217, %p218
      %p220 = scmp.ne.s32.totalorder %s208, %s209
      %p221 = scmp.eq.s32.totalorder %s94, 1
      %p222 = por %p220, %p221
      %p224 = scmp.ne.s32.totalorder %s209, %s223
      %p225 = scmp.eq.s32.totalorder %s94, 0
      %p226 = por %p224, %p225
      %s228 = sadd.s32 %s227, 1
      %p231 = scmp.eq.s32.totalorder %s88, 1
      %p232 = scmp.ne.s32.totalorder %s227, %s229
      %p233 = scmp.eq.s32.totalorder %s88, 0
      %p234 = por %p232, %p233
      %p235 = scmp.ne.s32.totalorder %s227, %s229
      %p236 = scmp.eq.s32.totalorder %s93, 1
      %p237 = por %p235, %p236
      %p238 = scmp.ne.s32.totalorder %s229, %s230
      %p239 = scmp.eq.s32.totalorder %s93, 0
      %p240 = por %p238, %p239
      %p241 = scmp.ne.s32.totalorder %s229, %s230
      %p242 = scmp.eq.s32.totalorder %s94, 1
      %p243 = por %p241, %p242
      %p245 = scmp.ne.s32.totalorder %s230, %s244
      %p246 = scmp.eq.s32.totalorder %s94, 0
      %p247 = por %p245, %p246
      %s249 = sadd.s32 %s248, 1
      %p252 = scmp.eq.s32.totalorder %s88, 1
      %p253 = scmp.ne.s32.totalorder %s248, %s250
      %p254 = scmp.eq.s32.totalorder %s88, 0
      %p255 = por %p253, %p254
      %p256 = scmp.ne.s32.totalorder %s248, %s250
      %p257 = scmp.eq.s32.totalorder %s93, 1
      %p258 = por %p256, %p257
      %p259 = scmp.ne.s32.totalorder %s250, %s251
      %p260 = scmp.eq.s32.totalorder %s93, 0
      %p261 = por %p259, %p260
      %p262 = scmp.ne.s32.totalorder %s250, %s251
      %p263 = scmp.eq.s32.totalorder %s94, 1
      %p264 = por %p262, %p263
      %p266 = scmp.ne.s32.totalorder %s251, %s265
      %p267 = scmp.eq.s32.totalorder %s94, 0
      %p268 = por %p266, %p267
      %s270 = sadd.s32 %s269, 1
      %p273 = scmp.eq.s32.totalorder %s88, 1
      %p274 = scmp.ne.s32.totalorder %s269, %s271
      %p275 = scmp.eq.s32.totalorder %s88, 0
      %p276 = por %p274, %p275
      %p277 = scmp.ne.s32.totalorder %s269, %s271
      %p278 = scmp.eq.s32.totalorder %s93, 1
      %p279 = por %p277, %p278
      %p280 = scmp.ne.s32.totalorder %s271, %s272
      %p281 = scmp.eq.s32.totalorder %s93, 0
      %p282 = por %p280, %p281
      %p283 = scmp.ne.s32.totalorder %s271, %s272
      %p284 = scmp.eq.s32.totalorder %s94, 1
      %p285 = por %p283, %p284
      %p287 = scmp.ne.s32.totalorder %s272, %s286
      %p288 = scmp.eq.s32.totalorder %s94, 0
      %p289 = por %p287, %p288
      %s291 = sadd.s32 %s290, 1
      %p294 = scmp.eq.s32.totalorder %s88, 1
      %p295 = scmp.ne.s32.totalorder %s290, %s292
      %p296 = scmp.eq.s32.totalorder %s88, 0
      %p297 = por %p295, %p296
      %p298 = scmp.ne.s32.totalorder %s290, %s292
      %p299 = scmp.eq.s32.totalorder %s93, 1
      %p300 = por %p298, %p299
      %p301 = scmp.ne.s32.totalorder %s292, %s293
      %p302 = scmp.eq.s32.totalorder %s93, 0
      %p303 = por %p301, %p302
      %p304 = scmp.ne.s32.totalorder %s292, %s293
      %p305 = scmp.eq.s32.totalorder %s94, 1
      %p306 = por %p304, %p305
      %p308 = scmp.ne.s32.totalorder %s293, %s307
      %p309 = scmp.eq.s32.totalorder %s94, 0
      %p310 = por %p308, %p309
      %s312 = sadd.s32 %s311, 1
      %p315 = scmp.eq.s32.totalorder %s88, 1
      %p316 = scmp.ne.s32.totalorder %s311, %s313
      %p317 = scmp.eq.s32.totalorder %s88, 0
      %p318 = por %p316, %p317
      %p319 = scmp.ne.s32.totalorder %s311, %s313
      %p320 = scmp.eq.s32.totalorder %s93, 1
      %p321 = por %p319, %p320
      %p322 = scmp.ne.s32.totalorder %s313, %s314
      %p323 = scmp.eq.s32.totalorder %s93, 0
      %p324 = por %p322, %p323
      %p325 = scmp.ne.s32.totalorder %s313, %s314
      %p326 = scmp.eq.s32.totalorder %s94, 1
      %p327 = por %p325, %p326
      %p329 = scmp.ne.s32.totalorder %s314, %s328
      %p330 = scmp.eq.s32.totalorder %s94, 0
      %p331 = por %p329, %p330
      %s333 = sadd.s32 %s332, 1
      %p336 = scmp.eq.s32.totalorder %s88, 1
      %p337 = scmp.ne.s32.totalorder %s332, %s334
      %p338 = scmp.eq.s32.totalorder %s88, 0
      %p339 = por %p337, %p338
      %p340 = scmp.ne.s32.totalorder %s332, %s334
      %p341 = scmp.eq.s32.totalorder %s93, 1
      %p342 = por %p340, %p341
      %p343 = scmp.ne.s32.totalorder %s334, %s335
      %p344 = scmp.eq.s32.totalorder %s93, 0
      %p345 = por %p343, %p344
      %p346 = scmp.ne.s32.totalorder %s334, %s335
      %p347 = scmp.eq.s32.totalorder %s94, 1
      %p348 = por %p346, %p347
      %p350 = scmp.ne.s32.totalorder %s335, %s349
      %p351 = scmp.eq.s32.totalorder %s94, 0
      %p352 = por %p350, %p351
      %s354 = sadd.s32 %s353, 1
      %p357 = scmp.eq.s32.totalorder %s88, 1
      %p358 = scmp.ne.s32.totalorder %s353, %s355
      %p359 = scmp.eq.s32.totalorder %s88, 0
      %p360 = por %p358, %p359
      %p361 = scmp.ne.s32.totalorder %s353, %s355
      %p362 = scmp.eq.s32.totalorder %s93, 1
      %p363 = por %p361, %p362
      %p364 = scmp.ne.s32.totalorder %s355, %s356
      %p365 = scmp.eq.s32.totalorder %s93, 0
      %p366 = por %p364, %p365
      %p367 = scmp.ne.s32.totalorder %s355, %s356
      %p368 = scmp.eq.s32.totalorder %s94, 1
      %p369 = por %p367, %p368
      %p371 = scmp.ne.s32.totalorder %s356, %s370
      %p372 = scmp.eq.s32.totalorder %s94, 0
      %p373 = por %p371, %p372
      %s375 = sadd.s32 %s374, 1
      %p378 = scmp.eq.s32.totalorder %s88, 1
      %p379 = scmp.ne.s32.totalorder %s374, %s376
      %p380 = scmp.eq.s32.totalorder %s88, 0
      %p381 = por %p379, %p380
      %p382 = scmp.ne.s32.totalorder %s374, %s376
      %p383 = scmp.eq.s32.totalorder %s93, 1
      %p384 = por %p382, %p383
      %p385 = scmp.ne.s32.totalorder %s376, %s377
      %p386 = scmp.eq.s32.totalorder %s93, 0
      %p387 = por %p385, %p386
      %p388 = scmp.ne.s32.totalorder %s376, %s377
      %p389 = scmp.eq.s32.totalorder %s94, 1
      %p390 = por %p388, %p389
      %p392 = scmp.ne.s32.totalorder %s377, %s391
      %p393 = scmp.eq.s32.totalorder %s94, 0
      %p394 = por %p392, %p393
      %s396 = sadd.s32 %s395, 1
      %p399 = scmp.eq.s32.totalorder %s88, 1
      %p400 = scmp.ne.s32.totalorder %s395, %s397
      %p401 = scmp.eq.s32.totalorder %s88, 0
      %p402 = por %p400, %p401
      %p403 = scmp.ne.s32.totalorder %s395, %s397
      %p404 = scmp.eq.s32.totalorder %s93, 1
      %p405 = por %p403, %p404
      %p406 = scmp.ne.s32.totalorder %s397, %s398
      %p407 = scmp.eq.s32.totalorder %s93, 0
      %p408 = por %p406, %p407
      %p409 = scmp.ne.s32.totalorder %s397, %s398
      %p410 = scmp.eq.s32.totalorder %s94, 1
      %p411 = por %p409, %p410
      %p413 = scmp.ne.s32.totalorder %s398, %s412
      %p414 = scmp.eq.s32.totalorder %s94, 0
      %p415 = por %p413, %p414
      %s417 = sadd.s32 %s416, 1
      %p420 = scmp.eq.s32.totalorder %s88, 1
      %p421 = scmp.ne.s32.totalorder %s416, %s418
      %p422 = scmp.eq.s32.totalorder %s88, 0
      %p423 = por %p421, %p422
      %p424 = scmp.ne.s32.totalorder %s416, %s418
      %p425 = scmp.eq.s32.totalorder %s93, 1
      %p426 = por %p424, %p425
      %p427 = scmp.ne.s32.totalorder %s418, %s419
      %p428 = scmp.eq.s32.totalorder %s93, 0
      %p429 = por %p427, %p428
      %p430 = scmp.ne.s32.totalorder %s418, %s419
      %p431 = scmp.eq.s32.totalorder %s94, 1
      %p432 = por %p430, %p431
      %p434 = scmp.ne.s32.totalorder %s419, %s433
      %p435 = scmp.eq.s32.totalorder %s94, 0
      %p436 = por %p434, %p435
      %s438 = sadd.s32 %s437, 1
      %p441 = scmp.eq.s32.totalorder %s88, 1
      %p442 = scmp.ne.s32.totalorder %s437, %s439
      %p443 = scmp.eq.s32.totalorder %s88, 0
      %p444 = por %p442, %p443
      %p445 = scmp.ne.s32.totalorder %s437, %s439
      %p446 = scmp.eq.s32.totalorder %s93, 1
      %p447 = por %p445, %p446
      %p448 = scmp.ne.s32.totalorder %s439, %s440
      %p449 = scmp.eq.s32.totalorder %s93, 0
      %p450 = por %p448, %p449
      %p451 = scmp.ne.s32.totalorder %s439, %s440
      %p452 = scmp.eq.s32.totalorder %s94, 1
      %p453 = por %p451, %p452
      %p455 = scmp.ne.s32.totalorder %s440, %s454
      %p456 = scmp.eq.s32.totalorder %s94, 0
      %p457 = por %p455, %p456
      %s459 = sadd.s32 %s458, 1
      %p462 = scmp.eq.s32.totalorder %s88, 1
      %p463 = scmp.ne.s32.totalorder %s458, %s460
      %p464 = scmp.eq.s32.totalorder %s88, 0
      %p465 = por %p463, %p464
      %p466 = scmp.ne.s32.totalorder %s458, %s460
      %p467 = scmp.eq.s32.totalorder %s93, 1
      %p468 = por %p466, %p467
      %p469 = scmp.ne.s32.totalorder %s460, %s461
      %p470 = scmp.eq.s32.totalorder %s93, 0
      %p471 = por %p469, %p470
      %p472 = scmp.ne.s32.totalorder %s460, %s461
      %p473 = scmp.eq.s32.totalorder %s94, 1
      %p474 = por %p472, %p473
      %p476 = scmp.ne.s32.totalorder %s461, %s475
      %p477 = scmp.eq.s32.totalorder %s94, 0
      %p478 = por %p476, %p477
      %s480 = sadd.s32 %s479, 1
      %p483 = scmp.eq.s32.totalorder %s88, 1
      %p484 = scmp.ne.s32.totalorder %s479, %s481
      %p485 = scmp.eq.s32.totalorder %s88, 0
      %p486 = por %p484, %p485
      %p487 = scmp.ne.s32.totalorder %s479, %s481
      %p488 = scmp.eq.s32.totalorder %s93, 1
      %p489 = por %p487, %p488
      %p490 = scmp.ne.s32.totalorder %s481, %s482
      %p491 = scmp.eq.s32.totalorder %s93, 0
      %p492 = por %p490, %p491
      %p493 = scmp.ne.s32.totalorder %s481, %s482
      %p494 = scmp.eq.s32.totalorder %s94, 1
      %p495 = por %p493, %p494
      %p497 = scmp.ne.s32.totalorder %s482, %s496
      %p498 = scmp.eq.s32.totalorder %s94, 0
      %p499 = por %p497, %p498
      %s501 = sadd.s32 %s500, 1
      %p504 = scmp.eq.s32.totalorder %s88, 1
      %p505 = scmp.ne.s32.totalorder %s500, %s502
      %p506 = scmp.eq.s32.totalorder %s88, 0
      %p507 = por %p505, %p506
      %p508 = scmp.ne.s32.totalorder %s500, %s502
      %p509 = scmp.eq.s32.totalorder %s93, 1
      %p510 = por %p508, %p509
      %p511 = scmp.ne.s32.totalorder %s502, %s503
      %p512 = scmp.eq.s32.totalorder %s93, 0
      %p513 = por %p511, %p512
      %p514 = scmp.ne.s32.totalorder %s502, %s503
      %p515 = scmp.eq.s32.totalorder %s94, 1
      %p516 = por %p514, %p515
      %p518 = scmp.ne.s32.totalorder %s503, %s517
      %p519 = scmp.eq.s32.totalorder %s94, 0
      %p520 = por %p518, %p519
      %s522 = sadd.s32 %s521, 1
      %p525 = scmp.eq.s32.totalorder %s88, 1
      %p526 = scmp.ne.s32.totalorder %s521, %s523
      %p527 = scmp.eq.s32.totalorder %s88, 0
      %p528 = por %p526, %p527
      %p529 = scmp.ne.s32.totalorder %s521, %s523
      %p530 = scmp.eq.s32.totalorder %s93, 1
      %p531 = por %p529, %p530
      %p532 = scmp.ne.s32.totalorder %s523, %s524
      %p533 = scmp.eq.s32.totalorder %s93, 0
      %p534 = por %p532, %p533
      %p535 = scmp.ne.s32.totalorder %s523, %s524
      %p536 = scmp.eq.s32.totalorder %s94, 1
      %p537 = por %p535, %p536
      %p539 = scmp.ne.s32.totalorder %s524, %s538
      %p540 = scmp.eq.s32.totalorder %s94, 0
      %p541 = por %p539, %p540
      %s543 = sadd.s32 %s542, 1
      %p546 = scmp.eq.s32.totalorder %s88, 1
      %p547 = scmp.ne.s32.totalorder %s542, %s544
      %p548 = scmp.eq.s32.totalorder %s88, 0
      %p549 = por %p547, %p548
      %p550 = scmp.ne.s32.totalorder %s542, %s544
      %p551 = scmp.eq.s32.totalorder %s93, 1
      %p552 = por %p550, %p551
      %p553 = scmp.ne.s32.totalorder %s544, %s545
      %p554 = scmp.eq.s32.totalorder %s93, 0
      %p555 = por %p553, %p554
      %p556 = scmp.ne.s32.totalorder %s544, %s545
      %p557 = scmp.eq.s32.totalorder %s94, 1
      %p558 = por %p556, %p557
      %p560 = scmp.ne.s32.totalorder %s545, %s559
      %p561 = scmp.eq.s32.totalorder %s94, 0
      %p562 = por %p560, %p561
      %s564 = sadd.s32 %s563, 1
      %p567 = scmp.eq.s32.totalorder %s88, 1
      %p568 = scmp.ne.s32.totalorder %s563, %s565
      %p569 = scmp.eq.s32.totalorder %s88, 0
      %p570 = por %p568, %p569
      %p571 = scmp.ne.s32.totalorder %s563, %s565
      %p572 = scmp.eq.s32.totalorder %s93, 1
      %p573 = por %p571, %p572
      %p574 = scmp.ne.s32.totalorder %s565, %s566
      %p575 = scmp.eq.s32.totalorder %s93, 0
      %p576 = por %p574, %p575
      %p577 = scmp.ne.s32.totalorder %s565, %s566
      %p578 = scmp.eq.s32.totalorder %s94, 1
      %p579 = por %p577, %p578
      %p581 = scmp.ne.s32.totalorder %s566, %s580
      %p582 = scmp.eq.s32.totalorder %s94, 0
      %p583 = por %p581, %p582
      %s585 = sadd.s32 %s584, 1
      %p588 = scmp.eq.s32.totalorder %s88, 1
      %p589 = scmp.ne.s32.totalorder %s584, %s586
      %p590 = scmp.eq.s32.totalorder %s88, 0
      %p591 = por %p589, %p590
      %p592 = scmp.ne.s32.totalorder %s584, %s586
      %p593 = scmp.eq.s32.totalorder %s93, 1
      %p594 = por %p592, %p593
      %p595 = scmp.ne.s32.totalorder %s586, %s587
      %p596 = scmp.eq.s32.totalorder %s93, 0
      %p597 = por %p595, %p596
      %p598 = scmp.ne.s32.totalorder %s586, %s587
      %p599 = scmp.eq.s32.totalorder %s94, 1
      %p600 = por %p598, %p599
      %p602 = scmp.ne.s32.totalorder %s587, %s601
      %p603 = scmp.eq.s32.totalorder %s94, 0
      %p604 = por %p602, %p603
      %s606 = sadd.s32 %s605, 1
      %p609 = scmp.eq.s32.totalorder %s88, 1
      %p610 = scmp.ne.s32.totalorder %s605, %s607
      %p611 = scmp.eq.s32.totalorder %s88, 0
      %p612 = por %p610, %p611
      %p613 = scmp.ne.s32.totalorder %s605, %s607
      %p614 = scmp.eq.s32.totalorder %s93, 1
      %p615 = por %p613, %p614
      %p616 = scmp.ne.s32.totalorder %s607, %s608
      %p617 = scmp.eq.s32.totalorder %s93, 0
      %p618 = por %p616, %p617
      %p619 = scmp.ne.s32.totalorder %s607, %s608
      %p620 = scmp.eq.s32.totalorder %s94, 1
      %p621 = por %p619, %p620
      %p623 = scmp.ne.s32.totalorder %s608, %s622
      %p624 = scmp.eq.s32.totalorder %s94, 0
      %p625 = por %p623, %p624
      %s627 = sadd.s32 %s626, 1
      %p630 = scmp.eq.s32.totalorder %s88, 1
      %p631 = scmp.ne.s32.totalorder %s626, %s628
      %p632 = scmp.eq.s32.totalorder %s88, 0
      %p633 = por %p631, %p632
      %p634 = scmp.ne.s32.totalorder %s626, %s628
      %p635 = scmp.eq.s32.totalorder %s93, 1
      %p636 = por %p634, %p635
      %p637 = scmp.ne.s32.totalorder %s628, %s629
      %p638 = scmp.eq.s32.totalorder %s93, 0
      %p639 = por %p637, %p638
      %p640 = scmp.ne.s32.totalorder %s628, %s629
      %p641 = scmp.eq.s32.totalorder %s94, 1
      %p642 = por %p640, %p641
      %p644 = scmp.ne.s32.totalorder %s629, %s643
      %p645 = scmp.eq.s32.totalorder %s94, 0
      %p646 = por %p644, %p645
      %s648 = sadd.s32 %s647, 1
      %p651 = scmp.eq.s32.totalorder %s88, 1
      %p652 = scmp.ne.s32.totalorder %s647, %s649
      %p653 = scmp.eq.s32.totalorder %s88, 0
      %p654 = por %p652, %p653
      %p655 = scmp.ne.s32.totalorder %s647, %s649
      %p656 = scmp.eq.s32.totalorder %s93, 1
      %p657 = por %p655, %p656
      %p658 = scmp.ne.s32.totalorder %s649, %s650
      %p659 = scmp.eq.s32.totalorder %s93, 0
      %p660 = por %p658, %p659
      %p661 = scmp.ne.s32.totalorder %s649, %s650
      %p662 = scmp.eq.s32.totalorder %s94, 1
      %p663 = por %p661, %p662
      %p665 = scmp.ne.s32.totalorder %s650, %s664
      %p666 = scmp.eq.s32.totalorder %s94, 0
      %p667 = por %p665, %p666
      %s669 = sadd.s32 %s668, 1
      %p672 = scmp.eq.s32.totalorder %s88, 1
      %p673 = scmp.ne.s32.totalorder %s668, %s670
      %p674 = scmp.eq.s32.totalorder %s88, 0
      %p675 = por %p673, %p674
      %p676 = scmp.ne.s32.totalorder %s668, %s670
      %p677 = scmp.eq.s32.totalorder %s93, 1
      %p678 = por %p676, %p677
      %p679 = scmp.ne.s32.totalorder %s670, %s671
      %p680 = scmp.eq.s32.totalorder %s93, 0
      %p681 = por %p679, %p680
      %p682 = scmp.ne.s32.totalorder %s670, %s671
      %p683 = scmp.eq.s32.totalorder %s94, 1
      %p684 = por %p682, %p683
      %p686 = scmp.ne.s32.totalorder %s671, %s685
      %p687 = scmp.eq.s32.totalorder %s94, 0
      %p688 = por %p686, %p687
      %s690 = sadd.s32 %s689, 1
      %p693 = scmp.eq.s32.totalorder %s88, 1
      %p694 = scmp.ne.s32.totalorder %s689, %s691
      %p695 = scmp.eq.s32.totalorder %s88, 0
      %p696 = por %p694, %p695
      %p697 = scmp.ne.s32.totalorder %s689, %s691
      %p698 = scmp.eq.s32.totalorder %s93, 1
      %p699 = por %p697, %p698
      %p700 = scmp.ne.s32.totalorder %s691, %s692
      %p701 = scmp.eq.s32.totalorder %s93, 0
      %p702 = por %p700, %p701
      %p703 = scmp.ne.s32.totalorder %s691, %s692
      %p704 = scmp.eq.s32.totalorder %s94, 1
      %p705 = por %p703, %p704
      %p707 = scmp.ne.s32.totalorder %s692, %s706
      %p708 = scmp.eq.s32.totalorder %s94, 0
      %p709 = por %p707, %p708
      %s711 = sadd.s32 %s710, 1
      %p714 = scmp.eq.s32.totalorder %s88, 1
      %p715 = scmp.ne.s32.totalorder %s710, %s712
      %p716 = scmp.eq.s32.totalorder %s88, 0
      %p717 = por %p715, %p716
      %p718 = scmp.ne.s32.totalorder %s710, %s712
      %p719 = scmp.eq.s32.totalorder %s93, 1
      %p720 = por %p718, %p719
      %p721 = scmp.ne.s32.totalorder %s712, %s713
      %p722 = scmp.eq.s32.totalorder %s93, 0
      %p723 = por %p721, %p722
      %p724 = scmp.ne.s32.totalorder %s712, %s713
      %p725 = scmp.eq.s32.totalorder %s94, 1
      %p726 = por %p724, %p725
      %p728 = scmp.ne.s32.totalorder %s713, %s727
      %p729 = scmp.eq.s32.totalorder %s94, 0
      %p730 = por %p728, %p729
      %s732 = sadd.s32 %s731, 1
      %p735 = scmp.eq.s32.totalorder %s88, 1
      %p736 = scmp.ne.s32.totalorder %s731, %s733
      %p737 = scmp.eq.s32.totalorder %s88, 0
      %p738 = por %p736, %p737
      %p739 = scmp.ne.s32.totalorder %s731, %s733
      %p740 = scmp.eq.s32.totalorder %s93, 1
      %p741 = por %p739, %p740
      %p742 = scmp.ne.s32.totalorder %s733, %s734
      %p743 = scmp.eq.s32.totalorder %s93, 0
      %p744 = por %p742, %p743
      %p745 = scmp.ne.s32.totalorder %s733, %s734
      %p746 = scmp.eq.s32.totalorder %s94, 1
      %p747 = por %p745, %p746
      %p749 = scmp.ne.s32.totalorder %s734, %s748
      %p750 = scmp.eq.s32.totalorder %s94, 0
      %p751 = por %p749, %p750
      %s753 = sadd.s32 %s752, 1
      %p756 = scmp.eq.s32.totalorder %s88, 1
      %p757 = scmp.ne.s32.totalorder %s752, %s754
      %p758 = scmp.eq.s32.totalorder %s88, 0
      %p759 = por %p757, %p758
      %p760 = scmp.ne.s32.totalorder %s752, %s754
      %p761 = scmp.eq.s32.totalorder %s93, 1
      %p762 = por %p760, %p761
      %p763 = scmp.ne.s32.totalorder %s754, %s755
      %p764 = scmp.eq.s32.totalorder %s93, 0
      %p765 = por %p763, %p764
      %p766 = scmp.ne.s32.totalorder %s754, %s755
      %p767 = scmp.eq.s32.totalorder %s94, 1
      %p768 = por %p766, %p767
      %p770 = scmp.ne.s32.totalorder %s755, %s769
      %p771 = scmp.eq.s32.totalorder %s94, 0
      %p772 = por %p770, %p771
      %s774 = sadd.s32 %s773, 1
      %p777 = scmp.eq.s32.totalorder %s88, 1
      %p778 = scmp.ne.s32.totalorder %s773, %s775
      %p779 = scmp.eq.s32.totalorder %s88, 0
      %p780 = por %p778, %p779
      %p781 = scmp.ne.s32.totalorder %s773, %s775
      %p782 = scmp.eq.s32.totalorder %s93, 1
      %p783 = por %p781, %p782
      %p784 = scmp.ne.s32.totalorder %s775, %s776
      %p785 = scmp.eq.s32.totalorder %s93, 0
      %p786 = por %p784, %p785
      %p787 = scmp.ne.s32.totalorder %s775, %s776
      %p788 = scmp.eq.s32.totalorder %s94, 1
      %p789 = por %p787, %p788
      %p791 = scmp.ne.s32.totalorder %s776, %s790
      %p792 = scmp.eq.s32.totalorder %s94, 0
      %p793 = por %p791, %p792
      %s795 = sadd.s32 %s794, 1
      %p798 = scmp.eq.s32.totalorder %s88, 1
      %p799 = scmp.ne.s32.totalorder %s794, %s796
      %p800 = scmp.eq.s32.totalorder %s88, 0
      %p801 = por %p799, %p800
      %p802 = scmp.ne.s32.totalorder %s794, %s796
      %p803 = scmp.eq.s32.totalorder %s93, 1
      %p804 = por %p802, %p803
      %p805 = scmp.ne.s32.totalorder %s796, %s797
      %p806 = scmp.eq.s32.totalorder %s93, 0
      %p807 = por %p805, %p806
      %p808 = scmp.ne.s32.totalorder %s796, %s797
      %p809 = scmp.eq.s32.totalorder %s94, 1
      %p810 = por %p808, %p809
      %p812 = scmp.ne.s32.totalorder %s797, %s811
      %p813 = scmp.eq.s32.totalorder %s94, 0
      %p814 = por %p812, %p813
      %s816 = sadd.s32 %s815, 1
      %p819 = scmp.eq.s32.totalorder %s88, 1
      %p820 = scmp.ne.s32.totalorder %s815, %s817
      %p821 = scmp.eq.s32.totalorder %s88, 0
      %p822 = por %p820, %p821
      %p823 = scmp.ne.s32.totalorder %s815, %s817
      %p824 = scmp.eq.s32.totalorder %s93, 1
      %p825 = por %p823, %p824
      %p826 = scmp.ne.s32.totalorder %s817, %s818
      %p827 = scmp.eq.s32.totalorder %s93, 0
      %p828 = por %p826, %p827
      %p829 = scmp.ne.s32.totalorder %s817, %s818
      %p830 = scmp.eq.s32.totalorder %s94, 1
      %p831 = por %p829, %p830
      %p833 = scmp.ne.s32.totalorder %s818, %s832
      %p834 = scmp.eq.s32.totalorder %s94, 0
      %p835 = por %p833, %p834
      %s837 = sadd.s32 %s836, 1
      %p840 = scmp.eq.s32.totalorder %s88, 1
      %p841 = scmp.ne.s32.totalorder %s836, %s838
      %p842 = scmp.eq.s32.totalorder %s88, 0
      %p843 = por %p841, %p842
      %p844 = scmp.ne.s32.totalorder %s836, %s838
      %p845 = scmp.eq.s32.totalorder %s93, 1
      %p846 = por %p844, %p845
      %p847 = scmp.ne.s32.totalorder %s838, %s839
      %p848 = scmp.eq.s32.totalorder %s93, 0
      %p849 = por %p847, %p848
      %p850 = scmp.ne.s32.totalorder %s838, %s839
      %p851 = scmp.eq.s32.totalorder %s94, 1
      %p852 = por %p850, %p851
      %p854 = scmp.ne.s32.totalorder %s839, %s853
      %p855 = scmp.eq.s32.totalorder %s94, 0
      %p856 = por %p854, %p855
      %s857 = ssub.s32 %s88, %s95
      %p858 = scmp.eq.s32.totalorder %s857, 0
      %s860 = sadd.s32 %s859, 1
      %s861 = scalar_select %p858, %s859, %s860
      %p864 = pneg %p858
      %p865 = scmp.eq.s32.totalorder %s88, 1
      %p866 = por %p864, %p865
      %p867 = scmp.ne.s32.totalorder %s859, %s862
      %p868 = scmp.eq.s32.totalorder %s88, 0
      %p869 = por %p867, %p868
      %p870 = scmp.ne.s32.totalorder %s859, %s862
      %p871 = scmp.eq.s32.totalorder %s93, 1
      %p872 = por %p870, %p871
      %p873 = scmp.ne.s32.totalorder %s862, %s863
      %p874 = scmp.eq.s32.totalorder %s93, 0
      %p875 = por %p873, %p874
      %p876 = scmp.ne.s32.totalorder %s862, %s863
      %p877 = scmp.eq.s32.totalorder %s94, 1
      %p878 = por %p876, %p877
      %p880 = scmp.ne.s32.totalorder %s863, %s879
      %p881 = scmp.eq.s32.totalorder %s94, 0
      %p882 = por %p880, %p881
      %s883 = ssub.s32 %s88, %s95
      %p884 = scmp.eq.s32.totalorder %s883, 0
      %s886 = sadd.s32 %s885, 1
      %s887 = scalar_select %p884, %s885, %s886
      %p890 = pneg %p884
      %p891 = scmp.eq.s32.totalorder %s88, 1
      %p892 = por %p890, %p891
      %p893 = scmp.ne.s32.totalorder %s885, %s888
      %p894 = scmp.eq.s32.totalorder %s88, 0
      %p895 = por %p893, %p894
      %p896 = scmp.ne.s32.totalorder %s885, %s888
      %p897 = scmp.eq.s32.totalorder %s93, 1
      %p898 = por %p896, %p897
      %p899 = scmp.ne.s32.totalorder %s888, %s889
      %p900 = scmp.eq.s32.totalorder %s93, 0
      %p901 = por %p899, %p900
      %p902 = scmp.ne.s32.totalorder %s888, %s889
      %p903 = scmp.eq.s32.totalorder %s94, 1
      %p904 = por %p902, %p903
      %p906 = scmp.ne.s32.totalorder %s889, %s905
      %p907 = scmp.eq.s32.totalorder %s94, 0
      %p908 = por %p906, %p907
      %p909 = scmp.le.s32.totalorder 1, %s88
      %p910 = scmp.lt.s32.totalorder %s88, 3
      %p911 = pnand %p909, %p910
      %p912 = pneg %p911
      // Predicated region
      $region9: #{tpu_custom_call.1} parent=5 // pred_check
        _
      $region10: #{tpu_custom_call.1} parent=5 // pred_check_branch
        %914 = sbr.rel (%p911) target = $region12
      $region11: #{tpu_custom_call.1} parent=5 // pred_region
        %s915 = ssub.s32 %s88, 1
        // Predicated region
        $region13: #{tpu_custom_call.1} parent=11 // pred_check
          %p916 = pneg %p135
        $region14: #{tpu_custom_call.1} parent=11 // pred_check_branch
          %918 = sbr.rel (%p916) target = $region16
        $region15: #{tpu_custom_call.1} parent=11 // pred_region
          _
        $region16: #{tpu_custom_call.1} parent=11 // pred_fallthru
          _
        // Predicated region
        $region17: #{tpu_custom_call.1} parent=11 // pred_check
          %p919 = pneg %p156
        $region18: #{tpu_custom_call.1} parent=11 // pred_check_branch
          %921 = sbr.rel (%p919) target = $region20
        $region19: #{tpu_custom_call.1} parent=11 // pred_region
          _
        $region20: #{tpu_custom_call.1} parent=11 // pred_fallthru
          _
        // Predicated region
        $region21: #{tpu_custom_call.1} parent=11 // pred_check
          %p922 = pneg %p177
        $region22: #{tpu_custom_call.1} parent=11 // pred_check_branch
          %924 = sbr.rel (%p922) target = $region24
        $region23: #{tpu_custom_call.1} parent=11 // pred_region
          _
        $region24: #{tpu_custom_call.1} parent=11 // pred_fallthru
          _
        // Predicated region
        $region25: #{tpu_custom_call.1} parent=11 // pred_check
          %p925 = pneg %p198
        $region26: #{tpu_custom_call.1} parent=11 // pred_check_branch
          %927 = sbr.rel (%p925) target = $region28
        $region27: #{tpu_custom_call.1} parent=11 // pred_region
          _
        $region28: #{tpu_custom_call.1} parent=11 // pred_fallthru
          _
        // Predicated region
        $region29: #{tpu_custom_call.1} parent=11 // pred_check
          %p928 = pneg %p219
        $region30: #{tpu_custom_call.1} parent=11 // pred_check_branch
          %930 = sbr.rel (%p928) target = $region32
        $region31: #{tpu_custom_call.1} parent=11 // pred_region
          _
        $region32: #{tpu_custom_call.1} parent=11 // pred_fallthru
          _
        // Predicated region
        $region33: #{tpu_custom_call.1} parent=11 // pred_check
          %p931 = pneg %p240
        $region34: #{tpu_custom_call.1} parent=11 // pred_check_branch
          %933 = sbr.rel (%p931) target = $region36
        $region35: #{tpu_custom_call.1} parent=11 // pred_region
          _
        $region36: #{tpu_custom_call.1} parent=11 // pred_fallthru
          _
        // Predicated region
        $region37: #{tpu_custom_call.1} parent=11 // pred_check
          %p934 = pneg %p261
        $region38: #{tpu_custom_call.1} parent=11 // pred_check_branch
          %936 = sbr.rel (%p934) target = $region40
        $region39: #{tpu_custom_call.1} parent=11 // pred_region
          _
        $region40: #{tpu_custom_call.1} parent=11 // pred_fallthru
          _
        // Predicated region
        $region41: #{tpu_custom_call.1} parent=11 // pred_check
          %p937 = pneg %p282
        $region42: #{tpu_custom_call.1} parent=11 // pred_check_branch
          %939 = sbr.rel (%p937) target = $region44
        $region43: #{tpu_custom_call.1} parent=11 // pred_region
          _
        $region44: #{tpu_custom_call.1} parent=11 // pred_fallthru
          _
        // Predicated region
        $region45: #{tpu_custom_call.1} parent=11 // pred_check
          %p940 = pneg %p303
        $region46: #{tpu_custom_call.1} parent=11 // pred_check_branch
          %942 = sbr.rel (%p940) target = $region48
        $region47: #{tpu_custom_call.1} parent=11 // pred_region
          _
        $region48: #{tpu_custom_call.1} parent=11 // pred_fallthru
          _
        // Predicated region
        $region49: #{tpu_custom_call.1} parent=11 // pred_check
          %p943 = pneg %p324
        $region50: #{tpu_custom_call.1} parent=11 // pred_check_branch
          %945 = sbr.rel (%p943) target = $region52
        $region51: #{tpu_custom_call.1} parent=11 // pred_region
          _
        $region52: #{tpu_custom_call.1} parent=11 // pred_fallthru
          _
        // Predicated region
        $region53: #{tpu_custom_call.1} parent=11 // pred_check
          %p946 = pneg %p345
        $region54: #{tpu_custom_call.1} parent=11 // pred_check_branch
          %948 = sbr.rel (%p946) target = $region56
        $region55: #{tpu_custom_call.1} parent=11 // pred_region
          _
        $region56: #{tpu_custom_call.1} parent=11 // pred_fallthru
          _
        // Predicated region
        $region57: #{tpu_custom_call.1} parent=11 // pred_check
          %p949 = pneg %p366
        $region58: #{tpu_custom_call.1} parent=11 // pred_check_branch
          %951 = sbr.rel (%p949) target = $region60
        $region59: #{tpu_custom_call.1} parent=11 // pred_region
          _
        $region60: #{tpu_custom_call.1} parent=11 // pred_fallthru
          _
        // Predicated region
        $region61: #{tpu_custom_call.1} parent=11 // pred_check
          %p952 = pneg %p387
        $region62: #{tpu_custom_call.1} parent=11 // pred_check_branch
          %954 = sbr.rel (%p952) target = $region64
        $region63: #{tpu_custom_call.1} parent=11 // pred_region
          _
        $region64: #{tpu_custom_call.1} parent=11 // pred_fallthru
          _
        // Predicated region
        $region65: #{tpu_custom_call.1} parent=11 // pred_check
          %p955 = pneg %p408
        $region66: #{tpu_custom_call.1} parent=11 // pred_check_branch
          %957 = sbr.rel (%p955) target = $region68
        $region67: #{tpu_custom_call.1} parent=11 // pred_region
          _
        $region68: #{tpu_custom_call.1} parent=11 // pred_fallthru
          _
        // Predicated region
        $region69: #{tpu_custom_call.1} parent=11 // pred_check
          %p958 = pneg %p429
        $region70: #{tpu_custom_call.1} parent=11 // pred_check_branch
          %960 = sbr.rel (%p958) target = $region72
        $region71: #{tpu_custom_call.1} parent=11 // pred_region
          _
        $region72: #{tpu_custom_call.1} parent=11 // pred_fallthru
          _
        // Predicated region
        $region73: #{tpu_custom_call.1} parent=11 // pred_check
          %p961 = pneg %p450
        $region74: #{tpu_custom_call.1} parent=11 // pred_check_branch
          %963 = sbr.rel (%p961) target = $region76
        $region75: #{tpu_custom_call.1} parent=11 // pred_region
          _
        $region76: #{tpu_custom_call.1} parent=11 // pred_fallthru
          _
        // Predicated region
        $region77: #{tpu_custom_call.1} parent=11 // pred_check
          %p964 = pneg %p471
        $region78: #{tpu_custom_call.1} parent=11 // pred_check_branch
          %966 = sbr.rel (%p964) target = $region80
        $region79: #{tpu_custom_call.1} parent=11 // pred_region
          _
        $region80: #{tpu_custom_call.1} parent=11 // pred_fallthru
          _
        // Predicated region
        $region81: #{tpu_custom_call.1} parent=11 // pred_check
          %p967 = pneg %p492
        $region82: #{tpu_custom_call.1} parent=11 // pred_check_branch
          %969 = sbr.rel (%p967) target = $region84
        $region83: #{tpu_custom_call.1} parent=11 // pred_region
          _
        $region84: #{tpu_custom_call.1} parent=11 // pred_fallthru
          _
        // Predicated region
        $region85: #{tpu_custom_call.1} parent=11 // pred_check
          %p970 = pneg %p513
        $region86: #{tpu_custom_call.1} parent=11 // pred_check_branch
          %972 = sbr.rel (%p970) target = $region88
        $region87: #{tpu_custom_call.1} parent=11 // pred_region
          _
        $region88: #{tpu_custom_call.1} parent=11 // pred_fallthru
          _
        // Predicated region
        $region89: #{tpu_custom_call.1} parent=11 // pred_check
          %p973 = pneg %p534
        $region90: #{tpu_custom_call.1} parent=11 // pred_check_branch
          %975 = sbr.rel (%p973) target = $region92
        $region91: #{tpu_custom_call.1} parent=11 // pred_region
          _
        $region92: #{tpu_custom_call.1} parent=11 // pred_fallthru
          _
        // Predicated region
        $region93: #{tpu_custom_call.1} parent=11 // pred_check
          %p976 = pneg %p555
        $region94: #{tpu_custom_call.1} parent=11 // pred_check_branch
          %978 = sbr.rel (%p976) target = $region96
        $region95: #{tpu_custom_call.1} parent=11 // pred_region
          _
        $region96: #{tpu_custom_call.1} parent=11 // pred_fallthru
          _
        // Predicated region
        $region97: #{tpu_custom_call.1} parent=11 // pred_check
          %p979 = pneg %p576
        $region98: #{tpu_custom_call.1} parent=11 // pred_check_branch
          %981 = sbr.rel (%p979) target = $region100
        $region99: #{tpu_custom_call.1} parent=11 // pred_region
          _
        $region100: #{tpu_custom_call.1} parent=11 // pred_fallthru
          _
        // Predicated region
        $region101: #{tpu_custom_call.1} parent=11 // pred_check
          %p982 = pneg %p597
        $region102: #{tpu_custom_call.1} parent=11 // pred_check_branch
          %984 = sbr.rel (%p982) target = $region104
        $region103: #{tpu_custom_call.1} parent=11 // pred_region
          _
        $region104: #{tpu_custom_call.1} parent=11 // pred_fallthru
          _
        // Predicated region
        $region105: #{tpu_custom_call.1} parent=11 // pred_check
          %p985 = pneg %p618
        $region106: #{tpu_custom_call.1} parent=11 // pred_check_branch
          %987 = sbr.rel (%p985) target = $region108
        $region107: #{tpu_custom_call.1} parent=11 // pred_region
          _
        $region108: #{tpu_custom_call.1} parent=11 // pred_fallthru
          _
        // Predicated region
        $region109: #{tpu_custom_call.1} parent=11 // pred_check
          %p988 = pneg %p639
        $region110: #{tpu_custom_call.1} parent=11 // pred_check_branch
          %990 = sbr.rel (%p988) target = $region112
        $region111: #{tpu_custom_call.1} parent=11 // pred_region
          _
        $region112: #{tpu_custom_call.1} parent=11 // pred_fallthru
          _
        // Predicated region
        $region113: #{tpu_custom_call.1} parent=11 // pred_check
          %p991 = pneg %p660
        $region114: #{tpu_custom_call.1} parent=11 // pred_check_branch
          %993 = sbr.rel (%p991) target = $region116
        $region115: #{tpu_custom_call.1} parent=11 // pred_region
          _
        $region116: #{tpu_custom_call.1} parent=11 // pred_fallthru
          _
        // Predicated region
        $region117: #{tpu_custom_call.1} parent=11 // pred_check
          %p994 = pneg %p681
        $region118: #{tpu_custom_call.1} parent=11 // pred_check_branch
          %996 = sbr.rel (%p994) target = $region120
        $region119: #{tpu_custom_call.1} parent=11 // pred_region
          _
        $region120: #{tpu_custom_call.1} parent=11 // pred_fallthru
          _
        // Predicated region
        $region121: #{tpu_custom_call.1} parent=11 // pred_check
          %p997 = pneg %p702
        $region122: #{tpu_custom_call.1} parent=11 // pred_check_branch
          %999 = sbr.rel (%p997) target = $region124
        $region123: #{tpu_custom_call.1} parent=11 // pred_region
          _
        $region124: #{tpu_custom_call.1} parent=11 // pred_fallthru
          _
        // Predicated region
        $region125: #{tpu_custom_call.1} parent=11 // pred_check
          %p1000 = pneg %p723
        $region126: #{tpu_custom_call.1} parent=11 // pred_check_branch
          %1002 = sbr.rel (%p1000) target = $region128
        $region127: #{tpu_custom_call.1} parent=11 // pred_region
          _
        $region128: #{tpu_custom_call.1} parent=11 // pred_fallthru
          _
        // Predicated region
        $region129: #{tpu_custom_call.1} parent=11 // pred_check
          %p1003 = pneg %p744
        $region130: #{tpu_custom_call.1} parent=11 // pred_check_branch
          %1005 = sbr.rel (%p1003) target = $region132
        $region131: #{tpu_custom_call.1} parent=11 // pred_region
          _
        $region132: #{tpu_custom_call.1} parent=11 // pred_fallthru
          _
        // Predicated region
        $region133: #{tpu_custom_call.1} parent=11 // pred_check
          %p1006 = pneg %p765
        $region134: #{tpu_custom_call.1} parent=11 // pred_check_branch
          %1008 = sbr.rel (%p1006) target = $region136
        $region135: #{tpu_custom_call.1} parent=11 // pred_region
          _
        $region136: #{tpu_custom_call.1} parent=11 // pred_fallthru
          _
        // Predicated region
        $region137: #{tpu_custom_call.1} parent=11 // pred_check
          %p1009 = pneg %p786
        $region138: #{tpu_custom_call.1} parent=11 // pred_check_branch
          %1011 = sbr.rel (%p1009) target = $region140
        $region139: #{tpu_custom_call.1} parent=11 // pred_region
          _
        $region140: #{tpu_custom_call.1} parent=11 // pred_fallthru
          _
        // Predicated region
        $region141: #{tpu_custom_call.1} parent=11 // pred_check
          %p1012 = pneg %p807
        $region142: #{tpu_custom_call.1} parent=11 // pred_check_branch
          %1014 = sbr.rel (%p1012) target = $region144
        $region143: #{tpu_custom_call.1} parent=11 // pred_region
          _
        $region144: #{tpu_custom_call.1} parent=11 // pred_fallthru
          _
        // Predicated region
        $region145: #{tpu_custom_call.1} parent=11 // pred_check
          %p1015 = pneg %p828
        $region146: #{tpu_custom_call.1} parent=11 // pred_check_branch
          %1017 = sbr.rel (%p1015) target = $region148
        $region147: #{tpu_custom_call.1} parent=11 // pred_region
          _
        $region148: #{tpu_custom_call.1} parent=11 // pred_fallthru
          _
        // Predicated region
        $region149: #{tpu_custom_call.1} parent=11 // pred_check
          %p1018 = pneg %p849
        $region150: #{tpu_custom_call.1} parent=11 // pred_check_branch
          %1020 = sbr.rel (%p1018) target = $region152
        $region151: #{tpu_custom_call.1} parent=11 // pred_region
          _
        $region152: #{tpu_custom_call.1} parent=11 // pred_fallthru
          _
      $region12: #{tpu_custom_call.1} parent=5 // pred_fallthru
        _
      %p1021 = scmp.lt.s32.totalorder %s88, 2
      // Predicated region
      $region153: #{tpu_custom_call.1} parent=5 // pred_check
        %p1022 = pneg %p1021
      $region154: #{tpu_custom_call.1} parent=5 // pred_check_branch
        %1024 = sbr.rel (%p1022) target = $region156
      $region155: #{tpu_custom_call.1} parent=5 // pred_region
        // Predicated region
        $region157: #{tpu_custom_call.1} parent=155 // pred_check
          %p1025 = pneg %p108
        $region158: #{tpu_custom_call.1} parent=155 // pred_check_branch
          %1027 = sbr.rel (%p1025) target = $region160
        $region159: #{tpu_custom_call.1} parent=155 // pred_region
          %s1028 = smul.u32 2, %s88
          %p1029 = scmp.lt.s32.totalorder %s1028, 3
          %s1030 = scalar_select %p1029, %s1028, 3
          %s1031 = smul.addr %s1030, 8
          %s1032 = scalar_lea.vmem %s1, %s1031
          %s1033 = smul.u32 2, %s88
        $region160: #{tpu_custom_call.1} parent=155 // pred_fallthru
          _
      $region156: #{tpu_custom_call.1} parent=5 // pred_fallthru
        _
      %p1034 = scmp.le.s32.totalorder 1, %s88
      %p1035 = scmp.lt.s32.totalorder %s88, 3
      %p1036 = pnand %p1034, %p1035
      %p1037 = pneg %p1036
      // Predicated region
      $region161: #{tpu_custom_call.1} parent=5 // pred_check
        _
      $region162: #{tpu_custom_call.1} parent=5 // pred_check_branch
        %1039 = sbr.rel (%p1036) target = $region164
      $region163: #{tpu_custom_call.1} parent=5 // pred_region
        %s1040 = ssub.s32 %s88, 1
        %s1041 = smul.u32 2, %s93
        %p1042 = scmp.lt.s32.totalorder %s1041, 3
        %s1043 = scalar_select %p1042, %s1041, 3
        %s1044 = smul.addr %s1043, 8
        %s1045 = scalar_lea.vmem %s1, %s1044
        %p1046 = pneg %p114
        %p1047 = pneg %p111
        %p1048 = pneg %p135
        %p1049 = pneg %p132
        %p1050 = pneg %p156
        %p1051 = pneg %p153
        %p1052 = pneg %p177
        %p1053 = pneg %p174
        %p1054 = pneg %p198
        %p1055 = pneg %p195
        %p1056 = pneg %p219
        %p1057 = pneg %p216
        %p1058 = pneg %p240
        %p1059 = pneg %p237
        %p1060 = pneg %p261
        %p1061 = pneg %p258
        %p1062 = pneg %p282
        %p1063 = pneg %p279
        %p1064 = pneg %p303
        %p1065 = pneg %p300
        %p1066 = pneg %p324
        %p1067 = pneg %p321
        %p1068 = pneg %p345
        %p1069 = pneg %p342
        %p1070 = pneg %p366
        %p1071 = pneg %p363
        %p1072 = pneg %p387
        %p1073 = pneg %p384
        %p1074 = pneg %p408
        %p1075 = pneg %p405
        %p1076 = pneg %p429
        %p1077 = pneg %p426
        %p1078 = pneg %p450
        %p1079 = pneg %p447
        %p1080 = pneg %p471
        %p1081 = pneg %p468
        %p1082 = pneg %p492
        %p1083 = pneg %p489
        %p1084 = pneg %p513
        %p1085 = pneg %p510
        %p1086 = pneg %p534
        %p1087 = pneg %p531
        %p1088 = pneg %p555
        %p1089 = pneg %p552
        %p1090 = pneg %p576
        %p1091 = pneg %p573
        %p1092 = pneg %p597
        %p1093 = pneg %p594
        %p1094 = pneg %p618
        %p1095 = pneg %p615
        %p1096 = pneg %p639
        %p1097 = pneg %p636
        %p1098 = pneg %p660
        %p1099 = pneg %p657
        %p1100 = pneg %p681
        %p1101 = pneg %p678
        %p1102 = pneg %p702
        %p1103 = pneg %p699
        %p1104 = pneg %p723
        %p1105 = pneg %p720
        %p1106 = pneg %p744
        %p1107 = pneg %p741
        %p1108 = pneg %p765
        %p1109 = pneg %p762
        %p1110 = pneg %p786
        %p1111 = pneg %p783
        %p1112 = pneg %p807
        %p1113 = pneg %p804
        %p1114 = pneg %p828
        %p1115 = pneg %p825
        %p1116 = pneg %p849
        %p1117 = pneg %p846
        %p1118 = pneg %p875
        %p1119 = pneg %p872
        %s1120 = sand.u32 %s862, 1
        %s1121 = scalar_lea.sflag [#allocation4], %s1120
        %s1122 = sand.u32 %s862, 1
        %s1123 = smul.addr %s1122, 16
        %s1124 = scalar_lea.vmem [#allocation3], %s1123
        %p1125 = pneg %p901
        %p1126 = pneg %p898
        %s1127 = sand.u32 %s888, 1
        %s1128 = scalar_lea.sflag [#allocation6], %s1127
        %s1129 = sand.u32 %s888, 1
        %s1130 = smul.addr %s1129, 16
        %s1131 = scalar_lea.vmem [#allocation5], %s1130
        %s1132 = smul.u32 2, %s93
        %p1133 = scmp.lt.s32.totalorder %s1132, 3
        %s1134 = scalar_select %p1133, %s1132, 3
        %s1135 = smul.addr %s1134, 8
        %s1136 = scalar_lea.vmem %s1, %s1135
        %s1137 = smul.u32 2, %s93
        %s1138 = smul.u32 2, %s93
        %s1139 = smul.u32 2, %s93
        %v1141 = vld [vmem:[%s1136] sm:$0xff]
        %v1142 = vld [vmem:[%s1136 + $0x8] sm:$0xff]
        %v1143 = vld [vmem:[%s3] sm:$0x1]
        %v1144 = vld [vmem:[%s5] sm:$0x1]
        %vm1145 = vcmask 261120
        %v1146 = vsel %vm1145, %v1141, 0.0
        %1147 = vadd.xlane.f32.xlu0 %v1146
        %v1148 = vpop.xlane.xlu0 %1147
        %v1149 = vsel %vm1145, %v1142, 0.0
        %1150 = vadd.xlane.f32.xlu0 %v1149
        %v1151 = vpop.xlane.xlu0 %1150
        %v1152 = vrcp.pop 32.0
        %v1153 = vmul.f32 %v1148, %v1152
        %v1154 = vmul.f32 %v1151, %v1152
        %v1155 = vsub.f32 %v1141, %v1153
        %v1156 = vsub.f32 %v1142, %v1154
        %v1157 = vmul.f32 %v1155, %v1155
        %v1158 = vmul.f32 %v1156, %v1156
        %v1159 = vsel %vm1145, %v1157, 0.0
        %1160 = vadd.xlane.f32.xlu0 %v1159
        %v1161 = vpop.xlane.xlu0 %1160
        %v1162 = vsel %vm1145, %v1158, 0.0
        %1163 = vadd.xlane.f32.xlu0 %v1162
        %v1164 = vpop.xlane.xlu0 %1163
        %v1165 = vmul.f32 %v1161, %v1152
        %v1166 = vmul.f32 %v1164, %v1152
        %v1167 = vadd.f32 %v1165, 1e-05
        %v1168 = vadd.f32 %v1166, 1e-05
        %v1169 = vrsqrt.pop %v1167
        %v1170 = vrsqrt.pop %v1168
        %v1171 = vmul.f32 %v1155, %v1169
        %v1172 = vmul.f32 %v1156, %v1170
        %v1174 = vlaneseq
        %v1175 = vshrl.u32 %v1174, 7
        %v1176 = vsub.s32 0, %v1175
        %v1177 = vrot.slane %v1143, %v1176
        %v1179 = vmul.f32 %v1171, %v1177
        %v1180 = vmul.f32 %v1172, %v1177
        %v1182 = vlaneseq
        %v1183 = vshrl.u32 %v1182, 7
        %v1184 = vsub.s32 0, %v1183
        %v1185 = vrot.slane %v1144, %v1184
        %v1187 = vadd.f32 %v1179, %v1185
        %v1188 = vadd.f32 %v1180, %v1185
        %v1189 = vpack.c.bf16 %v1188, %v1187
        %v1190 = vld [vmem:[%s7] sm:$0xf]
        %v1191 = vld [vmem:[%s7 + $0x4] sm:$0xf]
        %v1192 = vld [vmem:[%s7 + $0x8] sm:$0xf]
        %v1193 = vld [vmem:[%s7 + $0xc] sm:$0xf]
        %v1194 = vld [vmem:[%s9] sm:$0x1]
        %v1196 = vlaneseq
        %v1197 = vshrl.u32 %v1196, 7
        %v1198 = vsub.s32 0, %v1197
        %v1199 = vrot.slane %v1194, %v1198
        %v1205 = vunpack.c.l.b16 %v1190
        %v1206 = vunpack.c.l.b16 %v1191
        %v1207 = vunpack.c.l.b16 %v1192
        %v1208 = vunpack.c.l.b16 %v1193
        %v1209 = vpack.c.b16 %v1206, %v1205
        %v1210 = vpack.c.b16 %v1208, %v1207
        %v1214 = vsel %vm1145, %v1189, 0
        %1216 = vmatprep.subr.bf16.mxu0 0
        %1217 = vmatpush1.bf16.msra.mxu0 0
        %1218 = vmatprep.subr.bf16.mxu0 0
        %1219 = vmatpush1.bf16.msra.mxu0 0
        %1220 = vmatprep.subr.bf16.mxu0 0
        %1221 = vmatpush1.bf16.msra.mxu0 0
        %1222 = vmatprep.subr.bf16.mxu0 0
        %1223 = vmatpush1.bf16.msra.mxu0 0
        %1224 = vmatprep.subr.bf16.mxu0 0
        %1225 = vmatpush1.bf16.msra.mxu0 0
        %1226 = vmatprep.subr.bf16.mxu0 0
        %1227 = vmatpush1.bf16.msra.mxu0 0
        %1228 = vmatprep.subr.bf16.mxu0 0
        %1229 = vmatpush1.bf16.msra.mxu0 %v1210
        %1230 = vmatprep.subr.bf16.mxu0 0
        %1231 = vmatpush1.bf16.msra.mxu0 %v1209
        %1232 = vmatprep.subr.bf16.mxu0 0
        %1233 = vmatpush2.bf16.msra.mxu0 0
        %1234 = vmatprep.subr.bf16.mxu0 0
        %1235 = vmatpush2.bf16.msra.mxu0 0
        %1236 = vmatprep.subr.bf16.mxu0 0
        %1237 = vmatpush2.bf16.msra.mxu0 0
        %1238 = vmatprep.subr.bf16.mxu0 0
        %1239 = vmatpush2.bf16.msra.mxu0 0
        %1240 = vmatprep.subr.bf16.mxu0 0
        %1241 = vmatpush2.bf16.msra.mxu0 0
        %1242 = vmatprep.subr.bf16.mxu0 0
        %1243 = vmatpush2.bf16.msra.mxu0 0
        %1244 = vmatprep.subr.bf16.mxu0 0
        %1245 = vmatpush2.bf16.msra.mxu0 0
        %1246 = vmatprep.subr.bf16.mxu0 0
        %1247 = vmatpush2.bf16.msra.mxu0 0
        %1248 = vmatprep.mubr.bf16.mxu0 0
        %1249 = vmatmul.mubr.bf16.gmra.mxu0 %v1214
        %v1250 = vpop.f32.mrf.mxu0
        %v1251 = vadd.f32 %v1199, %v1250
        %v1252 = vpop.f32.mrf.mxu0
        %v1253 = vpop.f32.mrf.mxu0
        %v1254 = vadd.f32 %v1199, %v1253
        %v1255 = vpop.f32.mrf.mxu0
        %1256 = vdwg.mxu0
        %v1257 = vxor.u32 %v1251, 2147483648
        %v1258 = vxor.u32 %v1254, 2147483648
        %v1259 = vmul.f32 %v1257, 1.442695
        %v1260 = vpow.pop %v1259
        %v1261 = vmul.f32 %v1258, 1.442695
        %v1262 = vpow.pop %v1261
        %v1263 = vadd.f32 %v1260, 1.0
        %v1264 = vadd.f32 %v1262, 1.0
        %v1265 = vrcp.pop %v1263
        %v1266 = vmul.f32 1.0, %v1265
        %v1267 = vrcp.pop %v1264
        %v1268 = vmul.f32 1.0, %v1267
        %v1269 = vmul.f32 %v1251, %v1266
        %v1270 = vmul.f32 %v1254, %v1268
        %v1271 = vpack.c.bf16 %v1270, %v1269
        %v1272 = vld [vmem:[%s11] sm:$0xf]
        %v1273 = vld [vmem:[%s11 + $0x4] sm:$0xf]
        %v1274 = vld [vmem:[%s11 + $0x8] sm:$0xf]
        %v1275 = vld [vmem:[%s11 + $0xc] sm:$0xf]
        %v1276 = vld [vmem:[%s11 + $0x10] sm:$0xf]
        %v1277 = vld [vmem:[%s11 + $0x14] sm:$0xf]
        %v1278 = vld [vmem:[%s11 + $0x18] sm:$0xf]
        %v1279 = vld [vmem:[%s11 + $0x1c] sm:$0xf]
        %v1280 = vld [vmem:[%s11 + $0x20] sm:$0xf]
        %v1281 = vld [vmem:[%s11 + $0x24] sm:$0xf]
        %v1282 = vld [vmem:[%s11 + $0x28] sm:$0xf]
        %v1283 = vld [vmem:[%s11 + $0x2c] sm:$0xf]
        %v1284 = vld [vmem:[%s11 + $0x30] sm:$0xf]
        %v1285 = vld [vmem:[%s11 + $0x34] sm:$0xf]
        %v1286 = vld [vmem:[%s11 + $0x38] sm:$0xf]
        %v1287 = vld [vmem:[%s11 + $0x3c] sm:$0xf]
        %v1288 = vld [vmem:[%s13] sm:$0x1]
        %v1290 = vlaneseq
        %v1291 = vshrl.u32 %v1290, 7
        %v1292 = vsub.s32 0, %v1291
        %v1293 = vrot.slane %v1288, %v1292
        %v1311 = vunpack.c.l.b16 %v1272
        %v1312 = vunpack.c.l.b16 %v1273
        %v1313 = vunpack.c.l.b16 %v1274
        %v1314 = vunpack.c.l.b16 %v1275
        %v1315 = vunpack.c.l.b16 %v1276
        %v1316 = vunpack.c.l.b16 %v1277
        %v1317 = vunpack.c.l.b16 %v1278
        %v1318 = vunpack.c.l.b16 %v1279
        %v1319 = vunpack.c.l.b16 %v1280
        %v1320 = vunpack.c.l.b16 %v1281
        %v1321 = vunpack.c.l.b16 %v1282
        %v1322 = vunpack.c.l.b16 %v1283
        %v1323 = vunpack.c.l.b16 %v1284
        %v1324 = vunpack.c.l.b16 %v1285
        %v1325 = vunpack.c.l.b16 %v1286
        %v1326 = vunpack.c.l.b16 %v1287
        %v1327 = vpack.c.b16 %v1312, %v1311
        %v1328 = vpack.c.b16 %v1314, %v1313
        %v1329 = vpack.c.b16 %v1316, %v1315
        %v1330 = vpack.c.b16 %v1318, %v1317
        %v1331 = vpack.c.b16 %v1320, %v1319
        %v1332 = vpack.c.b16 %v1322, %v1321
        %v1333 = vpack.c.b16 %v1324, %v1323
        %v1334 = vpack.c.b16 %v1326, %v1325
        %1343 = vmatprep.subr.bf16.mxu0 0
        %1344 = vmatpush1.bf16.msra.mxu0 %v1334
        %1345 = vmatprep.subr.bf16.mxu0 0
        %1346 = vmatpush1.bf16.msra.mxu0 %v1333
        %1347 = vmatprep.subr.bf16.mxu0 0
        %1348 = vmatpush1.bf16.msra.mxu0 %v1332
        %1349 = vmatprep.subr.bf16.mxu0 0
        %1350 = vmatpush1.bf16.msra.mxu0 %v1331
        %1351 = vmatprep.subr.bf16.mxu0 0
        %1352 = vmatpush1.bf16.msra.mxu0 %v1330
        %1353 = vmatprep.subr.bf16.mxu0 0
        %1354 = vmatpush1.bf16.msra.mxu0 %v1329
        %1355 = vmatprep.subr.bf16.mxu0 0
        %1356 = vmatpush1.bf16.msra.mxu0 %v1328
        %1357 = vmatprep.subr.bf16.mxu0 0
        %1358 = vmatpush1.bf16.msra.mxu0 %v1327
        %1359 = vmatprep.subr.bf16.mxu0 0
        %1360 = vmatpush2.bf16.msra.mxu0 0
        %1361 = vmatprep.subr.bf16.mxu0 0
        %1362 = vmatpush2.bf16.msra.mxu0 0
        %1363 = vmatprep.subr.bf16.mxu0 0
        %1364 = vmatpush2.bf16.msra.mxu0 0
        %1365 = vmatprep.subr.bf16.mxu0 0
        %1366 = vmatpush2.bf16.msra.mxu0 0
        %1367 = vmatprep.subr.bf16.mxu0 0
        %1368 = vmatpush2.bf16.msra.mxu0 0
        %1369 = vmatprep.subr.bf16.mxu0 0
        %1370 = vmatpush2.bf16.msra.mxu0 0
        %1371 = vmatprep.subr.bf16.mxu0 0
        %1372 = vmatpush2.bf16.msra.mxu0 0
        %1373 = vmatprep.subr.bf16.mxu0 0
        %1374 = vmatpush2.bf16.msra.mxu0 0
        %1375 = vmatprep.mubr.bf16.mxu0 0
        %1376 = vmatmul.mubr.bf16.gmra.mxu0 %v1271
        %v1377 = vpop.f32.mrf.mxu0
        %v1378 = vadd.f32 %v1293, %v1377
        %v1379 = vpop.f32.mrf.mxu0
        %v1380 = vpop.f32.mrf.mxu0
        %v1381 = vadd.f32 %v1293, %v1380
        %v1382 = vpop.f32.mrf.mxu0
        %1383 = vdwg.mxu0
        %v1384 = vmul.f32 %v1378, 0.5
        %v1385 = vmul.f32 %v1381, 0.5
        %v1386 = vadd.f32 %v1141, %v1384
        %v1387 = vadd.f32 %v1142, %v1385
        %v1388 = vld [vmem:[%s15] sm:$0x1]
        %v1389 = vld [vmem:[%s17] sm:$0x1]
        %v1390 = vsel %vm1145, %v1386, 0.0
        %1391 = vadd.xlane.f32.xlu0 %v1390
        %v1392 = vpop.xlane.xlu0 %1391
        %v1393 = vsel %vm1145, %v1387, 0.0
        %1394 = vadd.xlane.f32.xlu0 %v1393
        %v1395 = vpop.xlane.xlu0 %1394
        %v1396 = vmul.f32 %v1392, %v1152
        %v1397 = vmul.f32 %v1395, %v1152
        %v1398 = vsub.f32 %v1386, %v1396
        %v1399 = vsub.f32 %v1387, %v1397
        %v1400 = vmul.f32 %v1398, %v1398
        %v1401 = vmul.f32 %v1399, %v1399
        %v1402 = vsel %vm1145, %v1400, 0.0
        %1403 = vadd.xlane.f32.xlu0 %v1402
        %v1404 = vpop.xlane.xlu0 %1403
        %v1405 = vsel %vm1145, %v1401, 0.0
        %1406 = vadd.xlane.f32.xlu0 %v1405
        %v1407 = vpop.xlane.xlu0 %1406
        %v1408 = vmul.f32 %v1404, %v1152
        %v1409 = vmul.f32 %v1407, %v1152
        %v1410 = vadd.f32 %v1408, 1e-05
        %v1411 = vadd.f32 %v1409, 1e-05
        %v1412 = vrsqrt.pop %v1410
        %v1413 = vrsqrt.pop %v1411
        %v1414 = vmul.f32 %v1398, %v1412
        %v1415 = vmul.f32 %v1399, %v1413
        %v1417 = vlaneseq
        %v1418 = vshrl.u32 %v1417, 7
        %v1419 = vsub.s32 0, %v1418
        %v1420 = vrot.slane %v1388, %v1419
        %v1422 = vmul.f32 %v1414, %v1420
        %v1423 = vmul.f32 %v1415, %v1420
        %v1425 = vlaneseq
        %v1426 = vshrl.u32 %v1425, 7
        %v1427 = vsub.s32 0, %v1426
        %v1428 = vrot.slane %v1389, %v1427
        %v1430 = vadd.f32 %v1422, %v1428
        %v1431 = vadd.f32 %v1423, %v1428
        %v1432 = vpack.c.bf16 %v1431, %v1430
        %v1433 = vld [vmem:[%s19] sm:$0xf]
        %v1434 = vld [vmem:[%s19 + $0x4] sm:$0xf]
        %v1435 = vld [vmem:[%s19 + $0x8] sm:$0xf]
        %v1436 = vld [vmem:[%s19 + $0xc] sm:$0xf]
        %v1437 = vld [vmem:[%s21] sm:$0x1]
        %v1439 = vlaneseq
        %v1440 = vshrl.u32 %v1439, 7
        %v1441 = vsub.s32 0, %v1440
        %v1442 = vrot.slane %v1437, %v1441
        %v1448 = vunpack.c.l.b16 %v1433
        %v1449 = vunpack.c.l.b16 %v1434
        %v1450 = vunpack.c.l.b16 %v1435
        %v1451 = vunpack.c.l.b16 %v1436
        %v1452 = vpack.c.b16 %v1449, %v1448
        %v1453 = vpack.c.b16 %v1451, %v1450
        %v1457 = vsel %vm1145, %v1432, 0
        %1459 = vmatprep.subr.bf16.mxu0 0
        %1460 = vmatpush1.bf16.msra.mxu0 0
        %1461 = vmatprep.subr.bf16.mxu0 0
        %1462 = vmatpush1.bf16.msra.mxu0 0
        %1463 = vmatprep.subr.bf16.mxu0 0
        %1464 = vmatpush1.bf16.msra.mxu0 0
        %1465 = vmatprep.subr.bf16.mxu0 0
        %1466 = vmatpush1.bf16.msra.mxu0 0
        %1467 = vmatprep.subr.bf16.mxu0 0
        %1468 = vmatpush1.bf16.msra.mxu0 0
        %1469 = vmatprep.subr.bf16.mxu0 0
        %1470 = vmatpush1.bf16.msra.mxu0 0
        %1471 = vmatprep.subr.bf16.mxu0 0
        %1472 = vmatpush1.bf16.msra.mxu0 %v1453
        %1473 = vmatprep.subr.bf16.mxu0 0
        %1474 = vmatpush1.bf16.msra.mxu0 %v1452
        %1475 = vmatprep.subr.bf16.mxu0 0
        %1476 = vmatpush2.bf16.msra.mxu0 0
        %1477 = vmatprep.subr.bf16.mxu0 0
        %1478 = vmatpush2.bf16.msra.mxu0 0
        %1479 = vmatprep.subr.bf16.mxu0 0
        %1480 = vmatpush2.bf16.msra.mxu0 0
        %1481 = vmatprep.subr.bf16.mxu0 0
        %1482 = vmatpush2.bf16.msra.mxu0 0
        %1483 = vmatprep.subr.bf16.mxu0 0
        %1484 = vmatpush2.bf16.msra.mxu0 0
        %1485 = vmatprep.subr.bf16.mxu0 0
        %1486 = vmatpush2.bf16.msra.mxu0 0
        %1487 = vmatprep.subr.bf16.mxu0 0
        %1488 = vmatpush2.bf16.msra.mxu0 0
        %1489 = vmatprep.subr.bf16.mxu0 0
        %1490 = vmatpush2.bf16.msra.mxu0 0
        %1491 = vmatprep.mubr.bf16.mxu0 0
        %1492 = vmatmul.mubr.bf16.gmra.mxu0 %v1457
        %v1493 = vpop.f32.mrf.mxu0
        %v1494 = vadd.f32 %v1442, %v1493
        %v1495 = vpop.f32.mrf.mxu0
        %v1496 = vpop.f32.mrf.mxu0
        %v1497 = vadd.f32 %v1442, %v1496
        %v1498 = vpop.f32.mrf.mxu0
        %1499 = vdwg.mxu0
        %v1500 = vpack.c.bf16 %v1497, %v1494
        %1502 = vrot.lane.b32.xlu0 %v1500, 96
        %v1503 = vpop.permute.xlu0 %1502
        %vm1504 = vcmask 64512
        %v1506 = vsel %vm1504, %v1500, 0
        %v1509 = vsel %vm1504, %v1503, 0
        %1511 = vmatprep.subr.bf16.mxu0 0
        %1512 = vmatpush1.bf16.xpose.msra.mxu0 0
        %1513 = vmatprep.subr.bf16.mxu0 0
        %1514 = vmatpush1.bf16.xpose.msra.mxu0 0
        %1515 = vmatprep.subr.bf16.mxu0 0
        %1516 = vmatpush1.bf16.xpose.msra.mxu0 0
        %1517 = vmatprep.subr.bf16.mxu0 0
        %1518 = vmatpush1.bf16.xpose.msra.mxu0 0
        %1519 = vmatprep.subr.bf16.mxu0 0
        %1520 = vmatpush1.bf16.xpose.msra.mxu0 0
        %1521 = vmatprep.subr.bf16.mxu0 0
        %1522 = vmatpush1.bf16.xpose.msra.mxu0 0
        %1523 = vmatprep.subr.bf16.mxu0 0
        %1524 = vmatpush1.bf16.xpose.msra.mxu0 0
        %1525 = vmatprep.subr.bf16.mxu0 0
        %1526 = vmatpush1.bf16.xpose.msra.mxu0 %v1509
        %1527 = vmatprep.subr.bf16.mxu0 0
        %1528 = vmatpush2.bf16.xpose.msra.mxu0 0
        %1529 = vmatprep.subr.bf16.mxu0 0
        %1530 = vmatpush2.bf16.xpose.msra.mxu0 0
        %1531 = vmatprep.subr.bf16.mxu0 0
        %1532 = vmatpush2.bf16.xpose.msra.mxu0 0
        %1533 = vmatprep.subr.bf16.mxu0 0
        %1534 = vmatpush2.bf16.xpose.msra.mxu0 0
        %1535 = vmatprep.subr.bf16.mxu0 0
        %1536 = vmatpush2.bf16.xpose.msra.mxu0 0
        %1537 = vmatprep.subr.bf16.mxu0 0
        %1538 = vmatpush2.bf16.xpose.msra.mxu0 0
        %1539 = vmatprep.subr.bf16.mxu0 0
        %1540 = vmatpush2.bf16.xpose.msra.mxu0 0
        %1541 = vmatprep.subr.bf16.mxu0 0
        %1542 = vmatpush2.bf16.xpose.msra.mxu0 0
        %1543 = vmatprep.mubr.bf16.mxu0 0
        %1544 = vmatmul.mubr.bf16.gmra.mxu0 %v1506
        %v1545 = vpop.f32.mrf.mxu0
        %v1546 = vadd.f32 0.0, %v1545
        %v1547 = vpop.f32.mrf.mxu0
        %v1548 = vpop.f32.mrf.mxu0
        %v1549 = vadd.f32 0.0, %v1548
        %v1550 = vpop.f32.mrf.mxu0
        %1551 = vdwg.mxu0
        %vm1552 = vcmask 130048
        %v1553 = vsel %vm1552, %v1546, -inf
        %1554 = vmax.xlane.f32.xlu0 %v1553
        %v1555 = vpop.xlane.xlu0 %1554
        %v1556 = vsel %vm1552, %v1549, -inf
        %1557 = vmax.xlane.f32.xlu0 %v1556
        %v1558 = vpop.xlane.xlu0 %1557
        %v1559 = vsub.f32 %v1546, %v1555
        %v1560 = vsub.f32 %v1549, %v1558
        %v1561 = vmul.f32 %v1559, 1.442695
        %v1562 = vpow.pop %v1561
        %v1563 = vmul.f32 %v1560, 1.442695
        %v1564 = vpow.pop %v1563
        %v1565 = vsel %vm1552, %v1562, 0.0
        %1566 = vadd.xlane.f32.xlu0 %v1565
        %v1567 = vpop.xlane.xlu0 %1566
        %v1568 = vsel %vm1552, %v1564, 0.0
        %1569 = vadd.xlane.f32.xlu0 %v1568
        %v1570 = vpop.xlane.xlu0 %1569
        %v1571 = vrcp.pop %v1567
        %v1572 = vrcp.pop %v1570
        %v1573 = vmul.f32 %v1562, %v1571
        %v1574 = vmul.f32 %v1564, %v1572
        %v1575 = vpack.c.bf16 %v1574, %v1573
        %1576 = vrot.lane.b32.xlu0 %v1500, 64
        %v1577 = vpop.permute.xlu0 %1576
        %v1580 = vsel %vm1552, %v1575, 0
        %1582 = vmatprep.subr.bf16.mxu0 0
        %1583 = vmatpush1.bf16.msra.mxu0 0
        %1584 = vmatprep.subr.bf16.mxu0 0
        %1585 = vmatpush1.bf16.msra.mxu0 0
        %1586 = vmatprep.subr.bf16.mxu0 0
        %1587 = vmatpush1.bf16.msra.mxu0 0
        %1588 = vmatprep.subr.bf16.mxu0 0
        %1589 = vmatpush1.bf16.msra.mxu0 0
        %1590 = vmatprep.subr.bf16.mxu0 0
        %1591 = vmatpush1.bf16.msra.mxu0 0
        %1592 = vmatprep.subr.bf16.mxu0 0
        %1593 = vmatpush1.bf16.msra.mxu0 0
        %1594 = vmatprep.subr.bf16.mxu0 0
        %1595 = vmatpush1.bf16.msra.mxu0 0
        %1596 = vmatprep.subr.bf16.mxu0 0
        %1597 = vmatpush1.bf16.msra.mxu0 %v1577
        %1598 = vmatprep.subr.bf16.mxu0 0
        %1599 = vmatpush2.bf16.msra.mxu0 0
        %1600 = vmatprep.subr.bf16.mxu0 0
        %1601 = vmatpush2.bf16.msra.mxu0 0
        %1602 = vmatprep.subr.bf16.mxu0 0
        %1603 = vmatpush2.bf16.msra.mxu0 0
        %1604 = vmatprep.subr.bf16.mxu0 0
        %1605 = vmatpush2.bf16.msra.mxu0 0
        %1606 = vmatprep.subr.bf16.mxu0 0
        %1607 = vmatpush2.bf16.msra.mxu0 0
        %1608 = vmatprep.subr.bf16.mxu0 0
        %1609 = vmatpush2.bf16.msra.mxu0 0
        %1610 = vmatprep.subr.bf16.mxu0 0
        %1611 = vmatpush2.bf16.msra.mxu0 0
        %1612 = vmatprep.subr.bf16.mxu0 0
        %1613 = vmatpush2.bf16.msra.mxu0 0
        %1614 = vmatprep.mubr.bf16.mxu0 0
        %1615 = vmatmul.mubr.bf16.gmra.mxu0 %v1580
        %v1616 = vpop.f32.mrf.mxu0
        %v1617 = vadd.f32 0.0, %v1616
        %v1618 = vpop.f32.mrf.mxu0
        %v1619 = vpop.f32.mrf.mxu0
        %v1620 = vadd.f32 0.0, %v1619
        %v1621 = vpop.f32.mrf.mxu0
        %1622 = vdwg.mxu0
        %1623 = vrot.lane.b32.xlu0 %v1500, 120
        %v1624 = vpop.permute.xlu0 %1623
        %1625 = vrot.lane.b32.xlu0 %v1500, 88
        %v1626 = vpop.permute.xlu0 %1625
        %v1628 = vsel %vm1504, %v1624, 0
        %v1631 = vsel %vm1504, %v1626, 0
        %1633 = vmatprep.subr.bf16.mxu0 0
        %1634 = vmatpush1.bf16.xpose.msra.mxu0 0
        %1635 = vmatprep.subr.bf16.mxu0 0
        %1636 = vmatpush1.bf16.xpose.msra.mxu0 0
        %1637 = vmatprep.subr.bf16.mxu0 0
        %1638 = vmatpush1.bf16.xpose.msra.mxu0 0
        %1639 = vmatprep.subr.bf16.mxu0 0
        %1640 = vmatpush1.bf16.xpose.msra.mxu0 0
        %1641 = vmatprep.subr.bf16.mxu0 0
        %1642 = vmatpush1.bf16.xpose.msra.mxu0 0
        %1643 = vmatprep.subr.bf16.mxu0 0
        %1644 = vmatpush1.bf16.xpose.msra.mxu0 0
        %1645 = vmatprep.subr.bf16.mxu0 0
        %1646 = vmatpush1.bf16.xpose.msra.mxu0 0
        %1647 = vmatprep.subr.bf16.mxu0 0
        %1648 = vmatpush1.bf16.xpose.msra.mxu0 %v1631
        %1649 = vmatprep.subr.bf16.mxu0 0
        %1650 = vmatpush2.bf16.xpose.msra.mxu0 0
        %1651 = vmatprep.subr.bf16.mxu0 0
        %1652 = vmatpush2.bf16.xpose.msra.mxu0 0
        %1653 = vmatprep.subr.bf16.mxu0 0
        %1654 = vmatpush2.bf16.xpose.msra.mxu0 0
        %1655 = vmatprep.subr.bf16.mxu0 0
        %1656 = vmatpush2.bf16.xpose.msra.mxu0 0
        %1657 = vmatprep.subr.bf16.mxu0 0
        %1658 = vmatpush2.bf16.xpose.msra.mxu0 0
        %1659 = vmatprep.subr.bf16.mxu0 0
        %1660 = vmatpush2.bf16.xpose.msra.mxu0 0
        %1661 = vmatprep.subr.bf16.mxu0 0
        %1662 = vmatpush2.bf16.xpose.msra.mxu0 0
        %1663 = vmatprep.subr.bf16.mxu0 0
        %1664 = vmatpush2.bf16.xpose.msra.mxu0 0
        %1665 = vmatprep.mubr.bf16.mxu0 0
        %1666 = vmatmul.mubr.bf16.gmra.mxu0 %v1628
        %v1667 = vpop.f32.mrf.mxu0
        %v1668 = vadd.f32 0.0, %v1667
        %v1669 = vpop.f32.mrf.mxu0
        %v1670 = vpop.f32.mrf.mxu0
        %v1671 = vadd.f32 0.0, %v1670
        %v1672 = vpop.f32.mrf.mxu0
        %1673 = vdwg.mxu0
        %v1674 = vsel %vm1552, %v1668, -inf
        %1675 = vmax.xlane.f32.xlu0 %v1674
        %v1676 = vpop.xlane.xlu0 %1675
        %v1677 = vsel %vm1552, %v1671, -inf
        %1678 = vmax.xlane.f32.xlu0 %v1677
        %v1679 = vpop.xlane.xlu0 %1678
        %v1680 = vsub.f32 %v1668, %v1676
        %v1681 = vsub.f32 %v1671, %v1679
        %v1682 = vmul.f32 %v1680, 1.442695
        %v1683 = vpow.pop %v1682
        %v1684 = vmul.f32 %v1681, 1.442695
        %v1685 = vpow.pop %v1684
        %v1686 = vsel %vm1552, %v1683, 0.0
        %1687 = vadd.xlane.f32.xlu0 %v1686
        %v1688 = vpop.xlane.xlu0 %1687
        %v1689 = vsel %vm1552, %v1685, 0.0
        %1690 = vadd.xlane.f32.xlu0 %v1689
        %v1691 = vpop.xlane.xlu0 %1690
        %v1692 = vrcp.pop %v1688
        %v1693 = vrcp.pop %v1691
        %v1694 = vmul.f32 %v1683, %v1692
        %v1695 = vmul.f32 %v1685, %v1693
        %v1696 = vpack.c.bf16 %v1695, %v1694
        %1697 = vrot.lane.b32.xlu0 %v1500, 56
        %v1698 = vpop.permute.xlu0 %1697
        %v1701 = vsel %vm1552, %v1696, 0
        %1703 = vmatprep.subr.bf16.mxu0 0
        %1704 = vmatpush1.bf16.msra.mxu0 0
        %1705 = vmatprep.subr.bf16.mxu0 0
        %1706 = vmatpush1.bf16.msra.mxu0 0
        %1707 = vmatprep.subr.bf16.mxu0 0
        %1708 = vmatpush1.bf16.msra.mxu0 0
        %1709 = vmatprep.subr.bf16.mxu0 0
        %1710 = vmatpush1.bf16.msra.mxu0 0
        %1711 = vmatprep.subr.bf16.mxu0 0
        %1712 = vmatpush1.bf16.msra.mxu0 0
        %1713 = vmatprep.subr.bf16.mxu0 0
        %1714 = vmatpush1.bf16.msra.mxu0 0
        %1715 = vmatprep.subr.bf16.mxu0 0
        %1716 = vmatpush1.bf16.msra.mxu0 0
        %1717 = vmatprep.subr.bf16.mxu0 0
        %1718 = vmatpush1.bf16.msra.mxu0 %v1698
        %1719 = vmatprep.subr.bf16.mxu0 0
        %1720 = vmatpush2.bf16.msra.mxu0 0
        %1721 = vmatprep.subr.bf16.mxu0 0
        %1722 = vmatpush2.bf16.msra.mxu0 0
        %1723 = vmatprep.subr.bf16.mxu0 0
        %1724 = vmatpush2.bf16.msra.mxu0 0
        %1725 = vmatprep.subr.bf16.mxu0 0
        %1726 = vmatpush2.bf16.msra.mxu0 0
        %1727 = vmatprep.subr.bf16.mxu0 0
        %1728 = vmatpush2.bf16.msra.mxu0 0
        %1729 = vmatprep.subr.bf16.mxu0 0
        %1730 = vmatpush2.bf16.msra.mxu0 0
        %1731 = vmatprep.subr.bf16.mxu0 0
        %1732 = vmatpush2.bf16.msra.mxu0 0
        %1733 = vmatprep.subr.bf16.mxu0 0
        %1734 = vmatpush2.bf16.msra.mxu0 0
        %1735 = vmatprep.mubr.bf16.mxu0 0
        %1736 = vmatmul.mubr.bf16.gmra.mxu0 %v1701
        %v1737 = vpop.f32.mrf.mxu0
        %v1738 = vadd.f32 0.0, %v1737
        %v1739 = vpop.f32.mrf.mxu0
        %v1740 = vpop.f32.mrf.mxu0
        %v1741 = vadd.f32 0.0, %v1740
        %v1742 = vpop.f32.mrf.mxu0
        %1743 = vdwg.mxu0
        %1744 = vrot.lane.b32.xlu0 %v1500, 112
        %v1745 = vpop.permute.xlu0 %1744
        %1746 = vrot.lane.b32.xlu0 %v1500, 80
        %v1747 = vpop.permute.xlu0 %1746
        %v1749 = vsel %vm1504, %v1745, 0
        %v1752 = vsel %vm1504, %v1747, 0
        %1754 = vmatprep.subr.bf16.mxu0 0
        %1755 = vmatpush1.bf16.xpose.msra.mxu0 0
        %1756 = vmatprep.subr.bf16.mxu0 0
        %1757 = vmatpush1.bf16.xpose.msra.mxu0 0
        %1758 = vmatprep.subr.bf16.mxu0 0
        %1759 = vmatpush1.bf16.xpose.msra.mxu0 0
        %1760 = vmatprep.subr.bf16.mxu0 0
        %1761 = vmatpush1.bf16.xpose.msra.mxu0 0
        %1762 = vmatprep.subr.bf16.mxu0 0
        %1763 = vmatpush1.bf16.xpose.msra.mxu0 0
        %1764 = vmatprep.subr.bf16.mxu0 0
        %1765 = vmatpush1.bf16.xpose.msra.mxu0 0
        %1766 = vmatprep.subr.bf16.mxu0 0
        %1767 = vmatpush1.bf16.xpose.msra.mxu0 0
        %1768 = vmatprep.subr.bf16.mxu0 0
        %1769 = vmatpush1.bf16.xpose.msra.mxu0 %v1752
        %1770 = vmatprep.subr.bf16.mxu0 0
        %1771 = vmatpush2.bf16.xpose.msra.mxu0 0
        %1772 = vmatprep.subr.bf16.mxu0 0
        %1773 = vmatpush2.bf16.xpose.msra.mxu0 0
        %1774 = vmatprep.subr.bf16.mxu0 0
        %1775 = vmatpush2.bf16.xpose.msra.mxu0 0
        %1776 = vmatprep.subr.bf16.mxu0 0
        %1777 = vmatpush2.bf16.xpose.msra.mxu0 0
        %1778 = vmatprep.subr.bf16.mxu0 0
        %1779 = vmatpush2.bf16.xpose.msra.mxu0 0
        %1780 = vmatprep.subr.bf16.mxu0 0
        %1781 = vmatpush2.bf16.xpose.msra.mxu0 0
        %1782 = vmatprep.subr.bf16.mxu0 0
        %1783 = vmatpush2.bf16.xpose.msra.mxu0 0
        %1784 = vmatprep.subr.bf16.mxu0 0
        %1785 = vmatpush2.bf16.xpose.msra.mxu0 0
        %1786 = vmatprep.mubr.bf16.mxu0 0
        %1787 = vmatmul.mubr.bf16.gmra.mxu0 %v1749
        %v1788 = vpop.f32.mrf.mxu0
        %v1789 = vadd.f32 0.0, %v1788
        %v1790 = vpop.f32.mrf.mxu0
        %v1791 = vpop.f32.mrf.mxu0
        %v1792 = vadd.f32 0.0, %v1791
        %v1793 = vpop.f32.mrf.mxu0
        %1794 = vdwg.mxu0
        %v1795 = vsel %vm1552, %v1789, -inf
        %1796 = vmax.xlane.f32.xlu0 %v1795
        %v1797 = vpop.xlane.xlu0 %1796
        %v1798 = vsel %vm1552, %v1792, -inf
        %1799 = vmax.xlane.f32.xlu0 %v1798
        %v1800 = vpop.xlane.xlu0 %1799
        %v1801 = vsub.f32 %v1789, %v1797
        %v1802 = vsub.f32 %v1792, %v1800
        %v1803 = vmul.f32 %v1801, 1.442695
        %v1804 = vpow.pop %v1803
        %v1805 = vmul.f32 %v1802, 1.442695
        %v1806 = vpow.pop %v1805
        %v1807 = vsel %vm1552, %v1804, 0.0
        %1808 = vadd.xlane.f32.xlu0 %v1807
        %v1809 = vpop.xlane.xlu0 %1808
        %v1810 = vsel %vm1552, %v1806, 0.0
        %1811 = vadd.xlane.f32.xlu0 %v1810
        %v1812 = vpop.xlane.xlu0 %1811
        %v1813 = vrcp.pop %v1809
        %v1814 = vrcp.pop %v1812
        %v1815 = vmul.f32 %v1804, %v1813
        %v1816 = vmul.f32 %v1806, %v1814
        %v1817 = vpack.c.bf16 %v1816, %v1815
        %1818 = vrot.lane.b32.xlu0 %v1500, 48
        %v1819 = vpop.permute.xlu0 %1818
        %v1822 = vsel %vm1552, %v1817, 0
        %1824 = vmatprep.subr.bf16.mxu0 0
        %1825 = vmatpush1.bf16.msra.mxu0 0
        %1826 = vmatprep.subr.bf16.mxu0 0
        %1827 = vmatpush1.bf16.msra.mxu0 0
        %1828 = vmatprep.subr.bf16.mxu0 0
        %1829 = vmatpush1.bf16.msra.mxu0 0
        %1830 = vmatprep.subr.bf16.mxu0 0
        %1831 = vmatpush1.bf16.msra.mxu0 0
        %1832 = vmatprep.subr.bf16.mxu0 0
        %1833 = vmatpush1.bf16.msra.mxu0 0
        %1834 = vmatprep.subr.bf16.mxu0 0
        %1835 = vmatpush1.bf16.msra.mxu0 0
        %1836 = vmatprep.subr.bf16.mxu0 0
        %1837 = vmatpush1.bf16.msra.mxu0 0
        %1838 = vmatprep.subr.bf16.mxu0 0
        %1839 = vmatpush1.bf16.msra.mxu0 %v1819
        %1840 = vmatprep.subr.bf16.mxu0 0
        %1841 = vmatpush2.bf16.msra.mxu0 0
        %1842 = vmatprep.subr.bf16.mxu0 0
        %1843 = vmatpush2.bf16.msra.mxu0 0
        %1844 = vmatprep.subr.bf16.mxu0 0
        %1845 = vmatpush2.bf16.msra.mxu0 0
        %1846 = vmatprep.subr.bf16.mxu0 0
        %1847 = vmatpush2.bf16.msra.mxu0 0
        %1848 = vmatprep.subr.bf16.mxu0 0
        %1849 = vmatpush2.bf16.msra.mxu0 0
        %1850 = vmatprep.subr.bf16.mxu0 0
        %1851 = vmatpush2.bf16.msra.mxu0 0
        %1852 = vmatprep.subr.bf16.mxu0 0
        %1853 = vmatpush2.bf16.msra.mxu0 0
        %1854 = vmatprep.subr.bf16.mxu0 0
        %1855 = vmatpush2.bf16.msra.mxu0 0
        %1856 = vmatprep.mubr.bf16.mxu0 0
        %1857 = vmatmul.mubr.bf16.gmra.mxu0 %v1822
        %v1858 = vpop.f32.mrf.mxu0
        %v1859 = vadd.f32 0.0, %v1858
        %v1860 = vpop.f32.mrf.mxu0
        %v1861 = vpop.f32.mrf.mxu0
        %v1862 = vadd.f32 0.0, %v1861
        %v1863 = vpop.f32.mrf.mxu0
        %1864 = vdwg.mxu0
        %1865 = vrot.lane.b32.xlu0 %v1500, 104
        %v1866 = vpop.permute.xlu0 %1865
        %1867 = vrot.lane.b32.xlu0 %v1500, 72
        %v1868 = vpop.permute.xlu0 %1867
        %v1870 = vsel %vm1504, %v1866, 0
        %v1873 = vsel %vm1504, %v1868, 0
        %1875 = vmatprep.subr.bf16.mxu0 0
        %1876 = vmatpush1.bf16.xpose.msra.mxu0 0
        %1877 = vmatprep.subr.bf16.mxu0 0
        %1878 = vmatpush1.bf16.xpose.msra.mxu0 0
        %1879 = vmatprep.subr.bf16.mxu0 0
        %1880 = vmatpush1.bf16.xpose.msra.mxu0 0
        %1881 = vmatprep.subr.bf16.mxu0 0
        %1882 = vmatpush1.bf16.xpose.msra.mxu0 0
        %1883 = vmatprep.subr.bf16.mxu0 0
        %1884 = vmatpush1.bf16.xpose.msra.mxu0 0
        %1885 = vmatprep.subr.bf16.mxu0 0
        %1886 = vmatpush1.bf16.xpose.msra.mxu0 0
        %1887 = vmatprep.subr.bf16.mxu0 0
        %1888 = vmatpush1.bf16.xpose.msra.mxu0 0
        %1889 = vmatprep.subr.bf16.mxu0 0
        %1890 = vmatpush1.bf16.xpose.msra.mxu0 %v1873
        %1891 = vmatprep.subr.bf16.mxu0 0
        %1892 = vmatpush2.bf16.xpose.msra.mxu0 0
        %1893 = vmatprep.subr.bf16.mxu0 0
        %1894 = vmatpush2.bf16.xpose.msra.mxu0 0
        %1895 = vmatprep.subr.bf16.mxu0 0
        %1896 = vmatpush2.bf16.xpose.msra.mxu0 0
        %1897 = vmatprep.subr.bf16.mxu0 0
        %1898 = vmatpush2.bf16.xpose.msra.mxu0 0
        %1899 = vmatprep.subr.bf16.mxu0 0
        %1900 = vmatpush2.bf16.xpose.msra.mxu0 0
        %1901 = vmatprep.subr.bf16.mxu0 0
        %1902 = vmatpush2.bf16.xpose.msra.mxu0 0
        %1903 = vmatprep.subr.bf16.mxu0 0
        %1904 = vmatpush2.bf16.xpose.msra.mxu0 0
        %1905 = vmatprep.subr.bf16.mxu0 0
        %1906 = vmatpush2.bf16.xpose.msra.mxu0 0
        %1907 = vmatprep.mubr.bf16.mxu0 0
        %1908 = vmatmul.mubr.bf16.gmra.mxu0 %v1870
        %v1909 = vpop.f32.mrf.mxu0
        %v1910 = vadd.f32 0.0, %v1909
        %v1911 = vpop.f32.mrf.mxu0
        %v1912 = vpop.f32.mrf.mxu0
        %v1913 = vadd.f32 0.0, %v1912
        %v1914 = vpop.f32.mrf.mxu0
        %1915 = vdwg.mxu0
        %v1916 = vsel %vm1552, %v1910, -inf
        %1917 = vmax.xlane.f32.xlu0 %v1916
        %v1918 = vpop.xlane.xlu0 %1917
        %v1919 = vsel %vm1552, %v1913, -inf
        %1920 = vmax.xlane.f32.xlu0 %v1919
        %v1921 = vpop.xlane.xlu0 %1920
        %v1922 = vsub.f32 %v1910, %v1918
        %v1923 = vsub.f32 %v1913, %v1921
        %v1924 = vmul.f32 %v1922, 1.442695
        %v1925 = vpow.pop %v1924
        %v1926 = vmul.f32 %v1923, 1.442695
        %v1927 = vpow.pop %v1926
        %v1928 = vsel %vm1552, %v1925, 0.0
        %1929 = vadd.xlane.f32.xlu0 %v1928
        %v1930 = vpop.xlane.xlu0 %1929
        %v1931 = vsel %vm1552, %v1927, 0.0
        %1932 = vadd.xlane.f32.xlu0 %v1931
        %v1933 = vpop.xlane.xlu0 %1932
        %v1934 = vrcp.pop %v1930
        %v1935 = vrcp.pop %v1933
        %v1936 = vmul.f32 %v1925, %v1934
        %v1937 = vmul.f32 %v1927, %v1935
        %v1938 = vpack.c.bf16 %v1937, %v1936
        %1939 = vrot.lane.b32.xlu0 %v1500, 40
        %v1940 = vpop.permute.xlu0 %1939
        %v1943 = vsel %vm1552, %v1938, 0
        %1945 = vmatprep.subr.bf16.mxu0 0
        %1946 = vmatpush1.bf16.msra.mxu0 0
        %1947 = vmatprep.subr.bf16.mxu0 0
        %1948 = vmatpush1.bf16.msra.mxu0 0
        %1949 = vmatprep.subr.bf16.mxu0 0
        %1950 = vmatpush1.bf16.msra.mxu0 0
        %1951 = vmatprep.subr.bf16.mxu0 0
        %1952 = vmatpush1.bf16.msra.mxu0 0
        %1953 = vmatprep.subr.bf16.mxu0 0
        %1954 = vmatpush1.bf16.msra.mxu0 0
        %1955 = vmatprep.subr.bf16.mxu0 0
        %1956 = vmatpush1.bf16.msra.mxu0 0
        %1957 = vmatprep.subr.bf16.mxu0 0
        %1958 = vmatpush1.bf16.msra.mxu0 0
        %1959 = vmatprep.subr.bf16.mxu0 0
        %1960 = vmatpush1.bf16.msra.mxu0 %v1940
        %1961 = vmatprep.subr.bf16.mxu0 0
        %1962 = vmatpush2.bf16.msra.mxu0 0
        %1963 = vmatprep.subr.bf16.mxu0 0
        %1964 = vmatpush2.bf16.msra.mxu0 0
        %1965 = vmatprep.subr.bf16.mxu0 0
        %1966 = vmatpush2.bf16.msra.mxu0 0
        %1967 = vmatprep.subr.bf16.mxu0 0
        %1968 = vmatpush2.bf16.msra.mxu0 0
        %1969 = vmatprep.subr.bf16.mxu0 0
        %1970 = vmatpush2.bf16.msra.mxu0 0
        %1971 = vmatprep.subr.bf16.mxu0 0
        %1972 = vmatpush2.bf16.msra.mxu0 0
        %1973 = vmatprep.subr.bf16.mxu0 0
        %1974 = vmatpush2.bf16.msra.mxu0 0
        %1975 = vmatprep.subr.bf16.mxu0 0
        %1976 = vmatpush2.bf16.msra.mxu0 0
        %1977 = vmatprep.mubr.bf16.mxu0 0
        %1978 = vmatmul.mubr.bf16.gmra.mxu0 %v1943
        %v1979 = vpop.f32.mrf.mxu0
        %v1980 = vadd.f32 0.0, %v1979
        %v1981 = vpop.f32.mrf.mxu0
        %v1982 = vpop.f32.mrf.mxu0
        %v1983 = vadd.f32 0.0, %v1982
        %v1984 = vpop.f32.mrf.mxu0
        %1985 = vdwg.mxu0
        %1988 = vrot.lane.b32.xlu0 %v1738, 8
        %v1989 = vpop.permute.xlu0 %1988
        %1990 = vrot.lane.b32.xlu0 %v1741, 8
        %v1991 = vpop.permute.xlu0 %1990
        %1996 = vrot.lane.b32.xlu0 %v1859, 16
        %v1997 = vpop.permute.xlu0 %1996
        %1998 = vrot.lane.b32.xlu0 %v1862, 16
        %v1999 = vpop.permute.xlu0 %1998
        %2004 = vrot.lane.b32.xlu0 %v1980, 24
        %v2005 = vpop.permute.xlu0 %2004
        %2006 = vrot.lane.b32.xlu0 %v1983, 24
        %v2007 = vpop.permute.xlu0 %2006
        %v2010 = vsel %vm1504, %v1617, %v1989
        %v2011 = vsel %vm1504, %v1620, %v1991
        %v2012 = vsel %vm1552, %v2010, %v1997
        %v2013 = vsel %vm1552, %v2011, %v1999
        %vm2014 = vcmask 195584
        %v2015 = vsel %vm2014, %v2012, %v2005
        %v2016 = vsel %vm2014, %v2013, %v2007
        %v2017 = vpack.c.bf16 %v2016, %v2015
        %v2018 = vld [vmem:[%s23] sm:$0xf]
        %v2019 = vld [vmem:[%s23 + $0x4] sm:$0xf]
        %v2020 = vld [vmem:[%s23 + $0x8] sm:$0xf]
        %v2021 = vld [vmem:[%s23 + $0xc] sm:$0xf]
        %v2022 = vld [vmem:[%s25] sm:$0x1]
        %v2024 = vlaneseq
        %v2025 = vshrl.u32 %v2024, 7
        %v2026 = vsub.s32 0, %v2025
        %v2027 = vrot.slane %v2022, %v2026
        %v2033 = vunpack.c.l.b16 %v2018
        %v2034 = vunpack.c.l.b16 %v2019
        %v2035 = vunpack.c.l.b16 %v2020
        %v2036 = vunpack.c.l.b16 %v2021
        %v2037 = vpack.c.b16 %v2034, %v2033
        %v2038 = vpack.c.b16 %v2036, %v2035
        %v2042 = vsel %vm1145, %v2017, 0
        %2044 = vmatprep.subr.bf16.mxu0 0
        %2045 = vmatpush1.bf16.msra.mxu0 0
        %2046 = vmatprep.subr.bf16.mxu0 0
        %2047 = vmatpush1.bf16.msra.mxu0 0
        %2048 = vmatprep.subr.bf16.mxu0 0
        %2049 = vmatpush1.bf16.msra.mxu0 0
        %2050 = vmatprep.subr.bf16.mxu0 0
        %2051 = vmatpush1.bf16.msra.mxu0 0
        %2052 = vmatprep.subr.bf16.mxu0 0
        %2053 = vmatpush1.bf16.msra.mxu0 0
        %2054 = vmatprep.subr.bf16.mxu0 0
        %2055 = vmatpush1.bf16.msra.mxu0 0
        %2056 = vmatprep.subr.bf16.mxu0 0
        %2057 = vmatpush1.bf16.msra.mxu0 %v2038
        %2058 = vmatprep.subr.bf16.mxu0 0
        %2059 = vmatpush1.bf16.msra.mxu0 %v2037
        %2060 = vmatprep.subr.bf16.mxu0 0
        %2061 = vmatpush2.bf16.msra.mxu0 0
        %2062 = vmatprep.subr.bf16.mxu0 0
        %2063 = vmatpush2.bf16.msra.mxu0 0
        %2064 = vmatprep.subr.bf16.mxu0 0
        %2065 = vmatpush2.bf16.msra.mxu0 0
        %2066 = vmatprep.subr.bf16.mxu0 0
        %2067 = vmatpush2.bf16.msra.mxu0 0
        %2068 = vmatprep.subr.bf16.mxu0 0
        %2069 = vmatpush2.bf16.msra.mxu0 0
        %2070 = vmatprep.subr.bf16.mxu0 0
        %2071 = vmatpush2.bf16.msra.mxu0 0
        %2072 = vmatprep.subr.bf16.mxu0 0
        %2073 = vmatpush2.bf16.msra.mxu0 0
        %2074 = vmatprep.subr.bf16.mxu0 0
        %2075 = vmatpush2.bf16.msra.mxu0 0
        %2076 = vmatprep.mubr.bf16.mxu0 0
        %2077 = vmatmul.mubr.bf16.gmra.mxu0 %v2042
        %v2078 = vpop.f32.mrf.mxu0
        %v2079 = vadd.f32 %v2027, %v2078
        %v2080 = vpop.f32.mrf.mxu0
        %v2081 = vpop.f32.mrf.mxu0
        %v2082 = vadd.f32 %v2027, %v2081
        %v2083 = vpop.f32.mrf.mxu0
        %2084 = vdwg.mxu0
        %v2085 = vadd.f32 %v1386, %v2079
        %v2086 = vadd.f32 %v1387, %v2082
        %v2087 = vld [vmem:[%s27] sm:$0x1]
        %v2088 = vld [vmem:[%s29] sm:$0x1]
        %v2089 = vsel %vm1145, %v2085, 0.0
        %2090 = vadd.xlane.f32.xlu0 %v2089
        %v2091 = vpop.xlane.xlu0 %2090
        %v2092 = vsel %vm1145, %v2086, 0.0
        %2093 = vadd.xlane.f32.xlu0 %v2092
        %v2094 = vpop.xlane.xlu0 %2093
        %v2095 = vmul.f32 %v2091, %v1152
        %v2096 = vmul.f32 %v2094, %v1152
        %v2097 = vsub.f32 %v2085, %v2095
        %v2098 = vsub.f32 %v2086, %v2096
        %v2099 = vmul.f32 %v2097, %v2097
        %v2100 = vmul.f32 %v2098, %v2098
        %v2101 = vsel %vm1145, %v2099, 0.0
        %2102 = vadd.xlane.f32.xlu0 %v2101
        %v2103 = vpop.xlane.xlu0 %2102
        %v2104 = vsel %vm1145, %v2100, 0.0
        %2105 = vadd.xlane.f32.xlu0 %v2104
        %v2106 = vpop.xlane.xlu0 %2105
        %v2107 = vmul.f32 %v2103, %v1152
        %v2108 = vmul.f32 %v2106, %v1152
        %v2109 = vadd.f32 %v2107, 1e-05
        %v2110 = vadd.f32 %v2108, 1e-05
        %v2111 = vrsqrt.pop %v2109
        %v2112 = vrsqrt.pop %v2110
        %v2113 = vmul.f32 %v2097, %v2111
        %v2114 = vmul.f32 %v2098, %v2112
        %v2116 = vlaneseq
        %v2117 = vshrl.u32 %v2116, 7
        %v2118 = vsub.s32 0, %v2117
        %v2119 = vrot.slane %v2087, %v2118
        %v2121 = vmul.f32 %v2113, %v2119
        %v2122 = vmul.f32 %v2114, %v2119
        %v2124 = vlaneseq
        %v2125 = vshrl.u32 %v2124, 7
        %v2126 = vsub.s32 0, %v2125
        %v2127 = vrot.slane %v2088, %v2126
        %v2129 = vadd.f32 %v2121, %v2127
        %v2130 = vadd.f32 %v2122, %v2127
        %v2131 = vpack.c.bf16 %v2130, %v2129
        %v2132 = vld [vmem:[%s31] sm:$0xf]
        %v2133 = vld [vmem:[%s31 + $0x4] sm:$0xf]
        %v2134 = vld [vmem:[%s31 + $0x8] sm:$0xf]
        %v2135 = vld [vmem:[%s31 + $0xc] sm:$0xf]
        %v2136 = vld [vmem:[%s33] sm:$0x1]
        %v2138 = vlaneseq
        %v2139 = vshrl.u32 %v2138, 7
        %v2140 = vsub.s32 0, %v2139
        %v2141 = vrot.slane %v2136, %v2140
        %v2147 = vunpack.c.l.b16 %v2132
        %v2148 = vunpack.c.l.b16 %v2133
        %v2149 = vunpack.c.l.b16 %v2134
        %v2150 = vunpack.c.l.b16 %v2135
        %v2151 = vpack.c.b16 %v2148, %v2147
        %v2152 = vpack.c.b16 %v2150, %v2149
        %v2156 = vsel %vm1145, %v2131, 0
        %2158 = vmatprep.subr.bf16.mxu0 0
        %2159 = vmatpush1.bf16.msra.mxu0 0
        %2160 = vmatprep.subr.bf16.mxu0 0
        %2161 = vmatpush1.bf16.msra.mxu0 0
        %2162 = vmatprep.subr.bf16.mxu0 0
        %2163 = vmatpush1.bf16.msra.mxu0 0
        %2164 = vmatprep.subr.bf16.mxu0 0
        %2165 = vmatpush1.bf16.msra.mxu0 0
        %2166 = vmatprep.subr.bf16.mxu0 0
        %2167 = vmatpush1.bf16.msra.mxu0 0
        %2168 = vmatprep.subr.bf16.mxu0 0
        %2169 = vmatpush1.bf16.msra.mxu0 0
        %2170 = vmatprep.subr.bf16.mxu0 0
        %2171 = vmatpush1.bf16.msra.mxu0 %v2152
        %2172 = vmatprep.subr.bf16.mxu0 0
        %2173 = vmatpush1.bf16.msra.mxu0 %v2151
        %2174 = vmatprep.subr.bf16.mxu0 0
        %2175 = vmatpush2.bf16.msra.mxu0 0
        %2176 = vmatprep.subr.bf16.mxu0 0
        %2177 = vmatpush2.bf16.msra.mxu0 0
        %2178 = vmatprep.subr.bf16.mxu0 0
        %2179 = vmatpush2.bf16.msra.mxu0 0
        %2180 = vmatprep.subr.bf16.mxu0 0
        %2181 = vmatpush2.bf16.msra.mxu0 0
        %2182 = vmatprep.subr.bf16.mxu0 0
        %2183 = vmatpush2.bf16.msra.mxu0 0
        %2184 = vmatprep.subr.bf16.mxu0 0
        %2185 = vmatpush2.bf16.msra.mxu0 0
        %2186 = vmatprep.subr.bf16.mxu0 0
        %2187 = vmatpush2.bf16.msra.mxu0 0
        %2188 = vmatprep.subr.bf16.mxu0 0
        %2189 = vmatpush2.bf16.msra.mxu0 0
        %2190 = vmatprep.mubr.bf16.mxu0 0
        %2191 = vmatmul.mubr.bf16.gmra.mxu0 %v2156
        %v2192 = vpop.f32.mrf.mxu0
        %v2193 = vadd.f32 %v2141, %v2192
        %v2194 = vpop.f32.mrf.mxu0
        %v2195 = vpop.f32.mrf.mxu0
        %v2196 = vadd.f32 %v2141, %v2195
        %v2197 = vpop.f32.mrf.mxu0
        %2198 = vdwg.mxu0
        %v2199 = vld [vmem:[%s35] sm:$0xf]
        %v2200 = vld [vmem:[%s35 + $0x4] sm:$0xf]
        %v2201 = vld [vmem:[%s35 + $0x8] sm:$0xf]
        %v2202 = vld [vmem:[%s35 + $0xc] sm:$0xf]
        %v2203 = vld [vmem:[%s37] sm:$0x1]
        %v2205 = vlaneseq
        %v2206 = vshrl.u32 %v2205, 7
        %v2207 = vsub.s32 0, %v2206
        %v2208 = vrot.slane %v2203, %v2207
        %v2214 = vunpack.c.l.b16 %v2199
        %v2215 = vunpack.c.l.b16 %v2200
        %v2216 = vunpack.c.l.b16 %v2201
        %v2217 = vunpack.c.l.b16 %v2202
        %v2218 = vpack.c.b16 %v2215, %v2214
        %v2219 = vpack.c.b16 %v2217, %v2216
        %2222 = vmatprep.subr.bf16.mxu0 0
        %2223 = vmatpush1.bf16.msra.mxu0 0
        %2224 = vmatprep.subr.bf16.mxu0 0
        %2225 = vmatpush1.bf16.msra.mxu0 0
        %2226 = vmatprep.subr.bf16.mxu0 0
        %2227 = vmatpush1.bf16.msra.mxu0 0
        %2228 = vmatprep.subr.bf16.mxu0 0
        %2229 = vmatpush1.bf16.msra.mxu0 0
        %2230 = vmatprep.subr.bf16.mxu0 0
        %2231 = vmatpush1.bf16.msra.mxu0 0
        %2232 = vmatprep.subr.bf16.mxu0 0
        %2233 = vmatpush1.bf16.msra.mxu0 0
        %2234 = vmatprep.subr.bf16.mxu0 0
        %2235 = vmatpush1.bf16.msra.mxu0 %v2219
        %2236 = vmatprep.subr.bf16.mxu0 0
        %2237 = vmatpush1.bf16.msra.mxu0 %v2218
        %2238 = vmatprep.subr.bf16.mxu0 0
        %2239 = vmatpush2.bf16.msra.mxu0 0
        %2240 = vmatprep.subr.bf16.mxu0 0
        %2241 = vmatpush2.bf16.msra.mxu0 0
        %2242 = vmatprep.subr.bf16.mxu0 0
        %2243 = vmatpush2.bf16.msra.mxu0 0
        %2244 = vmatprep.subr.bf16.mxu0 0
        %2245 = vmatpush2.bf16.msra.mxu0 0
        %2246 = vmatprep.subr.bf16.mxu0 0
        %2247 = vmatpush2.bf16.msra.mxu0 0
        %2248 = vmatprep.subr.bf16.mxu0 0
        %2249 = vmatpush2.bf16.msra.mxu0 0
        %2250 = vmatprep.subr.bf16.mxu0 0
        %2251 = vmatpush2.bf16.msra.mxu0 0
        %2252 = vmatprep.subr.bf16.mxu0 0
        %2253 = vmatpush2.bf16.msra.mxu0 0
        %2254 = vmatprep.mubr.bf16.mxu0 0
        %2255 = vmatmul.mubr.bf16.gmra.mxu0 %v2156
        %v2256 = vpop.f32.mrf.mxu0
        %v2257 = vadd.f32 %v2208, %v2256
        %v2258 = vpop.f32.mrf.mxu0
        %v2259 = vpop.f32.mrf.mxu0
        %v2260 = vadd.f32 %v2208, %v2259
        %v2261 = vpop.f32.mrf.mxu0
        %2262 = vdwg.mxu0
        %v2263 = vxor.u32 %v2257, 2147483648
        %v2264 = vxor.u32 %v2260, 2147483648
        %v2265 = vmul.f32 %v2263, 1.442695
        %v2266 = vpow.pop %v2265
        %v2267 = vmul.f32 %v2264, 1.442695
        %v2268 = vpow.pop %v2267
        %v2269 = vadd.f32 %v2266, 1.0
        %v2270 = vadd.f32 %v2268, 1.0
        %v2271 = vrcp.pop %v2269
        %v2272 = vmul.f32 1.0, %v2271
        %v2273 = vrcp.pop %v2270
        %v2274 = vmul.f32 1.0, %v2273
        %v2275 = vmul.f32 %v2193, %v2272
        %v2276 = vmul.f32 %v2196, %v2274
        %2277 = vst.msk [vmem:[#allocation2] sm:$0xff] %vm1145, 0.0
        %vm2278 = vcmask 260096
        %2279 = vst.msk [vmem:[#allocation2 + $0x8] sm:$0x7f] %vm2278, 0.0
        %2280 = vst.msk [vmem:[#allocation2 + $0x1f] sm:$0xff] %vm1145, 0.0
        %2281 = vst.msk [vmem:[#allocation2 + $0x27] sm:$0x7f] %vm2278, 0.0
        %2282 = vst.msk [vmem:[#allocation2 + $0xf] sm:$0xff] %vm1145, %v2275
        %2283 = vst.msk [vmem:[#allocation2 + $0x17] sm:$0xff] %vm1145, %v2276
        %v2284 = vld [vmem:[%s39] sm:$0xff]
        %v2285 = vld [vmem:[%s39 + $0x8] sm:$0xff]
        %v2286 = vld [vmem:[%s39 + $0x10] sm:$0xff]
        %v2287 = vld [vmem:[%s39 + $0x18] sm:$0x7f]
        %v2288 = vld [vmem:[#allocation2] sm:$0xff]
        %v2289 = vld [vmem:[#allocation2 + $0x8] sm:$0xff]
        %v2290 = vlaneseq
        %v2291 = vshrl.u32 %v2290, 7
        %v2292 = vsub.s32 0, %v2291
        %v2293 = vrot.slane %v2284, %v2292
        %v2294 = vmul.f32 %v2288, %v2293
        %v2295 = vmul.f32 %v2289, %v2293
        %v2296 = vadd.f32 %v2294, 0.0
        %v2297 = vadd.f32 %v2295, 0.0
        %v2298 = vld [vmem:[#allocation2 + $0x1] sm:$0xff]
        %v2299 = vld [vmem:[#allocation2 + $0x9] sm:$0xff]
        %v2300 = vlaneseq
        %v2301 = vshrl.u32 %v2300, 7
        %v2302 = vsub.s32 1, %v2301
        %v2303 = vrot.slane %v2284, %v2302
        %v2304 = vmul.f32 %v2298, %v2303
        %v2305 = vmul.f32 %v2299, %v2303
        %v2306 = vadd.f32 %v2296, %v2304
        %v2307 = vadd.f32 %v2297, %v2305
        %v2308 = vld [vmem:[#allocation2 + $0x2] sm:$0xff]
        %v2309 = vld [vmem:[#allocation2 + $0xa] sm:$0xff]
        %v2310 = vlaneseq
        %v2311 = vshrl.u32 %v2310, 7
        %v2312 = vsub.s32 2, %v2311
        %v2313 = vrot.slane %v2284, %v2312
        %v2314 = vmul.f32 %v2308, %v2313
        %v2315 = vmul.f32 %v2309, %v2313
        %v2316 = vadd.f32 %v2306, %v2314
        %v2317 = vadd.f32 %v2307, %v2315
        %v2318 = vld [vmem:[#allocation2 + $0x3] sm:$0xff]
        %v2319 = vld [vmem:[#allocation2 + $0xb] sm:$0xff]
        %v2320 = vlaneseq
        %v2321 = vshrl.u32 %v2320, 7
        %v2322 = vsub.s32 3, %v2321
        %v2323 = vrot.slane %v2284, %v2322
        %v2324 = vmul.f32 %v2318, %v2323
        %v2325 = vmul.f32 %v2319, %v2323
        %v2326 = vadd.f32 %v2316, %v2324
        %v2327 = vadd.f32 %v2317, %v2325
        %v2328 = vld [vmem:[#allocation2 + $0x4] sm:$0xff]
        %v2329 = vld [vmem:[#allocation2 + $0xc] sm:$0xff]
        %v2330 = vlaneseq
        %v2331 = vshrl.u32 %v2330, 7
        %v2332 = vsub.s32 4, %v2331
        %v2333 = vrot.slane %v2284, %v2332
        %v2334 = vmul.f32 %v2328, %v2333
        %v2335 = vmul.f32 %v2329, %v2333
        %v2336 = vadd.f32 %v2326, %v2334
        %v2337 = vadd.f32 %v2327, %v2335
        %v2338 = vld [vmem:[#allocation2 + $0x5] sm:$0xff]
        %v2339 = vld [vmem:[#allocation2 + $0xd] sm:$0xff]
        %v2340 = vlaneseq
        %v2341 = vshrl.u32 %v2340, 7
        %v2342 = vsub.s32 5, %v2341
        %v2343 = vrot.slane %v2284, %v2342
        %v2344 = vmul.f32 %v2338, %v2343
        %v2345 = vmul.f32 %v2339, %v2343
        %v2346 = vadd.f32 %v2336, %v2344
        %v2347 = vadd.f32 %v2337, %v2345
        %v2348 = vld [vmem:[#allocation2 + $0x6] sm:$0xff]
        %v2349 = vld [vmem:[#allocation2 + $0xe] sm:$0xff]
        %v2350 = vlaneseq
        %v2351 = vshrl.u32 %v2350, 7
        %v2352 = vsub.s32 6, %v2351
        %v2353 = vrot.slane %v2284, %v2352
        %v2354 = vmul.f32 %v2348, %v2353
        %v2355 = vmul.f32 %v2349, %v2353
        %v2356 = vadd.f32 %v2346, %v2354
        %v2357 = vadd.f32 %v2347, %v2355
        %v2358 = vld [vmem:[#allocation2 + $0x7] sm:$0xff]
        %v2359 = vld [vmem:[#allocation2 + $0xf] sm:$0xff]
        %v2360 = vlaneseq
        %v2361 = vshrl.u32 %v2360, 7
        %v2362 = vsub.s32 7, %v2361
        %v2363 = vrot.slane %v2284, %v2362
        %v2364 = vmul.f32 %v2358, %v2363
        %v2365 = vmul.f32 %v2359, %v2363
        %v2366 = vadd.f32 %v2356, %v2364
        %v2367 = vadd.f32 %v2357, %v2365
        %v2368 = vld [vmem:[#allocation2 + $0x10] sm:$0xff]
        %v2369 = vlaneseq
        %v2370 = vshrl.u32 %v2369, 7
        %v2371 = vsub.s32 0, %v2370
        %v2372 = vrot.slane %v2285, %v2371
        %v2373 = vmul.f32 %v2289, %v2372
        %v2374 = vmul.f32 %v2368, %v2372
        %v2375 = vadd.f32 %v2366, %v2373
        %v2376 = vadd.f32 %v2367, %v2374
        %v2377 = vld [vmem:[#allocation2 + $0x11] sm:$0xff]
        %v2378 = vlaneseq
        %v2379 = vshrl.u32 %v2378, 7
        %v2380 = vsub.s32 1, %v2379
        %v2381 = vrot.slane %v2285, %v2380
        %v2382 = vmul.f32 %v2299, %v2381
        %v2383 = vmul.f32 %v2377, %v2381
        %v2384 = vadd.f32 %v2375, %v2382
        %v2385 = vadd.f32 %v2376, %v2383
        %v2386 = vld [vmem:[#allocation2 + $0x12] sm:$0xff]
        %v2387 = vlaneseq
        %v2388 = vshrl.u32 %v2387, 7
        %v2389 = vsub.s32 2, %v2388
        %v2390 = vrot.slane %v2285, %v2389
        %v2391 = vmul.f32 %v2309, %v2390
        %v2392 = vmul.f32 %v2386, %v2390
        %v2393 = vadd.f32 %v2384, %v2391
        %v2394 = vadd.f32 %v2385, %v2392
        %v2395 = vld [vmem:[#allocation2 + $0x13] sm:$0xff]
        %v2396 = vlaneseq
        %v2397 = vshrl.u32 %v2396, 7
        %v2398 = vsub.s32 3, %v2397
        %v2399 = vrot.slane %v2285, %v2398
        %v2400 = vmul.f32 %v2319, %v2399
        %v2401 = vmul.f32 %v2395, %v2399
        %v2402 = vadd.f32 %v2393, %v2400
        %v2403 = vadd.f32 %v2394, %v2401
        %v2404 = vld [vmem:[#allocation2 + $0x14] sm:$0xff]
        %v2405 = vlaneseq
        %v2406 = vshrl.u32 %v2405, 7
        %v2407 = vsub.s32 4, %v2406
        %v2408 = vrot.slane %v2285, %v2407
        %v2409 = vmul.f32 %v2329, %v2408
        %v2410 = vmul.f32 %v2404, %v2408
        %v2411 = vadd.f32 %v2402, %v2409
        %v2412 = vadd.f32 %v2403, %v2410
        %v2413 = vld [vmem:[#allocation2 + $0x15] sm:$0xff]
        %v2414 = vlaneseq
        %v2415 = vshrl.u32 %v2414, 7
        %v2416 = vsub.s32 5, %v2415
        %v2417 = vrot.slane %v2285, %v2416
        %v2418 = vmul.f32 %v2339, %v2417
        %v2419 = vmul.f32 %v2413, %v2417
        %v2420 = vadd.f32 %v2411, %v2418
        %v2421 = vadd.f32 %v2412, %v2419
        %v2422 = vld [vmem:[#allocation2 + $0x16] sm:$0xff]
        %v2423 = vlaneseq
        %v2424 = vshrl.u32 %v2423, 7
        %v2425 = vsub.s32 6, %v2424
        %v2426 = vrot.slane %v2285, %v2425
        %v2427 = vmul.f32 %v2349, %v2426
        %v2428 = vmul.f32 %v2422, %v2426
        %v2429 = vadd.f32 %v2420, %v2427
        %v2430 = vadd.f32 %v2421, %v2428
        %v2431 = vld [vmem:[#allocation2 + $0x17] sm:$0xff]
        %v2432 = vlaneseq
        %v2433 = vshrl.u32 %v2432, 7
        %v2434 = vsub.s32 7, %v2433
        %v2435 = vrot.slane %v2285, %v2434
        %v2436 = vmul.f32 %v2359, %v2435
        %v2437 = vmul.f32 %v2431, %v2435
        %v2438 = vadd.f32 %v2429, %v2436
        %v2439 = vadd.f32 %v2430, %v2437
        %v2440 = vld [vmem:[#allocation2 + $0x18] sm:$0xff]
        %v2441 = vlaneseq
        %v2442 = vshrl.u32 %v2441, 7
        %v2443 = vsub.s32 0, %v2442
        %v2444 = vrot.slane %v2286, %v2443
        %v2445 = vmul.f32 %v2368, %v2444
        %v2446 = vmul.f32 %v2440, %v2444
        %v2447 = vadd.f32 %v2438, %v2445
        %v2448 = vadd.f32 %v2439, %v2446
        %v2449 = vld [vmem:[#allocation2 + $0x19] sm:$0xff]
        %v2450 = vlaneseq
        %v2451 = vshrl.u32 %v2450, 7
        %v2452 = vsub.s32 1, %v2451
        %v2453 = vrot.slane %v2286, %v2452
        %v2454 = vmul.f32 %v2377, %v2453
        %v2455 = vmul.f32 %v2449, %v2453
        %v2456 = vadd.f32 %v2447, %v2454
        %v2457 = vadd.f32 %v2448, %v2455
        %v2458 = vld [vmem:[#allocation2 + $0x1a] sm:$0xff]
        %v2459 = vlaneseq
        %v2460 = vshrl.u32 %v2459, 7
        %v2461 = vsub.s32 2, %v2460
        %v2462 = vrot.slane %v2286, %v2461
        %v2463 = vmul.f32 %v2386, %v2462
        %v2464 = vmul.f32 %v2458, %v2462
        %v2465 = vadd.f32 %v2456, %v2463
        %v2466 = vadd.f32 %v2457, %v2464
        %v2467 = vld [vmem:[#allocation2 + $0x1b] sm:$0xff]
        %v2468 = vlaneseq
        %v2469 = vshrl.u32 %v2468, 7
        %v2470 = vsub.s32 3, %v2469
        %v2471 = vrot.slane %v2286, %v2470
        %v2472 = vmul.f32 %v2395, %v2471
        %v2473 = vmul.f32 %v2467, %v2471
        %v2474 = vadd.f32 %v2465, %v2472
        %v2475 = vadd.f32 %v2466, %v2473
        %v2476 = vld [vmem:[#allocation2 + $0x1c] sm:$0xff]
        %v2477 = vlaneseq
        %v2478 = vshrl.u32 %v2477, 7
        %v2479 = vsub.s32 4, %v2478
        %v2480 = vrot.slane %v2286, %v2479
        %v2481 = vmul.f32 %v2404, %v2480
        %v2482 = vmul.f32 %v2476, %v2480
        %v2483 = vadd.f32 %v2474, %v2481
        %v2484 = vadd.f32 %v2475, %v2482
        %v2485 = vld [vmem:[#allocation2 + $0x1d] sm:$0xff]
        %v2486 = vlaneseq
        %v2487 = vshrl.u32 %v2486, 7
        %v2488 = vsub.s32 5, %v2487
        %v2489 = vrot.slane %v2286, %v2488
        %v2490 = vmul.f32 %v2413, %v2489
        %v2491 = vmul.f32 %v2485, %v2489
        %v2492 = vadd.f32 %v2483, %v2490
        %v2493 = vadd.f32 %v2484, %v2491
        %v2494 = vld [vmem:[#allocation2 + $0x1e] sm:$0xff]
        %v2495 = vlaneseq
        %v2496 = vshrl.u32 %v2495, 7
        %v2497 = vsub.s32 6, %v2496
        %v2498 = vrot.slane %v2286, %v2497
        %v2499 = vmul.f32 %v2422, %v2498
        %v2500 = vmul.f32 %v2494, %v2498
        %v2501 = vadd.f32 %v2492, %v2499
        %v2502 = vadd.f32 %v2493, %v2500
        %v2503 = vld [vmem:[#allocation2 + $0x1f] sm:$0xff]
        %v2504 = vlaneseq
        %v2505 = vshrl.u32 %v2504, 7
        %v2506 = vsub.s32 7, %v2505
        %v2507 = vrot.slane %v2286, %v2506
        %v2508 = vmul.f32 %v2431, %v2507
        %v2509 = vmul.f32 %v2503, %v2507
        %v2510 = vadd.f32 %v2501, %v2508
        %v2511 = vadd.f32 %v2502, %v2509
        %v2512 = vld [vmem:[#allocation2 + $0x20] sm:$0xff]
        %v2513 = vlaneseq
        %v2514 = vshrl.u32 %v2513, 7
        %v2515 = vsub.s32 0, %v2514
        %v2516 = vrot.slane %v2287, %v2515
        %v2517 = vmul.f32 %v2440, %v2516
        %v2518 = vmul.f32 %v2512, %v2516
        %v2519 = vadd.f32 %v2510, %v2517
        %v2520 = vadd.f32 %v2511, %v2518
        %v2521 = vld [vmem:[#allocation2 + $0x21] sm:$0xff]
        %v2522 = vlaneseq
        %v2523 = vshrl.u32 %v2522, 7
        %v2524 = vsub.s32 1, %v2523
        %v2525 = vrot.slane %v2287, %v2524
        %v2526 = vmul.f32 %v2449, %v2525
        %v2527 = vmul.f32 %v2521, %v2525
        %v2528 = vadd.f32 %v2519, %v2526
        %v2529 = vadd.f32 %v2520, %v2527
        %v2530 = vld [vmem:[#allocation2 + $0x22] sm:$0xff]
        %v2531 = vlaneseq
        %v2532 = vshrl.u32 %v2531, 7
        %v2533 = vsub.s32 2, %v2532
        %v2534 = vrot.slane %v2287, %v2533
        %v2535 = vmul.f32 %v2458, %v2534
        %v2536 = vmul.f32 %v2530, %v2534
        %v2537 = vadd.f32 %v2528, %v2535
        %v2538 = vadd.f32 %v2529, %v2536
        %v2539 = vld [vmem:[#allocation2 + $0x23] sm:$0xff]
        %v2540 = vlaneseq
        %v2541 = vshrl.u32 %v2540, 7
        %v2542 = vsub.s32 3, %v2541
        %v2543 = vrot.slane %v2287, %v2542
        %v2544 = vmul.f32 %v2467, %v2543
        %v2545 = vmul.f32 %v2539, %v2543
        %v2546 = vadd.f32 %v2537, %v2544
        %v2547 = vadd.f32 %v2538, %v2545
        %v2548 = vld [vmem:[#allocation2 + $0x24] sm:$0xff]
        %v2549 = vlaneseq
        %v2550 = vshrl.u32 %v2549, 7
        %v2551 = vsub.s32 4, %v2550
        %v2552 = vrot.slane %v2287, %v2551
        %v2553 = vmul.f32 %v2476, %v2552
        %v2554 = vmul.f32 %v2548, %v2552
        %v2555 = vadd.f32 %v2546, %v2553
        %v2556 = vadd.f32 %v2547, %v2554
        %v2557 = vld [vmem:[#allocation2 + $0x25] sm:$0xff]
        %v2558 = vlaneseq
        %v2559 = vshrl.u32 %v2558, 7
        %v2560 = vsub.s32 5, %v2559
        %v2561 = vrot.slane %v2287, %v2560
        %v2562 = vmul.f32 %v2485, %v2561
        %v2563 = vmul.f32 %v2557, %v2561
        %v2564 = vadd.f32 %v2555, %v2562
        %v2565 = vadd.f32 %v2556, %v2563
        %v2566 = vld [vmem:[#allocation2 + $0x26] sm:$0xff]
        %v2567 = vlaneseq
        %v2568 = vshrl.u32 %v2567, 7
        %v2569 = vsub.s32 6, %v2568
        %v2570 = vrot.slane %v2287, %v2569
        %v2571 = vmul.f32 %v2494, %v2570
        %v2572 = vmul.f32 %v2566, %v2570
        %v2573 = vadd.f32 %v2564, %v2571
        %v2574 = vadd.f32 %v2565, %v2572
        %v2575 = vld [vmem:[%s41] sm:$0x1]
        %v2577 = vlaneseq
        %v2578 = vshrl.u32 %v2577, 7
        %v2579 = vsub.s32 0, %v2578
        %v2580 = vrot.slane %v2575, %v2579
        %v2582 = vmul.f32 %v2573, %v2580
        %v2583 = vmul.f32 %v2574, %v2580
        %v2584 = vld [vmem:[%s43] sm:$0x1]
        %v2586 = vlaneseq
        %v2587 = vshrl.u32 %v2586, 7
        %v2588 = vsub.s32 0, %v2587
        %v2589 = vrot.slane %v2584, %v2588
        %v2591 = vadd.f32 %v2582, %v2589
        %v2592 = vadd.f32 %v2583, %v2589
        %v2593 = vxor.u32 %v2591, 2147483648
        %v2594 = vxor.u32 %v2592, 2147483648
        %v2595 = vmul.f32 %v2593, 1.442695
        %v2596 = vpow.pop %v2595
        %v2597 = vmul.f32 %v2594, 1.442695
        %v2598 = vpow.pop %v2597
        %v2599 = vadd.f32 %v2596, 1.0
        %v2600 = vadd.f32 %v2598, 1.0
        %v2601 = vrcp.pop %v2599
        %v2602 = vmul.f32 1.0, %v2601
        %v2603 = vrcp.pop %v2600
        %v2604 = vmul.f32 1.0, %v2603
        %v2605 = vmul.f32 %v2591, %v2602
        %v2606 = vmul.f32 %v2592, %v2604
        %v2607 = vpack.c.bf16 %v2606, %v2605
        %v2608 = vld [vmem:[%s45] sm:$0xf]
        %v2609 = vld [vmem:[%s45 + $0x4] sm:$0xf]
        %v2610 = vld [vmem:[%s45 + $0x8] sm:$0xf]
        %v2611 = vld [vmem:[%s45 + $0xc] sm:$0xf]
        %v2612 = vld [vmem:[%s47] sm:$0x1]
        %v2614 = vlaneseq
        %v2615 = vshrl.u32 %v2614, 7
        %v2616 = vsub.s32 0, %v2615
        %v2617 = vrot.slane %v2612, %v2616
        %v2623 = vunpack.c.l.b16 %v2608
        %v2624 = vunpack.c.l.b16 %v2609
        %v2625 = vunpack.c.l.b16 %v2610
        %v2626 = vunpack.c.l.b16 %v2611
        %v2627 = vpack.c.b16 %v2624, %v2623
        %v2628 = vpack.c.b16 %v2626, %v2625
        %v2632 = vsel %vm1145, %v2607, 0
        %2634 = vmatprep.subr.bf16.mxu0 0
        %2635 = vmatpush1.bf16.msra.mxu0 0
        %2636 = vmatprep.subr.bf16.mxu0 0
        %2637 = vmatpush1.bf16.msra.mxu0 0
        %2638 = vmatprep.subr.bf16.mxu0 0
        %2639 = vmatpush1.bf16.msra.mxu0 0
        %2640 = vmatprep.subr.bf16.mxu0 0
        %2641 = vmatpush1.bf16.msra.mxu0 0
        %2642 = vmatprep.subr.bf16.mxu0 0
        %2643 = vmatpush1.bf16.msra.mxu0 0
        %2644 = vmatprep.subr.bf16.mxu0 0
        %2645 = vmatpush1.bf16.msra.mxu0 0
        %2646 = vmatprep.subr.bf16.mxu0 0
        %2647 = vmatpush1.bf16.msra.mxu0 %v2628
        %2648 = vmatprep.subr.bf16.mxu0 0
        %2649 = vmatpush1.bf16.msra.mxu0 %v2627
        %2650 = vmatprep.subr.bf16.mxu0 0
        %2651 = vmatpush2.bf16.msra.mxu0 0
        %2652 = vmatprep.subr.bf16.mxu0 0
        %2653 = vmatpush2.bf16.msra.mxu0 0
        %2654 = vmatprep.subr.bf16.mxu0 0
        %2655 = vmatpush2.bf16.msra.mxu0 0
        %2656 = vmatprep.subr.bf16.mxu0 0
        %2657 = vmatpush2.bf16.msra.mxu0 0
        %2658 = vmatprep.subr.bf16.mxu0 0
        %2659 = vmatpush2.bf16.msra.mxu0 0
        %2660 = vmatprep.subr.bf16.mxu0 0
        %2661 = vmatpush2.bf16.msra.mxu0 0
        %2662 = vmatprep.subr.bf16.mxu0 0
        %2663 = vmatpush2.bf16.msra.mxu0 0
        %2664 = vmatprep.subr.bf16.mxu0 0
        %2665 = vmatpush2.bf16.msra.mxu0 0
        %2666 = vmatprep.mubr.bf16.mxu0 0
        %2667 = vmatmul.mubr.bf16.gmra.mxu0 %v2632
        %v2668 = vpop.f32.mrf.mxu0
        %v2669 = vadd.f32 %v2617, %v2668
        %v2670 = vpop.f32.mrf.mxu0
        %v2671 = vpop.f32.mrf.mxu0
        %v2672 = vadd.f32 %v2617, %v2671
        %v2673 = vpop.f32.mrf.mxu0
        %2674 = vdwg.mxu0
        %v2675 = vadd.f32 %v2085, %v2669
        %v2676 = vadd.f32 %v2086, %v2672
        %v2677 = vld [vmem:[%s49] sm:$0x1]
        %v2678 = vld [vmem:[%s51] sm:$0x1]
        %v2679 = vsel %vm1145, %v2675, 0.0
        %2680 = vadd.xlane.f32.xlu0 %v2679
        %v2681 = vpop.xlane.xlu0 %2680
        %v2682 = vsel %vm1145, %v2676, 0.0
        %2683 = vadd.xlane.f32.xlu0 %v2682
        %v2684 = vpop.xlane.xlu0 %2683
        %v2685 = vmul.f32 %v2681, %v1152
        %v2686 = vmul.f32 %v2684, %v1152
        %v2687 = vsub.f32 %v2675, %v2685
        %v2688 = vsub.f32 %v2676, %v2686
        %v2689 = vmul.f32 %v2687, %v2687
        %v2690 = vmul.f32 %v2688, %v2688
        %v2691 = vsel %vm1145, %v2689, 0.0
        %2692 = vadd.xlane.f32.xlu0 %v2691
        %v2693 = vpop.xlane.xlu0 %2692
        %v2694 = vsel %vm1145, %v2690, 0.0
        %2695 = vadd.xlane.f32.xlu0 %v2694
        %v2696 = vpop.xlane.xlu0 %2695
        %v2697 = vmul.f32 %v2693, %v1152
        %v2698 = vmul.f32 %v2696, %v1152
        %v2699 = vadd.f32 %v2697, 1e-05
        %v2700 = vadd.f32 %v2698, 1e-05
        %v2701 = vrsqrt.pop %v2699
        %v2702 = vrsqrt.pop %v2700
        %v2703 = vmul.f32 %v2687, %v2701
        %v2704 = vmul.f32 %v2688, %v2702
        %v2706 = vlaneseq
        %v2707 = vshrl.u32 %v2706, 7
        %v2708 = vsub.s32 0, %v2707
        %v2709 = vrot.slane %v2677, %v2708
        %v2711 = vmul.f32 %v2703, %v2709
        %v2712 = vmul.f32 %v2704, %v2709
        %v2714 = vlaneseq
        %v2715 = vshrl.u32 %v2714, 7
        %v2716 = vsub.s32 0, %v2715
        %v2717 = vrot.slane %v2678, %v2716
        %v2719 = vadd.f32 %v2711, %v2717
        %v2720 = vadd.f32 %v2712, %v2717
        %v2721 = vpack.c.bf16 %v2720, %v2719
        %v2722 = vld [vmem:[%s53] sm:$0xf]
        %v2723 = vld [vmem:[%s53 + $0x4] sm:$0xf]
        %v2724 = vld [vmem:[%s53 + $0x8] sm:$0xf]
        %v2725 = vld [vmem:[%s53 + $0xc] sm:$0xf]
        %v2726 = vld [vmem:[%s55] sm:$0x1]
        %v2728 = vlaneseq
        %v2729 = vshrl.u32 %v2728, 7
        %v2730 = vsub.s32 0, %v2729
        %v2731 = vrot.slane %v2726, %v2730
        %v2737 = vunpack.c.l.b16 %v2722
        %v2738 = vunpack.c.l.b16 %v2723
        %v2739 = vunpack.c.l.b16 %v2724
        %v2740 = vunpack.c.l.b16 %v2725
        %v2741 = vpack.c.b16 %v2738, %v2737
        %v2742 = vpack.c.b16 %v2740, %v2739
        %v2746 = vsel %vm1145, %v2721, 0
        %2748 = vmatprep.subr.bf16.mxu0 0
        %2749 = vmatpush1.bf16.msra.mxu0 0
        %2750 = vmatprep.subr.bf16.mxu0 0
        %2751 = vmatpush1.bf16.msra.mxu0 0
        %2752 = vmatprep.subr.bf16.mxu0 0
        %2753 = vmatpush1.bf16.msra.mxu0 0
        %2754 = vmatprep.subr.bf16.mxu0 0
        %2755 = vmatpush1.bf16.msra.mxu0 0
        %2756 = vmatprep.subr.bf16.mxu0 0
        %2757 = vmatpush1.bf16.msra.mxu0 0
        %2758 = vmatprep.subr.bf16.mxu0 0
        %2759 = vmatpush1.bf16.msra.mxu0 0
        %2760 = vmatprep.subr.bf16.mxu0 0
        %2761 = vmatpush1.bf16.msra.mxu0 %v2742
        %2762 = vmatprep.subr.bf16.mxu0 0
        %2763 = vmatpush1.bf16.msra.mxu0 %v2741
        %2764 = vmatprep.subr.bf16.mxu0 0
        %2765 = vmatpush2.bf16.msra.mxu0 0
        %2766 = vmatprep.subr.bf16.mxu0 0
        %2767 = vmatpush2.bf16.msra.mxu0 0
        %2768 = vmatprep.subr.bf16.mxu0 0
        %2769 = vmatpush2.bf16.msra.mxu0 0
        %2770 = vmatprep.subr.bf16.mxu0 0
        %2771 = vmatpush2.bf16.msra.mxu0 0
        %2772 = vmatprep.subr.bf16.mxu0 0
        %2773 = vmatpush2.bf16.msra.mxu0 0
        %2774 = vmatprep.subr.bf16.mxu0 0
        %2775 = vmatpush2.bf16.msra.mxu0 0
        %2776 = vmatprep.subr.bf16.mxu0 0
        %2777 = vmatpush2.bf16.msra.mxu0 0
        %2778 = vmatprep.subr.bf16.mxu0 0
        %2779 = vmatpush2.bf16.msra.mxu0 0
        %2780 = vmatprep.mubr.bf16.mxu0 0
        %2781 = vmatmul.mubr.bf16.gmra.mxu0 %v2746
        %v2782 = vpop.f32.mrf.mxu0
        %v2783 = vadd.f32 %v2731, %v2782
        %v2784 = vpop.f32.mrf.mxu0
        %v2785 = vpop.f32.mrf.mxu0
        %v2786 = vadd.f32 %v2731, %v2785
        %v2787 = vpop.f32.mrf.mxu0
        %2788 = vdwg.mxu0
        %v2789 = vxor.u32 %v2783, 2147483648
        %v2790 = vxor.u32 %v2786, 2147483648
        %v2791 = vmul.f32 %v2789, 1.442695
        %v2792 = vpow.pop %v2791
        %v2793 = vmul.f32 %v2790, 1.442695
        %v2794 = vpow.pop %v2793
        %v2795 = vadd.f32 %v2792, 1.0
        %v2796 = vadd.f32 %v2794, 1.0
        %v2797 = vrcp.pop %v2795
        %v2798 = vmul.f32 1.0, %v2797
        %v2799 = vrcp.pop %v2796
        %v2800 = vmul.f32 1.0, %v2799
        %v2801 = vmul.f32 %v2783, %v2798
        %v2802 = vmul.f32 %v2786, %v2800
        %v2803 = vpack.c.bf16 %v2802, %v2801
        %v2804 = vld [vmem:[%s57] sm:$0xf]
        %v2805 = vld [vmem:[%s57 + $0x4] sm:$0xf]
        %v2806 = vld [vmem:[%s57 + $0x8] sm:$0xf]
        %v2807 = vld [vmem:[%s57 + $0xc] sm:$0xf]
        %v2808 = vld [vmem:[%s57 + $0x10] sm:$0xf]
        %v2809 = vld [vmem:[%s57 + $0x14] sm:$0xf]
        %v2810 = vld [vmem:[%s57 + $0x18] sm:$0xf]
        %v2811 = vld [vmem:[%s57 + $0x1c] sm:$0xf]
        %v2812 = vld [vmem:[%s57 + $0x20] sm:$0xf]
        %v2813 = vld [vmem:[%s57 + $0x24] sm:$0xf]
        %v2814 = vld [vmem:[%s57 + $0x28] sm:$0xf]
        %v2815 = vld [vmem:[%s57 + $0x2c] sm:$0xf]
        %v2816 = vld [vmem:[%s57 + $0x30] sm:$0xf]
        %v2817 = vld [vmem:[%s57 + $0x34] sm:$0xf]
        %v2818 = vld [vmem:[%s57 + $0x38] sm:$0xf]
        %v2819 = vld [vmem:[%s57 + $0x3c] sm:$0xf]
        %v2820 = vld [vmem:[%s59] sm:$0x1]
        %v2822 = vlaneseq
        %v2823 = vshrl.u32 %v2822, 7
        %v2824 = vsub.s32 0, %v2823
        %v2825 = vrot.slane %v2820, %v2824
        %v2843 = vunpack.c.l.b16 %v2804
        %v2844 = vunpack.c.l.b16 %v2805
        %v2845 = vunpack.c.l.b16 %v2806
        %v2846 = vunpack.c.l.b16 %v2807
        %v2847 = vunpack.c.l.b16 %v2808
        %v2848 = vunpack.c.l.b16 %v2809
        %v2849 = vunpack.c.l.b16 %v2810
        %v2850 = vunpack.c.l.b16 %v2811
        %v2851 = vunpack.c.l.b16 %v2812
        %v2852 = vunpack.c.l.b16 %v2813
        %v2853 = vunpack.c.l.b16 %v2814
        %v2854 = vunpack.c.l.b16 %v2815
        %v2855 = vunpack.c.l.b16 %v2816
        %v2856 = vunpack.c.l.b16 %v2817
        %v2857 = vunpack.c.l.b16 %v2818
        %v2858 = vunpack.c.l.b16 %v2819
        %v2859 = vpack.c.b16 %v2844, %v2843
        %v2860 = vpack.c.b16 %v2846, %v2845
        %v2861 = vpack.c.b16 %v2848, %v2847
        %v2862 = vpack.c.b16 %v2850, %v2849
        %v2863 = vpack.c.b16 %v2852, %v2851
        %v2864 = vpack.c.b16 %v2854, %v2853
        %v2865 = vpack.c.b16 %v2856, %v2855
        %v2866 = vpack.c.b16 %v2858, %v2857
        %2875 = vmatprep.subr.bf16.mxu0 0
        %2876 = vmatpush1.bf16.msra.mxu0 %v2866
        %2877 = vmatprep.subr.bf16.mxu0 0
        %2878 = vmatpush1.bf16.msra.mxu0 %v2865
        %2879 = vmatprep.subr.bf16.mxu0 0
        %2880 = vmatpush1.bf16.msra.mxu0 %v2864
        %2881 = vmatprep.subr.bf16.mxu0 0
        %2882 = vmatpush1.bf16.msra.mxu0 %v2863
        %2883 = vmatprep.subr.bf16.mxu0 0
        %2884 = vmatpush1.bf16.msra.mxu0 %v2862
        %2885 = vmatprep.subr.bf16.mxu0 0
        %2886 = vmatpush1.bf16.msra.mxu0 %v2861
        %2887 = vmatprep.subr.bf16.mxu0 0
        %2888 = vmatpush1.bf16.msra.mxu0 %v2860
        %2889 = vmatprep.subr.bf16.mxu0 0
        %2890 = vmatpush1.bf16.msra.mxu0 %v2859
        %2891 = vmatprep.subr.bf16.mxu0 0
        %2892 = vmatpush2.bf16.msra.mxu0 0
        %2893 = vmatprep.subr.bf16.mxu0 0
        %2894 = vmatpush2.bf16.msra.mxu0 0
        %2895 = vmatprep.subr.bf16.mxu0 0
        %2896 = vmatpush2.bf16.msra.mxu0 0
        %2897 = vmatprep.subr.bf16.mxu0 0
        %2898 = vmatpush2.bf16.msra.mxu0 0
        %2899 = vmatprep.subr.bf16.mxu0 0
        %2900 = vmatpush2.bf16.msra.mxu0 0
        %2901 = vmatprep.subr.bf16.mxu0 0
        %2902 = vmatpush2.bf16.msra.mxu0 0
        %2903 = vmatprep.subr.bf16.mxu0 0
        %2904 = vmatpush2.bf16.msra.mxu0 0
        %2905 = vmatprep.subr.bf16.mxu0 0
        %2906 = vmatpush2.bf16.msra.mxu0 0
        %2907 = vmatprep.mubr.bf16.mxu0 0
        %2908 = vmatmul.mubr.bf16.gmra.mxu0 %v2803
        %v2909 = vpop.f32.mrf.mxu0
        %v2910 = vadd.f32 %v2825, %v2909
        %v2911 = vpop.f32.mrf.mxu0
        %v2912 = vpop.f32.mrf.mxu0
        %v2913 = vadd.f32 %v2825, %v2912
        %v2914 = vpop.f32.mrf.mxu0
        %2915 = vdwg.mxu0
        %v2916 = vmul.f32 %v2910, 0.5
        %v2917 = vmul.f32 %v2913, 0.5
        %v2918 = vadd.f32 %v2675, %v2916
        %v2919 = vadd.f32 %v2676, %v2917
        %v2920 = vld [vmem:[%s61] sm:$0x1]
        %v2921 = vld [vmem:[%s63] sm:$0x1]
        %v2922 = vsel %vm1145, %v2918, 0.0
        %2923 = vadd.xlane.f32.xlu0 %v2922
        %v2924 = vpop.xlane.xlu0 %2923
        %v2925 = vsel %vm1145, %v2919, 0.0
        %2926 = vadd.xlane.f32.xlu0 %v2925
        %v2927 = vpop.xlane.xlu0 %2926
        %v2928 = vmul.f32 %v2924, %v1152
        %v2929 = vmul.f32 %v2927, %v1152
        %v2930 = vsub.f32 %v2918, %v2928
        %v2931 = vsub.f32 %v2919, %v2929
        %v2932 = vmul.f32 %v2930, %v2930
        %v2933 = vmul.f32 %v2931, %v2931
        %v2934 = vsel %vm1145, %v2932, 0.0
        %2935 = vadd.xlane.f32.xlu0 %v2934
        %v2936 = vpop.xlane.xlu0 %2935
        %v2937 = vsel %vm1145, %v2933, 0.0
        %2938 = vadd.xlane.f32.xlu0 %v2937
        %v2939 = vpop.xlane.xlu0 %2938
        %v2940 = vmul.f32 %v2936, %v1152
        %v2941 = vmul.f32 %v2939, %v1152
        %v2942 = vadd.f32 %v2940, 1e-05
        %v2943 = vadd.f32 %v2941, 1e-05
        %v2944 = vrsqrt.pop %v2942
        %v2945 = vrsqrt.pop %v2943
        %v2946 = vmul.f32 %v2930, %v2944
        %v2947 = vmul.f32 %v2931, %v2945
        %v2949 = vlaneseq
        %v2950 = vshrl.u32 %v2949, 7
        %v2951 = vsub.s32 0, %v2950
        %v2952 = vrot.slane %v2920, %v2951
        %v2954 = vmul.f32 %v2946, %v2952
        %v2955 = vmul.f32 %v2947, %v2952
        %v2957 = vlaneseq
        %v2958 = vshrl.u32 %v2957, 7
        %v2959 = vsub.s32 0, %v2958
        %v2960 = vrot.slane %v2921, %v2959
        %v2962 = vadd.f32 %v2954, %v2960
        %v2963 = vadd.f32 %v2955, %v2960
        %v2964 = vpack.c.bf16 %v2963, %v2962
        %v2965 = vld [vmem:[%s65] sm:$0xf]
        %v2966 = vld [vmem:[%s65 + $0x4] sm:$0xf]
        %v2967 = vld [vmem:[%s65 + $0x8] sm:$0xf]
        %v2968 = vld [vmem:[%s65 + $0xc] sm:$0xf]
        %v2969 = vld [vmem:[%s67] sm:$0x1]
        %v2971 = vlaneseq
        %v2972 = vshrl.u32 %v2971, 7
        %v2973 = vsub.s32 0, %v2972
        %v2974 = vrot.slane %v2969, %v2973
        %v2980 = vunpack.c.l.b16 %v2965
        %v2981 = vunpack.c.l.b16 %v2966
        %v2982 = vunpack.c.l.b16 %v2967
        %v2983 = vunpack.c.l.b16 %v2968
        %v2984 = vpack.c.b16 %v2981, %v2980
        %v2985 = vpack.c.b16 %v2983, %v2982
        %v2989 = vsel %vm1145, %v2964, 0
        %2991 = vmatprep.subr.bf16.mxu0 0
        %2992 = vmatpush1.bf16.msra.mxu0 0
        %2993 = vmatprep.subr.bf16.mxu0 0
        %2994 = vmatpush1.bf16.msra.mxu0 0
        %2995 = vmatprep.subr.bf16.mxu0 0
        %2996 = vmatpush1.bf16.msra.mxu0 0
        %2997 = vmatprep.subr.bf16.mxu0 0
        %2998 = vmatpush1.bf16.msra.mxu0 0
        %2999 = vmatprep.subr.bf16.mxu0 0
        %3000 = vmatpush1.bf16.msra.mxu0 0
        %3001 = vmatprep.subr.bf16.mxu0 0
        %3002 = vmatpush1.bf16.msra.mxu0 0
        %3003 = vmatprep.subr.bf16.mxu0 0
        %3004 = vmatpush1.bf16.msra.mxu0 %v2985
        %3005 = vmatprep.subr.bf16.mxu0 0
        %3006 = vmatpush1.bf16.msra.mxu0 %v2984
        %3007 = vmatprep.subr.bf16.mxu0 0
        %3008 = vmatpush2.bf16.msra.mxu0 0
        %3009 = vmatprep.subr.bf16.mxu0 0
        %3010 = vmatpush2.bf16.msra.mxu0 0
        %3011 = vmatprep.subr.bf16.mxu0 0
        %3012 = vmatpush2.bf16.msra.mxu0 0
        %3013 = vmatprep.subr.bf16.mxu0 0
        %3014 = vmatpush2.bf16.msra.mxu0 0
        %3015 = vmatprep.subr.bf16.mxu0 0
        %3016 = vmatpush2.bf16.msra.mxu0 0
        %3017 = vmatprep.subr.bf16.mxu0 0
        %3018 = vmatpush2.bf16.msra.mxu0 0
        %3019 = vmatprep.subr.bf16.mxu0 0
        %3020 = vmatpush2.bf16.msra.mxu0 0
        %3021 = vmatprep.subr.bf16.mxu0 0
        %3022 = vmatpush2.bf16.msra.mxu0 0
        %3023 = vmatprep.mubr.bf16.mxu0 0
        %3024 = vmatmul.mubr.bf16.gmra.mxu0 %v2989
        %v3025 = vpop.f32.mrf.mxu0
        %v3026 = vadd.f32 %v2974, %v3025
        %v3027 = vpop.f32.mrf.mxu0
        %v3028 = vpop.f32.mrf.mxu0
        %v3029 = vadd.f32 %v2974, %v3028
        %v3030 = vpop.f32.mrf.mxu0
        %3031 = vdwg.mxu0
        %3032 = vmax.xlane.f32.xlu0 %v3026
        %v3033 = vpop.xlane.xlu0 %3032
        %3034 = vmax.xlane.f32.xlu0 %v3029
        %v3035 = vpop.xlane.xlu0 %3034
        %v3036 = vsub.f32 %v3026, %v3033
        %v3037 = vsub.f32 %v3029, %v3035
        %v3038 = vmul.f32 %v3036, 1.442695
        %v3039 = vpow.pop %v3038
        %v3040 = vmul.f32 %v3037, 1.442695
        %v3041 = vpow.pop %v3040
        %3042 = vadd.xlane.f32.xlu0 %v3039
        %v3043 = vpop.xlane.xlu0 %3042
        %3044 = vadd.xlane.f32.xlu0 %v3041
        %v3045 = vpop.xlane.xlu0 %3044
        %v3046 = vrcp.pop %v3043
        %v3047 = vmul.f32 %v3039, %v3046
        %v3048 = vrcp.pop %v3045
        %v3049 = vmul.f32 %v3041, %v3048
        %v3050 = vpack.c.bf16 %v3049, %v3047
        %v3051 = vld [vmem:[%s69] sm:$0xf]
        %v3052 = vld [vmem:[%s69 + $0x4] sm:$0xf]
        %v3053 = vld [vmem:[%s69 + $0x8] sm:$0xf]
        %v3054 = vld [vmem:[%s69 + $0xc] sm:$0xf]
        %v3055 = vld [vmem:[%s69 + $0x10] sm:$0xf]
        %v3056 = vld [vmem:[%s69 + $0x14] sm:$0xf]
        %v3057 = vld [vmem:[%s69 + $0x18] sm:$0xf]
        %v3058 = vld [vmem:[%s69 + $0x1c] sm:$0xf]
        %v3059 = vld [vmem:[%s69 + $0x20] sm:$0xf]
        %v3060 = vld [vmem:[%s69 + $0x24] sm:$0xf]
        %v3061 = vld [vmem:[%s69 + $0x28] sm:$0xf]
        %v3062 = vld [vmem:[%s69 + $0x2c] sm:$0xf]
        %v3063 = vld [vmem:[%s69 + $0x30] sm:$0xf]
        %v3064 = vld [vmem:[%s69 + $0x34] sm:$0xf]
        %v3065 = vld [vmem:[%s69 + $0x38] sm:$0xf]
        %v3066 = vld [vmem:[%s69 + $0x3c] sm:$0xf]
        %v3067 = vld [vmem:[%s71] sm:$0x1]
        %v3069 = vlaneseq
        %v3070 = vshrl.u32 %v3069, 7
        %v3071 = vsub.s32 0, %v3070
        %v3072 = vrot.slane %v3067, %v3071
        %v3090 = vunpack.c.l.b16 %v3051
        %v3091 = vunpack.c.l.b16 %v3052
        %v3092 = vunpack.c.l.b16 %v3053
        %v3093 = vunpack.c.l.b16 %v3054
        %v3094 = vunpack.c.l.b16 %v3055
        %v3095 = vunpack.c.l.b16 %v3056
        %v3096 = vunpack.c.l.b16 %v3057
        %v3097 = vunpack.c.l.b16 %v3058
        %v3098 = vunpack.c.l.b16 %v3059
        %v3099 = vunpack.c.l.b16 %v3060
        %v3100 = vunpack.c.l.b16 %v3061
        %v3101 = vunpack.c.l.b16 %v3062
        %v3102 = vunpack.c.l.b16 %v3063
        %v3103 = vunpack.c.l.b16 %v3064
        %v3104 = vunpack.c.l.b16 %v3065
        %v3105 = vunpack.c.l.b16 %v3066
        %v3106 = vpack.c.b16 %v3091, %v3090
        %v3107 = vpack.c.b16 %v3093, %v3092
        %v3108 = vpack.c.b16 %v3095, %v3094
        %v3109 = vpack.c.b16 %v3097, %v3096
        %v3110 = vpack.c.b16 %v3099, %v3098
        %v3111 = vpack.c.b16 %v3101, %v3100
        %v3112 = vpack.c.b16 %v3103, %v3102
        %v3113 = vpack.c.b16 %v3105, %v3104
        %3122 = vmatprep.subr.bf16.mxu0 0
        %3123 = vmatpush1.bf16.msra.mxu0 %v3113
        %3124 = vmatprep.subr.bf16.mxu0 0
        %3125 = vmatpush1.bf16.msra.mxu0 %v3112
        %3126 = vmatprep.subr.bf16.mxu0 0
        %3127 = vmatpush1.bf16.msra.mxu0 %v3111
        %3128 = vmatprep.subr.bf16.mxu0 0
        %3129 = vmatpush1.bf16.msra.mxu0 %v3110
        %3130 = vmatprep.subr.bf16.mxu0 0
        %3131 = vmatpush1.bf16.msra.mxu0 %v3109
        %3132 = vmatprep.subr.bf16.mxu0 0
        %3133 = vmatpush1.bf16.msra.mxu0 %v3108
        %3134 = vmatprep.subr.bf16.mxu0 0
        %3135 = vmatpush1.bf16.msra.mxu0 %v3107
        %3136 = vmatprep.subr.bf16.mxu0 0
        %3137 = vmatpush1.bf16.msra.mxu0 %v3106
        %3138 = vmatprep.subr.bf16.mxu0 0
        %3139 = vmatpush2.bf16.msra.mxu0 0
        %3140 = vmatprep.subr.bf16.mxu0 0
        %3141 = vmatpush2.bf16.msra.mxu0 0
        %3142 = vmatprep.subr.bf16.mxu0 0
        %3143 = vmatpush2.bf16.msra.mxu0 0
        %3144 = vmatprep.subr.bf16.mxu0 0
        %3145 = vmatpush2.bf16.msra.mxu0 0
        %3146 = vmatprep.subr.bf16.mxu0 0
        %3147 = vmatpush2.bf16.msra.mxu0 0
        %3148 = vmatprep.subr.bf16.mxu0 0
        %3149 = vmatpush2.bf16.msra.mxu0 0
        %3150 = vmatprep.subr.bf16.mxu0 0
        %3151 = vmatpush2.bf16.msra.mxu0 0
        %3152 = vmatprep.subr.bf16.mxu0 0
        %3153 = vmatpush2.bf16.msra.mxu0 0
        %3154 = vmatprep.mubr.bf16.mxu0 0
        %3155 = vmatmul.mubr.bf16.gmra.mxu0 %v3050
        %v3156 = vpop.f32.mrf.mxu0
        %v3157 = vadd.f32 %v3072, %v3156
        %v3158 = vpop.f32.mrf.mxu0
        %v3159 = vpop.f32.mrf.mxu0
        %v3160 = vadd.f32 %v3072, %v3159
        %v3161 = vpop.f32.mrf.mxu0
        %3162 = vdwg.mxu0
        %v3163 = vadd.f32 %v2962, %v3157
        %v3164 = vadd.f32 %v2963, %v3160
        %3165 = vst.msk [vmem:[%s1124] sm:$0xff] %vm1145, %v3163
        %3166 = vst.msk [vmem:[%s1124 + $0x8] sm:$0xff] %vm1145, %v3164
        %3167 = vst [vmem:[%s1131] sm:$0xff] %v3026
        %3168 = vst [vmem:[%s1131 + $0x8] sm:$0xff] %v3029
        %s3169 = sand.u32 %s862, 1
        %s3170 = scalar_lea.sflag [#allocation4], %s3169
        %s3171 = sand.u32 %s862, 1
        %s3172 = smul.addr %s3171, 16
        %s3173 = scalar_lea.vmem [#allocation3], %s3172
        %s3174 = sand.u32 %s888, 1
        %s3175 = scalar_lea.sflag [#allocation6], %s3174
        %s3176 = sand.u32 %s888, 1
        %s3177 = smul.addr %s3176, 16
        %s3178 = scalar_lea.vmem [#allocation5], %s3177
        // Predicated region
        $region165: #{tpu_custom_call.1} parent=163 // pred_check
          %p3179 = pneg %p872
        $region166: #{tpu_custom_call.1} parent=163 // pred_check_branch
          %3181 = sbr.rel (%p3179) target = $region168
        $region167: #{tpu_custom_call.1} parent=163 // pred_region
          %s3182 = smul.u32 2, %s93
          %s3184 = ssub.s32 256, 256
          %3185 = vsyncadd %s3170, %s3184
          %s3186 = smul.addr %s3182, 128
          %s3187 = scalar_lea.hbm %s73, %s3186
          %s3188 = sshll.u32 %s3173, 4
          %s3189 = int_to_ptr.vmem [resolvable:$true] %s3188
          %3194 = dma.vmem_to_hbm [thread:$0]  %s3189, 256, %s3187, %s3170, 128, 128, 8
        $region168: #{tpu_custom_call.1} parent=163 // pred_fallthru
          _
        // Predicated region
        $region169: #{tpu_custom_call.1} parent=163 // pred_check
          %p3195 = pneg %p898
        $region170: #{tpu_custom_call.1} parent=163 // pred_check_branch
          %3197 = sbr.rel (%p3195) target = $region172
        $region171: #{tpu_custom_call.1} parent=163 // pred_region
          %s3198 = smul.u32 2, %s93
          %s3200 = ssub.s32 256, 256
          %3201 = vsyncadd %s3175, %s3200
          %s3202 = smul.addr %s3198, 128
          %s3203 = scalar_lea.hbm %s75, %s3202
          %s3204 = sshll.u32 %s3178, 4
          %s3205 = int_to_ptr.vmem [resolvable:$true] %s3204
          %3210 = dma.vmem_to_hbm [thread:$0]  %s3205, 256, %s3203, %s3175, 128, 128, 8
        $region172: #{tpu_custom_call.1} parent=163 // pred_fallthru
          _
      $region164: #{tpu_custom_call.1} parent=5 // pred_fallthru
        _
      %p3211 = scmp.le.s32.totalorder 2, %s88
      // Predicated region
      $region173: #{tpu_custom_call.1} parent=5 // pred_check
        %p3212 = pneg %p3211
      $region174: #{tpu_custom_call.1} parent=5 // pred_check_branch
        %3214 = sbr.rel (%p3212) target = $region176
      $region175: #{tpu_custom_call.1} parent=5 // pred_region
        %s3215 = ssub.s32 %s88, 2
        // Predicated region
        $region177: #{tpu_custom_call.1} parent=175 // pred_check
          %p3216 = pneg %p878
        $region178: #{tpu_custom_call.1} parent=175 // pred_check_branch
          %3218 = sbr.rel (%p3216) target = $region180
        $region179: #{tpu_custom_call.1} parent=175 // pred_region
          %s3219 = sand.u32 %s863, 1
          %s3220 = scalar_lea.sflag [#allocation4], %s3219
          %s3221 = sand.u32 %s863, 1
          %s3222 = smul.addr %s3221, 16
          %s3223 = scalar_lea.vmem [#allocation3], %s3222
          %3224 = dma.done %s3220, 256
        $region180: #{tpu_custom_call.1} parent=175 // pred_fallthru
          _
        // Predicated region
        $region181: #{tpu_custom_call.1} parent=175 // pred_check
          %p3225 = pneg %p904
        $region182: #{tpu_custom_call.1} parent=175 // pred_check_branch
          %3227 = sbr.rel (%p3225) target = $region184
        $region183: #{tpu_custom_call.1} parent=175 // pred_region
          %s3228 = sand.u32 %s889, 1
          %s3229 = scalar_lea.sflag [#allocation6], %s3228
          %s3230 = sand.u32 %s889, 1
          %s3231 = smul.addr %s3230, 16
          %s3232 = scalar_lea.vmem [#allocation5], %s3231
          %3233 = dma.done %s3229, 256
        $region184: #{tpu_custom_call.1} parent=175 // pred_fallthru
          _
      $region176: #{tpu_custom_call.1} parent=5 // pred_fallthru
        _
    $region6: #{tpu_custom_call.1} parent=1 // loop_footer
      %s92 = sadd.s32 1, %s88
    $region7: #{tpu_custom_call.1} parent=1 // loop_footer_branch
      %87 = sbr.rel target = $region3
    $region8: #{tpu_custom_call.1} parent=1 // loop_exit
      _
    %3234 = vsyncpa [#allocation4], 1
    %s3235 = scalar_lea.sflag [#allocation4], 1
    %3236 = vsyncpa %s3235, 1
    %3237 = vsyncpa [#allocation6], 1
    %s3238 = scalar_lea.sflag [#allocation6], 1
    %3239 = vsyncpa %s3238, 1

</llo_original>
